<compile_context>
chip_gen: v7x
topology: tpu7x:2x2x1
jax: 0.10.0
libtpu: 0.0.40
codegen_flags: <defaults>
</compile_context>

<pallas_src>
import functools

import jax
import jax.numpy as jnp
from jax.experimental import pallas as pl
from jax.experimental.pallas import tpu as pltpu

_X0 = 8  # column (sublane-group aligned) where the un-padded interior starts
         # inside the in-kernel zero-padded staging buffer.


def dwconv_bn_kernel(x_ref, w_ref, g_ref, b_ref, o_ref, xpad_ref, pln_ref, *, eps):
    # x_ref   : (1, H, W, Ct)    input channel tile (NHWC, C on lanes)
    # w_ref   : (3, 3, Ct)       depthwise 3x3 weights for this tile
    # g_ref   : (1, Ct)          BN gamma
    # b_ref   : (1, Ct)          BN beta
    # o_ref   : (1, H, W, Ct)    output tile
    # xpad_ref: (H+2, WP, Ct)    zero-padded staging buffer (interior at col _X0)
    # pln_ref : (2, H+2, W, Ct)  hoisted column-shifted planes (dx = 0 and dx = 2)
    _, H, W, Ct = o_ref.shape
    WP = xpad_ref.shape[1]
    X0 = _X0
    R0 = X0 + (W // 8) * 8          # first aligned column of the right zero region
    f32 = jnp.float32

    # ---- stage 1: in-kernel zero padding (sublane-group aligned stores only) ----
    z_side = jnp.zeros((H + 2, X0, Ct), f32)
    xpad_ref[:, 0:X0, :] = z_side                                   # left pad cols (incl. X0-1)
    xpad_ref[:, R0:WP, :] = jnp.zeros((H + 2, WP - R0, Ct), f32)    # right pad cols (incl. X0+W)
    z_row = jnp.zeros((1, R0 - X0, Ct), f32)
    xpad_ref[0:1, X0:R0, :] = z_row                                 # top pad row
    xpad_ref[H + 1:H + 2, X0:R0, :] = z_row                         # bottom pad row
    xpad_ref[1:H + 1, X0:X0 + W, :] = x_ref[0]                      # interior (aligned store)

    # ---- stage 2: hoist the dx (column) shifts: 2 shifted planes, built once ----
    # plane[k, a, x, c] == padded_input[a, x + dx, c] with dx = 0 (k=0), dx = 2 (k=1).
    # The dx = 1 (unshifted) taps are read straight from xpad_ref at column X0.
    xpv = xpad_ref[...]                                             # (H+2, WP, Ct)
    pln_ref[0, :, :, :] = xpv[:, X0 - 1:X0 - 1 + W, :]
    pln_ref[1, :, :, :] = xpv[:, X0 + 1:X0 + 1 + W, :]

    def tap(row, dx):
        if dx == 1:
            return xpad_ref[row, X0:X0 + W, :]
        return pln_ref[dx // 2, row, :, :]

    wv = [[w_ref[dy, dx, :] for dx in range(3)] for dy in range(3)]  # 9 x (Ct,)

    # ---- stage 3: 3x3 depthwise conv, row by row, with fused BN statistics ----
    sum_acc = jnp.zeros((W, Ct), f32)
    sq_acc = jnp.zeros((W, Ct), f32)
    for y in range(H):
        r = tap(y, 0) * wv[0][0]
        for dy in range(3):
            for dx in range(3):
                if dy == 0 and dx == 0:
                    continue
                r = r + tap(y + dy, dx) * wv[dy][dx]
        sum_acc = sum_acc + r
        sq_acc = sq_acc + r * r
        o_ref[0, y, :, :] = r                # stage un-normalized conv output

    # ---- stage 4: BN (training-mode batch stats) folded into one scale/shift ----
    inv_n = 1.0 / float(H * W)               # N == 1: stats over H*W samples
    mean = jnp.sum(sum_acc, axis=0) * inv_n                          # (Ct,)
    var = jnp.maximum(jnp.sum(sq_acc, axis=0) * inv_n - mean * mean, 0.0)
    scale = jax.lax.rsqrt(var + eps) * g_ref[0]
    shift = b_ref[0] - mean * scale
    for y in range(H):
        o_ref[0, y, :, :] = o_ref[0, y, :, :] * scale + shift


def depthwise_conv_bn_nhwc(x_nhwc, w_hwc, gamma, beta, *, eps=1e-3, c_tile=384):
    """Fused depthwise 3x3 conv + training-mode BatchNorm. NHWC in / NHWC out.

    Hot path: no layout transposes; only the channel axis is padded to a
    multiple of the lane-dense tile (fuses with surrounding XLA ops when
    jitted).  `c_tile` must be a multiple of 128.
    """
    N, H, W, C = x_nhwc.shape
    assert N == 1, "kernel written for batch 1 (as in the reference module)"
    assert c_tile % 128 == 0
    assert W >= 8

    n_tiles = pl.cdiv(C, c_tile)
    Cp = n_tiles * c_tile
    wp_stage = _X0 + ((W + 1 + 7) // 8) * 8   # staging width (aligned interior + pad cols)

    x_p = jnp.pad(x_nhwc.astype(jnp.float32), ((0, 0), (0, 0), (0, 0), (0, Cp - C)))
    w_p = jnp.zeros((3, 3, Cp), jnp.float32).at[:, :, :C].set(w_hwc.astype(jnp.float32))
    g_p = jnp.ones((1, Cp), jnp.float32).at[:, :C].set(gamma.astype(jnp.float32)[None, :])
    b_p = jnp.zeros((1, Cp), jnp.float32).at[:, :C].set(beta.astype(jnp.float32)[None, :])

    kernel = functools.partial(dwconv_bn_kernel, eps=eps)
    out_p = pl.pallas_call(
        kernel,
        out_shape=jax.ShapeDtypeStruct((N, H, W, Cp), jnp.float32),
        grid_spec=pltpu.PrefetchScalarGridSpec(
            num_scalar_prefetch=0,
            grid=(n_tiles,),
            in_specs=[
                pl.BlockSpec((1, H, W, c_tile), lambda i: (0, 0, 0, i)),
                pl.BlockSpec((3, 3, c_tile), lambda i: (0, 0, i)),
                pl.BlockSpec((1, c_tile), lambda i: (0, i)),
                pl.BlockSpec((1, c_tile), lambda i: (0, i)),
            ],
            out_specs=pl.BlockSpec((1, H, W, c_tile), lambda i: (0, 0, 0, i)),
            scratch_shapes=[
                pltpu.VMEM((H + 2, wp_stage, c_tile), jnp.float32),
                pltpu.VMEM((2, H + 2, W, c_tile), jnp.float32),
            ],
        ),
        compiler_params=pltpu.CompilerParams(
            dimension_semantics=("parallel",),
        ),
    )(x_p, w_p, g_p, b_p)
    return out_p[..., :C]


def depthwise_conv_bn_nchw(x_nchw, w_hwc, gamma, beta, *, eps=1e-3, c_tile=384):
    """PyTorch-layout (NCHW) wrapper: layout glue only.

    If the surrounding model can stay NHWC, call depthwise_conv_bn_nhwc
    directly and skip both transposes (they are pure data movement and cost
    more HBM traffic than the fused kernel itself at this size).
    """
    x_nhwc = jnp.transpose(x_nchw, (0, 2, 3, 1))
    out_nhwc = depthwise_conv_bn_nhwc(x_nhwc, w_hwc, gamma, beta, eps=eps, c_tile=c_tile)
    return jnp.transpose(out_nhwc, (0, 3, 1, 2))


def reference_forward(x_nchw, w_hwc, gamma, beta, eps=1e-3):
    """Pure-JAX reference mirroring PyTorch semantics (training-mode BN)."""
    C = x_nchw.shape[1]
    w_oihw = jnp.transpose(w_hwc, (2, 0, 1))[:, None, :, :]          # (C, 1, 3, 3)
    y = jax.lax.conv_general_dilated(
        x_nchw, w_oihw, window_strides=(1, 1), padding=((1, 1), (1, 1)),
        dimension_numbers=("NCHW", "OIHW", "NCHW"), feature_group_count=C)
    mean = jnp.mean(y, axis=(0, 2, 3), keepdims=True)
    var = jnp.mean((y - mean) ** 2, axis=(0, 2, 3), keepdims=True)
    return (y - mean) / jnp.sqrt(var + eps) * gamma.reshape(1, C, 1, 1) \
        + beta.reshape(1, C, 1, 1)


if __name__ == "__main__":
    # Shapes implied by the module: x340 = randn(1, 1344, 14, 14)
    N, C, H, W = 1, 1344, 14, 14
    eps = 1e-3

    key = jax.random.PRNGKey(0)
    kx, kw, kg, kb = jax.random.split(key, 4)
    x = jax.random.normal(kx, (N, C, H, W), dtype=jnp.float32)
    w = jax.random.normal(kw, (3, 3, C), dtype=jnp.float32) * 0.1     # depthwise weights
    gamma = 1.0 + 0.1 * jax.random.normal(kg, (C,), dtype=jnp.float32)
    beta = 0.1 * jax.random.normal(kb, (C,), dtype=jnp.float32)

    fwd = jax.jit(functools.partial(depthwise_conv_bn_nchw, eps=eps))
    out = jax.block_until_ready(fwd(x, w, gamma, beta))

    ref = jax.block_until_ready(reference_forward(x, w, gamma, beta, eps=eps))
    assert out.shape == (N, C, H, W)
    err = float(jnp.max(jnp.abs(out - ref)))
    assert err < 2e-3, err       # one-pass variance (E[x^2]-mean^2) vs two-pass ref
    print("KERNEL_OK")
</pallas_src>

<mosaic_0001>
module attributes {stable_mosaic.version = 11 : i64} {
  func.func @dwconv_bn_kernel(%arg0: i32, %arg1: memref<1x14x14x384xf32, #tpu.memory_space<vmem>>, %arg2: memref<3x3x384xf32, #tpu.memory_space<vmem>>, %arg3: memref<1x384xf32, #tpu.memory_space<vmem>>, %arg4: memref<1x384xf32, #tpu.memory_space<vmem>>, %arg5: memref<1x14x14x384xf32, #tpu.memory_space<vmem>>, %arg6: memref<16x24x384xf32, #tpu.memory_space<vmem>>, %arg7: memref<2x16x14x384xf32, #tpu.memory_space<vmem>>) attributes {dimension_semantics = [#tpu.dimension_semantics<parallel>], iteration_bounds = array<i64: 4>, scalar_prefetch = 0 : i64, scratch_operands = 2 : i64, tpu.core_type = #tpu.core_type<tc>, window_params = [{transform_indices = @transform_0, window_bounds = array<i64: 1, 14, 14, 384>}, {transform_indices = @transform_1, window_bounds = array<i64: 3, 3, 384>}, {transform_indices = @transform_2, window_bounds = array<i64: 1, 384>}, {transform_indices = @transform_3, window_bounds = array<i64: 1, 384>}, {transform_indices = @transform_4, window_bounds = array<i64: 1, 14, 14, 384>}]} {
    %cst = arith.constant 0.000000e+00 : f32
    %0 = vector.broadcast %cst : f32 to vector<16x8x384xf32>
    %c0 = arith.constant 0 : index
    %c0_0 = arith.constant 0 : index
    %c0_1 = arith.constant 0 : index
    %1 = vector.load %arg6[%c0, %c0_0, %c0_1] : memref<16x24x384xf32, #tpu.memory_space<vmem>>, vector<16x8x384xf32>
    tpu.vector_store %arg6[%c0, %c0_0, %c0_1], %0 {strides = array<i32>} : memref<16x24x384xf32, #tpu.memory_space<vmem>>, vector<16x8x384xf32>,
    %cst_2 = arith.constant 0.000000e+00 : f32
    %2 = vector.broadcast %cst_2 : f32 to vector<16x8x384xf32>
    %c0_3 = arith.constant 0 : index
    %c16 = arith.constant 16 : index
    %c0_4 = arith.constant 0 : index
    %3 = vector.load %arg6[%c0_3, %c16, %c0_4] : memref<16x24x384xf32, #tpu.memory_space<vmem>>, vector<16x8x384xf32>
    tpu.vector_store %arg6[%c0_3, %c16, %c0_4], %2 {strides = array<i32>} : memref<16x24x384xf32, #tpu.memory_space<vmem>>, vector<16x8x384xf32>,
    %cst_5 = arith.constant 0.000000e+00 : f32
    %4 = vector.broadcast %cst_5 : f32 to vector<1x8x384xf32>
    %c0_6 = arith.constant 0 : index
    %c8 = arith.constant 8 : index
    %c0_7 = arith.constant 0 : index
    %5 = vector.load %arg6[%c0_6, %c8, %c0_7] : memref<16x24x384xf32, #tpu.memory_space<vmem>>, vector<1x8x384xf32>
    tpu.vector_store %arg6[%c0_6, %c8, %c0_7], %4 {strides = array<i32>} : memref<16x24x384xf32, #tpu.memory_space<vmem>>, vector<1x8x384xf32>,
    %c15 = arith.constant 15 : index
    %c8_8 = arith.constant 8 : index
    %c0_9 = arith.constant 0 : index
    %6 = vector.load %arg6[%c15, %c8_8, %c0_9] : memref<16x24x384xf32, #tpu.memory_space<vmem>>, vector<1x8x384xf32>
    tpu.vector_store %arg6[%c15, %c8_8, %c0_9], %4 {strides = array<i32>} : memref<16x24x384xf32, #tpu.memory_space<vmem>>, vector<1x8x384xf32>,
    %c0_10 = arith.constant 0 : index
    %c0_11 = arith.constant 0 : index
    %c0_12 = arith.constant 0 : index
    %c0_13 = arith.constant 0 : index
    %7 = vector.load %arg1[%c0_10, %c0_11, %c0_12, %c0_13] : memref<1x14x14x384xf32, #tpu.memory_space<vmem>>, vector<1x14x14x384xf32>
    %8 = vector.shape_cast %7 : vector<1x14x14x384xf32> to vector<14x14x384xf32>
    %c1 = arith.constant 1 : index
    %c8_14 = arith.constant 8 : index
    %c0_15 = arith.constant 0 : index
    %9 = vector.load %arg6[%c1, %c8_14, %c0_15] : memref<16x24x384xf32, #tpu.memory_space<vmem>>, vector<14x14x384xf32>
    tpu.vector_store %arg6[%c1, %c8_14, %c0_15], %8 {strides = array<i32>} : memref<16x24x384xf32, #tpu.memory_space<vmem>>, vector<14x14x384xf32>,
    %c0_16 = arith.constant 0 : index
    %c0_17 = arith.constant 0 : index
    %c0_18 = arith.constant 0 : index
    %10 = vector.load %arg6[%c0_16, %c0_17, %c0_18] : memref<16x24x384xf32, #tpu.memory_space<vmem>>, vector<16x24x384xf32>
    %11 = vector.extract_strided_slice %10 {offsets = [0, 7, 0], sizes = [16, 14, 384], strides = [1, 1, 1]} : vector<16x24x384xf32> to vector<16x14x384xf32>
    %c0_19 = arith.constant 0 : index
    %c0_20 = arith.constant 0 : index
    %c0_21 = arith.constant 0 : index
    %c0_22 = arith.constant 0 : index
    %12 = vector.load %arg7[%c0_19, %c0_20, %c0_21, %c0_22] : memref<2x16x14x384xf32, #tpu.memory_space<vmem>>, vector<1x16x14x384xf32>
    %13 = vector.shape_cast %12 : vector<1x16x14x384xf32> to vector<16x14x384xf32>
    %14 = vector.shape_cast %11 : vector<16x14x384xf32> to vector<1x16x14x384xf32>
    tpu.vector_store %arg7[%c0_19, %c0_20, %c0_21, %c0_22], %14 {strides = array<i32>} : memref<2x16x14x384xf32, #tpu.memory_space<vmem>>, vector<1x16x14x384xf32>,
    %15 = vector.extract_strided_slice %10 {offsets = [0, 9, 0], sizes = [16, 14, 384], strides = [1, 1, 1]} : vector<16x24x384xf32> to vector<16x14x384xf32>
    %c1_23 = arith.constant 1 : index
    %c0_24 = arith.constant 0 : index
    %c0_25 = arith.constant 0 : index
    %c0_26 = arith.constant 0 : index
    %16 = vector.load %arg7[%c1_23, %c0_24, %c0_25, %c0_26] : memref<2x16x14x384xf32, #tpu.memory_space<vmem>>, vector<1x16x14x384xf32>
    %17 = vector.shape_cast %16 : vector<1x16x14x384xf32> to vector<16x14x384xf32>
    %18 = vector.shape_cast %15 : vector<16x14x384xf32> to vector<1x16x14x384xf32>
    tpu.vector_store %arg7[%c1_23, %c0_24, %c0_25, %c0_26], %18 {strides = array<i32>} : memref<2x16x14x384xf32, #tpu.memory_space<vmem>>, vector<1x16x14x384xf32>,
    %c0_27 = arith.constant 0 : index
    %c0_28 = arith.constant 0 : index
    %c0_29 = arith.constant 0 : index
    %19 = vector.load %arg2[%c0_27, %c0_28, %c0_29] : memref<3x3x384xf32, #tpu.memory_space<vmem>>, vector<1x1x384xf32>
    %20 = vector.shape_cast %19 : vector<1x1x384xf32> to vector<384xf32>
    %c0_30 = arith.constant 0 : index
    %c1_31 = arith.constant 1 : index
    %c0_32 = arith.constant 0 : index
    %21 = vector.load %arg2[%c0_30, %c1_31, %c0_32] : memref<3x3x384xf32, #tpu.memory_space<vmem>>, vector<1x1x384xf32>
    %22 = vector.shape_cast %21 : vector<1x1x384xf32> to vector<384xf32>
    %c0_33 = arith.constant 0 : index
    %c2 = arith.constant 2 : index
    %c0_34 = arith.constant 0 : index
    %23 = vector.load %arg2[%c0_33, %c2, %c0_34] : memref<3x3x384xf32, #tpu.memory_space<vmem>>, vector<1x1x384xf32>
    %24 = vector.shape_cast %23 : vector<1x1x384xf32> to vector<384xf32>
    %c1_35 = arith.constant 1 : index
    %c0_36 = arith.constant 0 : index
    %c0_37 = arith.constant 0 : index
    %25 = vector.load %arg2[%c1_35, %c0_36, %c0_37] : memref<3x3x384xf32, #tpu.memory_space<vmem>>, vector<1x1x384xf32>
    %26 = vector.shape_cast %25 : vector<1x1x384xf32> to vector<384xf32>
    %c1_38 = arith.constant 1 : index
    %c1_39 = arith.constant 1 : index
    %c0_40 = arith.constant 0 : index
    %27 = vector.load %arg2[%c1_38, %c1_39, %c0_40] : memref<3x3x384xf32, #tpu.memory_space<vmem>>, vector<1x1x384xf32>
    %28 = vector.shape_cast %27 : vector<1x1x384xf32> to vector<384xf32>
    %c1_41 = arith.constant 1 : index
    %c2_42 = arith.constant 2 : index
    %c0_43 = arith.constant 0 : index
    %29 = vector.load %arg2[%c1_41, %c2_42, %c0_43] : memref<3x3x384xf32, #tpu.memory_space<vmem>>, vector<1x1x384xf32>
    %30 = vector.shape_cast %29 : vector<1x1x384xf32> to vector<384xf32>
    %c2_44 = arith.constant 2 : index
    %c0_45 = arith.constant 0 : index
    %c0_46 = arith.constant 0 : index
    %31 = vector.load %arg2[%c2_44, %c0_45, %c0_46] : memref<3x3x384xf32, #tpu.memory_space<vmem>>, vector<1x1x384xf32>
    %32 = vector.shape_cast %31 : vector<1x1x384xf32> to vector<384xf32>
    %c2_47 = arith.constant 2 : index
    %c1_48 = arith.constant 1 : index
    %c0_49 = arith.constant 0 : index
    %33 = vector.load %arg2[%c2_47, %c1_48, %c0_49] : memref<3x3x384xf32, #tpu.memory_space<vmem>>, vector<1x1x384xf32>
    %34 = vector.shape_cast %33 : vector<1x1x384xf32> to vector<384xf32>
    %c2_50 = arith.constant 2 : index
    %c2_51 = arith.constant 2 : index
    %c0_52 = arith.constant 0 : index
    %35 = vector.load %arg2[%c2_50, %c2_51, %c0_52] : memref<3x3x384xf32, #tpu.memory_space<vmem>>, vector<1x1x384xf32>
    %36 = vector.shape_cast %35 : vector<1x1x384xf32> to vector<384xf32>
    %cst_53 = arith.constant 0.000000e+00 : f32
    %37 = vector.broadcast %cst_53 : f32 to vector<14x384xf32>
    %cst_54 = arith.constant 0.000000e+00 : f32
    %38 = vector.broadcast %cst_54 : f32 to vector<14x384xf32>
    %c0_55 = arith.constant 0 : index
    %c0_56 = arith.constant 0 : index
    %c0_57 = arith.constant 0 : index
    %c0_58 = arith.constant 0 : index
    %39 = vector.load %arg7[%c0_55, %c0_56, %c0_57, %c0_58] : memref<2x16x14x384xf32, #tpu.memory_space<vmem>>, vector<1x1x14x384xf32>
    %40 = vector.shape_cast %39 : vector<1x1x14x384xf32> to vector<14x384xf32>
    %41 = vector.shape_cast %20 : vector<384xf32> to vector<1x384xf32>
    %42 = vector.broadcast %41 : vector<1x384xf32> to vector<14x384xf32>
    %43 = arith.mulf %40, %42 : vector<14x384xf32>
    %c0_59 = arith.constant 0 : index
    %c8_60 = arith.constant 8 : index
    %c0_61 = arith.constant 0 : index
    %44 = vector.load %arg6[%c0_59, %c8_60, %c0_61] : memref<16x24x384xf32, #tpu.memory_space<vmem>>, vector<1x14x384xf32>
    %45 = vector.shape_cast %44 : vector<1x14x384xf32> to vector<14x384xf32>
    %46 = vector.shape_cast %22 : vector<384xf32> to vector<1x384xf32>
    %47 = vector.broadcast %46 : vector<1x384xf32> to vector<14x384xf32>
    %48 = arith.mulf %45, %47 : vector<14x384xf32>
    %49 = arith.addf %43, %48 : vector<14x384xf32>
    %c1_62 = arith.constant 1 : index
    %c0_63 = arith.constant 0 : index
    %c0_64 = arith.constant 0 : index
    %c0_65 = arith.constant 0 : index
    %50 = vector.load %arg7[%c1_62, %c0_63, %c0_64, %c0_65] : memref<2x16x14x384xf32, #tpu.memory_space<vmem>>, vector<1x1x14x384xf32>
    %51 = vector.shape_cast %50 : vector<1x1x14x384xf32> to vector<14x384xf32>
    %52 = vector.shape_cast %24 : vector<384xf32> to vector<1x384xf32>
    %53 = vector.broadcast %52 : vector<1x384xf32> to vector<14x384xf32>
    %54 = arith.mulf %51, %53 : vector<14x384xf32>
    %55 = arith.addf %49, %54 : vector<14x384xf32>
    %c0_66 = arith.constant 0 : index
    %c1_67 = arith.constant 1 : index
    %c0_68 = arith.constant 0 : index
    %c0_69 = arith.constant 0 : index
    %56 = vector.load %arg7[%c0_66, %c1_67, %c0_68, %c0_69] : memref<2x16x14x384xf32, #tpu.memory_space<vmem>>, vector<1x1x14x384xf32>
    %57 = vector.shape_cast %56 : vector<1x1x14x384xf32> to vector<14x384xf32>
    %58 = vector.shape_cast %26 : vector<384xf32> to vector<1x384xf32>
    %59 = vector.broadcast %58 : vector<1x384xf32> to vector<14x384xf32>
    %60 = arith.mulf %57, %59 : vector<14x384xf32>
    %61 = arith.addf %55, %60 : vector<14x384xf32>
    %c1_70 = arith.constant 1 : index
    %c8_71 = arith.constant 8 : index
    %c0_72 = arith.constant 0 : index
    %62 = vector.load %arg6[%c1_70, %c8_71, %c0_72] : memref<16x24x384xf32, #tpu.memory_space<vmem>>, vector<1x14x384xf32>
    %63 = vector.shape_cast %62 : vector<1x14x384xf32> to vector<14x384xf32>
    %64 = vector.shape_cast %28 : vector<384xf32> to vector<1x384xf32>
    %65 = vector.broadcast %64 : vector<1x384xf32> to vector<14x384xf32>
    %66 = arith.mulf %63, %65 : vector<14x384xf32>
    %67 = arith.addf %61, %66 : vector<14x384xf32>
    %c1_73 = arith.constant 1 : index
    %c1_74 = arith.constant 1 : index
    %c0_75 = arith.constant 0 : index
    %c0_76 = arith.constant 0 : index
    %68 = vector.load %arg7[%c1_73, %c1_74, %c0_75, %c0_76] : memref<2x16x14x384xf32, #tpu.memory_space<vmem>>, vector<1x1x14x384xf32>
    %69 = vector.shape_cast %68 : vector<1x1x14x384xf32> to vector<14x384xf32>
    %70 = vector.shape_cast %30 : vector<384xf32> to vector<1x384xf32>
    %71 = vector.broadcast %70 : vector<1x384xf32> to vector<14x384xf32>
    %72 = arith.mulf %69, %71 : vector<14x384xf32>
    %73 = arith.addf %67, %72 : vector<14x384xf32>
    %c0_77 = arith.constant 0 : index
    %c2_78 = arith.constant 2 : index
    %c0_79 = arith.constant 0 : index
    %c0_80 = arith.constant 0 : index
    %74 = vector.load %arg7[%c0_77, %c2_78, %c0_79, %c0_80] : memref<2x16x14x384xf32, #tpu.memory_space<vmem>>, vector<1x1x14x384xf32>
    %75 = vector.shape_cast %74 : vector<1x1x14x384xf32> to vector<14x384xf32>
    %76 = vector.shape_cast %32 : vector<384xf32> to vector<1x384xf32>
    %77 = vector.broadcast %76 : vector<1x384xf32> to vector<14x384xf32>
    %78 = arith.mulf %75, %77 : vector<14x384xf32>
    %79 = arith.addf %73, %78 : vector<14x384xf32>
    %c2_81 = arith.constant 2 : index
    %c8_82 = arith.constant 8 : index
    %c0_83 = arith.constant 0 : index
    %80 = vector.load %arg6[%c2_81, %c8_82, %c0_83] : memref<16x24x384xf32, #tpu.memory_space<vmem>>, vector<1x14x384xf32>
    %81 = vector.shape_cast %80 : vector<1x14x384xf32> to vector<14x384xf32>
    %82 = vector.shape_cast %34 : vector<384xf32> to vector<1x384xf32>
    %83 = vector.broadcast %82 : vector<1x384xf32> to vector<14x384xf32>
    %84 = arith.mulf %81, %83 : vector<14x384xf32>
    %85 = arith.addf %79, %84 : vector<14x384xf32>
    %c1_84 = arith.constant 1 : index
    %c2_85 = arith.constant 2 : index
    %c0_86 = arith.constant 0 : index
    %c0_87 = arith.constant 0 : index
    %86 = vector.load %arg7[%c1_84, %c2_85, %c0_86, %c0_87] : memref<2x16x14x384xf32, #tpu.memory_space<vmem>>, vector<1x1x14x384xf32>
    %87 = vector.shape_cast %86 : vector<1x1x14x384xf32> to vector<14x384xf32>
    %88 = vector.shape_cast %36 : vector<384xf32> to vector<1x384xf32>
    %89 = vector.broadcast %88 : vector<1x384xf32> to vector<14x384xf32>
    %90 = arith.mulf %87, %89 : vector<14x384xf32>
    %91 = arith.addf %85, %90 : vector<14x384xf32>
    %92 = arith.addf %37, %91 : vector<14x384xf32>
    %93 = arith.mulf %91, %91 : vector<14x384xf32>
    %94 = arith.addf %38, %93 : vector<14x384xf32>
    %c0_88 = arith.constant 0 : index
    %c0_89 = arith.constant 0 : index
    %c0_90 = arith.constant 0 : index
    %c0_91 = arith.constant 0 : index
    %95 = vector.load %arg5[%c0_88, %c0_89, %c0_90, %c0_91] : memref<1x14x14x384xf32, #tpu.memory_space<vmem>>, vector<1x1x14x384xf32>
    %96 = vector.shape_cast %95 : vector<1x1x14x384xf32> to vector<14x384xf32>
    %97 = vector.shape_cast %91 : vector<14x384xf32> to vector<1x1x14x384xf32>
    tpu.vector_store %arg5[%c0_88, %c0_89, %c0_90, %c0_91], %97 {strides = array<i32>} : memref<1x14x14x384xf32, #tpu.memory_space<vmem>>, vector<1x1x14x384xf32>,
    %c0_92 = arith.constant 0 : index
    %c1_93 = arith.constant 1 : index
    %c0_94 = arith.constant 0 : index
    %c0_95 = arith.constant 0 : index
    %98 = vector.load %arg7[%c0_92, %c1_93, %c0_94, %c0_95] : memref<2x16x14x384xf32, #tpu.memory_space<vmem>>, vector<1x1x14x384xf32>
    %99 = vector.shape_cast %98 : vector<1x1x14x384xf32> to vector<14x384xf32>
    %100 = vector.shape_cast %20 : vector<384xf32> to vector<1x384xf32>
    %101 = vector.broadcast %100 : vector<1x384xf32> to vector<14x384xf32>
    %102 = arith.mulf %99, %101 : vector<14x384xf32>
    %c1_96 = arith.constant 1 : index
    %c8_97 = arith.constant 8 : index
    %c0_98 = arith.constant 0 : index
    %103 = vector.load %arg6[%c1_96, %c8_97, %c0_98] : memref<16x24x384xf32, #tpu.memory_space<vmem>>, vector<1x14x384xf32>
    %104 = vector.shape_cast %103 : vector<1x14x384xf32> to vector<14x384xf32>
    %105 = vector.shape_cast %22 : vector<384xf32> to vector<1x384xf32>
    %106 = vector.broadcast %105 : vector<1x384xf32> to vector<14x384xf32>
    %107 = arith.mulf %104, %106 : vector<14x384xf32>
    %108 = arith.addf %102, %107 : vector<14x384xf32>
    %c1_99 = arith.constant 1 : index
    %c1_100 = arith.constant 1 : index
    %c0_101 = arith.constant 0 : index
    %c0_102 = arith.constant 0 : index
    %109 = vector.load %arg7[%c1_99, %c1_100, %c0_101, %c0_102] : memref<2x16x14x384xf32, #tpu.memory_space<vmem>>, vector<1x1x14x384xf32>
    %110 = vector.shape_cast %109 : vector<1x1x14x384xf32> to vector<14x384xf32>
    %111 = vector.shape_cast %24 : vector<384xf32> to vector<1x384xf32>
    %112 = vector.broadcast %111 : vector<1x384xf32> to vector<14x384xf32>
    %113 = arith.mulf %110, %112 : vector<14x384xf32>
    %114 = arith.addf %108, %113 : vector<14x384xf32>
    %c0_103 = arith.constant 0 : index
    %c2_104 = arith.constant 2 : index
    %c0_105 = arith.constant 0 : index
    %c0_106 = arith.constant 0 : index
    %115 = vector.load %arg7[%c0_103, %c2_104, %c0_105, %c0_106] : memref<2x16x14x384xf32, #tpu.memory_space<vmem>>, vector<1x1x14x384xf32>
    %116 = vector.shape_cast %115 : vector<1x1x14x384xf32> to vector<14x384xf32>
    %117 = vector.shape_cast %26 : vector<384xf32> to vector<1x384xf32>
    %118 = vector.broadcast %117 : vector<1x384xf32> to vector<14x384xf32>
    %119 = arith.mulf %116, %118 : vector<14x384xf32>
    %120 = arith.addf %114, %119 : vector<14x384xf32>
    %c2_107 = arith.constant 2 : index
    %c8_108 = arith.constant 8 : index
    %c0_109 = arith.constant 0 : index
    %121 = vector.load %arg6[%c2_107, %c8_108, %c0_109] : memref<16x24x384xf32, #tpu.memory_space<vmem>>, vector<1x14x384xf32>
    %122 = vector.shape_cast %121 : vector<1x14x384xf32> to vector<14x384xf32>
    %123 = vector.shape_cast %28 : vector<384xf32> to vector<1x384xf32>
    %124 = vector.broadcast %123 : vector<1x384xf32> to vector<14x384xf32>
    %125 = arith.mulf %122, %124 : vector<14x384xf32>
    %126 = arith.addf %120, %125 : vector<14x384xf32>
    %c1_110 = arith.constant 1 : index
    %c2_111 = arith.constant 2 : index
    %c0_112 = arith.constant 0 : index
    %c0_113 = arith.constant 0 : index
    %127 = vector.load %arg7[%c1_110, %c2_111, %c0_112, %c0_113] : memref<2x16x14x384xf32, #tpu.memory_space<vmem>>, vector<1x1x14x384xf32>
    %128 = vector.shape_cast %127 : vector<1x1x14x384xf32> to vector<14x384xf32>
    %129 = vector.shape_cast %30 : vector<384xf32> to vector<1x384xf32>
    %130 = vector.broadcast %129 : vector<1x384xf32> to vector<14x384xf32>
    %131 = arith.mulf %128, %130 : vector<14x384xf32>
    %132 = arith.addf %126, %131 : vector<14x384xf32>
    %c0_114 = arith.constant 0 : index
    %c3 = arith.constant 3 : index
    %c0_115 = arith.constant 0 : index
    %c0_116 = arith.constant 0 : index
    %133 = vector.load %arg7[%c0_114, %c3, %c0_115, %c0_116] : memref<2x16x14x384xf32, #tpu.memory_space<vmem>>, vector<1x1x14x384xf32>
    %134 = vector.shape_cast %133 : vector<1x1x14x384xf32> to vector<14x384xf32>
    %135 = vector.shape_cast %32 : vector<384xf32> to vector<1x384xf32>
    %136 = vector.broadcast %135 : vector<1x384xf32> to vector<14x384xf32>
    %137 = arith.mulf %134, %136 : vector<14x384xf32>
    %138 = arith.addf %132, %137 : vector<14x384xf32>
    %c3_117 = arith.constant 3 : index
    %c8_118 = arith.constant 8 : index
    %c0_119 = arith.constant 0 : index
    %139 = vector.load %arg6[%c3_117, %c8_118, %c0_119] : memref<16x24x384xf32, #tpu.memory_space<vmem>>, vector<1x14x384xf32>
    %140 = vector.shape_cast %139 : vector<1x14x384xf32> to vector<14x384xf32>
    %141 = vector.shape_cast %34 : vector<384xf32> to vector<1x384xf32>
    %142 = vector.broadcast %141 : vector<1x384xf32> to vector<14x384xf32>
    %143 = arith.mulf %140, %142 : vector<14x384xf32>
    %144 = arith.addf %138, %143 : vector<14x384xf32>
    %c1_120 = arith.constant 1 : index
    %c3_121 = arith.constant 3 : index
    %c0_122 = arith.constant 0 : index
    %c0_123 = arith.constant 0 : index
    %145 = vector.load %arg7[%c1_120, %c3_121, %c0_122, %c0_123] : memref<2x16x14x384xf32, #tpu.memory_space<vmem>>, vector<1x1x14x384xf32>
    %146 = vector.shape_cast %145 : vector<1x1x14x384xf32> to vector<14x384xf32>
    %147 = vector.shape_cast %36 : vector<384xf32> to vector<1x384xf32>
    %148 = vector.broadcast %147 : vector<1x384xf32> to vector<14x384xf32>
    %149 = arith.mulf %146, %148 : vector<14x384xf32>
    %150 = arith.addf %144, %149 : vector<14x384xf32>
    %151 = arith.addf %92, %150 : vector<14x384xf32>
    %152 = arith.mulf %150, %150 : vector<14x384xf32>
    %153 = arith.addf %94, %152 : vector<14x384xf32>
    %c0_124 = arith.constant 0 : index
    %c1_125 = arith.constant 1 : index
    %c0_126 = arith.constant 0 : index
    %c0_127 = arith.constant 0 : index
    %154 = vector.load %arg5[%c0_124, %c1_125, %c0_126, %c0_127] : memref<1x14x14x384xf32, #tpu.memory_space<vmem>>, vector<1x1x14x384xf32>
    %155 = vector.shape_cast %154 : vector<1x1x14x384xf32> to vector<14x384xf32>
    %156 = vector.shape_cast %150 : vector<14x384xf32> to vector<1x1x14x384xf32>
    tpu.vector_store %arg5[%c0_124, %c1_125, %c0_126, %c0_127], %156 {strides = array<i32>} : memref<1x14x14x384xf32, #tpu.memory_space<vmem>>, vector<1x1x14x384xf32>,
    %c0_128 = arith.constant 0 : index
    %c2_129 = arith.constant 2 : index
    %c0_130 = arith.constant 0 : index
    %c0_131 = arith.constant 0 : index
    %157 = vector.load %arg7[%c0_128, %c2_129, %c0_130, %c0_131] : memref<2x16x14x384xf32, #tpu.memory_space<vmem>>, vector<1x1x14x384xf32>
    %158 = vector.shape_cast %157 : vector<1x1x14x384xf32> to vector<14x384xf32>
    %159 = vector.shape_cast %20 : vector<384xf32> to vector<1x384xf32>
    %160 = vector.broadcast %159 : vector<1x384xf32> to vector<14x384xf32>
    %161 = arith.mulf %158, %160 : vector<14x384xf32>
    %c2_132 = arith.constant 2 : index
    %c8_133 = arith.constant 8 : index
    %c0_134 = arith.constant 0 : index
    %162 = vector.load %arg6[%c2_132, %c8_133, %c0_134] : memref<16x24x384xf32, #tpu.memory_space<vmem>>, vector<1x14x384xf32>
    %163 = vector.shape_cast %162 : vector<1x14x384xf32> to vector<14x384xf32>
    %164 = vector.shape_cast %22 : vector<384xf32> to vector<1x384xf32>
    %165 = vector.broadcast %164 : vector<1x384xf32> to vector<14x384xf32>
    %166 = arith.mulf %163, %165 : vector<14x384xf32>
    %167 = arith.addf %161, %166 : vector<14x384xf32>
    %c1_135 = arith.constant 1 : index
    %c2_136 = arith.constant 2 : index
    %c0_137 = arith.constant 0 : index
    %c0_138 = arith.constant 0 : index
    %168 = vector.load %arg7[%c1_135, %c2_136, %c0_137, %c0_138] : memref<2x16x14x384xf32, #tpu.memory_space<vmem>>, vector<1x1x14x384xf32>
    %169 = vector.shape_cast %168 : vector<1x1x14x384xf32> to vector<14x384xf32>
    %170 = vector.shape_cast %24 : vector<384xf32> to vector<1x384xf32>
    %171 = vector.broadcast %170 : vector<1x384xf32> to vector<14x384xf32>
    %172 = arith.mulf %169, %171 : vector<14x384xf32>
    %173 = arith.addf %167, %172 : vector<14x384xf32>
    %c0_139 = arith.constant 0 : index
    %c3_140 = arith.constant 3 : index
    %c0_141 = arith.constant 0 : index
    %c0_142 = arith.constant 0 : index
    %174 = vector.load %arg7[%c0_139, %c3_140, %c0_141, %c0_142] : memref<2x16x14x384xf32, #tpu.memory_space<vmem>>, vector<1x1x14x384xf32>
    %175 = vector.shape_cast %174 : vector<1x1x14x384xf32> to vector<14x384xf32>
    %176 = vector.shape_cast %26 : vector<384xf32> to vector<1x384xf32>
    %177 = vector.broadcast %176 : vector<1x384xf32> to vector<14x384xf32>
    %178 = arith.mulf %175, %177 : vector<14x384xf32>
    %179 = arith.addf %173, %178 : vector<14x384xf32>
    %c3_143 = arith.constant 3 : index
    %c8_144 = arith.constant 8 : index
    %c0_145 = arith.constant 0 : index
    %180 = vector.load %arg6[%c3_143, %c8_144, %c0_145] : memref<16x24x384xf32, #tpu.memory_space<vmem>>, vector<1x14x384xf32>
    %181 = vector.shape_cast %180 : vector<1x14x384xf32> to vector<14x384xf32>
    %182 = vector.shape_cast %28 : vector<384xf32> to vector<1x384xf32>
    %183 = vector.broadcast %182 : vector<1x384xf32> to vector<14x384xf32>
    %184 = arith.mulf %181, %183 : vector<14x384xf32>
    %185 = arith.addf %179, %184 : vector<14x384xf32>
    %c1_146 = arith.constant 1 : index
    %c3_147 = arith.constant 3 : index
    %c0_148 = arith.constant 0 : index
    %c0_149 = arith.constant 0 : index
    %186 = vector.load %arg7[%c1_146, %c3_147, %c0_148, %c0_149] : memref<2x16x14x384xf32, #tpu.memory_space<vmem>>, vector<1x1x14x384xf32>
    %187 = vector.shape_cast %186 : vector<1x1x14x384xf32> to vector<14x384xf32>
    %188 = vector.shape_cast %30 : vector<384xf32> to vector<1x384xf32>
    %189 = vector.broadcast %188 : vector<1x384xf32> to vector<14x384xf32>
    %190 = arith.mulf %187, %189 : vector<14x384xf32>
    %191 = arith.addf %185, %190 : vector<14x384xf32>
    %c0_150 = arith.constant 0 : index
    %c4 = arith.constant 4 : index
    %c0_151 = arith.constant 0 : index
    %c0_152 = arith.constant 0 : index
    %192 = vector.load %arg7[%c0_150, %c4, %c0_151, %c0_152] : memref<2x16x14x384xf32, #tpu.memory_space<vmem>>, vector<1x1x14x384xf32>
    %193 = vector.shape_cast %192 : vector<1x1x14x384xf32> to vector<14x384xf32>
    %194 = vector.shape_cast %32 : vector<384xf32> to vector<1x384xf32>
    %195 = vector.broadcast %194 : vector<1x384xf32> to vector<14x384xf32>
    %196 = arith.mulf %193, %195 : vector<14x384xf32>
    %197 = arith.addf %191, %196 : vector<14x384xf32>
    %c4_153 = arith.constant 4 : index
    %c8_154 = arith.constant 8 : index
    %c0_155 = arith.constant 0 : index
    %198 = vector.load %arg6[%c4_153, %c8_154, %c0_155] : memref<16x24x384xf32, #tpu.memory_space<vmem>>, vector<1x14x384xf32>
    %199 = vector.shape_cast %198 : vector<1x14x384xf32> to vector<14x384xf32>
    %200 = vector.shape_cast %34 : vector<384xf32> to vector<1x384xf32>
    %201 = vector.broadcast %200 : vector<1x384xf32> to vector<14x384xf32>
    %202 = arith.mulf %199, %201 : vector<14x384xf32>
    %203 = arith.addf %197, %202 : vector<14x384xf32>
    %c1_156 = arith.constant 1 : index
    %c4_157 = arith.constant 4 : index
    %c0_158 = arith.constant 0 : index
    %c0_159 = arith.constant 0 : index
    %204 = vector.load %arg7[%c1_156, %c4_157, %c0_158, %c0_159] : memref<2x16x14x384xf32, #tpu.memory_space<vmem>>, vector<1x1x14x384xf32>
    %205 = vector.shape_cast %204 : vector<1x1x14x384xf32> to vector<14x384xf32>
    %206 = vector.shape_cast %36 : vector<384xf32> to vector<1x384xf32>
    %207 = vector.broadcast %206 : vector<1x384xf32> to vector<14x384xf32>
    %208 = arith.mulf %205, %207 : vector<14x384xf32>
    %209 = arith.addf %203, %208 : vector<14x384xf32>
    %210 = arith.addf %151, %209 : vector<14x384xf32>
    %211 = arith.mulf %209, %209 : vector<14x384xf32>
    %212 = arith.addf %153, %211 : vector<14x384xf32>
    %c0_160 = arith.constant 0 : index
    %c2_161 = arith.constant 2 : index
    %c0_162 = arith.constant 0 : index
    %c0_163 = arith.constant 0 : index
    %213 = vector.load %arg5[%c0_160, %c2_161, %c0_162, %c0_163] : memref<1x14x14x384xf32, #tpu.memory_space<vmem>>, vector<1x1x14x384xf32>
    %214 = vector.shape_cast %213 : vector<1x1x14x384xf32> to vector<14x384xf32>
    %215 = vector.shape_cast %209 : vector<14x384xf32> to vector<1x1x14x384xf32>
    tpu.vector_store %arg5[%c0_160, %c2_161, %c0_162, %c0_163], %215 {strides = array<i32>} : memref<1x14x14x384xf32, #tpu.memory_space<vmem>>, vector<1x1x14x384xf32>,
    %c0_164 = arith.constant 0 : index
    %c3_165 = arith.constant 3 : index
    %c0_166 = arith.constant 0 : index
    %c0_167 = arith.constant 0 : index
    %216 = vector.load %arg7[%c0_164, %c3_165, %c0_166, %c0_167] : memref<2x16x14x384xf32, #tpu.memory_space<vmem>>, vector<1x1x14x384xf32>
    %217 = vector.shape_cast %216 : vector<1x1x14x384xf32> to vector<14x384xf32>
    %218 = vector.shape_cast %20 : vector<384xf32> to vector<1x384xf32>
    %219 = vector.broadcast %218 : vector<1x384xf32> to vector<14x384xf32>
    %220 = arith.mulf %217, %219 : vector<14x384xf32>
    %c3_168 = arith.constant 3 : index
    %c8_169 = arith.constant 8 : index
    %c0_170 = arith.constant 0 : index
    %221 = vector.load %arg6[%c3_168, %c8_169, %c0_170] : memref<16x24x384xf32, #tpu.memory_space<vmem>>, vector<1x14x384xf32>
    %222 = vector.shape_cast %221 : vector<1x14x384xf32> to vector<14x384xf32>
    %223 = vector.shape_cast %22 : vector<384xf32> to vector<1x384xf32>
    %224 = vector.broadcast %223 : vector<1x384xf32> to vector<14x384xf32>
    %225 = arith.mulf %222, %224 : vector<14x384xf32>
    %226 = arith.addf %220, %225 : vector<14x384xf32>
    %c1_171 = arith.constant 1 : index
    %c3_172 = arith.constant 3 : index
    %c0_173 = arith.constant 0 : index
    %c0_174 = arith.constant 0 : index
    %227 = vector.load %arg7[%c1_171, %c3_172, %c0_173, %c0_174] : memref<2x16x14x384xf32, #tpu.memory_space<vmem>>, vector<1x1x14x384xf32>
    %228 = vector.shape_cast %227 : vector<1x1x14x384xf32> to vector<14x384xf32>
    %229 = vector.shape_cast %24 : vector<384xf32> to vector<1x384xf32>
    %230 = vector.broadcast %229 : vector<1x384xf32> to vector<14x384xf32>
    %231 = arith.mulf %228, %230 : vector<14x384xf32>
    %232 = arith.addf %226, %231 : vector<14x384xf32>
    %c0_175 = arith.constant 0 : index
    %c4_176 = arith.constant 4 : index
    %c0_177 = arith.constant 0 : index
    %c0_178 = arith.constant 0 : index
    %233 = vector.load %arg7[%c0_175, %c4_176, %c0_177, %c0_178] : memref<2x16x14x384xf32, #tpu.memory_space<vmem>>, vector<1x1x14x384xf32>
    %234 = vector.shape_cast %233 : vector<1x1x14x384xf32> to vector<14x384xf32>
    %235 = vector.shape_cast %26 : vector<384xf32> to vector<1x384xf32>
    %236 = vector.broadcast %235 : vector<1x384xf32> to vector<14x384xf32>
    %237 = arith.mulf %234, %236 : vector<14x384xf32>
    %238 = arith.addf %232, %237 : vector<14x384xf32>
    %c4_179 = arith.constant 4 : index
    %c8_180 = arith.constant 8 : index
    %c0_181 = arith.constant 0 : index
    %239 = vector.load %arg6[%c4_179, %c8_180, %c0_181] : memref<16x24x384xf32, #tpu.memory_space<vmem>>, vector<1x14x384xf32>
    %240 = vector.shape_cast %239 : vector<1x14x384xf32> to vector<14x384xf32>
    %241 = vector.shape_cast %28 : vector<384xf32> to vector<1x384xf32>
    %242 = vector.broadcast %241 : vector<1x384xf32> to vector<14x384xf32>
    %243 = arith.mulf %240, %242 : vector<14x384xf32>
    %244 = arith.addf %238, %243 : vector<14x384xf32>
    %c1_182 = arith.constant 1 : index
    %c4_183 = arith.constant 4 : index
    %c0_184 = arith.constant 0 : index
    %c0_185 = arith.constant 0 : index
    %245 = vector.load %arg7[%c1_182, %c4_183, %c0_184, %c0_185] : memref<2x16x14x384xf32, #tpu.memory_space<vmem>>, vector<1x1x14x384xf32>
    %246 = vector.shape_cast %245 : vector<1x1x14x384xf32> to vector<14x384xf32>
    %247 = vector.shape_cast %30 : vector<384xf32> to vector<1x384xf32>
    %248 = vector.broadcast %247 : vector<1x384xf32> to vector<14x384xf32>
    %249 = arith.mulf %246, %248 : vector<14x384xf32>
    %250 = arith.addf %244, %249 : vector<14x384xf32>
    %c0_186 = arith.constant 0 : index
    %c5 = arith.constant 5 : index
    %c0_187 = arith.constant 0 : index
    %c0_188 = arith.constant 0 : index
    %251 = vector.load %arg7[%c0_186, %c5, %c0_187, %c0_188] : memref<2x16x14x384xf32, #tpu.memory_space<vmem>>, vector<1x1x14x384xf32>
    %252 = vector.shape_cast %251 : vector<1x1x14x384xf32> to vector<14x384xf32>
    %253 = vector.shape_cast %32 : vector<384xf32> to vector<1x384xf32>
    %254 = vector.broadcast %253 : vector<1x384xf32> to vector<14x384xf32>
    %255 = arith.mulf %252, %254 : vector<14x384xf32>
    %256 = arith.addf %250, %255 : vector<14x384xf32>
    %c5_189 = arith.constant 5 : index
    %c8_190 = arith.constant 8 : index
    %c0_191 = arith.constant 0 : index
    %257 = vector.load %arg6[%c5_189, %c8_190, %c0_191] : memref<16x24x384xf32, #tpu.memory_space<vmem>>, vector<1x14x384xf32>
    %258 = vector.shape_cast %257 : vector<1x14x384xf32> to vector<14x384xf32>
    %259 = vector.shape_cast %34 : vector<384xf32> to vector<1x384xf32>
    %260 = vector.broadcast %259 : vector<1x384xf32> to vector<14x384xf32>
    %261 = arith.mulf %258, %260 : vector<14x384xf32>
    %262 = arith.addf %256, %261 : vector<14x384xf32>
    %c1_192 = arith.constant 1 : index
    %c5_193 = arith.constant 5 : index
    %c0_194 = arith.constant 0 : index
    %c0_195 = arith.constant 0 : index
    %263 = vector.load %arg7[%c1_192, %c5_193, %c0_194, %c0_195] : memref<2x16x14x384xf32, #tpu.memory_space<vmem>>, vector<1x1x14x384xf32>
    %264 = vector.shape_cast %263 : vector<1x1x14x384xf32> to vector<14x384xf32>
    %265 = vector.shape_cast %36 : vector<384xf32> to vector<1x384xf32>
    %266 = vector.broadcast %265 : vector<1x384xf32> to vector<14x384xf32>
    %267 = arith.mulf %264, %266 : vector<14x384xf32>
    %268 = arith.addf %262, %267 : vector<14x384xf32>
    %269 = arith.addf %210, %268 : vector<14x384xf32>
    %270 = arith.mulf %268, %268 : vector<14x384xf32>
    %271 = arith.addf %212, %270 : vector<14x384xf32>
    %c0_196 = arith.constant 0 : index
    %c3_197 = arith.constant 3 : index
    %c0_198 = arith.constant 0 : index
    %c0_199 = arith.constant 0 : index
    %272 = vector.load %arg5[%c0_196, %c3_197, %c0_198, %c0_199] : memref<1x14x14x384xf32, #tpu.memory_space<vmem>>, vector<1x1x14x384xf32>
    %273 = vector.shape_cast %272 : vector<1x1x14x384xf32> to vector<14x384xf32>
    %274 = vector.shape_cast %268 : vector<14x384xf32> to vector<1x1x14x384xf32>
    tpu.vector_store %arg5[%c0_196, %c3_197, %c0_198, %c0_199], %274 {strides = array<i32>} : memref<1x14x14x384xf32, #tpu.memory_space<vmem>>, vector<1x1x14x384xf32>,
    %c0_200 = arith.constant 0 : index
    %c4_201 = arith.constant 4 : index
    %c0_202 = arith.constant 0 : index
    %c0_203 = arith.constant 0 : index
    %275 = vector.load %arg7[%c0_200, %c4_201, %c0_202, %c0_203] : memref<2x16x14x384xf32, #tpu.memory_space<vmem>>, vector<1x1x14x384xf32>
    %276 = vector.shape_cast %275 : vector<1x1x14x384xf32> to vector<14x384xf32>
    %277 = vector.shape_cast %20 : vector<384xf32> to vector<1x384xf32>
    %278 = vector.broadcast %277 : vector<1x384xf32> to vector<14x384xf32>
    %279 = arith.mulf %276, %278 : vector<14x384xf32>
    %c4_204 = arith.constant 4 : index
    %c8_205 = arith.constant 8 : index
    %c0_206 = arith.constant 0 : index
    %280 = vector.load %arg6[%c4_204, %c8_205, %c0_206] : memref<16x24x384xf32, #tpu.memory_space<vmem>>, vector<1x14x384xf32>
    %281 = vector.shape_cast %280 : vector<1x14x384xf32> to vector<14x384xf32>
    %282 = vector.shape_cast %22 : vector<384xf32> to vector<1x384xf32>
    %283 = vector.broadcast %282 : vector<1x384xf32> to vector<14x384xf32>
    %284 = arith.mulf %281, %283 : vector<14x384xf32>
    %285 = arith.addf %279, %284 : vector<14x384xf32>
    %c1_207 = arith.constant 1 : index
    %c4_208 = arith.constant 4 : index
    %c0_209 = arith.constant 0 : index
    %c0_210 = arith.constant 0 : index
    %286 = vector.load %arg7[%c1_207, %c4_208, %c0_209, %c0_210] : memref<2x16x14x384xf32, #tpu.memory_space<vmem>>, vector<1x1x14x384xf32>
    %287 = vector.shape_cast %286 : vector<1x1x14x384xf32> to vector<14x384xf32>
    %288 = vector.shape_cast %24 : vector<384xf32> to vector<1x384xf32>
    %289 = vector.broadcast %288 : vector<1x384xf32> to vector<14x384xf32>
    %290 = arith.mulf %287, %289 : vector<14x384xf32>
    %291 = arith.addf %285, %290 : vector<14x384xf32>
    %c0_211 = arith.constant 0 : index
    %c5_212 = arith.constant 5 : index
    %c0_213 = arith.constant 0 : index
    %c0_214 = arith.constant 0 : index
    %292 = vector.load %arg7[%c0_211, %c5_212, %c0_213, %c0_214] : memref<2x16x14x384xf32, #tpu.memory_space<vmem>>, vector<1x1x14x384xf32>
    %293 = vector.shape_cast %292 : vector<1x1x14x384xf32> to vector<14x384xf32>
    %294 = vector.shape_cast %26 : vector<384xf32> to vector<1x384xf32>
    %295 = vector.broadcast %294 : vector<1x384xf32> to vector<14x384xf32>
    %296 = arith.mulf %293, %295 : vector<14x384xf32>
    %297 = arith.addf %291, %296 : vector<14x384xf32>
    %c5_215 = arith.constant 5 : index
    %c8_216 = arith.constant 8 : index
    %c0_217 = arith.constant 0 : index
    %298 = vector.load %arg6[%c5_215, %c8_216, %c0_217] : memref<16x24x384xf32, #tpu.memory_space<vmem>>, vector<1x14x384xf32>
    %299 = vector.shape_cast %298 : vector<1x14x384xf32> to vector<14x384xf32>
    %300 = vector.shape_cast %28 : vector<384xf32> to vector<1x384xf32>
    %301 = vector.broadcast %300 : vector<1x384xf32> to vector<14x384xf32>
    %302 = arith.mulf %299, %301 : vector<14x384xf32>
    %303 = arith.addf %297, %302 : vector<14x384xf32>
    %c1_218 = arith.constant 1 : index
    %c5_219 = arith.constant 5 : index
    %c0_220 = arith.constant 0 : index
    %c0_221 = arith.constant 0 : index
    %304 = vector.load %arg7[%c1_218, %c5_219, %c0_220, %c0_221] : memref<2x16x14x384xf32, #tpu.memory_space<vmem>>, vector<1x1x14x384xf32>
    %305 = vector.shape_cast %304 : vector<1x1x14x384xf32> to vector<14x384xf32>
    %306 = vector.shape_cast %30 : vector<384xf32> to vector<1x384xf32>
    %307 = vector.broadcast %306 : vector<1x384xf32> to vector<14x384xf32>
    %308 = arith.mulf %305, %307 : vector<14x384xf32>
    %309 = arith.addf %303, %308 : vector<14x384xf32>
    %c0_222 = arith.constant 0 : index
    %c6 = arith.constant 6 : index
    %c0_223 = arith.constant 0 : index
    %c0_224 = arith.constant 0 : index
    %310 = vector.load %arg7[%c0_222, %c6, %c0_223, %c0_224] : memref<2x16x14x384xf32, #tpu.memory_space<vmem>>, vector<1x1x14x384xf32>
    %311 = vector.shape_cast %310 : vector<1x1x14x384xf32> to vector<14x384xf32>
    %312 = vector.shape_cast %32 : vector<384xf32> to vector<1x384xf32>
    %313 = vector.broadcast %312 : vector<1x384xf32> to vector<14x384xf32>
    %314 = arith.mulf %311, %313 : vector<14x384xf32>
    %315 = arith.addf %309, %314 : vector<14x384xf32>
    %c6_225 = arith.constant 6 : index
    %c8_226 = arith.constant 8 : index
    %c0_227 = arith.constant 0 : index
    %316 = vector.load %arg6[%c6_225, %c8_226, %c0_227] : memref<16x24x384xf32, #tpu.memory_space<vmem>>, vector<1x14x384xf32>
    %317 = vector.shape_cast %316 : vector<1x14x384xf32> to vector<14x384xf32>
    %318 = vector.shape_cast %34 : vector<384xf32> to vector<1x384xf32>
    %319 = vector.broadcast %318 : vector<1x384xf32> to vector<14x384xf32>
    %320 = arith.mulf %317, %319 : vector<14x384xf32>
    %321 = arith.addf %315, %320 : vector<14x384xf32>
    %c1_228 = arith.constant 1 : index
    %c6_229 = arith.constant 6 : index
    %c0_230 = arith.constant 0 : index
    %c0_231 = arith.constant 0 : index
    %322 = vector.load %arg7[%c1_228, %c6_229, %c0_230, %c0_231] : memref<2x16x14x384xf32, #tpu.memory_space<vmem>>, vector<1x1x14x384xf32>
    %323 = vector.shape_cast %322 : vector<1x1x14x384xf32> to vector<14x384xf32>
    %324 = vector.shape_cast %36 : vector<384xf32> to vector<1x384xf32>
    %325 = vector.broadcast %324 : vector<1x384xf32> to vector<14x384xf32>
    %326 = arith.mulf %323, %325 : vector<14x384xf32>
    %327 = arith.addf %321, %326 : vector<14x384xf32>
    %328 = arith.addf %269, %327 : vector<14x384xf32>
    %329 = arith.mulf %327, %327 : vector<14x384xf32>
    %330 = arith.addf %271, %329 : vector<14x384xf32>
    %c0_232 = arith.constant 0 : index
    %c4_233 = arith.constant 4 : index
    %c0_234 = arith.constant 0 : index
    %c0_235 = arith.constant 0 : index
    %331 = vector.load %arg5[%c0_232, %c4_233, %c0_234, %c0_235] : memref<1x14x14x384xf32, #tpu.memory_space<vmem>>, vector<1x1x14x384xf32>
    %332 = vector.shape_cast %331 : vector<1x1x14x384xf32> to vector<14x384xf32>
    %333 = vector.shape_cast %327 : vector<14x384xf32> to vector<1x1x14x384xf32>
    tpu.vector_store %arg5[%c0_232, %c4_233, %c0_234, %c0_235], %333 {strides = array<i32>} : memref<1x14x14x384xf32, #tpu.memory_space<vmem>>, vector<1x1x14x384xf32>,
    %c0_236 = arith.constant 0 : index
    %c5_237 = arith.constant 5 : index
    %c0_238 = arith.constant 0 : index
    %c0_239 = arith.constant 0 : index
    %334 = vector.load %arg7[%c0_236, %c5_237, %c0_238, %c0_239] : memref<2x16x14x384xf32, #tpu.memory_space<vmem>>, vector<1x1x14x384xf32>
    %335 = vector.shape_cast %334 : vector<1x1x14x384xf32> to vector<14x384xf32>
    %336 = vector.shape_cast %20 : vector<384xf32> to vector<1x384xf32>
    %337 = vector.broadcast %336 : vector<1x384xf32> to vector<14x384xf32>
    %338 = arith.mulf %335, %337 : vector<14x384xf32>
    %c5_240 = arith.constant 5 : index
    %c8_241 = arith.constant 8 : index
    %c0_242 = arith.constant 0 : index
    %339 = vector.load %arg6[%c5_240, %c8_241, %c0_242] : memref<16x24x384xf32, #tpu.memory_space<vmem>>, vector<1x14x384xf32>
    %340 = vector.shape_cast %339 : vector<1x14x384xf32> to vector<14x384xf32>
    %341 = vector.shape_cast %22 : vector<384xf32> to vector<1x384xf32>
    %342 = vector.broadcast %341 : vector<1x384xf32> to vector<14x384xf32>
    %343 = arith.mulf %340, %342 : vector<14x384xf32>
    %344 = arith.addf %338, %343 : vector<14x384xf32>
    %c1_243 = arith.constant 1 : index
    %c5_244 = arith.constant 5 : index
    %c0_245 = arith.constant 0 : index
    %c0_246 = arith.constant 0 : index
    %345 = vector.load %arg7[%c1_243, %c5_244, %c0_245, %c0_246] : memref<2x16x14x384xf32, #tpu.memory_space<vmem>>, vector<1x1x14x384xf32>
    %346 = vector.shape_cast %345 : vector<1x1x14x384xf32> to vector<14x384xf32>
    %347 = vector.shape_cast %24 : vector<384xf32> to vector<1x384xf32>
    %348 = vector.broadcast %347 : vector<1x384xf32> to vector<14x384xf32>
    %349 = arith.mulf %346, %348 : vector<14x384xf32>
    %350 = arith.addf %344, %349 : vector<14x384xf32>
    %c0_247 = arith.constant 0 : index
    %c6_248 = arith.constant 6 : index
    %c0_249 = arith.constant 0 : index
    %c0_250 = arith.constant 0 : index
    %351 = vector.load %arg7[%c0_247, %c6_248, %c0_249, %c0_250] : memref<2x16x14x384xf32, #tpu.memory_space<vmem>>, vector<1x1x14x384xf32>
    %352 = vector.shape_cast %351 : vector<1x1x14x384xf32> to vector<14x384xf32>
    %353 = vector.shape_cast %26 : vector<384xf32> to vector<1x384xf32>
    %354 = vector.broadcast %353 : vector<1x384xf32> to vector<14x384xf32>
    %355 = arith.mulf %352, %354 : vector<14x384xf32>
    %356 = arith.addf %350, %355 : vector<14x384xf32>
    %c6_251 = arith.constant 6 : index
    %c8_252 = arith.constant 8 : index
    %c0_253 = arith.constant 0 : index
    %357 = vector.load %arg6[%c6_251, %c8_252, %c0_253] : memref<16x24x384xf32, #tpu.memory_space<vmem>>, vector<1x14x384xf32>
    %358 = vector.shape_cast %357 : vector<1x14x384xf32> to vector<14x384xf32>
    %359 = vector.shape_cast %28 : vector<384xf32> to vector<1x384xf32>
    %360 = vector.broadcast %359 : vector<1x384xf32> to vector<14x384xf32>
    %361 = arith.mulf %358, %360 : vector<14x384xf32>
    %362 = arith.addf %356, %361 : vector<14x384xf32>
    %c1_254 = arith.constant 1 : index
    %c6_255 = arith.constant 6 : index
    %c0_256 = arith.constant 0 : index
    %c0_257 = arith.constant 0 : index
    %363 = vector.load %arg7[%c1_254, %c6_255, %c0_256, %c0_257] : memref<2x16x14x384xf32, #tpu.memory_space<vmem>>, vector<1x1x14x384xf32>
    %364 = vector.shape_cast %363 : vector<1x1x14x384xf32> to vector<14x384xf32>
    %365 = vector.shape_cast %30 : vector<384xf32> to vector<1x384xf32>
    %366 = vector.broadcast %365 : vector<1x384xf32> to vector<14x384xf32>
    %367 = arith.mulf %364, %366 : vector<14x384xf32>
    %368 = arith.addf %362, %367 : vector<14x384xf32>
    %c0_258 = arith.constant 0 : index
    %c7 = arith.constant 7 : index
    %c0_259 = arith.constant 0 : index
    %c0_260 = arith.constant 0 : index
    %369 = vector.load %arg7[%c0_258, %c7, %c0_259, %c0_260] : memref<2x16x14x384xf32, #tpu.memory_space<vmem>>, vector<1x1x14x384xf32>
    %370 = vector.shape_cast %369 : vector<1x1x14x384xf32> to vector<14x384xf32>
    %371 = vector.shape_cast %32 : vector<384xf32> to vector<1x384xf32>
    %372 = vector.broadcast %371 : vector<1x384xf32> to vector<14x384xf32>
    %373 = arith.mulf %370, %372 : vector<14x384xf32>
    %374 = arith.addf %368, %373 : vector<14x384xf32>
    %c7_261 = arith.constant 7 : index
    %c8_262 = arith.constant 8 : index
    %c0_263 = arith.constant 0 : index
    %375 = vector.load %arg6[%c7_261, %c8_262, %c0_263] : memref<16x24x384xf32, #tpu.memory_space<vmem>>, vector<1x14x384xf32>
    %376 = vector.shape_cast %375 : vector<1x14x384xf32> to vector<14x384xf32>
    %377 = vector.shape_cast %34 : vector<384xf32> to vector<1x384xf32>
    %378 = vector.broadcast %377 : vector<1x384xf32> to vector<14x384xf32>
    %379 = arith.mulf %376, %378 : vector<14x384xf32>
    %380 = arith.addf %374, %379 : vector<14x384xf32>
    %c1_264 = arith.constant 1 : index
    %c7_265 = arith.constant 7 : index
    %c0_266 = arith.constant 0 : index
    %c0_267 = arith.constant 0 : index
    %381 = vector.load %arg7[%c1_264, %c7_265, %c0_266, %c0_267] : memref<2x16x14x384xf32, #tpu.memory_space<vmem>>, vector<1x1x14x384xf32>
    %382 = vector.shape_cast %381 : vector<1x1x14x384xf32> to vector<14x384xf32>
    %383 = vector.shape_cast %36 : vector<384xf32> to vector<1x384xf32>
    %384 = vector.broadcast %383 : vector<1x384xf32> to vector<14x384xf32>
    %385 = arith.mulf %382, %384 : vector<14x384xf32>
    %386 = arith.addf %380, %385 : vector<14x384xf32>
    %387 = arith.addf %328, %386 : vector<14x384xf32>
    %388 = arith.mulf %386, %386 : vector<14x384xf32>
    %389 = arith.addf %330, %388 : vector<14x384xf32>
    %c0_268 = arith.constant 0 : index
    %c5_269 = arith.constant 5 : index
    %c0_270 = arith.constant 0 : index
    %c0_271 = arith.constant 0 : index
    %390 = vector.load %arg5[%c0_268, %c5_269, %c0_270, %c0_271] : memref<1x14x14x384xf32, #tpu.memory_space<vmem>>, vector<1x1x14x384xf32>
    %391 = vector.shape_cast %390 : vector<1x1x14x384xf32> to vector<14x384xf32>
    %392 = vector.shape_cast %386 : vector<14x384xf32> to vector<1x1x14x384xf32>
    tpu.vector_store %arg5[%c0_268, %c5_269, %c0_270, %c0_271], %392 {strides = array<i32>} : memref<1x14x14x384xf32, #tpu.memory_space<vmem>>, vector<1x1x14x384xf32>,
    %c0_272 = arith.constant 0 : index
    %c6_273 = arith.constant 6 : index
    %c0_274 = arith.constant 0 : index
    %c0_275 = arith.constant 0 : index
    %393 = vector.load %arg7[%c0_272, %c6_273, %c0_274, %c0_275] : memref<2x16x14x384xf32, #tpu.memory_space<vmem>>, vector<1x1x14x384xf32>
    %394 = vector.shape_cast %393 : vector<1x1x14x384xf32> to vector<14x384xf32>
    %395 = vector.shape_cast %20 : vector<384xf32> to vector<1x384xf32>
    %396 = vector.broadcast %395 : vector<1x384xf32> to vector<14x384xf32>
    %397 = arith.mulf %394, %396 : vector<14x384xf32>
    %c6_276 = arith.constant 6 : index
    %c8_277 = arith.constant 8 : index
    %c0_278 = arith.constant 0 : index
    %398 = vector.load %arg6[%c6_276, %c8_277, %c0_278] : memref<16x24x384xf32, #tpu.memory_space<vmem>>, vector<1x14x384xf32>
    %399 = vector.shape_cast %398 : vector<1x14x384xf32> to vector<14x384xf32>
    %400 = vector.shape_cast %22 : vector<384xf32> to vector<1x384xf32>
    %401 = vector.broadcast %400 : vector<1x384xf32> to vector<14x384xf32>
    %402 = arith.mulf %399, %401 : vector<14x384xf32>
    %403 = arith.addf %397, %402 : vector<14x384xf32>
    %c1_279 = arith.constant 1 : index
    %c6_280 = arith.constant 6 : index
    %c0_281 = arith.constant 0 : index
    %c0_282 = arith.constant 0 : index
    %404 = vector.load %arg7[%c1_279, %c6_280, %c0_281, %c0_282] : memref<2x16x14x384xf32, #tpu.memory_space<vmem>>, vector<1x1x14x384xf32>
    %405 = vector.shape_cast %404 : vector<1x1x14x384xf32> to vector<14x384xf32>
    %406 = vector.shape_cast %24 : vector<384xf32> to vector<1x384xf32>
    %407 = vector.broadcast %406 : vector<1x384xf32> to vector<14x384xf32>
    %408 = arith.mulf %405, %407 : vector<14x384xf32>
    %409 = arith.addf %403, %408 : vector<14x384xf32>
    %c0_283 = arith.constant 0 : index
    %c7_284 = arith.constant 7 : index
    %c0_285 = arith.constant 0 : index
    %c0_286 = arith.constant 0 : index
    %410 = vector.load %arg7[%c0_283, %c7_284, %c0_285, %c0_286] : memref<2x16x14x384xf32, #tpu.memory_space<vmem>>, vector<1x1x14x384xf32>
    %411 = vector.shape_cast %410 : vector<1x1x14x384xf32> to vector<14x384xf32>
    %412 = vector.shape_cast %26 : vector<384xf32> to vector<1x384xf32>
    %413 = vector.broadcast %412 : vector<1x384xf32> to vector<14x384xf32>
    %414 = arith.mulf %411, %413 : vector<14x384xf32>
    %415 = arith.addf %409, %414 : vector<14x384xf32>
    %c7_287 = arith.constant 7 : index
    %c8_288 = arith.constant 8 : index
    %c0_289 = arith.constant 0 : index
    %416 = vector.load %arg6[%c7_287, %c8_288, %c0_289] : memref<16x24x384xf32, #tpu.memory_space<vmem>>, vector<1x14x384xf32>
    %417 = vector.shape_cast %416 : vector<1x14x384xf32> to vector<14x384xf32>
    %418 = vector.shape_cast %28 : vector<384xf32> to vector<1x384xf32>
    %419 = vector.broadcast %418 : vector<1x384xf32> to vector<14x384xf32>
    %420 = arith.mulf %417, %419 : vector<14x384xf32>
    %421 = arith.addf %415, %420 : vector<14x384xf32>
    %c1_290 = arith.constant 1 : index
    %c7_291 = arith.constant 7 : index
    %c0_292 = arith.constant 0 : index
    %c0_293 = arith.constant 0 : index
    %422 = vector.load %arg7[%c1_290, %c7_291, %c0_292, %c0_293] : memref<2x16x14x384xf32, #tpu.memory_space<vmem>>, vector<1x1x14x384xf32>
    %423 = vector.shape_cast %422 : vector<1x1x14x384xf32> to vector<14x384xf32>
    %424 = vector.shape_cast %30 : vector<384xf32> to vector<1x384xf32>
    %425 = vector.broadcast %424 : vector<1x384xf32> to vector<14x384xf32>
    %426 = arith.mulf %423, %425 : vector<14x384xf32>
    %427 = arith.addf %421, %426 : vector<14x384xf32>
    %c0_294 = arith.constant 0 : index
    %c8_295 = arith.constant 8 : index
    %c0_296 = arith.constant 0 : index
    %c0_297 = arith.constant 0 : index
    %428 = vector.load %arg7[%c0_294, %c8_295, %c0_296, %c0_297] : memref<2x16x14x384xf32, #tpu.memory_space<vmem>>, vector<1x1x14x384xf32>
    %429 = vector.shape_cast %428 : vector<1x1x14x384xf32> to vector<14x384xf32>
    %430 = vector.shape_cast %32 : vector<384xf32> to vector<1x384xf32>
    %431 = vector.broadcast %430 : vector<1x384xf32> to vector<14x384xf32>
    %432 = arith.mulf %429, %431 : vector<14x384xf32>
    %433 = arith.addf %427, %432 : vector<14x384xf32>
    %c8_298 = arith.constant 8 : index
    %c8_299 = arith.constant 8 : index
    %c0_300 = arith.constant 0 : index
    %434 = vector.load %arg6[%c8_298, %c8_299, %c0_300] : memref<16x24x384xf32, #tpu.memory_space<vmem>>, vector<1x14x384xf32>
    %435 = vector.shape_cast %434 : vector<1x14x384xf32> to vector<14x384xf32>
    %436 = vector.shape_cast %34 : vector<384xf32> to vector<1x384xf32>
    %437 = vector.broadcast %436 : vector<1x384xf32> to vector<14x384xf32>
    %438 = arith.mulf %435, %437 : vector<14x384xf32>
    %439 = arith.addf %433, %438 : vector<14x384xf32>
    %c1_301 = arith.constant 1 : index
    %c8_302 = arith.constant 8 : index
    %c0_303 = arith.constant 0 : index
    %c0_304 = arith.constant 0 : index
    %440 = vector.load %arg7[%c1_301, %c8_302, %c0_303, %c0_304] : memref<2x16x14x384xf32, #tpu.memory_space<vmem>>, vector<1x1x14x384xf32>
    %441 = vector.shape_cast %440 : vector<1x1x14x384xf32> to vector<14x384xf32>
    %442 = vector.shape_cast %36 : vector<384xf32> to vector<1x384xf32>
    %443 = vector.broadcast %442 : vector<1x384xf32> to vector<14x384xf32>
    %444 = arith.mulf %441, %443 : vector<14x384xf32>
    %445 = arith.addf %439, %444 : vector<14x384xf32>
    %446 = arith.addf %387, %445 : vector<14x384xf32>
    %447 = arith.mulf %445, %445 : vector<14x384xf32>
    %448 = arith.addf %389, %447 : vector<14x384xf32>
    %c0_305 = arith.constant 0 : index
    %c6_306 = arith.constant 6 : index
    %c0_307 = arith.constant 0 : index
    %c0_308 = arith.constant 0 : index
    %449 = vector.load %arg5[%c0_305, %c6_306, %c0_307, %c0_308] : memref<1x14x14x384xf32, #tpu.memory_space<vmem>>, vector<1x1x14x384xf32>
    %450 = vector.shape_cast %449 : vector<1x1x14x384xf32> to vector<14x384xf32>
    %451 = vector.shape_cast %445 : vector<14x384xf32> to vector<1x1x14x384xf32>
    tpu.vector_store %arg5[%c0_305, %c6_306, %c0_307, %c0_308], %451 {strides = array<i32>} : memref<1x14x14x384xf32, #tpu.memory_space<vmem>>, vector<1x1x14x384xf32>,
    %c0_309 = arith.constant 0 : index
    %c7_310 = arith.constant 7 : index
    %c0_311 = arith.constant 0 : index
    %c0_312 = arith.constant 0 : index
    %452 = vector.load %arg7[%c0_309, %c7_310, %c0_311, %c0_312] : memref<2x16x14x384xf32, #tpu.memory_space<vmem>>, vector<1x1x14x384xf32>
    %453 = vector.shape_cast %452 : vector<1x1x14x384xf32> to vector<14x384xf32>
    %454 = vector.shape_cast %20 : vector<384xf32> to vector<1x384xf32>
    %455 = vector.broadcast %454 : vector<1x384xf32> to vector<14x384xf32>
    %456 = arith.mulf %453, %455 : vector<14x384xf32>
    %c7_313 = arith.constant 7 : index
    %c8_314 = arith.constant 8 : index
    %c0_315 = arith.constant 0 : index
    %457 = vector.load %arg6[%c7_313, %c8_314, %c0_315] : memref<16x24x384xf32, #tpu.memory_space<vmem>>, vector<1x14x384xf32>
    %458 = vector.shape_cast %457 : vector<1x14x384xf32> to vector<14x384xf32>
    %459 = vector.shape_cast %22 : vector<384xf32> to vector<1x384xf32>
    %460 = vector.broadcast %459 : vector<1x384xf32> to vector<14x384xf32>
    %461 = arith.mulf %458, %460 : vector<14x384xf32>
    %462 = arith.addf %456, %461 : vector<14x384xf32>
    %c1_316 = arith.constant 1 : index
    %c7_317 = arith.constant 7 : index
    %c0_318 = arith.constant 0 : index
    %c0_319 = arith.constant 0 : index
    %463 = vector.load %arg7[%c1_316, %c7_317, %c0_318, %c0_319] : memref<2x16x14x384xf32, #tpu.memory_space<vmem>>, vector<1x1x14x384xf32>
    %464 = vector.shape_cast %463 : vector<1x1x14x384xf32> to vector<14x384xf32>
    %465 = vector.shape_cast %24 : vector<384xf32> to vector<1x384xf32>
    %466 = vector.broadcast %465 : vector<1x384xf32> to vector<14x384xf32>
    %467 = arith.mulf %464, %466 : vector<14x384xf32>
    %468 = arith.addf %462, %467 : vector<14x384xf32>
    %c0_320 = arith.constant 0 : index
    %c8_321 = arith.constant 8 : index
    %c0_322 = arith.constant 0 : index
    %c0_323 = arith.constant 0 : index
    %469 = vector.load %arg7[%c0_320, %c8_321, %c0_322, %c0_323] : memref<2x16x14x384xf32, #tpu.memory_space<vmem>>, vector<1x1x14x384xf32>
    %470 = vector.shape_cast %469 : vector<1x1x14x384xf32> to vector<14x384xf32>
    %471 = vector.shape_cast %26 : vector<384xf32> to vector<1x384xf32>
    %472 = vector.broadcast %471 : vector<1x384xf32> to vector<14x384xf32>
    %473 = arith.mulf %470, %472 : vector<14x384xf32>
    %474 = arith.addf %468, %473 : vector<14x384xf32>
    %c8_324 = arith.constant 8 : index
    %c8_325 = arith.constant 8 : index
    %c0_326 = arith.constant 0 : index
    %475 = vector.load %arg6[%c8_324, %c8_325, %c0_326] : memref<16x24x384xf32, #tpu.memory_space<vmem>>, vector<1x14x384xf32>
    %476 = vector.shape_cast %475 : vector<1x14x384xf32> to vector<14x384xf32>
    %477 = vector.shape_cast %28 : vector<384xf32> to vector<1x384xf32>
    %478 = vector.broadcast %477 : vector<1x384xf32> to vector<14x384xf32>
    %479 = arith.mulf %476, %478 : vector<14x384xf32>
    %480 = arith.addf %474, %479 : vector<14x384xf32>
    %c1_327 = arith.constant 1 : index
    %c8_328 = arith.constant 8 : index
    %c0_329 = arith.constant 0 : index
    %c0_330 = arith.constant 0 : index
    %481 = vector.load %arg7[%c1_327, %c8_328, %c0_329, %c0_330] : memref<2x16x14x384xf32, #tpu.memory_space<vmem>>, vector<1x1x14x384xf32>
    %482 = vector.shape_cast %481 : vector<1x1x14x384xf32> to vector<14x384xf32>
    %483 = vector.shape_cast %30 : vector<384xf32> to vector<1x384xf32>
    %484 = vector.broadcast %483 : vector<1x384xf32> to vector<14x384xf32>
    %485 = arith.mulf %482, %484 : vector<14x384xf32>
    %486 = arith.addf %480, %485 : vector<14x384xf32>
    %c0_331 = arith.constant 0 : index
    %c9 = arith.constant 9 : index
    %c0_332 = arith.constant 0 : index
    %c0_333 = arith.constant 0 : index
    %487 = vector.load %arg7[%c0_331, %c9, %c0_332, %c0_333] : memref<2x16x14x384xf32, #tpu.memory_space<vmem>>, vector<1x1x14x384xf32>
    %488 = vector.shape_cast %487 : vector<1x1x14x384xf32> to vector<14x384xf32>
    %489 = vector.shape_cast %32 : vector<384xf32> to vector<1x384xf32>
    %490 = vector.broadcast %489 : vector<1x384xf32> to vector<14x384xf32>
    %491 = arith.mulf %488, %490 : vector<14x384xf32>
    %492 = arith.addf %486, %491 : vector<14x384xf32>
    %c9_334 = arith.constant 9 : index
    %c8_335 = arith.constant 8 : index
    %c0_336 = arith.constant 0 : index
    %493 = vector.load %arg6[%c9_334, %c8_335, %c0_336] : memref<16x24x384xf32, #tpu.memory_space<vmem>>, vector<1x14x384xf32>
    %494 = vector.shape_cast %493 : vector<1x14x384xf32> to vector<14x384xf32>
    %495 = vector.shape_cast %34 : vector<384xf32> to vector<1x384xf32>
    %496 = vector.broadcast %495 : vector<1x384xf32> to vector<14x384xf32>
    %497 = arith.mulf %494, %496 : vector<14x384xf32>
    %498 = arith.addf %492, %497 : vector<14x384xf32>
    %c1_337 = arith.constant 1 : index
    %c9_338 = arith.constant 9 : index
    %c0_339 = arith.constant 0 : index
    %c0_340 = arith.constant 0 : index
    %499 = vector.load %arg7[%c1_337, %c9_338, %c0_339, %c0_340] : memref<2x16x14x384xf32, #tpu.memory_space<vmem>>, vector<1x1x14x384xf32>
    %500 = vector.shape_cast %499 : vector<1x1x14x384xf32> to vector<14x384xf32>
    %501 = vector.shape_cast %36 : vector<384xf32> to vector<1x384xf32>
    %502 = vector.broadcast %501 : vector<1x384xf32> to vector<14x384xf32>
    %503 = arith.mulf %500, %502 : vector<14x384xf32>
    %504 = arith.addf %498, %503 : vector<14x384xf32>
    %505 = arith.addf %446, %504 : vector<14x384xf32>
    %506 = arith.mulf %504, %504 : vector<14x384xf32>
    %507 = arith.addf %448, %506 : vector<14x384xf32>
    %c0_341 = arith.constant 0 : index
    %c7_342 = arith.constant 7 : index
    %c0_343 = arith.constant 0 : index
    %c0_344 = arith.constant 0 : index
    %508 = vector.load %arg5[%c0_341, %c7_342, %c0_343, %c0_344] : memref<1x14x14x384xf32, #tpu.memory_space<vmem>>, vector<1x1x14x384xf32>
    %509 = vector.shape_cast %508 : vector<1x1x14x384xf32> to vector<14x384xf32>
    %510 = vector.shape_cast %504 : vector<14x384xf32> to vector<1x1x14x384xf32>
    tpu.vector_store %arg5[%c0_341, %c7_342, %c0_343, %c0_344], %510 {strides = array<i32>} : memref<1x14x14x384xf32, #tpu.memory_space<vmem>>, vector<1x1x14x384xf32>,
    %c0_345 = arith.constant 0 : index
    %c8_346 = arith.constant 8 : index
    %c0_347 = arith.constant 0 : index
    %c0_348 = arith.constant 0 : index
    %511 = vector.load %arg7[%c0_345, %c8_346, %c0_347, %c0_348] : memref<2x16x14x384xf32, #tpu.memory_space<vmem>>, vector<1x1x14x384xf32>
    %512 = vector.shape_cast %511 : vector<1x1x14x384xf32> to vector<14x384xf32>
    %513 = vector.shape_cast %20 : vector<384xf32> to vector<1x384xf32>
    %514 = vector.broadcast %513 : vector<1x384xf32> to vector<14x384xf32>
    %515 = arith.mulf %512, %514 : vector<14x384xf32>
    %c8_349 = arith.constant 8 : index
    %c8_350 = arith.constant 8 : index
    %c0_351 = arith.constant 0 : index
    %516 = vector.load %arg6[%c8_349, %c8_350, %c0_351] : memref<16x24x384xf32, #tpu.memory_space<vmem>>, vector<1x14x384xf32>
    %517 = vector.shape_cast %516 : vector<1x14x384xf32> to vector<14x384xf32>
    %518 = vector.shape_cast %22 : vector<384xf32> to vector<1x384xf32>
    %519 = vector.broadcast %518 : vector<1x384xf32> to vector<14x384xf32>
    %520 = arith.mulf %517, %519 : vector<14x384xf32>
    %521 = arith.addf %515, %520 : vector<14x384xf32>
    %c1_352 = arith.constant 1 : index
    %c8_353 = arith.constant 8 : index
    %c0_354 = arith.constant 0 : index
    %c0_355 = arith.constant 0 : index
    %522 = vector.load %arg7[%c1_352, %c8_353, %c0_354, %c0_355] : memref<2x16x14x384xf32, #tpu.memory_space<vmem>>, vector<1x1x14x384xf32>
    %523 = vector.shape_cast %522 : vector<1x1x14x384xf32> to vector<14x384xf32>
    %524 = vector.shape_cast %24 : vector<384xf32> to vector<1x384xf32>
    %525 = vector.broadcast %524 : vector<1x384xf32> to vector<14x384xf32>
    %526 = arith.mulf %523, %525 : vector<14x384xf32>
    %527 = arith.addf %521, %526 : vector<14x384xf32>
    %c0_356 = arith.constant 0 : index
    %c9_357 = arith.constant 9 : index
    %c0_358 = arith.constant 0 : index
    %c0_359 = arith.constant 0 : index
    %528 = vector.load %arg7[%c0_356, %c9_357, %c0_358, %c0_359] : memref<2x16x14x384xf32, #tpu.memory_space<vmem>>, vector<1x1x14x384xf32>
    %529 = vector.shape_cast %528 : vector<1x1x14x384xf32> to vector<14x384xf32>
    %530 = vector.shape_cast %26 : vector<384xf32> to vector<1x384xf32>
    %531 = vector.broadcast %530 : vector<1x384xf32> to vector<14x384xf32>
    %532 = arith.mulf %529, %531 : vector<14x384xf32>
    %533 = arith.addf %527, %532 : vector<14x384xf32>
    %c9_360 = arith.constant 9 : index
    %c8_361 = arith.constant 8 : index
    %c0_362 = arith.constant 0 : index
    %534 = vector.load %arg6[%c9_360, %c8_361, %c0_362] : memref<16x24x384xf32, #tpu.memory_space<vmem>>, vector<1x14x384xf32>
    %535 = vector.shape_cast %534 : vector<1x14x384xf32> to vector<14x384xf32>
    %536 = vector.shape_cast %28 : vector<384xf32> to vector<1x384xf32>
    %537 = vector.broadcast %536 : vector<1x384xf32> to vector<14x384xf32>
    %538 = arith.mulf %535, %537 : vector<14x384xf32>
    %539 = arith.addf %533, %538 : vector<14x384xf32>
    %c1_363 = arith.constant 1 : index
    %c9_364 = arith.constant 9 : index
    %c0_365 = arith.constant 0 : index
    %c0_366 = arith.constant 0 : index
    %540 = vector.load %arg7[%c1_363, %c9_364, %c0_365, %c0_366] : memref<2x16x14x384xf32, #tpu.memory_space<vmem>>, vector<1x1x14x384xf32>
    %541 = vector.shape_cast %540 : vector<1x1x14x384xf32> to vector<14x384xf32>
    %542 = vector.shape_cast %30 : vector<384xf32> to vector<1x384xf32>
    %543 = vector.broadcast %542 : vector<1x384xf32> to vector<14x384xf32>
    %544 = arith.mulf %541, %543 : vector<14x384xf32>
    %545 = arith.addf %539, %544 : vector<14x384xf32>
    %c0_367 = arith.constant 0 : index
    %c10 = arith.constant 10 : index
    %c0_368 = arith.constant 0 : index
    %c0_369 = arith.constant 0 : index
    %546 = vector.load %arg7[%c0_367, %c10, %c0_368, %c0_369] : memref<2x16x14x384xf32, #tpu.memory_space<vmem>>, vector<1x1x14x384xf32>
    %547 = vector.shape_cast %546 : vector<1x1x14x384xf32> to vector<14x384xf32>
    %548 = vector.shape_cast %32 : vector<384xf32> to vector<1x384xf32>
    %549 = vector.broadcast %548 : vector<1x384xf32> to vector<14x384xf32>
    %550 = arith.mulf %547, %549 : vector<14x384xf32>
    %551 = arith.addf %545, %550 : vector<14x384xf32>
    %c10_370 = arith.constant 10 : index
    %c8_371 = arith.constant 8 : index
    %c0_372 = arith.constant 0 : index
    %552 = vector.load %arg6[%c10_370, %c8_371, %c0_372] : memref<16x24x384xf32, #tpu.memory_space<vmem>>, vector<1x14x384xf32>
    %553 = vector.shape_cast %552 : vector<1x14x384xf32> to vector<14x384xf32>
    %554 = vector.shape_cast %34 : vector<384xf32> to vector<1x384xf32>
    %555 = vector.broadcast %554 : vector<1x384xf32> to vector<14x384xf32>
    %556 = arith.mulf %553, %555 : vector<14x384xf32>
    %557 = arith.addf %551, %556 : vector<14x384xf32>
    %c1_373 = arith.constant 1 : index
    %c10_374 = arith.constant 10 : index
    %c0_375 = arith.constant 0 : index
    %c0_376 = arith.constant 0 : index
    %558 = vector.load %arg7[%c1_373, %c10_374, %c0_375, %c0_376] : memref<2x16x14x384xf32, #tpu.memory_space<vmem>>, vector<1x1x14x384xf32>
    %559 = vector.shape_cast %558 : vector<1x1x14x384xf32> to vector<14x384xf32>
    %560 = vector.shape_cast %36 : vector<384xf32> to vector<1x384xf32>
    %561 = vector.broadcast %560 : vector<1x384xf32> to vector<14x384xf32>
    %562 = arith.mulf %559, %561 : vector<14x384xf32>
    %563 = arith.addf %557, %562 : vector<14x384xf32>
    %564 = arith.addf %505, %563 : vector<14x384xf32>
    %565 = arith.mulf %563, %563 : vector<14x384xf32>
    %566 = arith.addf %507, %565 : vector<14x384xf32>
    %c0_377 = arith.constant 0 : index
    %c8_378 = arith.constant 8 : index
    %c0_379 = arith.constant 0 : index
    %c0_380 = arith.constant 0 : index
    %567 = vector.load %arg5[%c0_377, %c8_378, %c0_379, %c0_380] : memref<1x14x14x384xf32, #tpu.memory_space<vmem>>, vector<1x1x14x384xf32>
    %568 = vector.shape_cast %567 : vector<1x1x14x384xf32> to vector<14x384xf32>
    %569 = vector.shape_cast %563 : vector<14x384xf32> to vector<1x1x14x384xf32>
    tpu.vector_store %arg5[%c0_377, %c8_378, %c0_379, %c0_380], %569 {strides = array<i32>} : memref<1x14x14x384xf32, #tpu.memory_space<vmem>>, vector<1x1x14x384xf32>,
    %c0_381 = arith.constant 0 : index
    %c9_382 = arith.constant 9 : index
    %c0_383 = arith.constant 0 : index
    %c0_384 = arith.constant 0 : index
    %570 = vector.load %arg7[%c0_381, %c9_382, %c0_383, %c0_384] : memref<2x16x14x384xf32, #tpu.memory_space<vmem>>, vector<1x1x14x384xf32>
    %571 = vector.shape_cast %570 : vector<1x1x14x384xf32> to vector<14x384xf32>
    %572 = vector.shape_cast %20 : vector<384xf32> to vector<1x384xf32>
    %573 = vector.broadcast %572 : vector<1x384xf32> to vector<14x384xf32>
    %574 = arith.mulf %571, %573 : vector<14x384xf32>
    %c9_385 = arith.constant 9 : index
    %c8_386 = arith.constant 8 : index
    %c0_387 = arith.constant 0 : index
    %575 = vector.load %arg6[%c9_385, %c8_386, %c0_387] : memref<16x24x384xf32, #tpu.memory_space<vmem>>, vector<1x14x384xf32>
    %576 = vector.shape_cast %575 : vector<1x14x384xf32> to vector<14x384xf32>
    %577 = vector.shape_cast %22 : vector<384xf32> to vector<1x384xf32>
    %578 = vector.broadcast %577 : vector<1x384xf32> to vector<14x384xf32>
    %579 = arith.mulf %576, %578 : vector<14x384xf32>
    %580 = arith.addf %574, %579 : vector<14x384xf32>
    %c1_388 = arith.constant 1 : index
    %c9_389 = arith.constant 9 : index
    %c0_390 = arith.constant 0 : index
    %c0_391 = arith.constant 0 : index
    %581 = vector.load %arg7[%c1_388, %c9_389, %c0_390, %c0_391] : memref<2x16x14x384xf32, #tpu.memory_space<vmem>>, vector<1x1x14x384xf32>
    %582 = vector.shape_cast %581 : vector<1x1x14x384xf32> to vector<14x384xf32>
    %583 = vector.shape_cast %24 : vector<384xf32> to vector<1x384xf32>
    %584 = vector.broadcast %583 : vector<1x384xf32> to vector<14x384xf32>
    %585 = arith.mulf %582, %584 : vector<14x384xf32>
    %586 = arith.addf %580, %585 : vector<14x384xf32>
    %c0_392 = arith.constant 0 : index
    %c10_393 = arith.constant 10 : index
    %c0_394 = arith.constant 0 : index
    %c0_395 = arith.constant 0 : index
    %587 = vector.load %arg7[%c0_392, %c10_393, %c0_394, %c0_395] : memref<2x16x14x384xf32, #tpu.memory_space<vmem>>, vector<1x1x14x384xf32>
    %588 = vector.shape_cast %587 : vector<1x1x14x384xf32> to vector<14x384xf32>
    %589 = vector.shape_cast %26 : vector<384xf32> to vector<1x384xf32>
    %590 = vector.broadcast %589 : vector<1x384xf32> to vector<14x384xf32>
    %591 = arith.mulf %588, %590 : vector<14x384xf32>
    %592 = arith.addf %586, %591 : vector<14x384xf32>
    %c10_396 = arith.constant 10 : index
    %c8_397 = arith.constant 8 : index
    %c0_398 = arith.constant 0 : index
    %593 = vector.load %arg6[%c10_396, %c8_397, %c0_398] : memref<16x24x384xf32, #tpu.memory_space<vmem>>, vector<1x14x384xf32>
    %594 = vector.shape_cast %593 : vector<1x14x384xf32> to vector<14x384xf32>
    %595 = vector.shape_cast %28 : vector<384xf32> to vector<1x384xf32>
    %596 = vector.broadcast %595 : vector<1x384xf32> to vector<14x384xf32>
    %597 = arith.mulf %594, %596 : vector<14x384xf32>
    %598 = arith.addf %592, %597 : vector<14x384xf32>
    %c1_399 = arith.constant 1 : index
    %c10_400 = arith.constant 10 : index
    %c0_401 = arith.constant 0 : index
    %c0_402 = arith.constant 0 : index
    %599 = vector.load %arg7[%c1_399, %c10_400, %c0_401, %c0_402] : memref<2x16x14x384xf32, #tpu.memory_space<vmem>>, vector<1x1x14x384xf32>
    %600 = vector.shape_cast %599 : vector<1x1x14x384xf32> to vector<14x384xf32>
    %601 = vector.shape_cast %30 : vector<384xf32> to vector<1x384xf32>
    %602 = vector.broadcast %601 : vector<1x384xf32> to vector<14x384xf32>
    %603 = arith.mulf %600, %602 : vector<14x384xf32>
    %604 = arith.addf %598, %603 : vector<14x384xf32>
    %c0_403 = arith.constant 0 : index
    %c11 = arith.constant 11 : index
    %c0_404 = arith.constant 0 : index
    %c0_405 = arith.constant 0 : index
    %605 = vector.load %arg7[%c0_403, %c11, %c0_404, %c0_405] : memref<2x16x14x384xf32, #tpu.memory_space<vmem>>, vector<1x1x14x384xf32>
    %606 = vector.shape_cast %605 : vector<1x1x14x384xf32> to vector<14x384xf32>
    %607 = vector.shape_cast %32 : vector<384xf32> to vector<1x384xf32>
    %608 = vector.broadcast %607 : vector<1x384xf32> to vector<14x384xf32>
    %609 = arith.mulf %606, %608 : vector<14x384xf32>
    %610 = arith.addf %604, %609 : vector<14x384xf32>
    %c11_406 = arith.constant 11 : index
    %c8_407 = arith.constant 8 : index
    %c0_408 = arith.constant 0 : index
    %611 = vector.load %arg6[%c11_406, %c8_407, %c0_408] : memref<16x24x384xf32, #tpu.memory_space<vmem>>, vector<1x14x384xf32>
    %612 = vector.shape_cast %611 : vector<1x14x384xf32> to vector<14x384xf32>
    %613 = vector.shape_cast %34 : vector<384xf32> to vector<1x384xf32>
    %614 = vector.broadcast %613 : vector<1x384xf32> to vector<14x384xf32>
    %615 = arith.mulf %612, %614 : vector<14x384xf32>
    %616 = arith.addf %610, %615 : vector<14x384xf32>
    %c1_409 = arith.constant 1 : index
    %c11_410 = arith.constant 11 : index
    %c0_411 = arith.constant 0 : index
    %c0_412 = arith.constant 0 : index
    %617 = vector.load %arg7[%c1_409, %c11_410, %c0_411, %c0_412] : memref<2x16x14x384xf32, #tpu.memory_space<vmem>>, vector<1x1x14x384xf32>
    %618 = vector.shape_cast %617 : vector<1x1x14x384xf32> to vector<14x384xf32>
    %619 = vector.shape_cast %36 : vector<384xf32> to vector<1x384xf32>
    %620 = vector.broadcast %619 : vector<1x384xf32> to vector<14x384xf32>
    %621 = arith.mulf %618, %620 : vector<14x384xf32>
    %622 = arith.addf %616, %621 : vector<14x384xf32>
    %623 = arith.addf %564, %622 : vector<14x384xf32>
    %624 = arith.mulf %622, %622 : vector<14x384xf32>
    %625 = arith.addf %566, %624 : vector<14x384xf32>
    %c0_413 = arith.constant 0 : index
    %c9_414 = arith.constant 9 : index
    %c0_415 = arith.constant 0 : index
    %c0_416 = arith.constant 0 : index
    %626 = vector.load %arg5[%c0_413, %c9_414, %c0_415, %c0_416] : memref<1x14x14x384xf32, #tpu.memory_space<vmem>>, vector<1x1x14x384xf32>
    %627 = vector.shape_cast %626 : vector<1x1x14x384xf32> to vector<14x384xf32>
    %628 = vector.shape_cast %622 : vector<14x384xf32> to vector<1x1x14x384xf32>
    tpu.vector_store %arg5[%c0_413, %c9_414, %c0_415, %c0_416], %628 {strides = array<i32>} : memref<1x14x14x384xf32, #tpu.memory_space<vmem>>, vector<1x1x14x384xf32>,
    %c0_417 = arith.constant 0 : index
    %c10_418 = arith.constant 10 : index
    %c0_419 = arith.constant 0 : index
    %c0_420 = arith.constant 0 : index
    %629 = vector.load %arg7[%c0_417, %c10_418, %c0_419, %c0_420] : memref<2x16x14x384xf32, #tpu.memory_space<vmem>>, vector<1x1x14x384xf32>
    %630 = vector.shape_cast %629 : vector<1x1x14x384xf32> to vector<14x384xf32>
    %631 = vector.shape_cast %20 : vector<384xf32> to vector<1x384xf32>
    %632 = vector.broadcast %631 : vector<1x384xf32> to vector<14x384xf32>
    %633 = arith.mulf %630, %632 : vector<14x384xf32>
    %c10_421 = arith.constant 10 : index
    %c8_422 = arith.constant 8 : index
    %c0_423 = arith.constant 0 : index
    %634 = vector.load %arg6[%c10_421, %c8_422, %c0_423] : memref<16x24x384xf32, #tpu.memory_space<vmem>>, vector<1x14x384xf32>
    %635 = vector.shape_cast %634 : vector<1x14x384xf32> to vector<14x384xf32>
    %636 = vector.shape_cast %22 : vector<384xf32> to vector<1x384xf32>
    %637 = vector.broadcast %636 : vector<1x384xf32> to vector<14x384xf32>
    %638 = arith.mulf %635, %637 : vector<14x384xf32>
    %639 = arith.addf %633, %638 : vector<14x384xf32>
    %c1_424 = arith.constant 1 : index
    %c10_425 = arith.constant 10 : index
    %c0_426 = arith.constant 0 : index
    %c0_427 = arith.constant 0 : index
    %640 = vector.load %arg7[%c1_424, %c10_425, %c0_426, %c0_427] : memref<2x16x14x384xf32, #tpu.memory_space<vmem>>, vector<1x1x14x384xf32>
    %641 = vector.shape_cast %640 : vector<1x1x14x384xf32> to vector<14x384xf32>
    %642 = vector.shape_cast %24 : vector<384xf32> to vector<1x384xf32>
    %643 = vector.broadcast %642 : vector<1x384xf32> to vector<14x384xf32>
    %644 = arith.mulf %641, %643 : vector<14x384xf32>
    %645 = arith.addf %639, %644 : vector<14x384xf32>
    %c0_428 = arith.constant 0 : index
    %c11_429 = arith.constant 11 : index
    %c0_430 = arith.constant 0 : index
    %c0_431 = arith.constant 0 : index
    %646 = vector.load %arg7[%c0_428, %c11_429, %c0_430, %c0_431] : memref<2x16x14x384xf32, #tpu.memory_space<vmem>>, vector<1x1x14x384xf32>
    %647 = vector.shape_cast %646 : vector<1x1x14x384xf32> to vector<14x384xf32>
    %648 = vector.shape_cast %26 : vector<384xf32> to vector<1x384xf32>
    %649 = vector.broadcast %648 : vector<1x384xf32> to vector<14x384xf32>
    %650 = arith.mulf %647, %649 : vector<14x384xf32>
    %651 = arith.addf %645, %650 : vector<14x384xf32>
    %c11_432 = arith.constant 11 : index
    %c8_433 = arith.constant 8 : index
    %c0_434 = arith.constant 0 : index
    %652 = vector.load %arg6[%c11_432, %c8_433, %c0_434] : memref<16x24x384xf32, #tpu.memory_space<vmem>>, vector<1x14x384xf32>
    %653 = vector.shape_cast %652 : vector<1x14x384xf32> to vector<14x384xf32>
    %654 = vector.shape_cast %28 : vector<384xf32> to vector<1x384xf32>
    %655 = vector.broadcast %654 : vector<1x384xf32> to vector<14x384xf32>
    %656 = arith.mulf %653, %655 : vector<14x384xf32>
    %657 = arith.addf %651, %656 : vector<14x384xf32>
    %c1_435 = arith.constant 1 : index
    %c11_436 = arith.constant 11 : index
    %c0_437 = arith.constant 0 : index
    %c0_438 = arith.constant 0 : index
    %658 = vector.load %arg7[%c1_435, %c11_436, %c0_437, %c0_438] : memref<2x16x14x384xf32, #tpu.memory_space<vmem>>, vector<1x1x14x384xf32>
    %659 = vector.shape_cast %658 : vector<1x1x14x384xf32> to vector<14x384xf32>
    %660 = vector.shape_cast %30 : vector<384xf32> to vector<1x384xf32>
    %661 = vector.broadcast %660 : vector<1x384xf32> to vector<14x384xf32>
    %662 = arith.mulf %659, %661 : vector<14x384xf32>
    %663 = arith.addf %657, %662 : vector<14x384xf32>
    %c0_439 = arith.constant 0 : index
    %c12 = arith.constant 12 : index
    %c0_440 = arith.constant 0 : index
    %c0_441 = arith.constant 0 : index
    %664 = vector.load %arg7[%c0_439, %c12, %c0_440, %c0_441] : memref<2x16x14x384xf32, #tpu.memory_space<vmem>>, vector<1x1x14x384xf32>
    %665 = vector.shape_cast %664 : vector<1x1x14x384xf32> to vector<14x384xf32>
    %666 = vector.shape_cast %32 : vector<384xf32> to vector<1x384xf32>
    %667 = vector.broadcast %666 : vector<1x384xf32> to vector<14x384xf32>
    %668 = arith.mulf %665, %667 : vector<14x384xf32>
    %669 = arith.addf %663, %668 : vector<14x384xf32>
    %c12_442 = arith.constant 12 : index
    %c8_443 = arith.constant 8 : index
    %c0_444 = arith.constant 0 : index
    %670 = vector.load %arg6[%c12_442, %c8_443, %c0_444] : memref<16x24x384xf32, #tpu.memory_space<vmem>>, vector<1x14x384xf32>
    %671 = vector.shape_cast %670 : vector<1x14x384xf32> to vector<14x384xf32>
    %672 = vector.shape_cast %34 : vector<384xf32> to vector<1x384xf32>
    %673 = vector.broadcast %672 : vector<1x384xf32> to vector<14x384xf32>
    %674 = arith.mulf %671, %673 : vector<14x384xf32>
    %675 = arith.addf %669, %674 : vector<14x384xf32>
    %c1_445 = arith.constant 1 : index
    %c12_446 = arith.constant 12 : index
    %c0_447 = arith.constant 0 : index
    %c0_448 = arith.constant 0 : index
    %676 = vector.load %arg7[%c1_445, %c12_446, %c0_447, %c0_448] : memref<2x16x14x384xf32, #tpu.memory_space<vmem>>, vector<1x1x14x384xf32>
    %677 = vector.shape_cast %676 : vector<1x1x14x384xf32> to vector<14x384xf32>
    %678 = vector.shape_cast %36 : vector<384xf32> to vector<1x384xf32>
    %679 = vector.broadcast %678 : vector<1x384xf32> to vector<14x384xf32>
    %680 = arith.mulf %677, %679 : vector<14x384xf32>
    %681 = arith.addf %675, %680 : vector<14x384xf32>
    %682 = arith.addf %623, %681 : vector<14x384xf32>
    %683 = arith.mulf %681, %681 : vector<14x384xf32>
    %684 = arith.addf %625, %683 : vector<14x384xf32>
    %c0_449 = arith.constant 0 : index
    %c10_450 = arith.constant 10 : index
    %c0_451 = arith.constant 0 : index
    %c0_452 = arith.constant 0 : index
    %685 = vector.load %arg5[%c0_449, %c10_450, %c0_451, %c0_452] : memref<1x14x14x384xf32, #tpu.memory_space<vmem>>, vector<1x1x14x384xf32>
    %686 = vector.shape_cast %685 : vector<1x1x14x384xf32> to vector<14x384xf32>
    %687 = vector.shape_cast %681 : vector<14x384xf32> to vector<1x1x14x384xf32>
    tpu.vector_store %arg5[%c0_449, %c10_450, %c0_451, %c0_452], %687 {strides = array<i32>} : memref<1x14x14x384xf32, #tpu.memory_space<vmem>>, vector<1x1x14x384xf32>,
    %c0_453 = arith.constant 0 : index
    %c11_454 = arith.constant 11 : index
    %c0_455 = arith.constant 0 : index
    %c0_456 = arith.constant 0 : index
    %688 = vector.load %arg7[%c0_453, %c11_454, %c0_455, %c0_456] : memref<2x16x14x384xf32, #tpu.memory_space<vmem>>, vector<1x1x14x384xf32>
    %689 = vector.shape_cast %688 : vector<1x1x14x384xf32> to vector<14x384xf32>
    %690 = vector.shape_cast %20 : vector<384xf32> to vector<1x384xf32>
    %691 = vector.broadcast %690 : vector<1x384xf32> to vector<14x384xf32>
    %692 = arith.mulf %689, %691 : vector<14x384xf32>
    %c11_457 = arith.constant 11 : index
    %c8_458 = arith.constant 8 : index
    %c0_459 = arith.constant 0 : index
    %693 = vector.load %arg6[%c11_457, %c8_458, %c0_459] : memref<16x24x384xf32, #tpu.memory_space<vmem>>, vector<1x14x384xf32>
    %694 = vector.shape_cast %693 : vector<1x14x384xf32> to vector<14x384xf32>
    %695 = vector.shape_cast %22 : vector<384xf32> to vector<1x384xf32>
    %696 = vector.broadcast %695 : vector<1x384xf32> to vector<14x384xf32>
    %697 = arith.mulf %694, %696 : vector<14x384xf32>
    %698 = arith.addf %692, %697 : vector<14x384xf32>
    %c1_460 = arith.constant 1 : index
    %c11_461 = arith.constant 11 : index
    %c0_462 = arith.constant 0 : index
    %c0_463 = arith.constant 0 : index
    %699 = vector.load %arg7[%c1_460, %c11_461, %c0_462, %c0_463] : memref<2x16x14x384xf32, #tpu.memory_space<vmem>>, vector<1x1x14x384xf32>
    %700 = vector.shape_cast %699 : vector<1x1x14x384xf32> to vector<14x384xf32>
    %701 = vector.shape_cast %24 : vector<384xf32> to vector<1x384xf32>
    %702 = vector.broadcast %701 : vector<1x384xf32> to vector<14x384xf32>
    %703 = arith.mulf %700, %702 : vector<14x384xf32>
    %704 = arith.addf %698, %703 : vector<14x384xf32>
    %c0_464 = arith.constant 0 : index
    %c12_465 = arith.constant 12 : index
    %c0_466 = arith.constant 0 : index
    %c0_467 = arith.constant 0 : index
    %705 = vector.load %arg7[%c0_464, %c12_465, %c0_466, %c0_467] : memref<2x16x14x384xf32, #tpu.memory_space<vmem>>, vector<1x1x14x384xf32>
    %706 = vector.shape_cast %705 : vector<1x1x14x384xf32> to vector<14x384xf32>
    %707 = vector.shape_cast %26 : vector<384xf32> to vector<1x384xf32>
    %708 = vector.broadcast %707 : vector<1x384xf32> to vector<14x384xf32>
    %709 = arith.mulf %706, %708 : vector<14x384xf32>
    %710 = arith.addf %704, %709 : vector<14x384xf32>
    %c12_468 = arith.constant 12 : index
    %c8_469 = arith.constant 8 : index
    %c0_470 = arith.constant 0 : index
    %711 = vector.load %arg6[%c12_468, %c8_469, %c0_470] : memref<16x24x384xf32, #tpu.memory_space<vmem>>, vector<1x14x384xf32>
    %712 = vector.shape_cast %711 : vector<1x14x384xf32> to vector<14x384xf32>
    %713 = vector.shape_cast %28 : vector<384xf32> to vector<1x384xf32>
    %714 = vector.broadcast %713 : vector<1x384xf32> to vector<14x384xf32>
    %715 = arith.mulf %712, %714 : vector<14x384xf32>
    %716 = arith.addf %710, %715 : vector<14x384xf32>
    %c1_471 = arith.constant 1 : index
    %c12_472 = arith.constant 12 : index
    %c0_473 = arith.constant 0 : index
    %c0_474 = arith.constant 0 : index
    %717 = vector.load %arg7[%c1_471, %c12_472, %c0_473, %c0_474] : memref<2x16x14x384xf32, #tpu.memory_space<vmem>>, vector<1x1x14x384xf32>
    %718 = vector.shape_cast %717 : vector<1x1x14x384xf32> to vector<14x384xf32>
    %719 = vector.shape_cast %30 : vector<384xf32> to vector<1x384xf32>
    %720 = vector.broadcast %719 : vector<1x384xf32> to vector<14x384xf32>
    %721 = arith.mulf %718, %720 : vector<14x384xf32>
    %722 = arith.addf %716, %721 : vector<14x384xf32>
    %c0_475 = arith.constant 0 : index
    %c13 = arith.constant 13 : index
    %c0_476 = arith.constant 0 : index
    %c0_477 = arith.constant 0 : index
    %723 = vector.load %arg7[%c0_475, %c13, %c0_476, %c0_477] : memref<2x16x14x384xf32, #tpu.memory_space<vmem>>, vector<1x1x14x384xf32>
    %724 = vector.shape_cast %723 : vector<1x1x14x384xf32> to vector<14x384xf32>
    %725 = vector.shape_cast %32 : vector<384xf32> to vector<1x384xf32>
    %726 = vector.broadcast %725 : vector<1x384xf32> to vector<14x384xf32>
    %727 = arith.mulf %724, %726 : vector<14x384xf32>
    %728 = arith.addf %722, %727 : vector<14x384xf32>
    %c13_478 = arith.constant 13 : index
    %c8_479 = arith.constant 8 : index
    %c0_480 = arith.constant 0 : index
    %729 = vector.load %arg6[%c13_478, %c8_479, %c0_480] : memref<16x24x384xf32, #tpu.memory_space<vmem>>, vector<1x14x384xf32>
    %730 = vector.shape_cast %729 : vector<1x14x384xf32> to vector<14x384xf32>
    %731 = vector.shape_cast %34 : vector<384xf32> to vector<1x384xf32>
    %732 = vector.broadcast %731 : vector<1x384xf32> to vector<14x384xf32>
    %733 = arith.mulf %730, %732 : vector<14x384xf32>
    %734 = arith.addf %728, %733 : vector<14x384xf32>
    %c1_481 = arith.constant 1 : index
    %c13_482 = arith.constant 13 : index
    %c0_483 = arith.constant 0 : index
    %c0_484 = arith.constant 0 : index
    %735 = vector.load %arg7[%c1_481, %c13_482, %c0_483, %c0_484] : memref<2x16x14x384xf32, #tpu.memory_space<vmem>>, vector<1x1x14x384xf32>
    %736 = vector.shape_cast %735 : vector<1x1x14x384xf32> to vector<14x384xf32>
    %737 = vector.shape_cast %36 : vector<384xf32> to vector<1x384xf32>
    %738 = vector.broadcast %737 : vector<1x384xf32> to vector<14x384xf32>
    %739 = arith.mulf %736, %738 : vector<14x384xf32>
    %740 = arith.addf %734, %739 : vector<14x384xf32>
    %741 = arith.addf %682, %740 : vector<14x384xf32>
    %742 = arith.mulf %740, %740 : vector<14x384xf32>
    %743 = arith.addf %684, %742 : vector<14x384xf32>
    %c0_485 = arith.constant 0 : index
    %c11_486 = arith.constant 11 : index
    %c0_487 = arith.constant 0 : index
    %c0_488 = arith.constant 0 : index
    %744 = vector.load %arg5[%c0_485, %c11_486, %c0_487, %c0_488] : memref<1x14x14x384xf32, #tpu.memory_space<vmem>>, vector<1x1x14x384xf32>
    %745 = vector.shape_cast %744 : vector<1x1x14x384xf32> to vector<14x384xf32>
    %746 = vector.shape_cast %740 : vector<14x384xf32> to vector<1x1x14x384xf32>
    tpu.vector_store %arg5[%c0_485, %c11_486, %c0_487, %c0_488], %746 {strides = array<i32>} : memref<1x14x14x384xf32, #tpu.memory_space<vmem>>, vector<1x1x14x384xf32>,
    %c0_489 = arith.constant 0 : index
    %c12_490 = arith.constant 12 : index
    %c0_491 = arith.constant 0 : index
    %c0_492 = arith.constant 0 : index
    %747 = vector.load %arg7[%c0_489, %c12_490, %c0_491, %c0_492] : memref<2x16x14x384xf32, #tpu.memory_space<vmem>>, vector<1x1x14x384xf32>
    %748 = vector.shape_cast %747 : vector<1x1x14x384xf32> to vector<14x384xf32>
    %749 = vector.shape_cast %20 : vector<384xf32> to vector<1x384xf32>
    %750 = vector.broadcast %749 : vector<1x384xf32> to vector<14x384xf32>
    %751 = arith.mulf %748, %750 : vector<14x384xf32>
    %c12_493 = arith.constant 12 : index
    %c8_494 = arith.constant 8 : index
    %c0_495 = arith.constant 0 : index
    %752 = vector.load %arg6[%c12_493, %c8_494, %c0_495] : memref<16x24x384xf32, #tpu.memory_space<vmem>>, vector<1x14x384xf32>
    %753 = vector.shape_cast %752 : vector<1x14x384xf32> to vector<14x384xf32>
    %754 = vector.shape_cast %22 : vector<384xf32> to vector<1x384xf32>
    %755 = vector.broadcast %754 : vector<1x384xf32> to vector<14x384xf32>
    %756 = arith.mulf %753, %755 : vector<14x384xf32>
    %757 = arith.addf %751, %756 : vector<14x384xf32>
    %c1_496 = arith.constant 1 : index
    %c12_497 = arith.constant 12 : index
    %c0_498 = arith.constant 0 : index
    %c0_499 = arith.constant 0 : index
    %758 = vector.load %arg7[%c1_496, %c12_497, %c0_498, %c0_499] : memref<2x16x14x384xf32, #tpu.memory_space<vmem>>, vector<1x1x14x384xf32>
    %759 = vector.shape_cast %758 : vector<1x1x14x384xf32> to vector<14x384xf32>
    %760 = vector.shape_cast %24 : vector<384xf32> to vector<1x384xf32>
    %761 = vector.broadcast %760 : vector<1x384xf32> to vector<14x384xf32>
    %762 = arith.mulf %759, %761 : vector<14x384xf32>
    %763 = arith.addf %757, %762 : vector<14x384xf32>
    %c0_500 = arith.constant 0 : index
    %c13_501 = arith.constant 13 : index
    %c0_502 = arith.constant 0 : index
    %c0_503 = arith.constant 0 : index
    %764 = vector.load %arg7[%c0_500, %c13_501, %c0_502, %c0_503] : memref<2x16x14x384xf32, #tpu.memory_space<vmem>>, vector<1x1x14x384xf32>
    %765 = vector.shape_cast %764 : vector<1x1x14x384xf32> to vector<14x384xf32>
    %766 = vector.shape_cast %26 : vector<384xf32> to vector<1x384xf32>
    %767 = vector.broadcast %766 : vector<1x384xf32> to vector<14x384xf32>
    %768 = arith.mulf %765, %767 : vector<14x384xf32>
    %769 = arith.addf %763, %768 : vector<14x384xf32>
    %c13_504 = arith.constant 13 : index
    %c8_505 = arith.constant 8 : index
    %c0_506 = arith.constant 0 : index
    %770 = vector.load %arg6[%c13_504, %c8_505, %c0_506] : memref<16x24x384xf32, #tpu.memory_space<vmem>>, vector<1x14x384xf32>
    %771 = vector.shape_cast %770 : vector<1x14x384xf32> to vector<14x384xf32>
    %772 = vector.shape_cast %28 : vector<384xf32> to vector<1x384xf32>
    %773 = vector.broadcast %772 : vector<1x384xf32> to vector<14x384xf32>
    %774 = arith.mulf %771, %773 : vector<14x384xf32>
    %775 = arith.addf %769, %774 : vector<14x384xf32>
    %c1_507 = arith.constant 1 : index
    %c13_508 = arith.constant 13 : index
    %c0_509 = arith.constant 0 : index
    %c0_510 = arith.constant 0 : index
    %776 = vector.load %arg7[%c1_507, %c13_508, %c0_509, %c0_510] : memref<2x16x14x384xf32, #tpu.memory_space<vmem>>, vector<1x1x14x384xf32>
    %777 = vector.shape_cast %776 : vector<1x1x14x384xf32> to vector<14x384xf32>
    %778 = vector.shape_cast %30 : vector<384xf32> to vector<1x384xf32>
    %779 = vector.broadcast %778 : vector<1x384xf32> to vector<14x384xf32>
    %780 = arith.mulf %777, %779 : vector<14x384xf32>
    %781 = arith.addf %775, %780 : vector<14x384xf32>
    %c0_511 = arith.constant 0 : index
    %c14 = arith.constant 14 : index
    %c0_512 = arith.constant 0 : index
    %c0_513 = arith.constant 0 : index
    %782 = vector.load %arg7[%c0_511, %c14, %c0_512, %c0_513] : memref<2x16x14x384xf32, #tpu.memory_space<vmem>>, vector<1x1x14x384xf32>
    %783 = vector.shape_cast %782 : vector<1x1x14x384xf32> to vector<14x384xf32>
    %784 = vector.shape_cast %32 : vector<384xf32> to vector<1x384xf32>
    %785 = vector.broadcast %784 : vector<1x384xf32> to vector<14x384xf32>
    %786 = arith.mulf %783, %785 : vector<14x384xf32>
    %787 = arith.addf %781, %786 : vector<14x384xf32>
    %c14_514 = arith.constant 14 : index
    %c8_515 = arith.constant 8 : index
    %c0_516 = arith.constant 0 : index
    %788 = vector.load %arg6[%c14_514, %c8_515, %c0_516] : memref<16x24x384xf32, #tpu.memory_space<vmem>>, vector<1x14x384xf32>
    %789 = vector.shape_cast %788 : vector<1x14x384xf32> to vector<14x384xf32>
    %790 = vector.shape_cast %34 : vector<384xf32> to vector<1x384xf32>
    %791 = vector.broadcast %790 : vector<1x384xf32> to vector<14x384xf32>
    %792 = arith.mulf %789, %791 : vector<14x384xf32>
    %793 = arith.addf %787, %792 : vector<14x384xf32>
    %c1_517 = arith.constant 1 : index
    %c14_518 = arith.constant 14 : index
    %c0_519 = arith.constant 0 : index
    %c0_520 = arith.constant 0 : index
    %794 = vector.load %arg7[%c1_517, %c14_518, %c0_519, %c0_520] : memref<2x16x14x384xf32, #tpu.memory_space<vmem>>, vector<1x1x14x384xf32>
    %795 = vector.shape_cast %794 : vector<1x1x14x384xf32> to vector<14x384xf32>
    %796 = vector.shape_cast %36 : vector<384xf32> to vector<1x384xf32>
    %797 = vector.broadcast %796 : vector<1x384xf32> to vector<14x384xf32>
    %798 = arith.mulf %795, %797 : vector<14x384xf32>
    %799 = arith.addf %793, %798 : vector<14x384xf32>
    %800 = arith.addf %741, %799 : vector<14x384xf32>
    %801 = arith.mulf %799, %799 : vector<14x384xf32>
    %802 = arith.addf %743, %801 : vector<14x384xf32>
    %c0_521 = arith.constant 0 : index
    %c12_522 = arith.constant 12 : index
    %c0_523 = arith.constant 0 : index
    %c0_524 = arith.constant 0 : index
    %803 = vector.load %arg5[%c0_521, %c12_522, %c0_523, %c0_524] : memref<1x14x14x384xf32, #tpu.memory_space<vmem>>, vector<1x1x14x384xf32>
    %804 = vector.shape_cast %803 : vector<1x1x14x384xf32> to vector<14x384xf32>
    %805 = vector.shape_cast %799 : vector<14x384xf32> to vector<1x1x14x384xf32>
    tpu.vector_store %arg5[%c0_521, %c12_522, %c0_523, %c0_524], %805 {strides = array<i32>} : memref<1x14x14x384xf32, #tpu.memory_space<vmem>>, vector<1x1x14x384xf32>,
    %c0_525 = arith.constant 0 : index
    %c13_526 = arith.constant 13 : index
    %c0_527 = arith.constant 0 : index
    %c0_528 = arith.constant 0 : index
    %806 = vector.load %arg7[%c0_525, %c13_526, %c0_527, %c0_528] : memref<2x16x14x384xf32, #tpu.memory_space<vmem>>, vector<1x1x14x384xf32>
    %807 = vector.shape_cast %806 : vector<1x1x14x384xf32> to vector<14x384xf32>
    %808 = vector.shape_cast %20 : vector<384xf32> to vector<1x384xf32>
    %809 = vector.broadcast %808 : vector<1x384xf32> to vector<14x384xf32>
    %810 = arith.mulf %807, %809 : vector<14x384xf32>
    %c13_529 = arith.constant 13 : index
    %c8_530 = arith.constant 8 : index
    %c0_531 = arith.constant 0 : index
    %811 = vector.load %arg6[%c13_529, %c8_530, %c0_531] : memref<16x24x384xf32, #tpu.memory_space<vmem>>, vector<1x14x384xf32>
    %812 = vector.shape_cast %811 : vector<1x14x384xf32> to vector<14x384xf32>
    %813 = vector.shape_cast %22 : vector<384xf32> to vector<1x384xf32>
    %814 = vector.broadcast %813 : vector<1x384xf32> to vector<14x384xf32>
    %815 = arith.mulf %812, %814 : vector<14x384xf32>
    %816 = arith.addf %810, %815 : vector<14x384xf32>
    %c1_532 = arith.constant 1 : index
    %c13_533 = arith.constant 13 : index
    %c0_534 = arith.constant 0 : index
    %c0_535 = arith.constant 0 : index
    %817 = vector.load %arg7[%c1_532, %c13_533, %c0_534, %c0_535] : memref<2x16x14x384xf32, #tpu.memory_space<vmem>>, vector<1x1x14x384xf32>
    %818 = vector.shape_cast %817 : vector<1x1x14x384xf32> to vector<14x384xf32>
    %819 = vector.shape_cast %24 : vector<384xf32> to vector<1x384xf32>
    %820 = vector.broadcast %819 : vector<1x384xf32> to vector<14x384xf32>
    %821 = arith.mulf %818, %820 : vector<14x384xf32>
    %822 = arith.addf %816, %821 : vector<14x384xf32>
    %c0_536 = arith.constant 0 : index
    %c14_537 = arith.constant 14 : index
    %c0_538 = arith.constant 0 : index
    %c0_539 = arith.constant 0 : index
    %823 = vector.load %arg7[%c0_536, %c14_537, %c0_538, %c0_539] : memref<2x16x14x384xf32, #tpu.memory_space<vmem>>, vector<1x1x14x384xf32>
    %824 = vector.shape_cast %823 : vector<1x1x14x384xf32> to vector<14x384xf32>
    %825 = vector.shape_cast %26 : vector<384xf32> to vector<1x384xf32>
    %826 = vector.broadcast %825 : vector<1x384xf32> to vector<14x384xf32>
    %827 = arith.mulf %824, %826 : vector<14x384xf32>
    %828 = arith.addf %822, %827 : vector<14x384xf32>
    %c14_540 = arith.constant 14 : index
    %c8_541 = arith.constant 8 : index
    %c0_542 = arith.constant 0 : index
    %829 = vector.load %arg6[%c14_540, %c8_541, %c0_542] : memref<16x24x384xf32, #tpu.memory_space<vmem>>, vector<1x14x384xf32>
    %830 = vector.shape_cast %829 : vector<1x14x384xf32> to vector<14x384xf32>
    %831 = vector.shape_cast %28 : vector<384xf32> to vector<1x384xf32>
    %832 = vector.broadcast %831 : vector<1x384xf32> to vector<14x384xf32>
    %833 = arith.mulf %830, %832 : vector<14x384xf32>
    %834 = arith.addf %828, %833 : vector<14x384xf32>
    %c1_543 = arith.constant 1 : index
    %c14_544 = arith.constant 14 : index
    %c0_545 = arith.constant 0 : index
    %c0_546 = arith.constant 0 : index
    %835 = vector.load %arg7[%c1_543, %c14_544, %c0_545, %c0_546] : memref<2x16x14x384xf32, #tpu.memory_space<vmem>>, vector<1x1x14x384xf32>
    %836 = vector.shape_cast %835 : vector<1x1x14x384xf32> to vector<14x384xf32>
    %837 = vector.shape_cast %30 : vector<384xf32> to vector<1x384xf32>
    %838 = vector.broadcast %837 : vector<1x384xf32> to vector<14x384xf32>
    %839 = arith.mulf %836, %838 : vector<14x384xf32>
    %840 = arith.addf %834, %839 : vector<14x384xf32>
    %c0_547 = arith.constant 0 : index
    %c15_548 = arith.constant 15 : index
    %c0_549 = arith.constant 0 : index
    %c0_550 = arith.constant 0 : index
    %841 = vector.load %arg7[%c0_547, %c15_548, %c0_549, %c0_550] : memref<2x16x14x384xf32, #tpu.memory_space<vmem>>, vector<1x1x14x384xf32>
    %842 = vector.shape_cast %841 : vector<1x1x14x384xf32> to vector<14x384xf32>
    %843 = vector.shape_cast %32 : vector<384xf32> to vector<1x384xf32>
    %844 = vector.broadcast %843 : vector<1x384xf32> to vector<14x384xf32>
    %845 = arith.mulf %842, %844 : vector<14x384xf32>
    %846 = arith.addf %840, %845 : vector<14x384xf32>
    %c15_551 = arith.constant 15 : index
    %c8_552 = arith.constant 8 : index
    %c0_553 = arith.constant 0 : index
    %847 = vector.load %arg6[%c15_551, %c8_552, %c0_553] : memref<16x24x384xf32, #tpu.memory_space<vmem>>, vector<1x14x384xf32>
    %848 = vector.shape_cast %847 : vector<1x14x384xf32> to vector<14x384xf32>
    %849 = vector.shape_cast %34 : vector<384xf32> to vector<1x384xf32>
    %850 = vector.broadcast %849 : vector<1x384xf32> to vector<14x384xf32>
    %851 = arith.mulf %848, %850 : vector<14x384xf32>
    %852 = arith.addf %846, %851 : vector<14x384xf32>
    %c1_554 = arith.constant 1 : index
    %c15_555 = arith.constant 15 : index
    %c0_556 = arith.constant 0 : index
    %c0_557 = arith.constant 0 : index
    %853 = vector.load %arg7[%c1_554, %c15_555, %c0_556, %c0_557] : memref<2x16x14x384xf32, #tpu.memory_space<vmem>>, vector<1x1x14x384xf32>
    %854 = vector.shape_cast %853 : vector<1x1x14x384xf32> to vector<14x384xf32>
    %855 = vector.shape_cast %36 : vector<384xf32> to vector<1x384xf32>
    %856 = vector.broadcast %855 : vector<1x384xf32> to vector<14x384xf32>
    %857 = arith.mulf %854, %856 : vector<14x384xf32>
    %858 = arith.addf %852, %857 : vector<14x384xf32>
    %859 = arith.addf %800, %858 : vector<14x384xf32>
    %860 = arith.mulf %858, %858 : vector<14x384xf32>
    %861 = arith.addf %802, %860 : vector<14x384xf32>
    %c0_558 = arith.constant 0 : index
    %c13_559 = arith.constant 13 : index
    %c0_560 = arith.constant 0 : index
    %c0_561 = arith.constant 0 : index
    %862 = vector.load %arg5[%c0_558, %c13_559, %c0_560, %c0_561] : memref<1x14x14x384xf32, #tpu.memory_space<vmem>>, vector<1x1x14x384xf32>
    %863 = vector.shape_cast %862 : vector<1x1x14x384xf32> to vector<14x384xf32>
    %864 = vector.shape_cast %858 : vector<14x384xf32> to vector<1x1x14x384xf32>
    tpu.vector_store %arg5[%c0_558, %c13_559, %c0_560, %c0_561], %864 {strides = array<i32>} : memref<1x14x14x384xf32, #tpu.memory_space<vmem>>, vector<1x1x14x384xf32>,
    %cst_562 = arith.constant dense<0.000000e+00> : vector<384xf32>
    %865 = vector.multi_reduction <add>, %859, %cst_562 [0] : vector<14x384xf32> to vector<384xf32>
    %cst_563 = arith.constant 0.00510204071 : f32
    %866 = vector.broadcast %cst_563 : f32 to vector<384xf32>
    %867 = arith.mulf %865, %866 : vector<384xf32>
    %cst_564 = arith.constant dense<0.000000e+00> : vector<384xf32>
    %868 = vector.multi_reduction <add>, %861, %cst_564 [0] : vector<14x384xf32> to vector<384xf32>
    %cst_565 = arith.constant 0.00510204071 : f32
    %869 = vector.broadcast %cst_565 : f32 to vector<384xf32>
    %870 = arith.mulf %868, %869 : vector<384xf32>
    %871 = arith.mulf %867, %867 : vector<384xf32>
    %872 = arith.subf %870, %871 : vector<384xf32>
    %cst_566 = arith.constant 0.000000e+00 : f32
    %873 = vector.broadcast %cst_566 : f32 to vector<384xf32>
    %874 = arith.maximumf %872, %873 : vector<384xf32>
    %cst_567 = arith.constant 1.000000e-03 : f32
    %875 = vector.broadcast %cst_567 : f32 to vector<384xf32>
    %876 = arith.addf %874, %875 : vector<384xf32>
    %877 = math.rsqrt %876 : vector<384xf32>
    %c0_568 = arith.constant 0 : index
    %c0_569 = arith.constant 0 : index
    %878 = vector.load %arg3[%c0_568, %c0_569] : memref<1x384xf32, #tpu.memory_space<vmem>>, vector<1x384xf32>
    %879 = vector.shape_cast %878 : vector<1x384xf32> to vector<384xf32>
    %880 = arith.mulf %877, %879 : vector<384xf32>
    %c0_570 = arith.constant 0 : index
    %c0_571 = arith.constant 0 : index
    %881 = vector.load %arg4[%c0_570, %c0_571] : memref<1x384xf32, #tpu.memory_space<vmem>>, vector<1x384xf32>
    %882 = vector.shape_cast %881 : vector<1x384xf32> to vector<384xf32>
    %883 = arith.mulf %867, %880 : vector<384xf32>
    %884 = arith.subf %882, %883 : vector<384xf32>
    %c0_572 = arith.constant 0 : index
    %c0_573 = arith.constant 0 : index
    %c0_574 = arith.constant 0 : index
    %c0_575 = arith.constant 0 : index
    %885 = vector.load %arg5[%c0_572, %c0_573, %c0_574, %c0_575] : memref<1x14x14x384xf32, #tpu.memory_space<vmem>>, vector<1x1x14x384xf32>
    %886 = vector.shape_cast %885 : vector<1x1x14x384xf32> to vector<14x384xf32>
    %887 = vector.shape_cast %880 : vector<384xf32> to vector<1x384xf32>
    %888 = vector.broadcast %887 : vector<1x384xf32> to vector<14x384xf32>
    %889 = arith.mulf %886, %888 : vector<14x384xf32>
    %890 = vector.shape_cast %884 : vector<384xf32> to vector<1x384xf32>
    %891 = vector.broadcast %890 : vector<1x384xf32> to vector<14x384xf32>
    %892 = arith.addf %889, %891 : vector<14x384xf32>
    %c0_576 = arith.constant 0 : index
    %c0_577 = arith.constant 0 : index
    %c0_578 = arith.constant 0 : index
    %c0_579 = arith.constant 0 : index
    %893 = vector.load %arg5[%c0_576, %c0_577, %c0_578, %c0_579] : memref<1x14x14x384xf32, #tpu.memory_space<vmem>>, vector<1x1x14x384xf32>
    %894 = vector.shape_cast %893 : vector<1x1x14x384xf32> to vector<14x384xf32>
    %895 = vector.shape_cast %892 : vector<14x384xf32> to vector<1x1x14x384xf32>
    tpu.vector_store %arg5[%c0_576, %c0_577, %c0_578, %c0_579], %895 {strides = array<i32>} : memref<1x14x14x384xf32, #tpu.memory_space<vmem>>, vector<1x1x14x384xf32>,
    %c0_580 = arith.constant 0 : index
    %c1_581 = arith.constant 1 : index
    %c0_582 = arith.constant 0 : index
    %c0_583 = arith.constant 0 : index
    %896 = vector.load %arg5[%c0_580, %c1_581, %c0_582, %c0_583] : memref<1x14x14x384xf32, #tpu.memory_space<vmem>>, vector<1x1x14x384xf32>
    %897 = vector.shape_cast %896 : vector<1x1x14x384xf32> to vector<14x384xf32>
    %898 = vector.shape_cast %880 : vector<384xf32> to vector<1x384xf32>
    %899 = vector.broadcast %898 : vector<1x384xf32> to vector<14x384xf32>
    %900 = arith.mulf %897, %899 : vector<14x384xf32>
    %901 = vector.shape_cast %884 : vector<384xf32> to vector<1x384xf32>
    %902 = vector.broadcast %901 : vector<1x384xf32> to vector<14x384xf32>
    %903 = arith.addf %900, %902 : vector<14x384xf32>
    %c0_584 = arith.constant 0 : index
    %c1_585 = arith.constant 1 : index
    %c0_586 = arith.constant 0 : index
    %c0_587 = arith.constant 0 : index
    %904 = vector.load %arg5[%c0_584, %c1_585, %c0_586, %c0_587] : memref<1x14x14x384xf32, #tpu.memory_space<vmem>>, vector<1x1x14x384xf32>
    %905 = vector.shape_cast %904 : vector<1x1x14x384xf32> to vector<14x384xf32>
    %906 = vector.shape_cast %903 : vector<14x384xf32> to vector<1x1x14x384xf32>
    tpu.vector_store %arg5[%c0_584, %c1_585, %c0_586, %c0_587], %906 {strides = array<i32>} : memref<1x14x14x384xf32, #tpu.memory_space<vmem>>, vector<1x1x14x384xf32>,
    %c0_588 = arith.constant 0 : index
    %c2_589 = arith.constant 2 : index
    %c0_590 = arith.constant 0 : index
    %c0_591 = arith.constant 0 : index
    %907 = vector.load %arg5[%c0_588, %c2_589, %c0_590, %c0_591] : memref<1x14x14x384xf32, #tpu.memory_space<vmem>>, vector<1x1x14x384xf32>
    %908 = vector.shape_cast %907 : vector<1x1x14x384xf32> to vector<14x384xf32>
    %909 = vector.shape_cast %880 : vector<384xf32> to vector<1x384xf32>
    %910 = vector.broadcast %909 : vector<1x384xf32> to vector<14x384xf32>
    %911 = arith.mulf %908, %910 : vector<14x384xf32>
    %912 = vector.shape_cast %884 : vector<384xf32> to vector<1x384xf32>
    %913 = vector.broadcast %912 : vector<1x384xf32> to vector<14x384xf32>
    %914 = arith.addf %911, %913 : vector<14x384xf32>
    %c0_592 = arith.constant 0 : index
    %c2_593 = arith.constant 2 : index
    %c0_594 = arith.constant 0 : index
    %c0_595 = arith.constant 0 : index
    %915 = vector.load %arg5[%c0_592, %c2_593, %c0_594, %c0_595] : memref<1x14x14x384xf32, #tpu.memory_space<vmem>>, vector<1x1x14x384xf32>
    %916 = vector.shape_cast %915 : vector<1x1x14x384xf32> to vector<14x384xf32>
    %917 = vector.shape_cast %914 : vector<14x384xf32> to vector<1x1x14x384xf32>
    tpu.vector_store %arg5[%c0_592, %c2_593, %c0_594, %c0_595], %917 {strides = array<i32>} : memref<1x14x14x384xf32, #tpu.memory_space<vmem>>, vector<1x1x14x384xf32>,
    %c0_596 = arith.constant 0 : index
    %c3_597 = arith.constant 3 : index
    %c0_598 = arith.constant 0 : index
    %c0_599 = arith.constant 0 : index
    %918 = vector.load %arg5[%c0_596, %c3_597, %c0_598, %c0_599] : memref<1x14x14x384xf32, #tpu.memory_space<vmem>>, vector<1x1x14x384xf32>
    %919 = vector.shape_cast %918 : vector<1x1x14x384xf32> to vector<14x384xf32>
    %920 = vector.shape_cast %880 : vector<384xf32> to vector<1x384xf32>
    %921 = vector.broadcast %920 : vector<1x384xf32> to vector<14x384xf32>
    %922 = arith.mulf %919, %921 : vector<14x384xf32>
    %923 = vector.shape_cast %884 : vector<384xf32> to vector<1x384xf32>
    %924 = vector.broadcast %923 : vector<1x384xf32> to vector<14x384xf32>
    %925 = arith.addf %922, %924 : vector<14x384xf32>
    %c0_600 = arith.constant 0 : index
    %c3_601 = arith.constant 3 : index
    %c0_602 = arith.constant 0 : index
    %c0_603 = arith.constant 0 : index
    %926 = vector.load %arg5[%c0_600, %c3_601, %c0_602, %c0_603] : memref<1x14x14x384xf32, #tpu.memory_space<vmem>>, vector<1x1x14x384xf32>
    %927 = vector.shape_cast %926 : vector<1x1x14x384xf32> to vector<14x384xf32>
    %928 = vector.shape_cast %925 : vector<14x384xf32> to vector<1x1x14x384xf32>
    tpu.vector_store %arg5[%c0_600, %c3_601, %c0_602, %c0_603], %928 {strides = array<i32>} : memref<1x14x14x384xf32, #tpu.memory_space<vmem>>, vector<1x1x14x384xf32>,
    %c0_604 = arith.constant 0 : index
    %c4_605 = arith.constant 4 : index
    %c0_606 = arith.constant 0 : index
    %c0_607 = arith.constant 0 : index
    %929 = vector.load %arg5[%c0_604, %c4_605, %c0_606, %c0_607] : memref<1x14x14x384xf32, #tpu.memory_space<vmem>>, vector<1x1x14x384xf32>
    %930 = vector.shape_cast %929 : vector<1x1x14x384xf32> to vector<14x384xf32>
    %931 = vector.shape_cast %880 : vector<384xf32> to vector<1x384xf32>
    %932 = vector.broadcast %931 : vector<1x384xf32> to vector<14x384xf32>
    %933 = arith.mulf %930, %932 : vector<14x384xf32>
    %934 = vector.shape_cast %884 : vector<384xf32> to vector<1x384xf32>
    %935 = vector.broadcast %934 : vector<1x384xf32> to vector<14x384xf32>
    %936 = arith.addf %933, %935 : vector<14x384xf32>
    %c0_608 = arith.constant 0 : index
    %c4_609 = arith.constant 4 : index
    %c0_610 = arith.constant 0 : index
    %c0_611 = arith.constant 0 : index
    %937 = vector.load %arg5[%c0_608, %c4_609, %c0_610, %c0_611] : memref<1x14x14x384xf32, #tpu.memory_space<vmem>>, vector<1x1x14x384xf32>
    %938 = vector.shape_cast %937 : vector<1x1x14x384xf32> to vector<14x384xf32>
    %939 = vector.shape_cast %936 : vector<14x384xf32> to vector<1x1x14x384xf32>
    tpu.vector_store %arg5[%c0_608, %c4_609, %c0_610, %c0_611], %939 {strides = array<i32>} : memref<1x14x14x384xf32, #tpu.memory_space<vmem>>, vector<1x1x14x384xf32>,
    %c0_612 = arith.constant 0 : index
    %c5_613 = arith.constant 5 : index
    %c0_614 = arith.constant 0 : index
    %c0_615 = arith.constant 0 : index
    %940 = vector.load %arg5[%c0_612, %c5_613, %c0_614, %c0_615] : memref<1x14x14x384xf32, #tpu.memory_space<vmem>>, vector<1x1x14x384xf32>
    %941 = vector.shape_cast %940 : vector<1x1x14x384xf32> to vector<14x384xf32>
    %942 = vector.shape_cast %880 : vector<384xf32> to vector<1x384xf32>
    %943 = vector.broadcast %942 : vector<1x384xf32> to vector<14x384xf32>
    %944 = arith.mulf %941, %943 : vector<14x384xf32>
    %945 = vector.shape_cast %884 : vector<384xf32> to vector<1x384xf32>
    %946 = vector.broadcast %945 : vector<1x384xf32> to vector<14x384xf32>
    %947 = arith.addf %944, %946 : vector<14x384xf32>
    %c0_616 = arith.constant 0 : index
    %c5_617 = arith.constant 5 : index
    %c0_618 = arith.constant 0 : index
    %c0_619 = arith.constant 0 : index
    %948 = vector.load %arg5[%c0_616, %c5_617, %c0_618, %c0_619] : memref<1x14x14x384xf32, #tpu.memory_space<vmem>>, vector<1x1x14x384xf32>
    %949 = vector.shape_cast %948 : vector<1x1x14x384xf32> to vector<14x384xf32>
    %950 = vector.shape_cast %947 : vector<14x384xf32> to vector<1x1x14x384xf32>
    tpu.vector_store %arg5[%c0_616, %c5_617, %c0_618, %c0_619], %950 {strides = array<i32>} : memref<1x14x14x384xf32, #tpu.memory_space<vmem>>, vector<1x1x14x384xf32>,
    %c0_620 = arith.constant 0 : index
    %c6_621 = arith.constant 6 : index
    %c0_622 = arith.constant 0 : index
    %c0_623 = arith.constant 0 : index
    %951 = vector.load %arg5[%c0_620, %c6_621, %c0_622, %c0_623] : memref<1x14x14x384xf32, #tpu.memory_space<vmem>>, vector<1x1x14x384xf32>
    %952 = vector.shape_cast %951 : vector<1x1x14x384xf32> to vector<14x384xf32>
    %953 = vector.shape_cast %880 : vector<384xf32> to vector<1x384xf32>
    %954 = vector.broadcast %953 : vector<1x384xf32> to vector<14x384xf32>
    %955 = arith.mulf %952, %954 : vector<14x384xf32>
    %956 = vector.shape_cast %884 : vector<384xf32> to vector<1x384xf32>
    %957 = vector.broadcast %956 : vector<1x384xf32> to vector<14x384xf32>
    %958 = arith.addf %955, %957 : vector<14x384xf32>
    %c0_624 = arith.constant 0 : index
    %c6_625 = arith.constant 6 : index
    %c0_626 = arith.constant 0 : index
    %c0_627 = arith.constant 0 : index
    %959 = vector.load %arg5[%c0_624, %c6_625, %c0_626, %c0_627] : memref<1x14x14x384xf32, #tpu.memory_space<vmem>>, vector<1x1x14x384xf32>
    %960 = vector.shape_cast %959 : vector<1x1x14x384xf32> to vector<14x384xf32>
    %961 = vector.shape_cast %958 : vector<14x384xf32> to vector<1x1x14x384xf32>
    tpu.vector_store %arg5[%c0_624, %c6_625, %c0_626, %c0_627], %961 {strides = array<i32>} : memref<1x14x14x384xf32, #tpu.memory_space<vmem>>, vector<1x1x14x384xf32>,
    %c0_628 = arith.constant 0 : index
    %c7_629 = arith.constant 7 : index
    %c0_630 = arith.constant 0 : index
    %c0_631 = arith.constant 0 : index
    %962 = vector.load %arg5[%c0_628, %c7_629, %c0_630, %c0_631] : memref<1x14x14x384xf32, #tpu.memory_space<vmem>>, vector<1x1x14x384xf32>
    %963 = vector.shape_cast %962 : vector<1x1x14x384xf32> to vector<14x384xf32>
    %964 = vector.shape_cast %880 : vector<384xf32> to vector<1x384xf32>
    %965 = vector.broadcast %964 : vector<1x384xf32> to vector<14x384xf32>
    %966 = arith.mulf %963, %965 : vector<14x384xf32>
    %967 = vector.shape_cast %884 : vector<384xf32> to vector<1x384xf32>
    %968 = vector.broadcast %967 : vector<1x384xf32> to vector<14x384xf32>
    %969 = arith.addf %966, %968 : vector<14x384xf32>
    %c0_632 = arith.constant 0 : index
    %c7_633 = arith.constant 7 : index
    %c0_634 = arith.constant 0 : index
    %c0_635 = arith.constant 0 : index
    %970 = vector.load %arg5[%c0_632, %c7_633, %c0_634, %c0_635] : memref<1x14x14x384xf32, #tpu.memory_space<vmem>>, vector<1x1x14x384xf32>
    %971 = vector.shape_cast %970 : vector<1x1x14x384xf32> to vector<14x384xf32>
    %972 = vector.shape_cast %969 : vector<14x384xf32> to vector<1x1x14x384xf32>
    tpu.vector_store %arg5[%c0_632, %c7_633, %c0_634, %c0_635], %972 {strides = array<i32>} : memref<1x14x14x384xf32, #tpu.memory_space<vmem>>, vector<1x1x14x384xf32>,
    %c0_636 = arith.constant 0 : index
    %c8_637 = arith.constant 8 : index
    %c0_638 = arith.constant 0 : index
    %c0_639 = arith.constant 0 : index
    %973 = vector.load %arg5[%c0_636, %c8_637, %c0_638, %c0_639] : memref<1x14x14x384xf32, #tpu.memory_space<vmem>>, vector<1x1x14x384xf32>
    %974 = vector.shape_cast %973 : vector<1x1x14x384xf32> to vector<14x384xf32>
    %975 = vector.shape_cast %880 : vector<384xf32> to vector<1x384xf32>
    %976 = vector.broadcast %975 : vector<1x384xf32> to vector<14x384xf32>
    %977 = arith.mulf %974, %976 : vector<14x384xf32>
    %978 = vector.shape_cast %884 : vector<384xf32> to vector<1x384xf32>
    %979 = vector.broadcast %978 : vector<1x384xf32> to vector<14x384xf32>
    %980 = arith.addf %977, %979 : vector<14x384xf32>
    %c0_640 = arith.constant 0 : index
    %c8_641 = arith.constant 8 : index
    %c0_642 = arith.constant 0 : index
    %c0_643 = arith.constant 0 : index
    %981 = vector.load %arg5[%c0_640, %c8_641, %c0_642, %c0_643] : memref<1x14x14x384xf32, #tpu.memory_space<vmem>>, vector<1x1x14x384xf32>
    %982 = vector.shape_cast %981 : vector<1x1x14x384xf32> to vector<14x384xf32>
    %983 = vector.shape_cast %980 : vector<14x384xf32> to vector<1x1x14x384xf32>
    tpu.vector_store %arg5[%c0_640, %c8_641, %c0_642, %c0_643], %983 {strides = array<i32>} : memref<1x14x14x384xf32, #tpu.memory_space<vmem>>, vector<1x1x14x384xf32>,
    %c0_644 = arith.constant 0 : index
    %c9_645 = arith.constant 9 : index
    %c0_646 = arith.constant 0 : index
    %c0_647 = arith.constant 0 : index
    %984 = vector.load %arg5[%c0_644, %c9_645, %c0_646, %c0_647] : memref<1x14x14x384xf32, #tpu.memory_space<vmem>>, vector<1x1x14x384xf32>
    %985 = vector.shape_cast %984 : vector<1x1x14x384xf32> to vector<14x384xf32>
    %986 = vector.shape_cast %880 : vector<384xf32> to vector<1x384xf32>
    %987 = vector.broadcast %986 : vector<1x384xf32> to vector<14x384xf32>
    %988 = arith.mulf %985, %987 : vector<14x384xf32>
    %989 = vector.shape_cast %884 : vector<384xf32> to vector<1x384xf32>
    %990 = vector.broadcast %989 : vector<1x384xf32> to vector<14x384xf32>
    %991 = arith.addf %988, %990 : vector<14x384xf32>
    %c0_648 = arith.constant 0 : index
    %c9_649 = arith.constant 9 : index
    %c0_650 = arith.constant 0 : index
    %c0_651 = arith.constant 0 : index
    %992 = vector.load %arg5[%c0_648, %c9_649, %c0_650, %c0_651] : memref<1x14x14x384xf32, #tpu.memory_space<vmem>>, vector<1x1x14x384xf32>
    %993 = vector.shape_cast %992 : vector<1x1x14x384xf32> to vector<14x384xf32>
    %994 = vector.shape_cast %991 : vector<14x384xf32> to vector<1x1x14x384xf32>
    tpu.vector_store %arg5[%c0_648, %c9_649, %c0_650, %c0_651], %994 {strides = array<i32>} : memref<1x14x14x384xf32, #tpu.memory_space<vmem>>, vector<1x1x14x384xf32>,
    %c0_652 = arith.constant 0 : index
    %c10_653 = arith.constant 10 : index
    %c0_654 = arith.constant 0 : index
    %c0_655 = arith.constant 0 : index
    %995 = vector.load %arg5[%c0_652, %c10_653, %c0_654, %c0_655] : memref<1x14x14x384xf32, #tpu.memory_space<vmem>>, vector<1x1x14x384xf32>
    %996 = vector.shape_cast %995 : vector<1x1x14x384xf32> to vector<14x384xf32>
    %997 = vector.shape_cast %880 : vector<384xf32> to vector<1x384xf32>
    %998 = vector.broadcast %997 : vector<1x384xf32> to vector<14x384xf32>
    %999 = arith.mulf %996, %998 : vector<14x384xf32>
    %1000 = vector.shape_cast %884 : vector<384xf32> to vector<1x384xf32>
    %1001 = vector.broadcast %1000 : vector<1x384xf32> to vector<14x384xf32>
    %1002 = arith.addf %999, %1001 : vector<14x384xf32>
    %c0_656 = arith.constant 0 : index
    %c10_657 = arith.constant 10 : index
    %c0_658 = arith.constant 0 : index
    %c0_659 = arith.constant 0 : index
    %1003 = vector.load %arg5[%c0_656, %c10_657, %c0_658, %c0_659] : memref<1x14x14x384xf32, #tpu.memory_space<vmem>>, vector<1x1x14x384xf32>
    %1004 = vector.shape_cast %1003 : vector<1x1x14x384xf32> to vector<14x384xf32>
    %1005 = vector.shape_cast %1002 : vector<14x384xf32> to vector<1x1x14x384xf32>
    tpu.vector_store %arg5[%c0_656, %c10_657, %c0_658, %c0_659], %1005 {strides = array<i32>} : memref<1x14x14x384xf32, #tpu.memory_space<vmem>>, vector<1x1x14x384xf32>,
    %c0_660 = arith.constant 0 : index
    %c11_661 = arith.constant 11 : index
    %c0_662 = arith.constant 0 : index
    %c0_663 = arith.constant 0 : index
    %1006 = vector.load %arg5[%c0_660, %c11_661, %c0_662, %c0_663] : memref<1x14x14x384xf32, #tpu.memory_space<vmem>>, vector<1x1x14x384xf32>
    %1007 = vector.shape_cast %1006 : vector<1x1x14x384xf32> to vector<14x384xf32>
    %1008 = vector.shape_cast %880 : vector<384xf32> to vector<1x384xf32>
    %1009 = vector.broadcast %1008 : vector<1x384xf32> to vector<14x384xf32>
    %1010 = arith.mulf %1007, %1009 : vector<14x384xf32>
    %1011 = vector.shape_cast %884 : vector<384xf32> to vector<1x384xf32>
    %1012 = vector.broadcast %1011 : vector<1x384xf32> to vector<14x384xf32>
    %1013 = arith.addf %1010, %1012 : vector<14x384xf32>
    %c0_664 = arith.constant 0 : index
    %c11_665 = arith.constant 11 : index
    %c0_666 = arith.constant 0 : index
    %c0_667 = arith.constant 0 : index
    %1014 = vector.load %arg5[%c0_664, %c11_665, %c0_666, %c0_667] : memref<1x14x14x384xf32, #tpu.memory_space<vmem>>, vector<1x1x14x384xf32>
    %1015 = vector.shape_cast %1014 : vector<1x1x14x384xf32> to vector<14x384xf32>
    %1016 = vector.shape_cast %1013 : vector<14x384xf32> to vector<1x1x14x384xf32>
    tpu.vector_store %arg5[%c0_664, %c11_665, %c0_666, %c0_667], %1016 {strides = array<i32>} : memref<1x14x14x384xf32, #tpu.memory_space<vmem>>, vector<1x1x14x384xf32>,
    %c0_668 = arith.constant 0 : index
    %c12_669 = arith.constant 12 : index
    %c0_670 = arith.constant 0 : index
    %c0_671 = arith.constant 0 : index
    %1017 = vector.load %arg5[%c0_668, %c12_669, %c0_670, %c0_671] : memref<1x14x14x384xf32, #tpu.memory_space<vmem>>, vector<1x1x14x384xf32>
    %1018 = vector.shape_cast %1017 : vector<1x1x14x384xf32> to vector<14x384xf32>
    %1019 = vector.shape_cast %880 : vector<384xf32> to vector<1x384xf32>
    %1020 = vector.broadcast %1019 : vector<1x384xf32> to vector<14x384xf32>
    %1021 = arith.mulf %1018, %1020 : vector<14x384xf32>
    %1022 = vector.shape_cast %884 : vector<384xf32> to vector<1x384xf32>
    %1023 = vector.broadcast %1022 : vector<1x384xf32> to vector<14x384xf32>
    %1024 = arith.addf %1021, %1023 : vector<14x384xf32>
    %c0_672 = arith.constant 0 : index
    %c12_673 = arith.constant 12 : index
    %c0_674 = arith.constant 0 : index
    %c0_675 = arith.constant 0 : index
    %1025 = vector.load %arg5[%c0_672, %c12_673, %c0_674, %c0_675] : memref<1x14x14x384xf32, #tpu.memory_space<vmem>>, vector<1x1x14x384xf32>
    %1026 = vector.shape_cast %1025 : vector<1x1x14x384xf32> to vector<14x384xf32>
    %1027 = vector.shape_cast %1024 : vector<14x384xf32> to vector<1x1x14x384xf32>
    tpu.vector_store %arg5[%c0_672, %c12_673, %c0_674, %c0_675], %1027 {strides = array<i32>} : memref<1x14x14x384xf32, #tpu.memory_space<vmem>>, vector<1x1x14x384xf32>,
    %c0_676 = arith.constant 0 : index
    %c13_677 = arith.constant 13 : index
    %c0_678 = arith.constant 0 : index
    %c0_679 = arith.constant 0 : index
    %1028 = vector.load %arg5[%c0_676, %c13_677, %c0_678, %c0_679] : memref<1x14x14x384xf32, #tpu.memory_space<vmem>>, vector<1x1x14x384xf32>
    %1029 = vector.shape_cast %1028 : vector<1x1x14x384xf32> to vector<14x384xf32>
    %1030 = vector.shape_cast %880 : vector<384xf32> to vector<1x384xf32>
    %1031 = vector.broadcast %1030 : vector<1x384xf32> to vector<14x384xf32>
    %1032 = arith.mulf %1029, %1031 : vector<14x384xf32>
    %1033 = vector.shape_cast %884 : vector<384xf32> to vector<1x384xf32>
    %1034 = vector.broadcast %1033 : vector<1x384xf32> to vector<14x384xf32>
    %1035 = arith.addf %1032, %1034 : vector<14x384xf32>
    %c0_680 = arith.constant 0 : index
    %c13_681 = arith.constant 13 : index
    %c0_682 = arith.constant 0 : index
    %c0_683 = arith.constant 0 : index
    %1036 = vector.load %arg5[%c0_680, %c13_681, %c0_682, %c0_683] : memref<1x14x14x384xf32, #tpu.memory_space<vmem>>, vector<1x1x14x384xf32>
    %1037 = vector.shape_cast %1036 : vector<1x1x14x384xf32> to vector<14x384xf32>
    %1038 = vector.shape_cast %1035 : vector<14x384xf32> to vector<1x1x14x384xf32>
    tpu.vector_store %arg5[%c0_680, %c13_681, %c0_682, %c0_683], %1038 {strides = array<i32>} : memref<1x14x14x384xf32, #tpu.memory_space<vmem>>, vector<1x1x14x384xf32>,
    return
  }
  func.func @transform_0(%arg0: i32) -> (i32, i32, i32, i32) {
    %c0_i32 = arith.constant 0 : i32
    %c0_i32_0 = arith.constant 0 : i32
    %c0_i32_1 = arith.constant 0 : i32
    %c0_i32_2 = arith.constant 0 : i32
    return %c0_i32, %c0_i32_0, %c0_i32_1, %arg0 : i32, i32, i32, i32
  }
  func.func @transform_1(%arg0: i32) -> (i32, i32, i32) {
    %c0_i32 = arith.constant 0 : i32
    %c0_i32_0 = arith.constant 0 : i32
    %c0_i32_1 = arith.constant 0 : i32
    return %c0_i32, %c0_i32_0, %arg0 : i32, i32, i32
  }
  func.func @transform_2(%arg0: i32) -> (i32, i32) {
    %c0_i32 = arith.constant 0 : i32
    %c0_i32_0 = arith.constant 0 : i32
    return %c0_i32, %arg0 : i32, i32
  }
  func.func @transform_3(%arg0: i32) -> (i32, i32) {
    %c0_i32 = arith.constant 0 : i32
    %c0_i32_0 = arith.constant 0 : i32
    return %c0_i32, %arg0 : i32, i32
  }
  func.func @transform_4(%arg0: i32) -> (i32, i32, i32, i32) {
    %c0_i32 = arith.constant 0 : i32
    %c0_i32_0 = arith.constant 0 : i32
    %c0_i32_1 = arith.constant 0 : i32
    %c0_i32_2 = arith.constant 0 : i32
    return %c0_i32, %c0_i32_0, %c0_i32_1, %arg0 : i32, i32, i32, i32
  }
}

</mosaic_0001>

<llo_original>
// kernel: depthwise_conv_bn_nchw.1
$region0: #{depthwise_conv_bn_nchw.1}
  #allocation0 [shape = 'u32[]', space=smem, size = 0x4, offset = 0x4, fixed_abs, tag = 'smem constant byte address 0x4 - core index']
  #allocation1 [shape = 'u32[144,128]{1,0:T(1,128)}', space=vmem, size = 0x12000, scoped, tag = 'internal scratch']
  #allocation2 [shape = 'f32[16,24,384]{2,1,0:T(8,128)}', space=vmem, size = 0x90000, scoped, tag = 'scratch operand']
  #allocation3 [shape = 'f32[2,16,14,384]{3,2,1,0:T(8,128)}', space=vmem, size = 0xc0000, scoped, tag = 'scratch operand']
  %s0 = inlined_call_operand.vmem [shape: f32[1,14,14,1536], index: 0, kind: input, shape index: {}]
  %s1 = inlined_call_operand.vmem [shape: f32[3,3,1536], index: 1, kind: input, shape index: {}]
  %s2 = inlined_call_operand.vmem [shape: f32[1,1536], index: 2, kind: input, shape index: {}]
  %s3 = inlined_call_operand.vmem [shape: f32[1,1536], index: 3, kind: input, shape index: {}]
  %s4 = inlined_call_operand.vmem [shape: f32[1,14,14,1536], index: 4, kind: output, shape index: {}]
  %s5 = sld [smem:[#allocation0]]
  $region117: #{depthwise_conv_bn_nchw.1} parent=0
    _
  %s7 = ssub.s32 1, %s5
  %s8 = scalar_select 0, %s7, %s5
  $region1: #{depthwise_conv_bn_nchw.1} parent=0
    #allocation4 [shape = 'u8[688128]{0}', space=vmem, size = 0xa8000, scoped, tag = 'input window, operand 0']
    #allocation5 [shape = 'u8[36864]{0}', space=vmem, size = 0x9000, scoped, tag = 'input window, operand 1']
    #allocation6 [shape = 'u8[688128]{0}', space=vmem, size = 0xa8000, scoped, tag = 'output window, operand 0']
    loop: start=0, step=1, limit=6
    $region2: #{depthwise_conv_bn_nchw.1} parent=1 // loop_pre_header
      _
    $region3: #{depthwise_conv_bn_nchw.1} parent=1 // loop_header
      %s10 = sphi 0, %s14
      %p11 = scmp.ge.s32.totalorder %s10, 6
      %s20 = sphi 0, %s22
      %s23 = sphi 0, %s20
      %s24 = sphi 0, %s23
      %s40 = sphi 0, %s24
      %s46 = sphi 0, %s48
      %s49 = sphi 0, %s46
      %s50 = sphi 0, %s49
      %s66 = sphi 0, %s50
      %s72 = sphi 0, %s74
      %s75 = sphi 0, %s72
      %s76 = sphi 0, %s75
      %s92 = sphi 0, %s76
      %s98 = sphi 0, %s100
      %s101 = sphi 0, %s98
      %s102 = sphi 0, %s101
      %s118 = sphi 0, %s102
      %s124 = sphi 0, %s126
      %s127 = sphi 0, %s124
      %s128 = sphi 0, %s127
      %s144 = sphi 0, %s128
    $region4: #{depthwise_conv_bn_nchw.1} parent=1 // loop_header_branch
      %13 = sbr.rel (%p11) target = $region8
    $region5: #{depthwise_conv_bn_nchw.1} parent=1 // loop_body
      %s15 = ssub.s32 %s10, 1
      %s16 = ssub.s32 %s10, 2
      %s17 = sadd.s32 %s10, 1
      %s18 = ssub.s32 %s10, %s17
      %p19 = scmp.eq.s32.totalorder %s18, 0
      %s21 = sadd.s32 %s20, 1
      %s22 = scalar_select %p19, %s20, %s21
      %p25 = pneg %p19
      %p26 = scmp.eq.s32.totalorder %s10, 3
      %p27 = por %p25, %p26
      %p28 = scmp.ne.s32.totalorder %s20, %s23
      %p29 = scmp.eq.s32.totalorder %s10, 0
      %p30 = por %p28, %p29
      %p31 = scmp.ne.s32.totalorder %s20, %s23
      %p32 = scmp.eq.s32.totalorder %s15, 3
      %p33 = por %p31, %p32
      %p34 = scmp.ne.s32.totalorder %s23, %s24
      %p35 = scmp.eq.s32.totalorder %s15, 0
      %p36 = por %p34, %p35
      %p37 = scmp.ne.s32.totalorder %s23, %s24
      %p38 = scmp.eq.s32.totalorder %s16, 3
      %p39 = por %p37, %p38
      %p41 = scmp.ne.s32.totalorder %s24, %s40
      %p42 = scmp.eq.s32.totalorder %s16, 0
      %p43 = por %p41, %p42
      %s44 = ssub.s32 %s10, %s17
      %p45 = scmp.eq.s32.totalorder %s44, 0
      %s47 = sadd.s32 %s46, 1
      %s48 = scalar_select %p45, %s46, %s47
      %p51 = pneg %p45
      %p52 = scmp.eq.s32.totalorder %s10, 3
      %p53 = por %p51, %p52
      %p54 = scmp.ne.s32.totalorder %s46, %s49
      %p55 = scmp.eq.s32.totalorder %s10, 0
      %p56 = por %p54, %p55
      %p57 = scmp.ne.s32.totalorder %s46, %s49
      %p58 = scmp.eq.s32.totalorder %s15, 3
      %p59 = por %p57, %p58
      %p60 = scmp.ne.s32.totalorder %s49, %s50
      %p61 = scmp.eq.s32.totalorder %s15, 0
      %p62 = por %p60, %p61
      %p63 = scmp.ne.s32.totalorder %s49, %s50
      %p64 = scmp.eq.s32.totalorder %s16, 3
      %p65 = por %p63, %p64
      %p67 = scmp.ne.s32.totalorder %s50, %s66
      %p68 = scmp.eq.s32.totalorder %s16, 0
      %p69 = por %p67, %p68
      %s70 = ssub.s32 %s10, %s17
      %p71 = scmp.eq.s32.totalorder %s70, 0
      %s73 = sadd.s32 %s72, 1
      %s74 = scalar_select %p71, %s72, %s73
      %p77 = pneg %p71
      %p78 = scmp.eq.s32.totalorder %s10, 3
      %p79 = por %p77, %p78
      %p80 = scmp.ne.s32.totalorder %s72, %s75
      %p81 = scmp.eq.s32.totalorder %s10, 0
      %p82 = por %p80, %p81
      %p83 = scmp.ne.s32.totalorder %s72, %s75
      %p84 = scmp.eq.s32.totalorder %s15, 3
      %p85 = por %p83, %p84
      %p86 = scmp.ne.s32.totalorder %s75, %s76
      %p87 = scmp.eq.s32.totalorder %s15, 0
      %p88 = por %p86, %p87
      %p89 = scmp.ne.s32.totalorder %s75, %s76
      %p90 = scmp.eq.s32.totalorder %s16, 3
      %p91 = por %p89, %p90
      %p93 = scmp.ne.s32.totalorder %s76, %s92
      %p94 = scmp.eq.s32.totalorder %s16, 0
      %p95 = por %p93, %p94
      %s96 = ssub.s32 %s10, %s17
      %p97 = scmp.eq.s32.totalorder %s96, 0
      %s99 = sadd.s32 %s98, 1
      %s100 = scalar_select %p97, %s98, %s99
      %p103 = pneg %p97
      %p104 = scmp.eq.s32.totalorder %s10, 3
      %p105 = por %p103, %p104
      %p106 = scmp.ne.s32.totalorder %s98, %s101
      %p107 = scmp.eq.s32.totalorder %s10, 0
      %p108 = por %p106, %p107
      %p109 = scmp.ne.s32.totalorder %s98, %s101
      %p110 = scmp.eq.s32.totalorder %s15, 3
      %p111 = por %p109, %p110
      %p112 = scmp.ne.s32.totalorder %s101, %s102
      %p113 = scmp.eq.s32.totalorder %s15, 0
      %p114 = por %p112, %p113
      %p115 = scmp.ne.s32.totalorder %s101, %s102
      %p116 = scmp.eq.s32.totalorder %s16, 3
      %p117 = por %p115, %p116
      %p119 = scmp.ne.s32.totalorder %s102, %s118
      %p120 = scmp.eq.s32.totalorder %s16, 0
      %p121 = por %p119, %p120
      %s122 = ssub.s32 %s10, %s17
      %p123 = scmp.eq.s32.totalorder %s122, 0
      %s125 = sadd.s32 %s124, 1
      %s126 = scalar_select %p123, %s124, %s125
      %p129 = pneg %p123
      %p130 = scmp.eq.s32.totalorder %s10, 3
      %p131 = por %p129, %p130
      %p132 = scmp.ne.s32.totalorder %s124, %s127
      %p133 = scmp.eq.s32.totalorder %s10, 0
      %p134 = por %p132, %p133
      %p135 = scmp.ne.s32.totalorder %s124, %s127
      %p136 = scmp.eq.s32.totalorder %s15, 3
      %p137 = por %p135, %p136
      %p138 = scmp.ne.s32.totalorder %s127, %s128
      %p139 = scmp.eq.s32.totalorder %s15, 0
      %p140 = por %p138, %p139
      %p141 = scmp.ne.s32.totalorder %s127, %s128
      %p142 = scmp.eq.s32.totalorder %s16, 3
      %p143 = por %p141, %p142
      %p145 = scmp.ne.s32.totalorder %s128, %s144
      %p146 = scmp.eq.s32.totalorder %s16, 0
      %p147 = por %p145, %p146
      %p148 = scmp.le.s32.totalorder 1, %s10
      %p149 = scmp.lt.s32.totalorder %s10, 5
      %p150 = pnand %p148, %p149
      %p151 = pneg %p150
      // Predicated region
      $region9: #{depthwise_conv_bn_nchw.1} parent=5 // pred_check
        _
      $region10: #{depthwise_conv_bn_nchw.1} parent=5 // pred_check_branch
        %153 = sbr.rel (%p150) target = $region12
      $region11: #{depthwise_conv_bn_nchw.1} parent=5 // pred_region
        %s154 = ssub.s32 %s10, 1
      $region12: #{depthwise_conv_bn_nchw.1} parent=5 // pred_fallthru
        _
      %p155 = scmp.lt.s32.totalorder %s10, 4
      // Predicated region
      $region13: #{depthwise_conv_bn_nchw.1} parent=5 // pred_check
        %p156 = pneg %p155
      $region14: #{depthwise_conv_bn_nchw.1} parent=5 // pred_check_branch
        %158 = sbr.rel (%p156) target = $region16
      $region15: #{depthwise_conv_bn_nchw.1} parent=5 // pred_region
        // Predicated region
        $region17: #{depthwise_conv_bn_nchw.1} parent=15 // pred_check
          %p159 = pneg %p30
        $region18: #{depthwise_conv_bn_nchw.1} parent=15 // pred_check_branch
          %161 = sbr.rel (%p159) target = $region20
        $region19: #{depthwise_conv_bn_nchw.1} parent=15 // pred_region
          %s162 = sand.u32 %s20, 1
          %s163 = sand.u32 %s20, 1
          %s164 = smul.addr %s163, 672
          %s165 = scalar_lea.vmem [#allocation4], %s164
          %s166 = smul.u32 3, %s10
          %s167 = smul.addr %s166, 8
          %s168 = scalar_lea.vmem %s0, %s167
          // Predicated region
          $region21: #{depthwise_conv_bn_nchw.1} parent=19 // pred_check
            _
          $region22: #{depthwise_conv_bn_nchw.1} parent=19 // pred_check_branch
            %170 = sbr.rel (0) target = $region24
          $region23: #{depthwise_conv_bn_nchw.1} parent=19 // pred_region
            // Predicated region
            $region25: #{depthwise_conv_bn_nchw.1} parent=23 // pred_check
              _
            $region26: #{depthwise_conv_bn_nchw.1} parent=23 // pred_check_branch
              %172 = sbr.rel (0) target = $region28
            $region27: #{depthwise_conv_bn_nchw.1} parent=23 // pred_region
              loop: start=0, step=1, limit=1
              $region29: #{depthwise_conv_bn_nchw.1} parent=27 // loop_pre_header
                _
              $region30: #{depthwise_conv_bn_nchw.1} parent=27 // loop_header
                %s174 = sphi 0, %s178
                %p175 = scmp.ge.s32.totalorder %s174, 1
                %s179 = sphi %s168, %s168
                %s180 = sphi %s165, %s165
              $region31: #{depthwise_conv_bn_nchw.1} parent=27 // loop_header_branch
                %177 = sbr.rel (%p175) target = $region35
              $region32: #{depthwise_conv_bn_nchw.1} parent=27 // loop_body
                %v181 = vld [vmem:[%s179] sm:$0xff]
                %182 = vst [vmem:[%s180] sm:$0xff] %v181
                %v183 = vld [vmem:[%s179 + $0x8] sm:$0xff]
                %184 = vst [vmem:[%s180 + $0x8] sm:$0xff] %v183
                %v185 = vld [vmem:[%s179 + $0x10] sm:$0xff]
                %186 = vst [vmem:[%s180 + $0x10] sm:$0xff] %v185
                %v187 = vld [vmem:[%s179 + $0x60] sm:$0xff]
                %188 = vst [vmem:[%s180 + $0x18] sm:$0xff] %v187
                %v189 = vld [vmem:[%s179 + $0x68] sm:$0xff]
                %190 = vst [vmem:[%s180 + $0x20] sm:$0xff] %v189
                %v191 = vld [vmem:[%s179 + $0x70] sm:$0xff]
                %192 = vst [vmem:[%s180 + $0x28] sm:$0xff] %v191
                %v193 = vld [vmem:[%s179 + $0xc0] sm:$0xff]
                %194 = vst [vmem:[%s180 + $0x30] sm:$0xff] %v193
                %v195 = vld [vmem:[%s179 + $0xc8] sm:$0xff]
                %196 = vst [vmem:[%s180 + $0x38] sm:$0xff] %v195
                %v197 = vld [vmem:[%s179 + $0xd0] sm:$0xff]
                %198 = vst [vmem:[%s180 + $0x40] sm:$0xff] %v197
                %v199 = vld [vmem:[%s179 + $0x120] sm:$0xff]
                %200 = vst [vmem:[%s180 + $0x48] sm:$0xff] %v199
                %v201 = vld [vmem:[%s179 + $0x128] sm:$0xff]
                %202 = vst [vmem:[%s180 + $0x50] sm:$0xff] %v201
                %v203 = vld [vmem:[%s179 + $0x130] sm:$0xff]
                %204 = vst [vmem:[%s180 + $0x58] sm:$0xff] %v203
                %v205 = vld [vmem:[%s179 + $0x180] sm:$0xff]
                %206 = vst [vmem:[%s180 + $0x60] sm:$0xff] %v205
                %v207 = vld [vmem:[%s179 + $0x188] sm:$0xff]
                %208 = vst [vmem:[%s180 + $0x68] sm:$0xff] %v207
                %v209 = vld [vmem:[%s179 + $0x190] sm:$0xff]
                %210 = vst [vmem:[%s180 + $0x70] sm:$0xff] %v209
                %v211 = vld [vmem:[%s179 + $0x1e0] sm:$0xff]
                %212 = vst [vmem:[%s180 + $0x78] sm:$0xff] %v211
                %v213 = vld [vmem:[%s179 + $0x1e8] sm:$0xff]
                %214 = vst [vmem:[%s180 + $0x80] sm:$0xff] %v213
                %v215 = vld [vmem:[%s179 + $0x1f0] sm:$0xff]
                %216 = vst [vmem:[%s180 + $0x88] sm:$0xff] %v215
                %v217 = vld [vmem:[%s179 + $0x240] sm:$0xff]
                %218 = vst [vmem:[%s180 + $0x90] sm:$0xff] %v217
                %v219 = vld [vmem:[%s179 + $0x248] sm:$0xff]
                %220 = vst [vmem:[%s180 + $0x98] sm:$0xff] %v219
                %v221 = vld [vmem:[%s179 + $0x250] sm:$0xff]
                %222 = vst [vmem:[%s180 + $0xa0] sm:$0xff] %v221
                %v223 = vld [vmem:[%s179 + $0x2a0] sm:$0xff]
                %224 = vst [vmem:[%s180 + $0xa8] sm:$0xff] %v223
                %v225 = vld [vmem:[%s179 + $0x2a8] sm:$0xff]
                %226 = vst [vmem:[%s180 + $0xb0] sm:$0xff] %v225
                %v227 = vld [vmem:[%s179 + $0x2b0] sm:$0xff]
                %228 = vst [vmem:[%s180 + $0xb8] sm:$0xff] %v227
                %v229 = vld [vmem:[%s179 + $0x300] sm:$0xff]
                %230 = vst [vmem:[%s180 + $0xc0] sm:$0xff] %v229
                %v231 = vld [vmem:[%s179 + $0x308] sm:$0xff]
                %232 = vst [vmem:[%s180 + $0xc8] sm:$0xff] %v231
                %v233 = vld [vmem:[%s179 + $0x310] sm:$0xff]
                %234 = vst [vmem:[%s180 + $0xd0] sm:$0xff] %v233
                %v235 = vld [vmem:[%s179 + $0x360] sm:$0xff]
                %236 = vst [vmem:[%s180 + $0xd8] sm:$0xff] %v235
                %v237 = vld [vmem:[%s179 + $0x368] sm:$0xff]
                %238 = vst [vmem:[%s180 + $0xe0] sm:$0xff] %v237
                %v239 = vld [vmem:[%s179 + $0x370] sm:$0xff]
                %240 = vst [vmem:[%s180 + $0xe8] sm:$0xff] %v239
                %v241 = vld [vmem:[%s179 + $0x3c0] sm:$0xff]
                %242 = vst [vmem:[%s180 + $0xf0] sm:$0xff] %v241
                %v243 = vld [vmem:[%s179 + $0x3c8] sm:$0xff]
                %244 = vst [vmem:[%s180 + $0xf8] sm:$0xff] %v243
                %v245 = vld [vmem:[%s179 + $0x3d0] sm:$0xff]
                %246 = vst [vmem:[%s180 + $0x100] sm:$0xff] %v245
                %v247 = vld [vmem:[%s179 + $0x420] sm:$0xff]
                %248 = vst [vmem:[%s180 + $0x108] sm:$0xff] %v247
                %v249 = vld [vmem:[%s179 + $0x428] sm:$0xff]
                %250 = vst [vmem:[%s180 + $0x110] sm:$0xff] %v249
                %v251 = vld [vmem:[%s179 + $0x430] sm:$0xff]
                %252 = vst [vmem:[%s180 + $0x118] sm:$0xff] %v251
                %v253 = vld [vmem:[%s179 + $0x480] sm:$0xff]
                %254 = vst [vmem:[%s180 + $0x120] sm:$0xff] %v253
                %v255 = vld [vmem:[%s179 + $0x488] sm:$0xff]
                %256 = vst [vmem:[%s180 + $0x128] sm:$0xff] %v255
                %v257 = vld [vmem:[%s179 + $0x490] sm:$0xff]
                %258 = vst [vmem:[%s180 + $0x130] sm:$0xff] %v257
                %v259 = vld [vmem:[%s179 + $0x4e0] sm:$0xff]
                %260 = vst [vmem:[%s180 + $0x138] sm:$0xff] %v259
                %v261 = vld [vmem:[%s179 + $0x4e8] sm:$0xff]
                %262 = vst [vmem:[%s180 + $0x140] sm:$0xff] %v261
                %v263 = vld [vmem:[%s179 + $0x4f0] sm:$0xff]
                %264 = vst [vmem:[%s180 + $0x148] sm:$0xff] %v263
                %v265 = vld [vmem:[%s179 + $0x540] sm:$0xff]
                %266 = vst [vmem:[%s180 + $0x150] sm:$0xff] %v265
                %v267 = vld [vmem:[%s179 + $0x548] sm:$0xff]
                %268 = vst [vmem:[%s180 + $0x158] sm:$0xff] %v267
                %v269 = vld [vmem:[%s179 + $0x550] sm:$0xff]
                %270 = vst [vmem:[%s180 + $0x160] sm:$0xff] %v269
                %v271 = vld [vmem:[%s179 + $0x5a0] sm:$0xff]
                %272 = vst [vmem:[%s180 + $0x168] sm:$0xff] %v271
                %v273 = vld [vmem:[%s179 + $0x5a8] sm:$0xff]
                %274 = vst [vmem:[%s180 + $0x170] sm:$0xff] %v273
                %v275 = vld [vmem:[%s179 + $0x5b0] sm:$0xff]
                %276 = vst [vmem:[%s180 + $0x178] sm:$0xff] %v275
                %v277 = vld [vmem:[%s179 + $0x600] sm:$0xff]
                %278 = vst [vmem:[%s180 + $0x180] sm:$0xff] %v277
                %v279 = vld [vmem:[%s179 + $0x608] sm:$0xff]
                %280 = vst [vmem:[%s180 + $0x188] sm:$0xff] %v279
                %v281 = vld [vmem:[%s179 + $0x610] sm:$0xff]
                %282 = vst [vmem:[%s180 + $0x190] sm:$0xff] %v281
                %v283 = vld [vmem:[%s179 + $0x660] sm:$0xff]
                %284 = vst [vmem:[%s180 + $0x198] sm:$0xff] %v283
                %v285 = vld [vmem:[%s179 + $0x668] sm:$0xff]
                %286 = vst [vmem:[%s180 + $0x1a0] sm:$0xff] %v285
                %v287 = vld [vmem:[%s179 + $0x670] sm:$0xff]
                %288 = vst [vmem:[%s180 + $0x1a8] sm:$0xff] %v287
                %v289 = vld [vmem:[%s179 + $0x6c0] sm:$0xff]
                %290 = vst [vmem:[%s180 + $0x1b0] sm:$0xff] %v289
                %v291 = vld [vmem:[%s179 + $0x6c8] sm:$0xff]
                %292 = vst [vmem:[%s180 + $0x1b8] sm:$0xff] %v291
                %v293 = vld [vmem:[%s179 + $0x6d0] sm:$0xff]
                %294 = vst [vmem:[%s180 + $0x1c0] sm:$0xff] %v293
                %v295 = vld [vmem:[%s179 + $0x720] sm:$0xff]
                %296 = vst [vmem:[%s180 + $0x1c8] sm:$0xff] %v295
                %v297 = vld [vmem:[%s179 + $0x728] sm:$0xff]
                %298 = vst [vmem:[%s180 + $0x1d0] sm:$0xff] %v297
                %v299 = vld [vmem:[%s179 + $0x730] sm:$0xff]
                %300 = vst [vmem:[%s180 + $0x1d8] sm:$0xff] %v299
                %v301 = vld [vmem:[%s179 + $0x780] sm:$0xff]
                %302 = vst [vmem:[%s180 + $0x1e0] sm:$0xff] %v301
                %v303 = vld [vmem:[%s179 + $0x788] sm:$0xff]
                %304 = vst [vmem:[%s180 + $0x1e8] sm:$0xff] %v303
                %v305 = vld [vmem:[%s179 + $0x790] sm:$0xff]
                %306 = vst [vmem:[%s180 + $0x1f0] sm:$0xff] %v305
                %v307 = vld [vmem:[%s179 + $0x7e0] sm:$0xff]
                %308 = vst [vmem:[%s180 + $0x1f8] sm:$0xff] %v307
                %v309 = vld [vmem:[%s179 + $0x7e8] sm:$0xff]
                %310 = vst [vmem:[%s180 + $0x200] sm:$0xff] %v309
                %v311 = vld [vmem:[%s179 + $0x7f0] sm:$0xff]
                %312 = vst [vmem:[%s180 + $0x208] sm:$0xff] %v311
                %v313 = vld [vmem:[%s179 + $0x840] sm:$0xff]
                %314 = vst [vmem:[%s180 + $0x210] sm:$0xff] %v313
                %v315 = vld [vmem:[%s179 + $0x848] sm:$0xff]
                %316 = vst [vmem:[%s180 + $0x218] sm:$0xff] %v315
                %v317 = vld [vmem:[%s179 + $0x850] sm:$0xff]
                %318 = vst [vmem:[%s180 + $0x220] sm:$0xff] %v317
                %v319 = vld [vmem:[%s179 + $0x8a0] sm:$0xff]
                %320 = vst [vmem:[%s180 + $0x228] sm:$0xff] %v319
                %v321 = vld [vmem:[%s179 + $0x8a8] sm:$0xff]
                %322 = vst [vmem:[%s180 + $0x230] sm:$0xff] %v321
                %v323 = vld [vmem:[%s179 + $0x8b0] sm:$0xff]
                %324 = vst [vmem:[%s180 + $0x238] sm:$0xff] %v323
                %v325 = vld [vmem:[%s179 + $0x900] sm:$0xff]
                %326 = vst [vmem:[%s180 + $0x240] sm:$0xff] %v325
                %v327 = vld [vmem:[%s179 + $0x908] sm:$0xff]
                %328 = vst [vmem:[%s180 + $0x248] sm:$0xff] %v327
                %v329 = vld [vmem:[%s179 + $0x910] sm:$0xff]
                %330 = vst [vmem:[%s180 + $0x250] sm:$0xff] %v329
                %v331 = vld [vmem:[%s179 + $0x960] sm:$0xff]
                %332 = vst [vmem:[%s180 + $0x258] sm:$0xff] %v331
                %v333 = vld [vmem:[%s179 + $0x968] sm:$0xff]
                %334 = vst [vmem:[%s180 + $0x260] sm:$0xff] %v333
                %v335 = vld [vmem:[%s179 + $0x970] sm:$0xff]
                %336 = vst [vmem:[%s180 + $0x268] sm:$0xff] %v335
                %v337 = vld [vmem:[%s179 + $0x9c0] sm:$0xff]
                %338 = vst [vmem:[%s180 + $0x270] sm:$0xff] %v337
                %v339 = vld [vmem:[%s179 + $0x9c8] sm:$0xff]
                %340 = vst [vmem:[%s180 + $0x278] sm:$0xff] %v339
                %v341 = vld [vmem:[%s179 + $0x9d0] sm:$0xff]
                %342 = vst [vmem:[%s180 + $0x280] sm:$0xff] %v341
                %v343 = vld [vmem:[%s179 + $0xa20] sm:$0xff]
                %344 = vst [vmem:[%s180 + $0x288] sm:$0xff] %v343
                %v345 = vld [vmem:[%s179 + $0xa28] sm:$0xff]
                %346 = vst [vmem:[%s180 + $0x290] sm:$0xff] %v345
                %v347 = vld [vmem:[%s179 + $0xa30] sm:$0xff]
                %348 = vst [vmem:[%s180 + $0x298] sm:$0xff] %v347
              $region33: #{depthwise_conv_bn_nchw.1} parent=27 // loop_footer
                %s178 = sadd.s32 1, %s174
              $region34: #{depthwise_conv_bn_nchw.1} parent=27 // loop_footer_branch
                %173 = sbr.rel target = $region30
              $region35: #{depthwise_conv_bn_nchw.1} parent=27 // loop_exit
                _
            $region28: #{depthwise_conv_bn_nchw.1} parent=23 // pred_fallthru
              _
            // Predicated region
            $region36: #{depthwise_conv_bn_nchw.1} parent=23 // pred_check
              _
            $region37: #{depthwise_conv_bn_nchw.1} parent=23 // pred_check_branch
              %350 = sbr.rel target = $region39
            $region38: #{depthwise_conv_bn_nchw.1} parent=23 // pred_region
              _
            $region39: #{depthwise_conv_bn_nchw.1} parent=23 // pred_fallthru
              _
          $region24: #{depthwise_conv_bn_nchw.1} parent=19 // pred_fallthru
            _
          %351 = vnop
        $region20: #{depthwise_conv_bn_nchw.1} parent=15 // pred_fallthru
          _
        // Predicated region
        $region40: #{depthwise_conv_bn_nchw.1} parent=15 // pred_check
          %p352 = pneg %p56
        $region41: #{depthwise_conv_bn_nchw.1} parent=15 // pred_check_branch
          %354 = sbr.rel (%p352) target = $region43
        $region42: #{depthwise_conv_bn_nchw.1} parent=15 // pred_region
          %s355 = sand.u32 %s46, 1
          %s356 = sand.u32 %s46, 1
          %s357 = smul.addr %s356, 36
          %s358 = scalar_lea.vmem [#allocation5], %s357
          %s359 = smul.u32 3, %s10
          %s360 = smul.addr %s359, 4
          %s361 = scalar_lea.vmem %s1, %s360
          // Predicated region
          $region44: #{depthwise_conv_bn_nchw.1} parent=42 // pred_check
            _
          $region45: #{depthwise_conv_bn_nchw.1} parent=42 // pred_check_branch
            %363 = sbr.rel (0) target = $region47
          $region46: #{depthwise_conv_bn_nchw.1} parent=42 // pred_region
            // Predicated region
            $region48: #{depthwise_conv_bn_nchw.1} parent=46 // pred_check
              _
            $region49: #{depthwise_conv_bn_nchw.1} parent=46 // pred_check_branch
              %365 = sbr.rel (0) target = $region51
            $region50: #{depthwise_conv_bn_nchw.1} parent=46 // pred_region
              %s366 = scalar_lea.vmem %s361, 8
              %s367 = scalar_lea.vmem %s358, 8 [#allocation5]
              loop: start=0, step=1, limit=1
              $region52: #{depthwise_conv_bn_nchw.1} parent=50 // loop_pre_header
                _
              $region53: #{depthwise_conv_bn_nchw.1} parent=50 // loop_header
                %s369 = sphi 0, %s373
                %p370 = scmp.ge.s32.totalorder %s369, 1
                %s374 = sphi %s361, %s361
                %s375 = sphi %s358, %s358
              $region54: #{depthwise_conv_bn_nchw.1} parent=50 // loop_header_branch
                %372 = sbr.rel (%p370) target = $region58
              $region55: #{depthwise_conv_bn_nchw.1} parent=50 // loop_body
                %v376 = vld [vmem:[%s374] sm:$0xff]
                %377 = vst [vmem:[%s375] sm:$0xff] %v376
                %v378 = vld [vmem:[%s374 + $0x30] sm:$0xff]
                %379 = vst [vmem:[%s375 + $0xc] sm:$0xff] %v378
                %v380 = vld [vmem:[%s374 + $0x60] sm:$0xff]
                %381 = vst [vmem:[%s375 + $0x18] sm:$0xff] %v380
              $region56: #{depthwise_conv_bn_nchw.1} parent=50 // loop_footer
                %s373 = sadd.s32 1, %s369
              $region57: #{depthwise_conv_bn_nchw.1} parent=50 // loop_footer_branch
                %368 = sbr.rel target = $region53
              $region58: #{depthwise_conv_bn_nchw.1} parent=50 // loop_exit
                _
              loop: start=0, step=1, limit=1
              $region59: #{depthwise_conv_bn_nchw.1} parent=50 // loop_pre_header
                _
              $region60: #{depthwise_conv_bn_nchw.1} parent=50 // loop_header
                %s384 = sphi 0, %s388
                %p385 = scmp.ge.s32.totalorder %s384, 1
                %s389 = sphi %s366, %s366
                %s390 = sphi %s367, %s367
              $region61: #{depthwise_conv_bn_nchw.1} parent=50 // loop_header_branch
                %387 = sbr.rel (%p385) target = $region65
              $region62: #{depthwise_conv_bn_nchw.1} parent=50 // loop_body
                %v391 = vld [vmem:[%s389] sm:$0xf]
                %392 = vst [vmem:[%s390] sm:$0xf] %v391
                %v393 = vld [vmem:[%s389 + $0x30] sm:$0xf]
                %394 = vst [vmem:[%s390 + $0xc] sm:$0xf] %v393
                %v395 = vld [vmem:[%s389 + $0x60] sm:$0xf]
                %396 = vst [vmem:[%s390 + $0x18] sm:$0xf] %v395
              $region63: #{depthwise_conv_bn_nchw.1} parent=50 // loop_footer
                %s388 = sadd.s32 1, %s384
              $region64: #{depthwise_conv_bn_nchw.1} parent=50 // loop_footer_branch
                %383 = sbr.rel target = $region60
              $region65: #{depthwise_conv_bn_nchw.1} parent=50 // loop_exit
                _
            $region51: #{depthwise_conv_bn_nchw.1} parent=46 // pred_fallthru
              _
          $region47: #{depthwise_conv_bn_nchw.1} parent=42 // pred_fallthru
            _
          %397 = vnop
        $region43: #{depthwise_conv_bn_nchw.1} parent=15 // pred_fallthru
          _
        // Predicated region
        $region66: #{depthwise_conv_bn_nchw.1} parent=15 // pred_check
          %p398 = pneg %p82
        $region67: #{depthwise_conv_bn_nchw.1} parent=15 // pred_check_branch
          %400 = sbr.rel (%p398) target = $region69
        $region68: #{depthwise_conv_bn_nchw.1} parent=15 // pred_region
          %s401 = smul.u32 3, %s10
          %p402 = scmp.lt.s32.totalorder %s401, 11
          %s403 = scalar_select %p402, %s401, 11
          %s404 = scalar_lea.vmem %s2, %s403
          %s405 = smul.u32 3, %s10
        $region69: #{depthwise_conv_bn_nchw.1} parent=15 // pred_fallthru
          _
        // Predicated region
        $region70: #{depthwise_conv_bn_nchw.1} parent=15 // pred_check
          %p406 = pneg %p108
        $region71: #{depthwise_conv_bn_nchw.1} parent=15 // pred_check_branch
          %408 = sbr.rel (%p406) target = $region73
        $region72: #{depthwise_conv_bn_nchw.1} parent=15 // pred_region
          %s409 = smul.u32 3, %s10
          %p410 = scmp.lt.s32.totalorder %s409, 11
          %s411 = scalar_select %p410, %s409, 11
          %s412 = scalar_lea.vmem %s3, %s411
          %s413 = smul.u32 3, %s10
        $region73: #{depthwise_conv_bn_nchw.1} parent=15 // pred_fallthru
          _
      $region16: #{depthwise_conv_bn_nchw.1} parent=5 // pred_fallthru
        _
      %p414 = scmp.le.s32.totalorder 1, %s10
      %p415 = scmp.lt.s32.totalorder %s10, 5
      %p416 = pnand %p414, %p415
      %p417 = pneg %p416
      // Predicated region
      $region74: #{depthwise_conv_bn_nchw.1} parent=5 // pred_check
        _
      $region75: #{depthwise_conv_bn_nchw.1} parent=5 // pred_check_branch
        %419 = sbr.rel (%p416) target = $region77
      $region76: #{depthwise_conv_bn_nchw.1} parent=5 // pred_region
        %s420 = ssub.s32 %s10, 1
        %s421 = sand.u32 %s23, 1
        %s422 = sand.u32 %s23, 1
        %s423 = smul.addr %s422, 672
        %s424 = scalar_lea.vmem [#allocation4], %s423
        // Predicated region
        $region78: #{depthwise_conv_bn_nchw.1} parent=76 // pred_check
          %p425 = pneg %p36
        $region79: #{depthwise_conv_bn_nchw.1} parent=76 // pred_check_branch
          %427 = sbr.rel (%p425) target = $region81
        $region80: #{depthwise_conv_bn_nchw.1} parent=76 // pred_region
          _
        $region81: #{depthwise_conv_bn_nchw.1} parent=76 // pred_fallthru
          _
        %s428 = sand.u32 %s49, 1
        %s429 = sand.u32 %s49, 1
        %s430 = smul.addr %s429, 36
        %s431 = scalar_lea.vmem [#allocation5], %s430
        // Predicated region
        $region82: #{depthwise_conv_bn_nchw.1} parent=76 // pred_check
          %p432 = pneg %p62
        $region83: #{depthwise_conv_bn_nchw.1} parent=76 // pred_check_branch
          %434 = sbr.rel (%p432) target = $region85
        $region84: #{depthwise_conv_bn_nchw.1} parent=76 // pred_region
          _
        $region85: #{depthwise_conv_bn_nchw.1} parent=76 // pred_fallthru
          _
        %s435 = sand.u32 %s23, 1
        %s436 = sand.u32 %s23, 1
        %s437 = smul.addr %s436, 672
        %s438 = scalar_lea.vmem [#allocation4], %s437
        %p439 = pneg %p36
        %p440 = pneg %p33
        %s441 = sand.u32 %s49, 1
        %s442 = sand.u32 %s49, 1
        %s443 = smul.addr %s442, 36
        %s444 = scalar_lea.vmem [#allocation5], %s443
        %p445 = pneg %p62
        %p446 = pneg %p59
        %s447 = smul.u32 3, %s15
        %p448 = scmp.lt.s32.totalorder %s447, 11
        %s449 = scalar_select %p448, %s447, 11
        %s450 = scalar_lea.vmem %s2, %s449
        %p451 = pneg %p88
        %p452 = pneg %p85
        %s453 = smul.u32 3, %s15
        %p454 = scmp.lt.s32.totalorder %s453, 11
        %s455 = scalar_select %p454, %s453, 11
        %s456 = scalar_lea.vmem %s3, %s455
        %p457 = pneg %p114
        %p458 = pneg %p111
        %p459 = pneg %p140
        %p460 = pneg %p137
        %s461 = sand.u32 %s127, 1
        %s462 = sand.u32 %s127, 1
        %s463 = smul.addr %s462, 672
        %s464 = scalar_lea.vmem [#allocation6], %s463
        %s465 = smul.u32 3, %s15
        %s466 = smul.u32 3, %s15
        %s467 = smul.u32 3, %s15
        %p468 = scmp.lt.s32.totalorder %s467, 11
        %s469 = scalar_select %p468, %s467, 11
        %s470 = scalar_lea.vmem %s2, %s469
        %s471 = smul.u32 3, %s15
        %s472 = smul.u32 3, %s15
        %p473 = scmp.lt.s32.totalorder %s472, 11
        %s474 = scalar_select %p473, %s472, 11
        %s475 = scalar_lea.vmem %s3, %s474
        %s476 = smul.u32 3, %s15
        %s477 = smul.u32 3, %s15
        %478 = vst [vmem:[#allocation2] sm:$0xff] 0.0
        %479 = vst [vmem:[#allocation2 + $0x8] sm:$0xff] 0.0
        %480 = vst [vmem:[#allocation2 + $0x10] sm:$0xff] 0.0
        %481 = vst [vmem:[#allocation2 + $0x48] sm:$0xff] 0.0
        %482 = vst [vmem:[#allocation2 + $0x50] sm:$0xff] 0.0
        %483 = vst [vmem:[#allocation2 + $0x58] sm:$0xff] 0.0
        %484 = vst [vmem:[#allocation2 + $0x90] sm:$0xff] 0.0
        %485 = vst [vmem:[#allocation2 + $0x98] sm:$0xff] 0.0
        %486 = vst [vmem:[#allocation2 + $0xa0] sm:$0xff] 0.0
        %487 = vst [vmem:[#allocation2 + $0xd8] sm:$0xff] 0.0
        %488 = vst [vmem:[#allocation2 + $0xe0] sm:$0xff] 0.0
        %489 = vst [vmem:[#allocation2 + $0xe8] sm:$0xff] 0.0
        %490 = vst [vmem:[#allocation2 + $0x120] sm:$0xff] 0.0
        %491 = vst [vmem:[#allocation2 + $0x128] sm:$0xff] 0.0
        %492 = vst [vmem:[#allocation2 + $0x130] sm:$0xff] 0.0
        %493 = vst [vmem:[#allocation2 + $0x168] sm:$0xff] 0.0
        %494 = vst [vmem:[#allocation2 + $0x170] sm:$0xff] 0.0
        %495 = vst [vmem:[#allocation2 + $0x178] sm:$0xff] 0.0
        %496 = vst [vmem:[#allocation2 + $0x1b0] sm:$0xff] 0.0
        %497 = vst [vmem:[#allocation2 + $0x1b8] sm:$0xff] 0.0
        %498 = vst [vmem:[#allocation2 + $0x1c0] sm:$0xff] 0.0
        %499 = vst [vmem:[#allocation2 + $0x1f8] sm:$0xff] 0.0
        %500 = vst [vmem:[#allocation2 + $0x200] sm:$0xff] 0.0
        %501 = vst [vmem:[#allocation2 + $0x208] sm:$0xff] 0.0
        %502 = vst [vmem:[#allocation2 + $0x240] sm:$0xff] 0.0
        %503 = vst [vmem:[#allocation2 + $0x248] sm:$0xff] 0.0
        %504 = vst [vmem:[#allocation2 + $0x250] sm:$0xff] 0.0
        %505 = vst [vmem:[#allocation2 + $0x288] sm:$0xff] 0.0
        %506 = vst [vmem:[#allocation2 + $0x290] sm:$0xff] 0.0
        %507 = vst [vmem:[#allocation2 + $0x298] sm:$0xff] 0.0
        %508 = vst [vmem:[#allocation2 + $0x2d0] sm:$0xff] 0.0
        %509 = vst [vmem:[#allocation2 + $0x2d8] sm:$0xff] 0.0
        %510 = vst [vmem:[#allocation2 + $0x2e0] sm:$0xff] 0.0
        %511 = vst [vmem:[#allocation2 + $0x318] sm:$0xff] 0.0
        %512 = vst [vmem:[#allocation2 + $0x320] sm:$0xff] 0.0
        %513 = vst [vmem:[#allocation2 + $0x328] sm:$0xff] 0.0
        %514 = vst [vmem:[#allocation2 + $0x360] sm:$0xff] 0.0
        %515 = vst [vmem:[#allocation2 + $0x368] sm:$0xff] 0.0
        %516 = vst [vmem:[#allocation2 + $0x370] sm:$0xff] 0.0
        %517 = vst [vmem:[#allocation2 + $0x3a8] sm:$0xff] 0.0
        %518 = vst [vmem:[#allocation2 + $0x3b0] sm:$0xff] 0.0
        %519 = vst [vmem:[#allocation2 + $0x3b8] sm:$0xff] 0.0
        %520 = vst [vmem:[#allocation2 + $0x3f0] sm:$0xff] 0.0
        %521 = vst [vmem:[#allocation2 + $0x3f8] sm:$0xff] 0.0
        %522 = vst [vmem:[#allocation2 + $0x400] sm:$0xff] 0.0
        %523 = vst [vmem:[#allocation2 + $0x438] sm:$0xff] 0.0
        %524 = vst [vmem:[#allocation2 + $0x440] sm:$0xff] 0.0
        %525 = vst [vmem:[#allocation2 + $0x448] sm:$0xff] 0.0
        %526 = vst [vmem:[#allocation2 + $0x30] sm:$0xff] 0.0
        %527 = vst [vmem:[#allocation2 + $0x38] sm:$0xff] 0.0
        %528 = vst [vmem:[#allocation2 + $0x40] sm:$0xff] 0.0
        %529 = vst [vmem:[#allocation2 + $0x78] sm:$0xff] 0.0
        %530 = vst [vmem:[#allocation2 + $0x80] sm:$0xff] 0.0
        %531 = vst [vmem:[#allocation2 + $0x88] sm:$0xff] 0.0
        %532 = vst [vmem:[#allocation2 + $0xc0] sm:$0xff] 0.0
        %533 = vst [vmem:[#allocation2 + $0xc8] sm:$0xff] 0.0
        %534 = vst [vmem:[#allocation2 + $0xd0] sm:$0xff] 0.0
        %535 = vst [vmem:[#allocation2 + $0x108] sm:$0xff] 0.0
        %536 = vst [vmem:[#allocation2 + $0x110] sm:$0xff] 0.0
        %537 = vst [vmem:[#allocation2 + $0x118] sm:$0xff] 0.0
        %538 = vst [vmem:[#allocation2 + $0x150] sm:$0xff] 0.0
        %539 = vst [vmem:[#allocation2 + $0x158] sm:$0xff] 0.0
        %540 = vst [vmem:[#allocation2 + $0x160] sm:$0xff] 0.0
        %541 = vst [vmem:[#allocation2 + $0x198] sm:$0xff] 0.0
        %542 = vst [vmem:[#allocation2 + $0x1a0] sm:$0xff] 0.0
        %543 = vst [vmem:[#allocation2 + $0x1a8] sm:$0xff] 0.0
        %544 = vst [vmem:[#allocation2 + $0x1e0] sm:$0xff] 0.0
        %545 = vst [vmem:[#allocation2 + $0x1e8] sm:$0xff] 0.0
        %546 = vst [vmem:[#allocation2 + $0x1f0] sm:$0xff] 0.0
        %547 = vst [vmem:[#allocation2 + $0x228] sm:$0xff] 0.0
        %548 = vst [vmem:[#allocation2 + $0x230] sm:$0xff] 0.0
        %549 = vst [vmem:[#allocation2 + $0x238] sm:$0xff] 0.0
        %550 = vst [vmem:[#allocation2 + $0x270] sm:$0xff] 0.0
        %551 = vst [vmem:[#allocation2 + $0x278] sm:$0xff] 0.0
        %552 = vst [vmem:[#allocation2 + $0x280] sm:$0xff] 0.0
        %553 = vst [vmem:[#allocation2 + $0x2b8] sm:$0xff] 0.0
        %554 = vst [vmem:[#allocation2 + $0x2c0] sm:$0xff] 0.0
        %555 = vst [vmem:[#allocation2 + $0x2c8] sm:$0xff] 0.0
        %556 = vst [vmem:[#allocation2 + $0x300] sm:$0xff] 0.0
        %557 = vst [vmem:[#allocation2 + $0x308] sm:$0xff] 0.0
        %558 = vst [vmem:[#allocation2 + $0x310] sm:$0xff] 0.0
        %559 = vst [vmem:[#allocation2 + $0x348] sm:$0xff] 0.0
        %560 = vst [vmem:[#allocation2 + $0x350] sm:$0xff] 0.0
        %561 = vst [vmem:[#allocation2 + $0x358] sm:$0xff] 0.0
        %562 = vst [vmem:[#allocation2 + $0x390] sm:$0xff] 0.0
        %563 = vst [vmem:[#allocation2 + $0x398] sm:$0xff] 0.0
        %564 = vst [vmem:[#allocation2 + $0x3a0] sm:$0xff] 0.0
        %565 = vst [vmem:[#allocation2 + $0x3d8] sm:$0xff] 0.0
        %566 = vst [vmem:[#allocation2 + $0x3e0] sm:$0xff] 0.0
        %567 = vst [vmem:[#allocation2 + $0x3e8] sm:$0xff] 0.0
        %568 = vst [vmem:[#allocation2 + $0x420] sm:$0xff] 0.0
        %569 = vst [vmem:[#allocation2 + $0x428] sm:$0xff] 0.0
        %570 = vst [vmem:[#allocation2 + $0x430] sm:$0xff] 0.0
        %571 = vst [vmem:[#allocation2 + $0x468] sm:$0xff] 0.0
        %572 = vst [vmem:[#allocation2 + $0x470] sm:$0xff] 0.0
        %573 = vst [vmem:[#allocation2 + $0x478] sm:$0xff] 0.0
        %574 = vst [vmem:[#allocation2 + $0x18] sm:$0xff] 0.0
        %575 = vst [vmem:[#allocation2 + $0x20] sm:$0xff] 0.0
        %576 = vst [vmem:[#allocation2 + $0x28] sm:$0xff] 0.0
        %s577 = scalar_lea.vmem [#allocation2], 1080
        %578 = vst [vmem:[%s577 + $0x18] sm:$0xff] 0.0
        %579 = vst [vmem:[%s577 + $0x20] sm:$0xff] 0.0
        %580 = vst [vmem:[%s577 + $0x28] sm:$0xff] 0.0
        %v581 = vld [vmem:[%s424] sm:$0xff]
        %v582 = vld [vmem:[%s424 + $0x8] sm:$0xff]
        %v583 = vld [vmem:[%s424 + $0x10] sm:$0xff]
        %v584 = vld [vmem:[%s424 + $0x18] sm:$0x3f]
        %v585 = vld [vmem:[%s424 + $0x20] sm:$0x3f]
        %v586 = vld [vmem:[%s424 + $0x28] sm:$0x3f]
        %v587 = vld [vmem:[%s424 + $0x30] sm:$0xff]
        %v588 = vld [vmem:[%s424 + $0x38] sm:$0xff]
        %v589 = vld [vmem:[%s424 + $0x40] sm:$0xff]
        %v590 = vld [vmem:[%s424 + $0x48] sm:$0x3f]
        %v591 = vld [vmem:[%s424 + $0x50] sm:$0x3f]
        %v592 = vld [vmem:[%s424 + $0x58] sm:$0x3f]
        %v593 = vld [vmem:[%s424 + $0x60] sm:$0xff]
        %v594 = vld [vmem:[%s424 + $0x68] sm:$0xff]
        %v595 = vld [vmem:[%s424 + $0x70] sm:$0xff]
        %v596 = vld [vmem:[%s424 + $0x78] sm:$0x3f]
        %v597 = vld [vmem:[%s424 + $0x80] sm:$0x3f]
        %v598 = vld [vmem:[%s424 + $0x88] sm:$0x3f]
        %v599 = vld [vmem:[%s424 + $0x90] sm:$0xff]
        %v600 = vld [vmem:[%s424 + $0x98] sm:$0xff]
        %v601 = vld [vmem:[%s424 + $0xa0] sm:$0xff]
        %v602 = vld [vmem:[%s424 + $0xa8] sm:$0x3f]
        %v603 = vld [vmem:[%s424 + $0xb0] sm:$0x3f]
        %v604 = vld [vmem:[%s424 + $0xb8] sm:$0x3f]
        %v605 = vld [vmem:[%s424 + $0xc0] sm:$0xff]
        %v606 = vld [vmem:[%s424 + $0xc8] sm:$0xff]
        %v607 = vld [vmem:[%s424 + $0xd0] sm:$0xff]
        %v608 = vld [vmem:[%s424 + $0xd8] sm:$0x3f]
        %v609 = vld [vmem:[%s424 + $0xe0] sm:$0x3f]
        %v610 = vld [vmem:[%s424 + $0xe8] sm:$0x3f]
        %v611 = vld [vmem:[%s424 + $0xf0] sm:$0xff]
        %v612 = vld [vmem:[%s424 + $0xf8] sm:$0xff]
        %v613 = vld [vmem:[%s424 + $0x100] sm:$0xff]
        %v614 = vld [vmem:[%s424 + $0x108] sm:$0x3f]
        %v615 = vld [vmem:[%s424 + $0x110] sm:$0x3f]
        %v616 = vld [vmem:[%s424 + $0x118] sm:$0x3f]
        %v617 = vld [vmem:[%s424 + $0x120] sm:$0xff]
        %v618 = vld [vmem:[%s424 + $0x128] sm:$0xff]
        %v619 = vld [vmem:[%s424 + $0x130] sm:$0xff]
        %v620 = vld [vmem:[%s424 + $0x138] sm:$0x3f]
        %v621 = vld [vmem:[%s424 + $0x140] sm:$0x3f]
        %v622 = vld [vmem:[%s424 + $0x148] sm:$0x3f]
        %v623 = vld [vmem:[%s424 + $0x150] sm:$0xff]
        %v624 = vld [vmem:[%s424 + $0x158] sm:$0xff]
        %v625 = vld [vmem:[%s424 + $0x160] sm:$0xff]
        %v626 = vld [vmem:[%s424 + $0x168] sm:$0x3f]
        %v627 = vld [vmem:[%s424 + $0x170] sm:$0x3f]
        %v628 = vld [vmem:[%s424 + $0x178] sm:$0x3f]
        %v629 = vld [vmem:[%s424 + $0x180] sm:$0xff]
        %v630 = vld [vmem:[%s424 + $0x188] sm:$0xff]
        %v631 = vld [vmem:[%s424 + $0x190] sm:$0xff]
        %v632 = vld [vmem:[%s424 + $0x198] sm:$0x3f]
        %v633 = vld [vmem:[%s424 + $0x1a0] sm:$0x3f]
        %v634 = vld [vmem:[%s424 + $0x1a8] sm:$0x3f]
        %v635 = vld [vmem:[%s424 + $0x1b0] sm:$0xff]
        %v636 = vld [vmem:[%s424 + $0x1b8] sm:$0xff]
        %v637 = vld [vmem:[%s424 + $0x1c0] sm:$0xff]
        %v638 = vld [vmem:[%s424 + $0x1c8] sm:$0x3f]
        %v639 = vld [vmem:[%s424 + $0x1d0] sm:$0x3f]
        %v640 = vld [vmem:[%s424 + $0x1d8] sm:$0x3f]
        %v641 = vld [vmem:[%s424 + $0x1e0] sm:$0xff]
        %v642 = vld [vmem:[%s424 + $0x1e8] sm:$0xff]
        %v643 = vld [vmem:[%s424 + $0x1f0] sm:$0xff]
        %v644 = vld [vmem:[%s424 + $0x1f8] sm:$0x3f]
        %v645 = vld [vmem:[%s424 + $0x200] sm:$0x3f]
        %v646 = vld [vmem:[%s424 + $0x208] sm:$0x3f]
        %v647 = vld [vmem:[%s424 + $0x210] sm:$0xff]
        %v648 = vld [vmem:[%s424 + $0x218] sm:$0xff]
        %v649 = vld [vmem:[%s424 + $0x220] sm:$0xff]
        %v650 = vld [vmem:[%s424 + $0x228] sm:$0x3f]
        %v651 = vld [vmem:[%s424 + $0x230] sm:$0x3f]
        %v652 = vld [vmem:[%s424 + $0x238] sm:$0x3f]
        %v653 = vld [vmem:[%s424 + $0x240] sm:$0xff]
        %v654 = vld [vmem:[%s424 + $0x248] sm:$0xff]
        %v655 = vld [vmem:[%s424 + $0x250] sm:$0xff]
        %v656 = vld [vmem:[%s424 + $0x258] sm:$0x3f]
        %v657 = vld [vmem:[%s424 + $0x260] sm:$0x3f]
        %v658 = vld [vmem:[%s424 + $0x268] sm:$0x3f]
        %v659 = vld [vmem:[%s424 + $0x270] sm:$0xff]
        %v660 = vld [vmem:[%s424 + $0x278] sm:$0xff]
        %v661 = vld [vmem:[%s424 + $0x280] sm:$0xff]
        %v662 = vld [vmem:[%s424 + $0x288] sm:$0x3f]
        %v663 = vld [vmem:[%s424 + $0x290] sm:$0x3f]
        %v664 = vld [vmem:[%s424 + $0x298] sm:$0x3f]
        %s665 = scalar_lea.vmem [#allocation2], 72
        %666 = vst [vmem:[%s665 + $0x18] sm:$0xff] %v581
        %667 = vst [vmem:[%s665 + $0x20] sm:$0xff] %v582
        %668 = vst [vmem:[%s665 + $0x28] sm:$0xff] %v583
        %669 = vst [vmem:[%s665 + $0x30] sm:$0x3f] %v584
        %670 = vst [vmem:[%s665 + $0x38] sm:$0x3f] %v585
        %671 = vst [vmem:[%s665 + $0x40] sm:$0x3f] %v586
        %672 = vst [vmem:[%s665 + $0x60] sm:$0xff] %v587
        %673 = vst [vmem:[%s665 + $0x68] sm:$0xff] %v588
        %674 = vst [vmem:[%s665 + $0x70] sm:$0xff] %v589
        %675 = vst [vmem:[%s665 + $0x78] sm:$0x3f] %v590
        %676 = vst [vmem:[%s665 + $0x80] sm:$0x3f] %v591
        %677 = vst [vmem:[%s665 + $0x88] sm:$0x3f] %v592
        %678 = vst [vmem:[%s665 + $0xa8] sm:$0xff] %v593
        %679 = vst [vmem:[%s665 + $0xb0] sm:$0xff] %v594
        %680 = vst [vmem:[%s665 + $0xb8] sm:$0xff] %v595
        %681 = vst [vmem:[%s665 + $0xc0] sm:$0x3f] %v596
        %682 = vst [vmem:[%s665 + $0xc8] sm:$0x3f] %v597
        %683 = vst [vmem:[%s665 + $0xd0] sm:$0x3f] %v598
        %684 = vst [vmem:[%s665 + $0xf0] sm:$0xff] %v599
        %685 = vst [vmem:[%s665 + $0xf8] sm:$0xff] %v600
        %686 = vst [vmem:[%s665 + $0x100] sm:$0xff] %v601
        %687 = vst [vmem:[%s665 + $0x108] sm:$0x3f] %v602
        %688 = vst [vmem:[%s665 + $0x110] sm:$0x3f] %v603
        %689 = vst [vmem:[%s665 + $0x118] sm:$0x3f] %v604
        %690 = vst [vmem:[%s665 + $0x138] sm:$0xff] %v605
        %691 = vst [vmem:[%s665 + $0x140] sm:$0xff] %v606
        %692 = vst [vmem:[%s665 + $0x148] sm:$0xff] %v607
        %693 = vst [vmem:[%s665 + $0x150] sm:$0x3f] %v608
        %694 = vst [vmem:[%s665 + $0x158] sm:$0x3f] %v609
        %695 = vst [vmem:[%s665 + $0x160] sm:$0x3f] %v610
        %696 = vst [vmem:[%s665 + $0x180] sm:$0xff] %v611
        %697 = vst [vmem:[%s665 + $0x188] sm:$0xff] %v612
        %698 = vst [vmem:[%s665 + $0x190] sm:$0xff] %v613
        %699 = vst [vmem:[%s665 + $0x198] sm:$0x3f] %v614
        %700 = vst [vmem:[%s665 + $0x1a0] sm:$0x3f] %v615
        %701 = vst [vmem:[%s665 + $0x1a8] sm:$0x3f] %v616
        %702 = vst [vmem:[%s665 + $0x1c8] sm:$0xff] %v617
        %703 = vst [vmem:[%s665 + $0x1d0] sm:$0xff] %v618
        %704 = vst [vmem:[%s665 + $0x1d8] sm:$0xff] %v619
        %705 = vst [vmem:[%s665 + $0x1e0] sm:$0x3f] %v620
        %706 = vst [vmem:[%s665 + $0x1e8] sm:$0x3f] %v621
        %707 = vst [vmem:[%s665 + $0x1f0] sm:$0x3f] %v622
        %708 = vst [vmem:[%s665 + $0x210] sm:$0xff] %v623
        %709 = vst [vmem:[%s665 + $0x218] sm:$0xff] %v624
        %710 = vst [vmem:[%s665 + $0x220] sm:$0xff] %v625
        %711 = vst [vmem:[%s665 + $0x228] sm:$0x3f] %v626
        %712 = vst [vmem:[%s665 + $0x230] sm:$0x3f] %v627
        %713 = vst [vmem:[%s665 + $0x238] sm:$0x3f] %v628
        %714 = vst [vmem:[%s665 + $0x258] sm:$0xff] %v629
        %715 = vst [vmem:[%s665 + $0x260] sm:$0xff] %v630
        %716 = vst [vmem:[%s665 + $0x268] sm:$0xff] %v631
        %717 = vst [vmem:[%s665 + $0x270] sm:$0x3f] %v632
        %718 = vst [vmem:[%s665 + $0x278] sm:$0x3f] %v633
        %719 = vst [vmem:[%s665 + $0x280] sm:$0x3f] %v634
        %720 = vst [vmem:[%s665 + $0x2a0] sm:$0xff] %v635
        %721 = vst [vmem:[%s665 + $0x2a8] sm:$0xff] %v636
        %722 = vst [vmem:[%s665 + $0x2b0] sm:$0xff] %v637
        %723 = vst [vmem:[%s665 + $0x2b8] sm:$0x3f] %v638
        %724 = vst [vmem:[%s665 + $0x2c0] sm:$0x3f] %v639
        %725 = vst [vmem:[%s665 + $0x2c8] sm:$0x3f] %v640
        %726 = vst [vmem:[%s665 + $0x2e8] sm:$0xff] %v641
        %727 = vst [vmem:[%s665 + $0x2f0] sm:$0xff] %v642
        %728 = vst [vmem:[%s665 + $0x2f8] sm:$0xff] %v643
        %729 = vst [vmem:[%s665 + $0x300] sm:$0x3f] %v644
        %730 = vst [vmem:[%s665 + $0x308] sm:$0x3f] %v645
        %731 = vst [vmem:[%s665 + $0x310] sm:$0x3f] %v646
        %732 = vst [vmem:[%s665 + $0x330] sm:$0xff] %v647
        %733 = vst [vmem:[%s665 + $0x338] sm:$0xff] %v648
        %734 = vst [vmem:[%s665 + $0x340] sm:$0xff] %v649
        %735 = vst [vmem:[%s665 + $0x348] sm:$0x3f] %v650
        %736 = vst [vmem:[%s665 + $0x350] sm:$0x3f] %v651
        %737 = vst [vmem:[%s665 + $0x358] sm:$0x3f] %v652
        %738 = vst [vmem:[%s665 + $0x378] sm:$0xff] %v653
        %739 = vst [vmem:[%s665 + $0x380] sm:$0xff] %v654
        %740 = vst [vmem:[%s665 + $0x388] sm:$0xff] %v655
        %741 = vst [vmem:[%s665 + $0x390] sm:$0x3f] %v656
        %742 = vst [vmem:[%s665 + $0x398] sm:$0x3f] %v657
        %743 = vst [vmem:[%s665 + $0x3a0] sm:$0x3f] %v658
        %744 = vst [vmem:[%s665 + $0x3c0] sm:$0xff] %v659
        %745 = vst [vmem:[%s665 + $0x3c8] sm:$0xff] %v660
        %746 = vst [vmem:[%s665 + $0x3d0] sm:$0xff] %v661
        %747 = vst [vmem:[%s665 + $0x3d8] sm:$0x3f] %v662
        %748 = vst [vmem:[%s665 + $0x3e0] sm:$0x3f] %v663
        %749 = vst [vmem:[%s665 + $0x3e8] sm:$0x3f] %v664
        %v750 = vld [vmem:[#allocation2] sm:$0xff]
        %v751 = vld [vmem:[#allocation2 + $0x8] sm:$0xff]
        %v752 = vld [vmem:[#allocation2 + $0x10] sm:$0xff]
        %v753 = vld [vmem:[#allocation2 + $0x18] sm:$0xff]
        %v754 = vld [vmem:[#allocation2 + $0x20] sm:$0xff]
        %v755 = vld [vmem:[#allocation2 + $0x28] sm:$0xff]
        %v756 = vld [vmem:[#allocation2 + $0x30] sm:$0xff]
        %v757 = vld [vmem:[#allocation2 + $0x38] sm:$0xff]
        %v758 = vld [vmem:[#allocation2 + $0x40] sm:$0xff]
        %v759 = vld [vmem:[#allocation2 + $0x48] sm:$0xff]
        %v760 = vld [vmem:[#allocation2 + $0x50] sm:$0xff]
        %v761 = vld [vmem:[#allocation2 + $0x58] sm:$0xff]
        %v762 = vld [vmem:[#allocation2 + $0x60] sm:$0xff]
        %v763 = vld [vmem:[#allocation2 + $0x68] sm:$0xff]
        %v764 = vld [vmem:[#allocation2 + $0x70] sm:$0xff]
        %v765 = vld [vmem:[#allocation2 + $0x78] sm:$0xff]
        %v766 = vld [vmem:[#allocation2 + $0x80] sm:$0xff]
        %v767 = vld [vmem:[#allocation2 + $0x88] sm:$0xff]
        %v768 = vld [vmem:[#allocation2 + $0x90] sm:$0xff]
        %v769 = vld [vmem:[#allocation2 + $0x98] sm:$0xff]
        %v770 = vld [vmem:[#allocation2 + $0xa0] sm:$0xff]
        %v771 = vld [vmem:[#allocation2 + $0xa8] sm:$0xff]
        %v772 = vld [vmem:[#allocation2 + $0xb0] sm:$0xff]
        %v773 = vld [vmem:[#allocation2 + $0xb8] sm:$0xff]
        %v774 = vld [vmem:[#allocation2 + $0xc0] sm:$0xff]
        %v775 = vld [vmem:[#allocation2 + $0xc8] sm:$0xff]
        %v776 = vld [vmem:[#allocation2 + $0xd0] sm:$0xff]
        %v777 = vld [vmem:[#allocation2 + $0xd8] sm:$0xff]
        %v778 = vld [vmem:[#allocation2 + $0xe0] sm:$0xff]
        %v779 = vld [vmem:[#allocation2 + $0xe8] sm:$0xff]
        %v780 = vld [vmem:[#allocation2 + $0xf0] sm:$0xff]
        %v781 = vld [vmem:[#allocation2 + $0xf8] sm:$0xff]
        %v782 = vld [vmem:[#allocation2 + $0x100] sm:$0xff]
        %v783 = vld [vmem:[#allocation2 + $0x108] sm:$0xff]
        %v784 = vld [vmem:[#allocation2 + $0x110] sm:$0xff]
        %v785 = vld [vmem:[#allocation2 + $0x118] sm:$0xff]
        %v786 = vld [vmem:[#allocation2 + $0x120] sm:$0xff]
        %v787 = vld [vmem:[#allocation2 + $0x128] sm:$0xff]
        %v788 = vld [vmem:[#allocation2 + $0x130] sm:$0xff]
        %v789 = vld [vmem:[#allocation2 + $0x138] sm:$0xff]
        %v790 = vld [vmem:[#allocation2 + $0x140] sm:$0xff]
        %v791 = vld [vmem:[#allocation2 + $0x148] sm:$0xff]
        %v792 = vld [vmem:[#allocation2 + $0x150] sm:$0xff]
        %v793 = vld [vmem:[#allocation2 + $0x158] sm:$0xff]
        %v794 = vld [vmem:[#allocation2 + $0x160] sm:$0xff]
        %v795 = vld [vmem:[#allocation2 + $0x168] sm:$0xff]
        %v796 = vld [vmem:[#allocation2 + $0x170] sm:$0xff]
        %v797 = vld [vmem:[#allocation2 + $0x178] sm:$0xff]
        %v798 = vld [vmem:[#allocation2 + $0x180] sm:$0xff]
        %v799 = vld [vmem:[#allocation2 + $0x188] sm:$0xff]
        %v800 = vld [vmem:[#allocation2 + $0x190] sm:$0xff]
        %v801 = vld [vmem:[#allocation2 + $0x198] sm:$0xff]
        %v802 = vld [vmem:[#allocation2 + $0x1a0] sm:$0xff]
        %v803 = vld [vmem:[#allocation2 + $0x1a8] sm:$0xff]
        %v804 = vld [vmem:[#allocation2 + $0x1b0] sm:$0xff]
        %v805 = vld [vmem:[#allocation2 + $0x1b8] sm:$0xff]
        %v806 = vld [vmem:[#allocation2 + $0x1c0] sm:$0xff]
        %v807 = vld [vmem:[#allocation2 + $0x1c8] sm:$0xff]
        %v808 = vld [vmem:[#allocation2 + $0x1d0] sm:$0xff]
        %v809 = vld [vmem:[#allocation2 + $0x1d8] sm:$0xff]
        %v810 = vld [vmem:[#allocation2 + $0x1e0] sm:$0xff]
        %v811 = vld [vmem:[#allocation2 + $0x1e8] sm:$0xff]
        %v812 = vld [vmem:[#allocation2 + $0x1f0] sm:$0xff]
        %v813 = vld [vmem:[#allocation2 + $0x1f8] sm:$0xff]
        %v814 = vld [vmem:[#allocation2 + $0x200] sm:$0xff]
        %v815 = vld [vmem:[#allocation2 + $0x208] sm:$0xff]
        %v816 = vld [vmem:[#allocation2 + $0x210] sm:$0xff]
        %v817 = vld [vmem:[#allocation2 + $0x218] sm:$0xff]
        %v818 = vld [vmem:[#allocation2 + $0x220] sm:$0xff]
        %v819 = vld [vmem:[#allocation2 + $0x228] sm:$0xff]
        %v820 = vld [vmem:[#allocation2 + $0x230] sm:$0xff]
        %v821 = vld [vmem:[#allocation2 + $0x238] sm:$0xff]
        %v822 = vld [vmem:[#allocation2 + $0x240] sm:$0xff]
        %v823 = vld [vmem:[#allocation2 + $0x248] sm:$0xff]
        %v824 = vld [vmem:[#allocation2 + $0x250] sm:$0xff]
        %v825 = vld [vmem:[#allocation2 + $0x258] sm:$0xff]
        %v826 = vld [vmem:[#allocation2 + $0x260] sm:$0xff]
        %v827 = vld [vmem:[#allocation2 + $0x268] sm:$0xff]
        %v828 = vld [vmem:[#allocation2 + $0x270] sm:$0xff]
        %v829 = vld [vmem:[#allocation2 + $0x278] sm:$0xff]
        %v830 = vld [vmem:[#allocation2 + $0x280] sm:$0xff]
        %v831 = vld [vmem:[#allocation2 + $0x288] sm:$0xff]
        %v832 = vld [vmem:[#allocation2 + $0x290] sm:$0xff]
        %v833 = vld [vmem:[#allocation2 + $0x298] sm:$0xff]
        %v834 = vld [vmem:[#allocation2 + $0x2a0] sm:$0xff]
        %v835 = vld [vmem:[#allocation2 + $0x2a8] sm:$0xff]
        %v836 = vld [vmem:[#allocation2 + $0x2b0] sm:$0xff]
        %v837 = vld [vmem:[#allocation2 + $0x2b8] sm:$0xff]
        %v838 = vld [vmem:[#allocation2 + $0x2c0] sm:$0xff]
        %v839 = vld [vmem:[#allocation2 + $0x2c8] sm:$0xff]
        %v840 = vld [vmem:[#allocation2 + $0x2d0] sm:$0xff]
        %v841 = vld [vmem:[#allocation2 + $0x2d8] sm:$0xff]
        %v842 = vld [vmem:[#allocation2 + $0x2e0] sm:$0xff]
        %v843 = vld [vmem:[#allocation2 + $0x2e8] sm:$0xff]
        %v844 = vld [vmem:[#allocation2 + $0x2f0] sm:$0xff]
        %v845 = vld [vmem:[#allocation2 + $0x2f8] sm:$0xff]
        %v846 = vld [vmem:[#allocation2 + $0x300] sm:$0xff]
        %v847 = vld [vmem:[#allocation2 + $0x308] sm:$0xff]
        %v848 = vld [vmem:[#allocation2 + $0x310] sm:$0xff]
        %v849 = vld [vmem:[#allocation2 + $0x318] sm:$0xff]
        %v850 = vld [vmem:[#allocation2 + $0x320] sm:$0xff]
        %v851 = vld [vmem:[#allocation2 + $0x328] sm:$0xff]
        %v852 = vld [vmem:[#allocation2 + $0x330] sm:$0xff]
        %v853 = vld [vmem:[#allocation2 + $0x338] sm:$0xff]
        %v854 = vld [vmem:[#allocation2 + $0x340] sm:$0xff]
        %v855 = vld [vmem:[#allocation2 + $0x348] sm:$0xff]
        %v856 = vld [vmem:[#allocation2 + $0x350] sm:$0xff]
        %v857 = vld [vmem:[#allocation2 + $0x358] sm:$0xff]
        %v858 = vld [vmem:[#allocation2 + $0x360] sm:$0xff]
        %v859 = vld [vmem:[#allocation2 + $0x368] sm:$0xff]
        %v860 = vld [vmem:[#allocation2 + $0x370] sm:$0xff]
        %v861 = vld [vmem:[#allocation2 + $0x378] sm:$0xff]
        %v862 = vld [vmem:[#allocation2 + $0x380] sm:$0xff]
        %v863 = vld [vmem:[#allocation2 + $0x388] sm:$0xff]
        %v864 = vld [vmem:[#allocation2 + $0x390] sm:$0xff]
        %v865 = vld [vmem:[#allocation2 + $0x398] sm:$0xff]
        %v866 = vld [vmem:[#allocation2 + $0x3a0] sm:$0xff]
        %v867 = vld [vmem:[#allocation2 + $0x3a8] sm:$0xff]
        %v868 = vld [vmem:[#allocation2 + $0x3b0] sm:$0xff]
        %v869 = vld [vmem:[#allocation2 + $0x3b8] sm:$0xff]
        %v870 = vld [vmem:[#allocation2 + $0x3c0] sm:$0xff]
        %v871 = vld [vmem:[#allocation2 + $0x3c8] sm:$0xff]
        %v872 = vld [vmem:[#allocation2 + $0x3d0] sm:$0xff]
        %v873 = vld [vmem:[#allocation2 + $0x3d8] sm:$0xff]
        %v874 = vld [vmem:[#allocation2 + $0x3e0] sm:$0xff]
        %v875 = vld [vmem:[#allocation2 + $0x3e8] sm:$0xff]
        %v876 = vld [vmem:[#allocation2 + $0x3f0] sm:$0xff]
        %v877 = vld [vmem:[#allocation2 + $0x3f8] sm:$0xff]
        %v878 = vld [vmem:[#allocation2 + $0x400] sm:$0xff]
        %v879 = vld [vmem:[#allocation2 + $0x408] sm:$0xff]
        %v880 = vld [vmem:[#allocation2 + $0x410] sm:$0xff]
        %v881 = vld [vmem:[#allocation2 + $0x418] sm:$0xff]
        %v882 = vld [vmem:[#allocation2 + $0x420] sm:$0xff]
        %v883 = vld [vmem:[#allocation2 + $0x428] sm:$0xff]
        %v884 = vld [vmem:[#allocation2 + $0x430] sm:$0xff]
        %v885 = vld [vmem:[#allocation2 + $0x438] sm:$0xff]
        %v886 = vld [vmem:[#allocation2 + $0x440] sm:$0xff]
        %v887 = vld [vmem:[#allocation2 + $0x448] sm:$0xff]
        %v888 = vld [vmem:[#allocation2 + $0x450] sm:$0xff]
        %v889 = vld [vmem:[#allocation2 + $0x458] sm:$0xff]
        %v890 = vld [vmem:[#allocation2 + $0x460] sm:$0xff]
        %v891 = vld [vmem:[#allocation2 + $0x468] sm:$0xff]
        %v892 = vld [vmem:[#allocation2 + $0x470] sm:$0xff]
        %v893 = vld [vmem:[#allocation2 + $0x478] sm:$0xff]
        %vm1038 = vcmask 1040384
        %v1039 = vrot.slane %v750, 7
        %v1040 = vrot.slane %v753, 7
        %v1041 = vsel %vm1038, %v1039, %v1040
        %v1042 = vrot.slane %v751, 7
        %v1043 = vrot.slane %v754, 7
        %v1044 = vsel %vm1038, %v1042, %v1043
        %v1045 = vrot.slane %v752, 7
        %v1046 = vrot.slane %v755, 7
        %v1047 = vsel %vm1038, %v1045, %v1046
        %v1048 = vrot.slane %v756, 7
        %v1049 = vsel %vm1038, %v1040, %v1048
        %v1050 = vrot.slane %v757, 7
        %v1051 = vsel %vm1038, %v1043, %v1050
        %v1052 = vrot.slane %v758, 7
        %v1053 = vsel %vm1038, %v1046, %v1052
        %v1054 = vrot.slane %v759, 7
        %v1055 = vrot.slane %v762, 7
        %v1056 = vsel %vm1038, %v1054, %v1055
        %v1057 = vrot.slane %v760, 7
        %v1058 = vrot.slane %v763, 7
        %v1059 = vsel %vm1038, %v1057, %v1058
        %v1060 = vrot.slane %v761, 7
        %v1061 = vrot.slane %v764, 7
        %v1062 = vsel %vm1038, %v1060, %v1061
        %v1063 = vrot.slane %v765, 7
        %v1064 = vsel %vm1038, %v1055, %v1063
        %v1065 = vrot.slane %v766, 7
        %v1066 = vsel %vm1038, %v1058, %v1065
        %v1067 = vrot.slane %v767, 7
        %v1068 = vsel %vm1038, %v1061, %v1067
        %v1069 = vrot.slane %v768, 7
        %v1070 = vrot.slane %v771, 7
        %v1071 = vsel %vm1038, %v1069, %v1070
        %v1072 = vrot.slane %v769, 7
        %v1073 = vrot.slane %v772, 7
        %v1074 = vsel %vm1038, %v1072, %v1073
        %v1075 = vrot.slane %v770, 7
        %v1076 = vrot.slane %v773, 7
        %v1077 = vsel %vm1038, %v1075, %v1076
        %v1078 = vrot.slane %v774, 7
        %v1079 = vsel %vm1038, %v1070, %v1078
        %v1080 = vrot.slane %v775, 7
        %v1081 = vsel %vm1038, %v1073, %v1080
        %v1082 = vrot.slane %v776, 7
        %v1083 = vsel %vm1038, %v1076, %v1082
        %v1084 = vrot.slane %v777, 7
        %v1085 = vrot.slane %v780, 7
        %v1086 = vsel %vm1038, %v1084, %v1085
        %v1087 = vrot.slane %v778, 7
        %v1088 = vrot.slane %v781, 7
        %v1089 = vsel %vm1038, %v1087, %v1088
        %v1090 = vrot.slane %v779, 7
        %v1091 = vrot.slane %v782, 7
        %v1092 = vsel %vm1038, %v1090, %v1091
        %v1093 = vrot.slane %v783, 7
        %v1094 = vsel %vm1038, %v1085, %v1093
        %v1095 = vrot.slane %v784, 7
        %v1096 = vsel %vm1038, %v1088, %v1095
        %v1097 = vrot.slane %v785, 7
        %v1098 = vsel %vm1038, %v1091, %v1097
        %v1099 = vrot.slane %v786, 7
        %v1100 = vrot.slane %v789, 7
        %v1101 = vsel %vm1038, %v1099, %v1100
        %v1102 = vrot.slane %v787, 7
        %v1103 = vrot.slane %v790, 7
        %v1104 = vsel %vm1038, %v1102, %v1103
        %v1105 = vrot.slane %v788, 7
        %v1106 = vrot.slane %v791, 7
        %v1107 = vsel %vm1038, %v1105, %v1106
        %v1108 = vrot.slane %v792, 7
        %v1109 = vsel %vm1038, %v1100, %v1108
        %v1110 = vrot.slane %v793, 7
        %v1111 = vsel %vm1038, %v1103, %v1110
        %v1112 = vrot.slane %v794, 7
        %v1113 = vsel %vm1038, %v1106, %v1112
        %v1114 = vrot.slane %v795, 7
        %v1115 = vrot.slane %v798, 7
        %v1116 = vsel %vm1038, %v1114, %v1115
        %v1117 = vrot.slane %v796, 7
        %v1118 = vrot.slane %v799, 7
        %v1119 = vsel %vm1038, %v1117, %v1118
        %v1120 = vrot.slane %v797, 7
        %v1121 = vrot.slane %v800, 7
        %v1122 = vsel %vm1038, %v1120, %v1121
        %v1123 = vrot.slane %v801, 7
        %v1124 = vsel %vm1038, %v1115, %v1123
        %v1125 = vrot.slane %v802, 7
        %v1126 = vsel %vm1038, %v1118, %v1125
        %v1127 = vrot.slane %v803, 7
        %v1128 = vsel %vm1038, %v1121, %v1127
        %v1129 = vrot.slane %v804, 7
        %v1130 = vrot.slane %v807, 7
        %v1131 = vsel %vm1038, %v1129, %v1130
        %v1132 = vrot.slane %v805, 7
        %v1133 = vrot.slane %v808, 7
        %v1134 = vsel %vm1038, %v1132, %v1133
        %v1135 = vrot.slane %v806, 7
        %v1136 = vrot.slane %v809, 7
        %v1137 = vsel %vm1038, %v1135, %v1136
        %v1138 = vrot.slane %v810, 7
        %v1139 = vsel %vm1038, %v1130, %v1138
        %v1140 = vrot.slane %v811, 7
        %v1141 = vsel %vm1038, %v1133, %v1140
        %v1142 = vrot.slane %v812, 7
        %v1143 = vsel %vm1038, %v1136, %v1142
        %v1144 = vrot.slane %v813, 7
        %v1145 = vrot.slane %v816, 7
        %v1146 = vsel %vm1038, %v1144, %v1145
        %v1147 = vrot.slane %v814, 7
        %v1148 = vrot.slane %v817, 7
        %v1149 = vsel %vm1038, %v1147, %v1148
        %v1150 = vrot.slane %v815, 7
        %v1151 = vrot.slane %v818, 7
        %v1152 = vsel %vm1038, %v1150, %v1151
        %v1153 = vrot.slane %v819, 7
        %v1154 = vsel %vm1038, %v1145, %v1153
        %v1155 = vrot.slane %v820, 7
        %v1156 = vsel %vm1038, %v1148, %v1155
        %v1157 = vrot.slane %v821, 7
        %v1158 = vsel %vm1038, %v1151, %v1157
        %v1159 = vrot.slane %v822, 7
        %v1160 = vrot.slane %v825, 7
        %v1161 = vsel %vm1038, %v1159, %v1160
        %v1162 = vrot.slane %v823, 7
        %v1163 = vrot.slane %v826, 7
        %v1164 = vsel %vm1038, %v1162, %v1163
        %v1165 = vrot.slane %v824, 7
        %v1166 = vrot.slane %v827, 7
        %v1167 = vsel %vm1038, %v1165, %v1166
        %v1168 = vrot.slane %v828, 7
        %v1169 = vsel %vm1038, %v1160, %v1168
        %v1170 = vrot.slane %v829, 7
        %v1171 = vsel %vm1038, %v1163, %v1170
        %v1172 = vrot.slane %v830, 7
        %v1173 = vsel %vm1038, %v1166, %v1172
        %v1174 = vrot.slane %v831, 7
        %v1175 = vrot.slane %v834, 7
        %v1176 = vsel %vm1038, %v1174, %v1175
        %v1177 = vrot.slane %v832, 7
        %v1178 = vrot.slane %v835, 7
        %v1179 = vsel %vm1038, %v1177, %v1178
        %v1180 = vrot.slane %v833, 7
        %v1181 = vrot.slane %v836, 7
        %v1182 = vsel %vm1038, %v1180, %v1181
        %v1183 = vrot.slane %v837, 7
        %v1184 = vsel %vm1038, %v1175, %v1183
        %v1185 = vrot.slane %v838, 7
        %v1186 = vsel %vm1038, %v1178, %v1185
        %v1187 = vrot.slane %v839, 7
        %v1188 = vsel %vm1038, %v1181, %v1187
        %v1189 = vrot.slane %v840, 7
        %v1190 = vrot.slane %v843, 7
        %v1191 = vsel %vm1038, %v1189, %v1190
        %v1192 = vrot.slane %v841, 7
        %v1193 = vrot.slane %v844, 7
        %v1194 = vsel %vm1038, %v1192, %v1193
        %v1195 = vrot.slane %v842, 7
        %v1196 = vrot.slane %v845, 7
        %v1197 = vsel %vm1038, %v1195, %v1196
        %v1198 = vrot.slane %v846, 7
        %v1199 = vsel %vm1038, %v1190, %v1198
        %v1200 = vrot.slane %v847, 7
        %v1201 = vsel %vm1038, %v1193, %v1200
        %v1202 = vrot.slane %v848, 7
        %v1203 = vsel %vm1038, %v1196, %v1202
        %v1204 = vrot.slane %v849, 7
        %v1205 = vrot.slane %v852, 7
        %v1206 = vsel %vm1038, %v1204, %v1205
        %v1207 = vrot.slane %v850, 7
        %v1208 = vrot.slane %v853, 7
        %v1209 = vsel %vm1038, %v1207, %v1208
        %v1210 = vrot.slane %v851, 7
        %v1211 = vrot.slane %v854, 7
        %v1212 = vsel %vm1038, %v1210, %v1211
        %v1213 = vrot.slane %v855, 7
        %v1214 = vsel %vm1038, %v1205, %v1213
        %v1215 = vrot.slane %v856, 7
        %v1216 = vsel %vm1038, %v1208, %v1215
        %v1217 = vrot.slane %v857, 7
        %v1218 = vsel %vm1038, %v1211, %v1217
        %v1219 = vrot.slane %v858, 7
        %v1220 = vrot.slane %v861, 7
        %v1221 = vsel %vm1038, %v1219, %v1220
        %v1222 = vrot.slane %v859, 7
        %v1223 = vrot.slane %v862, 7
        %v1224 = vsel %vm1038, %v1222, %v1223
        %v1225 = vrot.slane %v860, 7
        %v1226 = vrot.slane %v863, 7
        %v1227 = vsel %vm1038, %v1225, %v1226
        %v1228 = vrot.slane %v864, 7
        %v1229 = vsel %vm1038, %v1220, %v1228
        %v1230 = vrot.slane %v865, 7
        %v1231 = vsel %vm1038, %v1223, %v1230
        %v1232 = vrot.slane %v866, 7
        %v1233 = vsel %vm1038, %v1226, %v1232
        %v1234 = vrot.slane %v867, 7
        %v1235 = vrot.slane %v870, 7
        %v1236 = vsel %vm1038, %v1234, %v1235
        %v1237 = vrot.slane %v868, 7
        %v1238 = vrot.slane %v871, 7
        %v1239 = vsel %vm1038, %v1237, %v1238
        %v1240 = vrot.slane %v869, 7
        %v1241 = vrot.slane %v872, 7
        %v1242 = vsel %vm1038, %v1240, %v1241
        %v1243 = vrot.slane %v873, 7
        %v1244 = vsel %vm1038, %v1235, %v1243
        %v1245 = vrot.slane %v874, 7
        %v1246 = vsel %vm1038, %v1238, %v1245
        %v1247 = vrot.slane %v875, 7
        %v1248 = vsel %vm1038, %v1241, %v1247
        %v1249 = vrot.slane %v876, 7
        %v1250 = vrot.slane %v879, 7
        %v1251 = vsel %vm1038, %v1249, %v1250
        %v1252 = vrot.slane %v877, 7
        %v1253 = vrot.slane %v880, 7
        %v1254 = vsel %vm1038, %v1252, %v1253
        %v1255 = vrot.slane %v878, 7
        %v1256 = vrot.slane %v881, 7
        %v1257 = vsel %vm1038, %v1255, %v1256
        %v1258 = vrot.slane %v882, 7
        %v1259 = vsel %vm1038, %v1250, %v1258
        %v1260 = vrot.slane %v883, 7
        %v1261 = vsel %vm1038, %v1253, %v1260
        %v1262 = vrot.slane %v884, 7
        %v1263 = vsel %vm1038, %v1256, %v1262
        %v1264 = vrot.slane %v885, 7
        %v1265 = vrot.slane %v888, 7
        %v1266 = vsel %vm1038, %v1264, %v1265
        %v1267 = vrot.slane %v886, 7
        %v1268 = vrot.slane %v889, 7
        %v1269 = vsel %vm1038, %v1267, %v1268
        %v1270 = vrot.slane %v887, 7
        %v1271 = vrot.slane %v890, 7
        %v1272 = vsel %vm1038, %v1270, %v1271
        %v1273 = vrot.slane %v891, 7
        %v1274 = vsel %vm1038, %v1265, %v1273
        %v1275 = vrot.slane %v892, 7
        %v1276 = vsel %vm1038, %v1268, %v1275
        %v1277 = vrot.slane %v893, 7
        %v1278 = vsel %vm1038, %v1271, %v1277
        %1375 = vst [vmem:[#allocation3] sm:$0xff] %v1041
        %1376 = vst [vmem:[#allocation3 + $0x8] sm:$0xff] %v1044
        %1377 = vst [vmem:[#allocation3 + $0x10] sm:$0xff] %v1047
        %1378 = vst [vmem:[#allocation3 + $0x18] sm:$0x3f] %v1049
        %1379 = vst [vmem:[#allocation3 + $0x20] sm:$0x3f] %v1051
        %1380 = vst [vmem:[#allocation3 + $0x28] sm:$0x3f] %v1053
        %1381 = vst [vmem:[#allocation3 + $0x30] sm:$0xff] %v1056
        %1382 = vst [vmem:[#allocation3 + $0x38] sm:$0xff] %v1059
        %1383 = vst [vmem:[#allocation3 + $0x40] sm:$0xff] %v1062
        %1384 = vst [vmem:[#allocation3 + $0x48] sm:$0x3f] %v1064
        %1385 = vst [vmem:[#allocation3 + $0x50] sm:$0x3f] %v1066
        %1386 = vst [vmem:[#allocation3 + $0x58] sm:$0x3f] %v1068
        %1387 = vst [vmem:[#allocation3 + $0x60] sm:$0xff] %v1071
        %1388 = vst [vmem:[#allocation3 + $0x68] sm:$0xff] %v1074
        %1389 = vst [vmem:[#allocation3 + $0x70] sm:$0xff] %v1077
        %1390 = vst [vmem:[#allocation3 + $0x78] sm:$0x3f] %v1079
        %1391 = vst [vmem:[#allocation3 + $0x80] sm:$0x3f] %v1081
        %1392 = vst [vmem:[#allocation3 + $0x88] sm:$0x3f] %v1083
        %1393 = vst [vmem:[#allocation3 + $0x90] sm:$0xff] %v1086
        %1394 = vst [vmem:[#allocation3 + $0x98] sm:$0xff] %v1089
        %1395 = vst [vmem:[#allocation3 + $0xa0] sm:$0xff] %v1092
        %1396 = vst [vmem:[#allocation3 + $0xa8] sm:$0x3f] %v1094
        %1397 = vst [vmem:[#allocation3 + $0xb0] sm:$0x3f] %v1096
        %1398 = vst [vmem:[#allocation3 + $0xb8] sm:$0x3f] %v1098
        %1399 = vst [vmem:[#allocation3 + $0xc0] sm:$0xff] %v1101
        %1400 = vst [vmem:[#allocation3 + $0xc8] sm:$0xff] %v1104
        %1401 = vst [vmem:[#allocation3 + $0xd0] sm:$0xff] %v1107
        %1402 = vst [vmem:[#allocation3 + $0xd8] sm:$0x3f] %v1109
        %1403 = vst [vmem:[#allocation3 + $0xe0] sm:$0x3f] %v1111
        %1404 = vst [vmem:[#allocation3 + $0xe8] sm:$0x3f] %v1113
        %1405 = vst [vmem:[#allocation3 + $0xf0] sm:$0xff] %v1116
        %1406 = vst [vmem:[#allocation3 + $0xf8] sm:$0xff] %v1119
        %1407 = vst [vmem:[#allocation3 + $0x100] sm:$0xff] %v1122
        %1408 = vst [vmem:[#allocation3 + $0x108] sm:$0x3f] %v1124
        %1409 = vst [vmem:[#allocation3 + $0x110] sm:$0x3f] %v1126
        %1410 = vst [vmem:[#allocation3 + $0x118] sm:$0x3f] %v1128
        %1411 = vst [vmem:[#allocation3 + $0x120] sm:$0xff] %v1131
        %1412 = vst [vmem:[#allocation3 + $0x128] sm:$0xff] %v1134
        %1413 = vst [vmem:[#allocation3 + $0x130] sm:$0xff] %v1137
        %1414 = vst [vmem:[#allocation3 + $0x138] sm:$0x3f] %v1139
        %1415 = vst [vmem:[#allocation3 + $0x140] sm:$0x3f] %v1141
        %1416 = vst [vmem:[#allocation3 + $0x148] sm:$0x3f] %v1143
        %1417 = vst [vmem:[#allocation3 + $0x150] sm:$0xff] %v1146
        %1418 = vst [vmem:[#allocation3 + $0x158] sm:$0xff] %v1149
        %1419 = vst [vmem:[#allocation3 + $0x160] sm:$0xff] %v1152
        %1420 = vst [vmem:[#allocation3 + $0x168] sm:$0x3f] %v1154
        %1421 = vst [vmem:[#allocation3 + $0x170] sm:$0x3f] %v1156
        %1422 = vst [vmem:[#allocation3 + $0x178] sm:$0x3f] %v1158
        %1423 = vst [vmem:[#allocation3 + $0x180] sm:$0xff] %v1161
        %1424 = vst [vmem:[#allocation3 + $0x188] sm:$0xff] %v1164
        %1425 = vst [vmem:[#allocation3 + $0x190] sm:$0xff] %v1167
        %1426 = vst [vmem:[#allocation3 + $0x198] sm:$0x3f] %v1169
        %1427 = vst [vmem:[#allocation3 + $0x1a0] sm:$0x3f] %v1171
        %1428 = vst [vmem:[#allocation3 + $0x1a8] sm:$0x3f] %v1173
        %1429 = vst [vmem:[#allocation3 + $0x1b0] sm:$0xff] %v1176
        %1430 = vst [vmem:[#allocation3 + $0x1b8] sm:$0xff] %v1179
        %1431 = vst [vmem:[#allocation3 + $0x1c0] sm:$0xff] %v1182
        %1432 = vst [vmem:[#allocation3 + $0x1c8] sm:$0x3f] %v1184
        %1433 = vst [vmem:[#allocation3 + $0x1d0] sm:$0x3f] %v1186
        %1434 = vst [vmem:[#allocation3 + $0x1d8] sm:$0x3f] %v1188
        %1435 = vst [vmem:[#allocation3 + $0x1e0] sm:$0xff] %v1191
        %1436 = vst [vmem:[#allocation3 + $0x1e8] sm:$0xff] %v1194
        %1437 = vst [vmem:[#allocation3 + $0x1f0] sm:$0xff] %v1197
        %1438 = vst [vmem:[#allocation3 + $0x1f8] sm:$0x3f] %v1199
        %1439 = vst [vmem:[#allocation3 + $0x200] sm:$0x3f] %v1201
        %1440 = vst [vmem:[#allocation3 + $0x208] sm:$0x3f] %v1203
        %1441 = vst [vmem:[#allocation3 + $0x210] sm:$0xff] %v1206
        %1442 = vst [vmem:[#allocation3 + $0x218] sm:$0xff] %v1209
        %1443 = vst [vmem:[#allocation3 + $0x220] sm:$0xff] %v1212
        %1444 = vst [vmem:[#allocation3 + $0x228] sm:$0x3f] %v1214
        %1445 = vst [vmem:[#allocation3 + $0x230] sm:$0x3f] %v1216
        %1446 = vst [vmem:[#allocation3 + $0x238] sm:$0x3f] %v1218
        %1447 = vst [vmem:[#allocation3 + $0x240] sm:$0xff] %v1221
        %1448 = vst [vmem:[#allocation3 + $0x248] sm:$0xff] %v1224
        %1449 = vst [vmem:[#allocation3 + $0x250] sm:$0xff] %v1227
        %1450 = vst [vmem:[#allocation3 + $0x258] sm:$0x3f] %v1229
        %1451 = vst [vmem:[#allocation3 + $0x260] sm:$0x3f] %v1231
        %1452 = vst [vmem:[#allocation3 + $0x268] sm:$0x3f] %v1233
        %1453 = vst [vmem:[#allocation3 + $0x270] sm:$0xff] %v1236
        %1454 = vst [vmem:[#allocation3 + $0x278] sm:$0xff] %v1239
        %1455 = vst [vmem:[#allocation3 + $0x280] sm:$0xff] %v1242
        %1456 = vst [vmem:[#allocation3 + $0x288] sm:$0x3f] %v1244
        %1457 = vst [vmem:[#allocation3 + $0x290] sm:$0x3f] %v1246
        %1458 = vst [vmem:[#allocation3 + $0x298] sm:$0x3f] %v1248
        %1459 = vst [vmem:[#allocation3 + $0x2a0] sm:$0xff] %v1251
        %1460 = vst [vmem:[#allocation3 + $0x2a8] sm:$0xff] %v1254
        %1461 = vst [vmem:[#allocation3 + $0x2b0] sm:$0xff] %v1257
        %1462 = vst [vmem:[#allocation3 + $0x2b8] sm:$0x3f] %v1259
        %1463 = vst [vmem:[#allocation3 + $0x2c0] sm:$0x3f] %v1261
        %1464 = vst [vmem:[#allocation3 + $0x2c8] sm:$0x3f] %v1263
        %1465 = vst [vmem:[#allocation3 + $0x2d0] sm:$0xff] %v1266
        %1466 = vst [vmem:[#allocation3 + $0x2d8] sm:$0xff] %v1269
        %1467 = vst [vmem:[#allocation3 + $0x2e0] sm:$0xff] %v1272
        %1468 = vst [vmem:[#allocation3 + $0x2e8] sm:$0x3f] %v1274
        %1469 = vst [vmem:[#allocation3 + $0x2f0] sm:$0x3f] %v1276
        %1470 = vst [vmem:[#allocation3 + $0x2f8] sm:$0x3f] %v1278
        %vm1471 = vcmask 1046528
        %v1472 = vrot.slane %v753, 1
        %v1473 = vrot.slane %v756, 1
        %v1474 = vsel %vm1471, %v1472, %v1473
        %v1475 = vrot.slane %v754, 1
        %v1476 = vrot.slane %v757, 1
        %v1477 = vsel %vm1471, %v1475, %v1476
        %v1478 = vrot.slane %v755, 1
        %v1479 = vrot.slane %v758, 1
        %v1480 = vsel %vm1471, %v1478, %v1479
        %v1481 = vrot.slane %v762, 1
        %v1482 = vrot.slane %v765, 1
        %v1483 = vsel %vm1471, %v1481, %v1482
        %v1484 = vrot.slane %v763, 1
        %v1485 = vrot.slane %v766, 1
        %v1486 = vsel %vm1471, %v1484, %v1485
        %v1487 = vrot.slane %v764, 1
        %v1488 = vrot.slane %v767, 1
        %v1489 = vsel %vm1471, %v1487, %v1488
        %v1490 = vrot.slane %v771, 1
        %v1491 = vrot.slane %v774, 1
        %v1492 = vsel %vm1471, %v1490, %v1491
        %v1493 = vrot.slane %v772, 1
        %v1494 = vrot.slane %v775, 1
        %v1495 = vsel %vm1471, %v1493, %v1494
        %v1496 = vrot.slane %v773, 1
        %v1497 = vrot.slane %v776, 1
        %v1498 = vsel %vm1471, %v1496, %v1497
        %v1499 = vrot.slane %v780, 1
        %v1500 = vrot.slane %v783, 1
        %v1501 = vsel %vm1471, %v1499, %v1500
        %v1502 = vrot.slane %v781, 1
        %v1503 = vrot.slane %v784, 1
        %v1504 = vsel %vm1471, %v1502, %v1503
        %v1505 = vrot.slane %v782, 1
        %v1506 = vrot.slane %v785, 1
        %v1507 = vsel %vm1471, %v1505, %v1506
        %v1508 = vrot.slane %v789, 1
        %v1509 = vrot.slane %v792, 1
        %v1510 = vsel %vm1471, %v1508, %v1509
        %v1511 = vrot.slane %v790, 1
        %v1512 = vrot.slane %v793, 1
        %v1513 = vsel %vm1471, %v1511, %v1512
        %v1514 = vrot.slane %v791, 1
        %v1515 = vrot.slane %v794, 1
        %v1516 = vsel %vm1471, %v1514, %v1515
        %v1517 = vrot.slane %v798, 1
        %v1518 = vrot.slane %v801, 1
        %v1519 = vsel %vm1471, %v1517, %v1518
        %v1520 = vrot.slane %v799, 1
        %v1521 = vrot.slane %v802, 1
        %v1522 = vsel %vm1471, %v1520, %v1521
        %v1523 = vrot.slane %v800, 1
        %v1524 = vrot.slane %v803, 1
        %v1525 = vsel %vm1471, %v1523, %v1524
        %v1526 = vrot.slane %v807, 1
        %v1527 = vrot.slane %v810, 1
        %v1528 = vsel %vm1471, %v1526, %v1527
        %v1529 = vrot.slane %v808, 1
        %v1530 = vrot.slane %v811, 1
        %v1531 = vsel %vm1471, %v1529, %v1530
        %v1532 = vrot.slane %v809, 1
        %v1533 = vrot.slane %v812, 1
        %v1534 = vsel %vm1471, %v1532, %v1533
        %v1535 = vrot.slane %v816, 1
        %v1536 = vrot.slane %v819, 1
        %v1537 = vsel %vm1471, %v1535, %v1536
        %v1538 = vrot.slane %v817, 1
        %v1539 = vrot.slane %v820, 1
        %v1540 = vsel %vm1471, %v1538, %v1539
        %v1541 = vrot.slane %v818, 1
        %v1542 = vrot.slane %v821, 1
        %v1543 = vsel %vm1471, %v1541, %v1542
        %v1544 = vrot.slane %v825, 1
        %v1545 = vrot.slane %v828, 1
        %v1546 = vsel %vm1471, %v1544, %v1545
        %v1547 = vrot.slane %v826, 1
        %v1548 = vrot.slane %v829, 1
        %v1549 = vsel %vm1471, %v1547, %v1548
        %v1550 = vrot.slane %v827, 1
        %v1551 = vrot.slane %v830, 1
        %v1552 = vsel %vm1471, %v1550, %v1551
        %v1553 = vrot.slane %v834, 1
        %v1554 = vrot.slane %v837, 1
        %v1555 = vsel %vm1471, %v1553, %v1554
        %v1556 = vrot.slane %v835, 1
        %v1557 = vrot.slane %v838, 1
        %v1558 = vsel %vm1471, %v1556, %v1557
        %v1559 = vrot.slane %v836, 1
        %v1560 = vrot.slane %v839, 1
        %v1561 = vsel %vm1471, %v1559, %v1560
        %v1562 = vrot.slane %v843, 1
        %v1563 = vrot.slane %v846, 1
        %v1564 = vsel %vm1471, %v1562, %v1563
        %v1565 = vrot.slane %v844, 1
        %v1566 = vrot.slane %v847, 1
        %v1567 = vsel %vm1471, %v1565, %v1566
        %v1568 = vrot.slane %v845, 1
        %v1569 = vrot.slane %v848, 1
        %v1570 = vsel %vm1471, %v1568, %v1569
        %v1571 = vrot.slane %v852, 1
        %v1572 = vrot.slane %v855, 1
        %v1573 = vsel %vm1471, %v1571, %v1572
        %v1574 = vrot.slane %v853, 1
        %v1575 = vrot.slane %v856, 1
        %v1576 = vsel %vm1471, %v1574, %v1575
        %v1577 = vrot.slane %v854, 1
        %v1578 = vrot.slane %v857, 1
        %v1579 = vsel %vm1471, %v1577, %v1578
        %v1580 = vrot.slane %v861, 1
        %v1581 = vrot.slane %v864, 1
        %v1582 = vsel %vm1471, %v1580, %v1581
        %v1583 = vrot.slane %v862, 1
        %v1584 = vrot.slane %v865, 1
        %v1585 = vsel %vm1471, %v1583, %v1584
        %v1586 = vrot.slane %v863, 1
        %v1587 = vrot.slane %v866, 1
        %v1588 = vsel %vm1471, %v1586, %v1587
        %v1589 = vrot.slane %v870, 1
        %v1590 = vrot.slane %v873, 1
        %v1591 = vsel %vm1471, %v1589, %v1590
        %v1592 = vrot.slane %v871, 1
        %v1593 = vrot.slane %v874, 1
        %v1594 = vsel %vm1471, %v1592, %v1593
        %v1595 = vrot.slane %v872, 1
        %v1596 = vrot.slane %v875, 1
        %v1597 = vsel %vm1471, %v1595, %v1596
        %v1598 = vrot.slane %v879, 1
        %v1599 = vrot.slane %v882, 1
        %v1600 = vsel %vm1471, %v1598, %v1599
        %v1601 = vrot.slane %v880, 1
        %v1602 = vrot.slane %v883, 1
        %v1603 = vsel %vm1471, %v1601, %v1602
        %v1604 = vrot.slane %v881, 1
        %v1605 = vrot.slane %v884, 1
        %v1606 = vsel %vm1471, %v1604, %v1605
        %v1607 = vrot.slane %v888, 1
        %v1608 = vrot.slane %v891, 1
        %v1609 = vsel %vm1471, %v1607, %v1608
        %v1610 = vrot.slane %v889, 1
        %v1611 = vrot.slane %v892, 1
        %v1612 = vsel %vm1471, %v1610, %v1611
        %v1613 = vrot.slane %v890, 1
        %v1614 = vrot.slane %v893, 1
        %v1615 = vsel %vm1471, %v1613, %v1614
        %s1712 = scalar_lea.vmem [#allocation3], 768
        %1713 = vst [vmem:[%s1712] sm:$0xff] %v1474
        %1714 = vst [vmem:[%s1712 + $0x8] sm:$0xff] %v1477
        %1715 = vst [vmem:[%s1712 + $0x10] sm:$0xff] %v1480
        %1716 = vst [vmem:[%s1712 + $0x18] sm:$0x3f] %v1473
        %1717 = vst [vmem:[%s1712 + $0x20] sm:$0x3f] %v1476
        %1718 = vst [vmem:[%s1712 + $0x28] sm:$0x3f] %v1479
        %1719 = vst [vmem:[%s1712 + $0x30] sm:$0xff] %v1483
        %1720 = vst [vmem:[%s1712 + $0x38] sm:$0xff] %v1486
        %1721 = vst [vmem:[%s1712 + $0x40] sm:$0xff] %v1489
        %1722 = vst [vmem:[%s1712 + $0x48] sm:$0x3f] %v1482
        %1723 = vst [vmem:[%s1712 + $0x50] sm:$0x3f] %v1485
        %1724 = vst [vmem:[%s1712 + $0x58] sm:$0x3f] %v1488
        %1725 = vst [vmem:[%s1712 + $0x60] sm:$0xff] %v1492
        %1726 = vst [vmem:[%s1712 + $0x68] sm:$0xff] %v1495
        %1727 = vst [vmem:[%s1712 + $0x70] sm:$0xff] %v1498
        %1728 = vst [vmem:[%s1712 + $0x78] sm:$0x3f] %v1491
        %1729 = vst [vmem:[%s1712 + $0x80] sm:$0x3f] %v1494
        %1730 = vst [vmem:[%s1712 + $0x88] sm:$0x3f] %v1497
        %1731 = vst [vmem:[%s1712 + $0x90] sm:$0xff] %v1501
        %1732 = vst [vmem:[%s1712 + $0x98] sm:$0xff] %v1504
        %1733 = vst [vmem:[%s1712 + $0xa0] sm:$0xff] %v1507
        %1734 = vst [vmem:[%s1712 + $0xa8] sm:$0x3f] %v1500
        %1735 = vst [vmem:[%s1712 + $0xb0] sm:$0x3f] %v1503
        %1736 = vst [vmem:[%s1712 + $0xb8] sm:$0x3f] %v1506
        %1737 = vst [vmem:[%s1712 + $0xc0] sm:$0xff] %v1510
        %1738 = vst [vmem:[%s1712 + $0xc8] sm:$0xff] %v1513
        %1739 = vst [vmem:[%s1712 + $0xd0] sm:$0xff] %v1516
        %1740 = vst [vmem:[%s1712 + $0xd8] sm:$0x3f] %v1509
        %1741 = vst [vmem:[%s1712 + $0xe0] sm:$0x3f] %v1512
        %1742 = vst [vmem:[%s1712 + $0xe8] sm:$0x3f] %v1515
        %1743 = vst [vmem:[%s1712 + $0xf0] sm:$0xff] %v1519
        %1744 = vst [vmem:[%s1712 + $0xf8] sm:$0xff] %v1522
        %1745 = vst [vmem:[%s1712 + $0x100] sm:$0xff] %v1525
        %1746 = vst [vmem:[%s1712 + $0x108] sm:$0x3f] %v1518
        %1747 = vst [vmem:[%s1712 + $0x110] sm:$0x3f] %v1521
        %1748 = vst [vmem:[%s1712 + $0x118] sm:$0x3f] %v1524
        %1749 = vst [vmem:[%s1712 + $0x120] sm:$0xff] %v1528
        %1750 = vst [vmem:[%s1712 + $0x128] sm:$0xff] %v1531
        %1751 = vst [vmem:[%s1712 + $0x130] sm:$0xff] %v1534
        %1752 = vst [vmem:[%s1712 + $0x138] sm:$0x3f] %v1527
        %1753 = vst [vmem:[%s1712 + $0x140] sm:$0x3f] %v1530
        %1754 = vst [vmem:[%s1712 + $0x148] sm:$0x3f] %v1533
        %1755 = vst [vmem:[%s1712 + $0x150] sm:$0xff] %v1537
        %1756 = vst [vmem:[%s1712 + $0x158] sm:$0xff] %v1540
        %1757 = vst [vmem:[%s1712 + $0x160] sm:$0xff] %v1543
        %1758 = vst [vmem:[%s1712 + $0x168] sm:$0x3f] %v1536
        %1759 = vst [vmem:[%s1712 + $0x170] sm:$0x3f] %v1539
        %1760 = vst [vmem:[%s1712 + $0x178] sm:$0x3f] %v1542
        %1761 = vst [vmem:[%s1712 + $0x180] sm:$0xff] %v1546
        %1762 = vst [vmem:[%s1712 + $0x188] sm:$0xff] %v1549
        %1763 = vst [vmem:[%s1712 + $0x190] sm:$0xff] %v1552
        %1764 = vst [vmem:[%s1712 + $0x198] sm:$0x3f] %v1545
        %1765 = vst [vmem:[%s1712 + $0x1a0] sm:$0x3f] %v1548
        %1766 = vst [vmem:[%s1712 + $0x1a8] sm:$0x3f] %v1551
        %1767 = vst [vmem:[%s1712 + $0x1b0] sm:$0xff] %v1555
        %1768 = vst [vmem:[%s1712 + $0x1b8] sm:$0xff] %v1558
        %1769 = vst [vmem:[%s1712 + $0x1c0] sm:$0xff] %v1561
        %1770 = vst [vmem:[%s1712 + $0x1c8] sm:$0x3f] %v1554
        %1771 = vst [vmem:[%s1712 + $0x1d0] sm:$0x3f] %v1557
        %1772 = vst [vmem:[%s1712 + $0x1d8] sm:$0x3f] %v1560
        %1773 = vst [vmem:[%s1712 + $0x1e0] sm:$0xff] %v1564
        %1774 = vst [vmem:[%s1712 + $0x1e8] sm:$0xff] %v1567
        %1775 = vst [vmem:[%s1712 + $0x1f0] sm:$0xff] %v1570
        %1776 = vst [vmem:[%s1712 + $0x1f8] sm:$0x3f] %v1563
        %1777 = vst [vmem:[%s1712 + $0x200] sm:$0x3f] %v1566
        %1778 = vst [vmem:[%s1712 + $0x208] sm:$0x3f] %v1569
        %1779 = vst [vmem:[%s1712 + $0x210] sm:$0xff] %v1573
        %1780 = vst [vmem:[%s1712 + $0x218] sm:$0xff] %v1576
        %1781 = vst [vmem:[%s1712 + $0x220] sm:$0xff] %v1579
        %1782 = vst [vmem:[%s1712 + $0x228] sm:$0x3f] %v1572
        %1783 = vst [vmem:[%s1712 + $0x230] sm:$0x3f] %v1575
        %1784 = vst [vmem:[%s1712 + $0x238] sm:$0x3f] %v1578
        %1785 = vst [vmem:[%s1712 + $0x240] sm:$0xff] %v1582
        %1786 = vst [vmem:[%s1712 + $0x248] sm:$0xff] %v1585
        %1787 = vst [vmem:[%s1712 + $0x250] sm:$0xff] %v1588
        %1788 = vst [vmem:[%s1712 + $0x258] sm:$0x3f] %v1581
        %1789 = vst [vmem:[%s1712 + $0x260] sm:$0x3f] %v1584
        %1790 = vst [vmem:[%s1712 + $0x268] sm:$0x3f] %v1587
        %1791 = vst [vmem:[%s1712 + $0x270] sm:$0xff] %v1591
        %1792 = vst [vmem:[%s1712 + $0x278] sm:$0xff] %v1594
        %1793 = vst [vmem:[%s1712 + $0x280] sm:$0xff] %v1597
        %1794 = vst [vmem:[%s1712 + $0x288] sm:$0x3f] %v1590
        %1795 = vst [vmem:[%s1712 + $0x290] sm:$0x3f] %v1593
        %1796 = vst [vmem:[%s1712 + $0x298] sm:$0x3f] %v1596
        %1797 = vst [vmem:[%s1712 + $0x2a0] sm:$0xff] %v1600
        %1798 = vst [vmem:[%s1712 + $0x2a8] sm:$0xff] %v1603
        %1799 = vst [vmem:[%s1712 + $0x2b0] sm:$0xff] %v1606
        %1800 = vst [vmem:[%s1712 + $0x2b8] sm:$0x3f] %v1599
        %1801 = vst [vmem:[%s1712 + $0x2c0] sm:$0x3f] %v1602
        %1802 = vst [vmem:[%s1712 + $0x2c8] sm:$0x3f] %v1605
        %1803 = vst [vmem:[%s1712 + $0x2d0] sm:$0xff] %v1609
        %1804 = vst [vmem:[%s1712 + $0x2d8] sm:$0xff] %v1612
        %1805 = vst [vmem:[%s1712 + $0x2e0] sm:$0xff] %v1615
        %1806 = vst [vmem:[%s1712 + $0x2e8] sm:$0x3f] %v1608
        %1807 = vst [vmem:[%s1712 + $0x2f0] sm:$0x3f] %v1611
        %1808 = vst [vmem:[%s1712 + $0x2f8] sm:$0x3f] %v1614
        %v1809 = vld [vmem:[%s431] ss:$4 sm:$0x7]
        %s1810 = scalar_lea.vmem %s431, 1 [#allocation5]
        %v1811 = vld [vmem:[%s1810] ss:$4 sm:$0x7]
        %s1812 = scalar_lea.vmem %s431, 2 [#allocation5]
        %v1813 = vld [vmem:[%s1812] ss:$4 sm:$0x7]
        %s1814 = scalar_lea.vmem %s431, 12 [#allocation5]
        %v1815 = vld [vmem:[%s1814] ss:$4 sm:$0x7]
        %s1816 = scalar_lea.vmem %s1814, 1 [#allocation5]
        %v1817 = vld [vmem:[%s1816] ss:$4 sm:$0x7]
        %s1818 = scalar_lea.vmem %s1814, 2 [#allocation5]
        %v1819 = vld [vmem:[%s1818] ss:$4 sm:$0x7]
        %s1820 = scalar_lea.vmem %s431, 24 [#allocation5]
        %v1821 = vld [vmem:[%s1820] ss:$4 sm:$0x7]
        %s1822 = scalar_lea.vmem %s1820, 1 [#allocation5]
        %v1823 = vld [vmem:[%s1822] ss:$4 sm:$0x7]
        %s1824 = scalar_lea.vmem %s1820, 2 [#allocation5]
        %v1825 = vld [vmem:[%s1824] ss:$4 sm:$0x7]
        %v1826 = vld [vmem:[#allocation3] sm:$0xff]
        %v1827 = vld [vmem:[#allocation3 + $0x8] sm:$0xff]
        %v1828 = vld [vmem:[#allocation3 + $0x10] sm:$0xff]
        %v1829 = vld [vmem:[#allocation3 + $0x18] sm:$0x3f]
        %v1830 = vld [vmem:[#allocation3 + $0x20] sm:$0x3f]
        %v1831 = vld [vmem:[#allocation3 + $0x28] sm:$0x3f]
        %v1833 = vlaneseq
        %v1834 = vshrl.u32 %v1833, 7
        %v1835 = vsub.s32 0, %v1834
        %v1836 = vrot.slane %v1809, %v1835
        %v1837 = vlaneseq
        %v1838 = vshrl.u32 %v1837, 7
        %v1839 = vsub.s32 1, %v1838
        %v1840 = vrot.slane %v1809, %v1839
        %v1841 = vlaneseq
        %v1842 = vshrl.u32 %v1841, 7
        %v1843 = vsub.s32 2, %v1842
        %v1844 = vrot.slane %v1809, %v1843
        %v1848 = vmul.f32 %v1826, %v1836
        %v1849 = vmul.f32 %v1827, %v1840
        %v1850 = vmul.f32 %v1828, %v1844
        %v1851 = vmul.f32 %v1829, %v1836
        %v1852 = vmul.f32 %v1830, %v1840
        %v1853 = vmul.f32 %v1831, %v1844
        %v1854 = vld [vmem:[#allocation2 + $0x18] sm:$0xff]
        %v1855 = vld [vmem:[#allocation2 + $0x20] sm:$0xff]
        %v1856 = vld [vmem:[#allocation2 + $0x28] sm:$0xff]
        %v1857 = vld [vmem:[#allocation2 + $0x30] sm:$0x3f]
        %v1858 = vld [vmem:[#allocation2 + $0x38] sm:$0x3f]
        %v1859 = vld [vmem:[#allocation2 + $0x40] sm:$0x3f]
        %v1861 = vlaneseq
        %v1862 = vshrl.u32 %v1861, 7
        %v1863 = vsub.s32 0, %v1862
        %v1864 = vrot.slane %v1811, %v1863
        %v1865 = vlaneseq
        %v1866 = vshrl.u32 %v1865, 7
        %v1867 = vsub.s32 1, %v1866
        %v1868 = vrot.slane %v1811, %v1867
        %v1869 = vlaneseq
        %v1870 = vshrl.u32 %v1869, 7
        %v1871 = vsub.s32 2, %v1870
        %v1872 = vrot.slane %v1811, %v1871
        %v1876 = vmul.f32 %v1854, %v1864
        %v1877 = vmul.f32 %v1855, %v1868
        %v1878 = vmul.f32 %v1856, %v1872
        %v1879 = vmul.f32 %v1857, %v1864
        %v1880 = vmul.f32 %v1858, %v1868
        %v1881 = vmul.f32 %v1859, %v1872
        %v1882 = vadd.f32 %v1848, %v1876
        %v1883 = vadd.f32 %v1849, %v1877
        %v1884 = vadd.f32 %v1850, %v1878
        %v1885 = vadd.f32 %v1851, %v1879
        %v1886 = vadd.f32 %v1852, %v1880
        %v1887 = vadd.f32 %v1853, %v1881
        %v1888 = vld [vmem:[%s1712] sm:$0xff]
        %v1889 = vld [vmem:[%s1712 + $0x8] sm:$0xff]
        %v1890 = vld [vmem:[%s1712 + $0x10] sm:$0xff]
        %v1891 = vld [vmem:[%s1712 + $0x18] sm:$0x3f]
        %v1892 = vld [vmem:[%s1712 + $0x20] sm:$0x3f]
        %v1893 = vld [vmem:[%s1712 + $0x28] sm:$0x3f]
        %v1895 = vlaneseq
        %v1896 = vshrl.u32 %v1895, 7
        %v1897 = vsub.s32 0, %v1896
        %v1898 = vrot.slane %v1813, %v1897
        %v1899 = vlaneseq
        %v1900 = vshrl.u32 %v1899, 7
        %v1901 = vsub.s32 1, %v1900
        %v1902 = vrot.slane %v1813, %v1901
        %v1903 = vlaneseq
        %v1904 = vshrl.u32 %v1903, 7
        %v1905 = vsub.s32 2, %v1904
        %v1906 = vrot.slane %v1813, %v1905
        %v1910 = vmul.f32 %v1888, %v1898
        %v1911 = vmul.f32 %v1889, %v1902
        %v1912 = vmul.f32 %v1890, %v1906
        %v1913 = vmul.f32 %v1891, %v1898
        %v1914 = vmul.f32 %v1892, %v1902
        %v1915 = vmul.f32 %v1893, %v1906
        %v1916 = vadd.f32 %v1882, %v1910
        %v1917 = vadd.f32 %v1883, %v1911
        %v1918 = vadd.f32 %v1884, %v1912
        %v1919 = vadd.f32 %v1885, %v1913
        %v1920 = vadd.f32 %v1886, %v1914
        %v1921 = vadd.f32 %v1887, %v1915
        %s1922 = scalar_lea.vmem [#allocation3], 48
        %v1923 = vld [vmem:[%s1922] sm:$0xff]
        %v1924 = vld [vmem:[%s1922 + $0x8] sm:$0xff]
        %v1925 = vld [vmem:[%s1922 + $0x10] sm:$0xff]
        %v1926 = vld [vmem:[%s1922 + $0x18] sm:$0x3f]
        %v1927 = vld [vmem:[%s1922 + $0x20] sm:$0x3f]
        %v1928 = vld [vmem:[%s1922 + $0x28] sm:$0x3f]
        %v1930 = vlaneseq
        %v1931 = vshrl.u32 %v1930, 7
        %v1932 = vsub.s32 0, %v1931
        %v1933 = vrot.slane %v1815, %v1932
        %v1934 = vlaneseq
        %v1935 = vshrl.u32 %v1934, 7
        %v1936 = vsub.s32 1, %v1935
        %v1937 = vrot.slane %v1815, %v1936
        %v1938 = vlaneseq
        %v1939 = vshrl.u32 %v1938, 7
        %v1940 = vsub.s32 2, %v1939
        %v1941 = vrot.slane %v1815, %v1940
        %v1945 = vmul.f32 %v1923, %v1933
        %v1946 = vmul.f32 %v1924, %v1937
        %v1947 = vmul.f32 %v1925, %v1941
        %v1948 = vmul.f32 %v1926, %v1933
        %v1949 = vmul.f32 %v1927, %v1937
        %v1950 = vmul.f32 %v1928, %v1941
        %v1951 = vadd.f32 %v1916, %v1945
        %v1952 = vadd.f32 %v1917, %v1946
        %v1953 = vadd.f32 %v1918, %v1947
        %v1954 = vadd.f32 %v1919, %v1948
        %v1955 = vadd.f32 %v1920, %v1949
        %v1956 = vadd.f32 %v1921, %v1950
        %v1957 = vld [vmem:[%s665 + $0x18] sm:$0xff]
        %v1958 = vld [vmem:[%s665 + $0x20] sm:$0xff]
        %v1959 = vld [vmem:[%s665 + $0x28] sm:$0xff]
        %v1960 = vld [vmem:[%s665 + $0x30] sm:$0x3f]
        %v1961 = vld [vmem:[%s665 + $0x38] sm:$0x3f]
        %v1962 = vld [vmem:[%s665 + $0x40] sm:$0x3f]
        %v1964 = vlaneseq
        %v1965 = vshrl.u32 %v1964, 7
        %v1966 = vsub.s32 0, %v1965
        %v1967 = vrot.slane %v1817, %v1966
        %v1968 = vlaneseq
        %v1969 = vshrl.u32 %v1968, 7
        %v1970 = vsub.s32 1, %v1969
        %v1971 = vrot.slane %v1817, %v1970
        %v1972 = vlaneseq
        %v1973 = vshrl.u32 %v1972, 7
        %v1974 = vsub.s32 2, %v1973
        %v1975 = vrot.slane %v1817, %v1974
        %v1979 = vmul.f32 %v1957, %v1967
        %v1980 = vmul.f32 %v1958, %v1971
        %v1981 = vmul.f32 %v1959, %v1975
        %v1982 = vmul.f32 %v1960, %v1967
        %v1983 = vmul.f32 %v1961, %v1971
        %v1984 = vmul.f32 %v1962, %v1975
        %v1985 = vadd.f32 %v1951, %v1979
        %v1986 = vadd.f32 %v1952, %v1980
        %v1987 = vadd.f32 %v1953, %v1981
        %v1988 = vadd.f32 %v1954, %v1982
        %v1989 = vadd.f32 %v1955, %v1983
        %v1990 = vadd.f32 %v1956, %v1984
        %s1991 = scalar_lea.vmem [#allocation3], 816
        %v1992 = vld [vmem:[%s1991] sm:$0xff]
        %v1993 = vld [vmem:[%s1991 + $0x8] sm:$0xff]
        %v1994 = vld [vmem:[%s1991 + $0x10] sm:$0xff]
        %v1995 = vld [vmem:[%s1991 + $0x18] sm:$0x3f]
        %v1996 = vld [vmem:[%s1991 + $0x20] sm:$0x3f]
        %v1997 = vld [vmem:[%s1991 + $0x28] sm:$0x3f]
        %v1999 = vlaneseq
        %v2000 = vshrl.u32 %v1999, 7
        %v2001 = vsub.s32 0, %v2000
        %v2002 = vrot.slane %v1819, %v2001
        %v2003 = vlaneseq
        %v2004 = vshrl.u32 %v2003, 7
        %v2005 = vsub.s32 1, %v2004
        %v2006 = vrot.slane %v1819, %v2005
        %v2007 = vlaneseq
        %v2008 = vshrl.u32 %v2007, 7
        %v2009 = vsub.s32 2, %v2008
        %v2010 = vrot.slane %v1819, %v2009
        %v2014 = vmul.f32 %v1992, %v2002
        %v2015 = vmul.f32 %v1993, %v2006
        %v2016 = vmul.f32 %v1994, %v2010
        %v2017 = vmul.f32 %v1995, %v2002
        %v2018 = vmul.f32 %v1996, %v2006
        %v2019 = vmul.f32 %v1997, %v2010
        %v2020 = vadd.f32 %v1985, %v2014
        %v2021 = vadd.f32 %v1986, %v2015
        %v2022 = vadd.f32 %v1987, %v2016
        %v2023 = vadd.f32 %v1988, %v2017
        %v2024 = vadd.f32 %v1989, %v2018
        %v2025 = vadd.f32 %v1990, %v2019
        %s2026 = scalar_lea.vmem [#allocation3], 96
        %v2027 = vld [vmem:[%s2026] sm:$0xff]
        %v2028 = vld [vmem:[%s2026 + $0x8] sm:$0xff]
        %v2029 = vld [vmem:[%s2026 + $0x10] sm:$0xff]
        %v2030 = vld [vmem:[%s2026 + $0x18] sm:$0x3f]
        %v2031 = vld [vmem:[%s2026 + $0x20] sm:$0x3f]
        %v2032 = vld [vmem:[%s2026 + $0x28] sm:$0x3f]
        %v2034 = vlaneseq
        %v2035 = vshrl.u32 %v2034, 7
        %v2036 = vsub.s32 0, %v2035
        %v2037 = vrot.slane %v1821, %v2036
        %v2038 = vlaneseq
        %v2039 = vshrl.u32 %v2038, 7
        %v2040 = vsub.s32 1, %v2039
        %v2041 = vrot.slane %v1821, %v2040
        %v2042 = vlaneseq
        %v2043 = vshrl.u32 %v2042, 7
        %v2044 = vsub.s32 2, %v2043
        %v2045 = vrot.slane %v1821, %v2044
        %v2049 = vmul.f32 %v2027, %v2037
        %v2050 = vmul.f32 %v2028, %v2041
        %v2051 = vmul.f32 %v2029, %v2045
        %v2052 = vmul.f32 %v2030, %v2037
        %v2053 = vmul.f32 %v2031, %v2041
        %v2054 = vmul.f32 %v2032, %v2045
        %v2055 = vadd.f32 %v2020, %v2049
        %v2056 = vadd.f32 %v2021, %v2050
        %v2057 = vadd.f32 %v2022, %v2051
        %v2058 = vadd.f32 %v2023, %v2052
        %v2059 = vadd.f32 %v2024, %v2053
        %v2060 = vadd.f32 %v2025, %v2054
        %s2061 = scalar_lea.vmem [#allocation2], 144
        %v2062 = vld [vmem:[%s2061 + $0x18] sm:$0xff]
        %v2063 = vld [vmem:[%s2061 + $0x20] sm:$0xff]
        %v2064 = vld [vmem:[%s2061 + $0x28] sm:$0xff]
        %v2065 = vld [vmem:[%s2061 + $0x30] sm:$0x3f]
        %v2066 = vld [vmem:[%s2061 + $0x38] sm:$0x3f]
        %v2067 = vld [vmem:[%s2061 + $0x40] sm:$0x3f]
        %v2069 = vlaneseq
        %v2070 = vshrl.u32 %v2069, 7
        %v2071 = vsub.s32 0, %v2070
        %v2072 = vrot.slane %v1823, %v2071
        %v2073 = vlaneseq
        %v2074 = vshrl.u32 %v2073, 7
        %v2075 = vsub.s32 1, %v2074
        %v2076 = vrot.slane %v1823, %v2075
        %v2077 = vlaneseq
        %v2078 = vshrl.u32 %v2077, 7
        %v2079 = vsub.s32 2, %v2078
        %v2080 = vrot.slane %v1823, %v2079
        %v2084 = vmul.f32 %v2062, %v2072
        %v2085 = vmul.f32 %v2063, %v2076
        %v2086 = vmul.f32 %v2064, %v2080
        %v2087 = vmul.f32 %v2065, %v2072
        %v2088 = vmul.f32 %v2066, %v2076
        %v2089 = vmul.f32 %v2067, %v2080
        %v2090 = vadd.f32 %v2055, %v2084
        %v2091 = vadd.f32 %v2056, %v2085
        %v2092 = vadd.f32 %v2057, %v2086
        %v2093 = vadd.f32 %v2058, %v2087
        %v2094 = vadd.f32 %v2059, %v2088
        %v2095 = vadd.f32 %v2060, %v2089
        %s2096 = scalar_lea.vmem [#allocation3], 864
        %v2097 = vld [vmem:[%s2096] sm:$0xff]
        %v2098 = vld [vmem:[%s2096 + $0x8] sm:$0xff]
        %v2099 = vld [vmem:[%s2096 + $0x10] sm:$0xff]
        %v2100 = vld [vmem:[%s2096 + $0x18] sm:$0x3f]
        %v2101 = vld [vmem:[%s2096 + $0x20] sm:$0x3f]
        %v2102 = vld [vmem:[%s2096 + $0x28] sm:$0x3f]
        %v2104 = vlaneseq
        %v2105 = vshrl.u32 %v2104, 7
        %v2106 = vsub.s32 0, %v2105
        %v2107 = vrot.slane %v1825, %v2106
        %v2108 = vlaneseq
        %v2109 = vshrl.u32 %v2108, 7
        %v2110 = vsub.s32 1, %v2109
        %v2111 = vrot.slane %v1825, %v2110
        %v2112 = vlaneseq
        %v2113 = vshrl.u32 %v2112, 7
        %v2114 = vsub.s32 2, %v2113
        %v2115 = vrot.slane %v1825, %v2114
        %v2119 = vmul.f32 %v2097, %v2107
        %v2120 = vmul.f32 %v2098, %v2111
        %v2121 = vmul.f32 %v2099, %v2115
        %v2122 = vmul.f32 %v2100, %v2107
        %v2123 = vmul.f32 %v2101, %v2111
        %v2124 = vmul.f32 %v2102, %v2115
        %v2125 = vadd.f32 %v2090, %v2119
        %v2126 = vadd.f32 %v2091, %v2120
        %v2127 = vadd.f32 %v2092, %v2121
        %v2128 = vadd.f32 %v2093, %v2122
        %v2129 = vadd.f32 %v2094, %v2123
        %v2130 = vadd.f32 %v2095, %v2124
        %v2131 = vadd.f32 %v2125, 0.0
        %v2132 = vadd.f32 %v2126, 0.0
        %v2133 = vadd.f32 %v2127, 0.0
        %v2134 = vadd.f32 %v2128, 0.0
        %v2135 = vadd.f32 %v2129, 0.0
        %v2136 = vadd.f32 %v2130, 0.0
        %v2137 = vmul.f32 %v2125, %v2125
        %v2138 = vmul.f32 %v2126, %v2126
        %v2139 = vmul.f32 %v2127, %v2127
        %v2140 = vmul.f32 %v2128, %v2128
        %v2141 = vmul.f32 %v2129, %v2129
        %v2142 = vmul.f32 %v2130, %v2130
        %v2143 = vadd.f32 %v2137, 0.0
        %v2144 = vadd.f32 %v2138, 0.0
        %v2145 = vadd.f32 %v2139, 0.0
        %v2146 = vadd.f32 %v2140, 0.0
        %v2147 = vadd.f32 %v2141, 0.0
        %v2148 = vadd.f32 %v2142, 0.0
        %2149 = vst [vmem:[%s464] sm:$0xff] %v2125
        %2150 = vst [vmem:[%s464 + $0x8] sm:$0xff] %v2126
        %2151 = vst [vmem:[%s464 + $0x10] sm:$0xff] %v2127
        %2152 = vst [vmem:[%s464 + $0x18] sm:$0x3f] %v2128
        %2153 = vst [vmem:[%s464 + $0x20] sm:$0x3f] %v2129
        %2154 = vst [vmem:[%s464 + $0x28] sm:$0x3f] %v2130
        %v2155 = vld [vmem:[%s1922] sm:$0xff]
        %v2156 = vld [vmem:[%s1922 + $0x8] sm:$0xff]
        %v2157 = vld [vmem:[%s1922 + $0x10] sm:$0xff]
        %v2158 = vld [vmem:[%s1922 + $0x18] sm:$0x3f]
        %v2159 = vld [vmem:[%s1922 + $0x20] sm:$0x3f]
        %v2160 = vld [vmem:[%s1922 + $0x28] sm:$0x3f]
        %v2161 = vmul.f32 %v2155, %v1836
        %v2162 = vmul.f32 %v2156, %v1840
        %v2163 = vmul.f32 %v2157, %v1844
        %v2164 = vmul.f32 %v2158, %v1836
        %v2165 = vmul.f32 %v2159, %v1840
        %v2166 = vmul.f32 %v2160, %v1844
        %v2167 = vld [vmem:[%s665 + $0x18] sm:$0xff]
        %v2168 = vld [vmem:[%s665 + $0x20] sm:$0xff]
        %v2169 = vld [vmem:[%s665 + $0x28] sm:$0xff]
        %v2170 = vld [vmem:[%s665 + $0x30] sm:$0x3f]
        %v2171 = vld [vmem:[%s665 + $0x38] sm:$0x3f]
        %v2172 = vld [vmem:[%s665 + $0x40] sm:$0x3f]
        %v2173 = vmul.f32 %v2167, %v1864
        %v2174 = vmul.f32 %v2168, %v1868
        %v2175 = vmul.f32 %v2169, %v1872
        %v2176 = vmul.f32 %v2170, %v1864
        %v2177 = vmul.f32 %v2171, %v1868
        %v2178 = vmul.f32 %v2172, %v1872
        %v2179 = vadd.f32 %v2161, %v2173
        %v2180 = vadd.f32 %v2162, %v2174
        %v2181 = vadd.f32 %v2163, %v2175
        %v2182 = vadd.f32 %v2164, %v2176
        %v2183 = vadd.f32 %v2165, %v2177
        %v2184 = vadd.f32 %v2166, %v2178
        %v2185 = vld [vmem:[%s1991] sm:$0xff]
        %v2186 = vld [vmem:[%s1991 + $0x8] sm:$0xff]
        %v2187 = vld [vmem:[%s1991 + $0x10] sm:$0xff]
        %v2188 = vld [vmem:[%s1991 + $0x18] sm:$0x3f]
        %v2189 = vld [vmem:[%s1991 + $0x20] sm:$0x3f]
        %v2190 = vld [vmem:[%s1991 + $0x28] sm:$0x3f]
        %v2191 = vmul.f32 %v2185, %v1898
        %v2192 = vmul.f32 %v2186, %v1902
        %v2193 = vmul.f32 %v2187, %v1906
        %v2194 = vmul.f32 %v2188, %v1898
        %v2195 = vmul.f32 %v2189, %v1902
        %v2196 = vmul.f32 %v2190, %v1906
        %v2197 = vadd.f32 %v2179, %v2191
        %v2198 = vadd.f32 %v2180, %v2192
        %v2199 = vadd.f32 %v2181, %v2193
        %v2200 = vadd.f32 %v2182, %v2194
        %v2201 = vadd.f32 %v2183, %v2195
        %v2202 = vadd.f32 %v2184, %v2196
        %v2203 = vld [vmem:[%s2026] sm:$0xff]
        %v2204 = vld [vmem:[%s2026 + $0x8] sm:$0xff]
        %v2205 = vld [vmem:[%s2026 + $0x10] sm:$0xff]
        %v2206 = vld [vmem:[%s2026 + $0x18] sm:$0x3f]
        %v2207 = vld [vmem:[%s2026 + $0x20] sm:$0x3f]
        %v2208 = vld [vmem:[%s2026 + $0x28] sm:$0x3f]
        %v2209 = vmul.f32 %v2203, %v1933
        %v2210 = vmul.f32 %v2204, %v1937
        %v2211 = vmul.f32 %v2205, %v1941
        %v2212 = vmul.f32 %v2206, %v1933
        %v2213 = vmul.f32 %v2207, %v1937
        %v2214 = vmul.f32 %v2208, %v1941
        %v2215 = vadd.f32 %v2197, %v2209
        %v2216 = vadd.f32 %v2198, %v2210
        %v2217 = vadd.f32 %v2199, %v2211
        %v2218 = vadd.f32 %v2200, %v2212
        %v2219 = vadd.f32 %v2201, %v2213
        %v2220 = vadd.f32 %v2202, %v2214
        %v2221 = vld [vmem:[%s2061 + $0x18] sm:$0xff]
        %v2222 = vld [vmem:[%s2061 + $0x20] sm:$0xff]
        %v2223 = vld [vmem:[%s2061 + $0x28] sm:$0xff]
        %v2224 = vld [vmem:[%s2061 + $0x30] sm:$0x3f]
        %v2225 = vld [vmem:[%s2061 + $0x38] sm:$0x3f]
        %v2226 = vld [vmem:[%s2061 + $0x40] sm:$0x3f]
        %v2227 = vmul.f32 %v2221, %v1967
        %v2228 = vmul.f32 %v2222, %v1971
        %v2229 = vmul.f32 %v2223, %v1975
        %v2230 = vmul.f32 %v2224, %v1967
        %v2231 = vmul.f32 %v2225, %v1971
        %v2232 = vmul.f32 %v2226, %v1975
        %v2233 = vadd.f32 %v2215, %v2227
        %v2234 = vadd.f32 %v2216, %v2228
        %v2235 = vadd.f32 %v2217, %v2229
        %v2236 = vadd.f32 %v2218, %v2230
        %v2237 = vadd.f32 %v2219, %v2231
        %v2238 = vadd.f32 %v2220, %v2232
        %v2239 = vld [vmem:[%s2096] sm:$0xff]
        %v2240 = vld [vmem:[%s2096 + $0x8] sm:$0xff]
        %v2241 = vld [vmem:[%s2096 + $0x10] sm:$0xff]
        %v2242 = vld [vmem:[%s2096 + $0x18] sm:$0x3f]
        %v2243 = vld [vmem:[%s2096 + $0x20] sm:$0x3f]
        %v2244 = vld [vmem:[%s2096 + $0x28] sm:$0x3f]
        %v2245 = vmul.f32 %v2239, %v2002
        %v2246 = vmul.f32 %v2240, %v2006
        %v2247 = vmul.f32 %v2241, %v2010
        %v2248 = vmul.f32 %v2242, %v2002
        %v2249 = vmul.f32 %v2243, %v2006
        %v2250 = vmul.f32 %v2244, %v2010
        %v2251 = vadd.f32 %v2233, %v2245
        %v2252 = vadd.f32 %v2234, %v2246
        %v2253 = vadd.f32 %v2235, %v2247
        %v2254 = vadd.f32 %v2236, %v2248
        %v2255 = vadd.f32 %v2237, %v2249
        %v2256 = vadd.f32 %v2238, %v2250
        %s2257 = scalar_lea.vmem [#allocation3], 144
        %v2258 = vld [vmem:[%s2257] sm:$0xff]
        %v2259 = vld [vmem:[%s2257 + $0x8] sm:$0xff]
        %v2260 = vld [vmem:[%s2257 + $0x10] sm:$0xff]
        %v2261 = vld [vmem:[%s2257 + $0x18] sm:$0x3f]
        %v2262 = vld [vmem:[%s2257 + $0x20] sm:$0x3f]
        %v2263 = vld [vmem:[%s2257 + $0x28] sm:$0x3f]
        %v2264 = vmul.f32 %v2258, %v2037
        %v2265 = vmul.f32 %v2259, %v2041
        %v2266 = vmul.f32 %v2260, %v2045
        %v2267 = vmul.f32 %v2261, %v2037
        %v2268 = vmul.f32 %v2262, %v2041
        %v2269 = vmul.f32 %v2263, %v2045
        %v2270 = vadd.f32 %v2251, %v2264
        %v2271 = vadd.f32 %v2252, %v2265
        %v2272 = vadd.f32 %v2253, %v2266
        %v2273 = vadd.f32 %v2254, %v2267
        %v2274 = vadd.f32 %v2255, %v2268
        %v2275 = vadd.f32 %v2256, %v2269
        %s2276 = scalar_lea.vmem [#allocation2], 216
        %v2277 = vld [vmem:[%s2276 + $0x18] sm:$0xff]
        %v2278 = vld [vmem:[%s2276 + $0x20] sm:$0xff]
        %v2279 = vld [vmem:[%s2276 + $0x28] sm:$0xff]
        %v2280 = vld [vmem:[%s2276 + $0x30] sm:$0x3f]
        %v2281 = vld [vmem:[%s2276 + $0x38] sm:$0x3f]
        %v2282 = vld [vmem:[%s2276 + $0x40] sm:$0x3f]
        %v2283 = vmul.f32 %v2277, %v2072
        %v2284 = vmul.f32 %v2278, %v2076
        %v2285 = vmul.f32 %v2279, %v2080
        %v2286 = vmul.f32 %v2280, %v2072
        %v2287 = vmul.f32 %v2281, %v2076
        %v2288 = vmul.f32 %v2282, %v2080
        %v2289 = vadd.f32 %v2270, %v2283
        %v2290 = vadd.f32 %v2271, %v2284
        %v2291 = vadd.f32 %v2272, %v2285
        %v2292 = vadd.f32 %v2273, %v2286
        %v2293 = vadd.f32 %v2274, %v2287
        %v2294 = vadd.f32 %v2275, %v2288
        %s2295 = scalar_lea.vmem [#allocation3], 912
        %v2296 = vld [vmem:[%s2295] sm:$0xff]
        %v2297 = vld [vmem:[%s2295 + $0x8] sm:$0xff]
        %v2298 = vld [vmem:[%s2295 + $0x10] sm:$0xff]
        %v2299 = vld [vmem:[%s2295 + $0x18] sm:$0x3f]
        %v2300 = vld [vmem:[%s2295 + $0x20] sm:$0x3f]
        %v2301 = vld [vmem:[%s2295 + $0x28] sm:$0x3f]
        %v2302 = vmul.f32 %v2296, %v2107
        %v2303 = vmul.f32 %v2297, %v2111
        %v2304 = vmul.f32 %v2298, %v2115
        %v2305 = vmul.f32 %v2299, %v2107
        %v2306 = vmul.f32 %v2300, %v2111
        %v2307 = vmul.f32 %v2301, %v2115
        %v2308 = vadd.f32 %v2289, %v2302
        %v2309 = vadd.f32 %v2290, %v2303
        %v2310 = vadd.f32 %v2291, %v2304
        %v2311 = vadd.f32 %v2292, %v2305
        %v2312 = vadd.f32 %v2293, %v2306
        %v2313 = vadd.f32 %v2294, %v2307
        %v2314 = vadd.f32 %v2131, %v2308
        %v2315 = vadd.f32 %v2132, %v2309
        %v2316 = vadd.f32 %v2133, %v2310
        %v2317 = vadd.f32 %v2134, %v2311
        %v2318 = vadd.f32 %v2135, %v2312
        %v2319 = vadd.f32 %v2136, %v2313
        %v2320 = vmul.f32 %v2308, %v2308
        %v2321 = vmul.f32 %v2309, %v2309
        %v2322 = vmul.f32 %v2310, %v2310
        %v2323 = vmul.f32 %v2311, %v2311
        %v2324 = vmul.f32 %v2312, %v2312
        %v2325 = vmul.f32 %v2313, %v2313
        %v2326 = vadd.f32 %v2143, %v2320
        %v2327 = vadd.f32 %v2144, %v2321
        %v2328 = vadd.f32 %v2145, %v2322
        %v2329 = vadd.f32 %v2146, %v2323
        %v2330 = vadd.f32 %v2147, %v2324
        %v2331 = vadd.f32 %v2148, %v2325
        %s2332 = scalar_lea.vmem %s464, 48 [#allocation6]
        %2333 = vst [vmem:[%s2332] sm:$0xff] %v2308
        %2334 = vst [vmem:[%s2332 + $0x8] sm:$0xff] %v2309
        %2335 = vst [vmem:[%s2332 + $0x10] sm:$0xff] %v2310
        %2336 = vst [vmem:[%s2332 + $0x18] sm:$0x3f] %v2311
        %2337 = vst [vmem:[%s2332 + $0x20] sm:$0x3f] %v2312
        %2338 = vst [vmem:[%s2332 + $0x28] sm:$0x3f] %v2313
        %v2339 = vld [vmem:[%s2026] sm:$0xff]
        %v2340 = vld [vmem:[%s2026 + $0x8] sm:$0xff]
        %v2341 = vld [vmem:[%s2026 + $0x10] sm:$0xff]
        %v2342 = vld [vmem:[%s2026 + $0x18] sm:$0x3f]
        %v2343 = vld [vmem:[%s2026 + $0x20] sm:$0x3f]
        %v2344 = vld [vmem:[%s2026 + $0x28] sm:$0x3f]
        %v2345 = vmul.f32 %v2339, %v1836
        %v2346 = vmul.f32 %v2340, %v1840
        %v2347 = vmul.f32 %v2341, %v1844
        %v2348 = vmul.f32 %v2342, %v1836
        %v2349 = vmul.f32 %v2343, %v1840
        %v2350 = vmul.f32 %v2344, %v1844
        %v2351 = vld [vmem:[%s2061 + $0x18] sm:$0xff]
        %v2352 = vld [vmem:[%s2061 + $0x20] sm:$0xff]
        %v2353 = vld [vmem:[%s2061 + $0x28] sm:$0xff]
        %v2354 = vld [vmem:[%s2061 + $0x30] sm:$0x3f]
        %v2355 = vld [vmem:[%s2061 + $0x38] sm:$0x3f]
        %v2356 = vld [vmem:[%s2061 + $0x40] sm:$0x3f]
        %v2357 = vmul.f32 %v2351, %v1864
        %v2358 = vmul.f32 %v2352, %v1868
        %v2359 = vmul.f32 %v2353, %v1872
        %v2360 = vmul.f32 %v2354, %v1864
        %v2361 = vmul.f32 %v2355, %v1868
        %v2362 = vmul.f32 %v2356, %v1872
        %v2363 = vadd.f32 %v2345, %v2357
        %v2364 = vadd.f32 %v2346, %v2358
        %v2365 = vadd.f32 %v2347, %v2359
        %v2366 = vadd.f32 %v2348, %v2360
        %v2367 = vadd.f32 %v2349, %v2361
        %v2368 = vadd.f32 %v2350, %v2362
        %v2369 = vld [vmem:[%s2096] sm:$0xff]
        %v2370 = vld [vmem:[%s2096 + $0x8] sm:$0xff]
        %v2371 = vld [vmem:[%s2096 + $0x10] sm:$0xff]
        %v2372 = vld [vmem:[%s2096 + $0x18] sm:$0x3f]
        %v2373 = vld [vmem:[%s2096 + $0x20] sm:$0x3f]
        %v2374 = vld [vmem:[%s2096 + $0x28] sm:$0x3f]
        %v2375 = vmul.f32 %v2369, %v1898
        %v2376 = vmul.f32 %v2370, %v1902
        %v2377 = vmul.f32 %v2371, %v1906
        %v2378 = vmul.f32 %v2372, %v1898
        %v2379 = vmul.f32 %v2373, %v1902
        %v2380 = vmul.f32 %v2374, %v1906
        %v2381 = vadd.f32 %v2363, %v2375
        %v2382 = vadd.f32 %v2364, %v2376
        %v2383 = vadd.f32 %v2365, %v2377
        %v2384 = vadd.f32 %v2366, %v2378
        %v2385 = vadd.f32 %v2367, %v2379
        %v2386 = vadd.f32 %v2368, %v2380
        %v2387 = vld [vmem:[%s2257] sm:$0xff]
        %v2388 = vld [vmem:[%s2257 + $0x8] sm:$0xff]
        %v2389 = vld [vmem:[%s2257 + $0x10] sm:$0xff]
        %v2390 = vld [vmem:[%s2257 + $0x18] sm:$0x3f]
        %v2391 = vld [vmem:[%s2257 + $0x20] sm:$0x3f]
        %v2392 = vld [vmem:[%s2257 + $0x28] sm:$0x3f]
        %v2393 = vmul.f32 %v2387, %v1933
        %v2394 = vmul.f32 %v2388, %v1937
        %v2395 = vmul.f32 %v2389, %v1941
        %v2396 = vmul.f32 %v2390, %v1933
        %v2397 = vmul.f32 %v2391, %v1937
        %v2398 = vmul.f32 %v2392, %v1941
        %v2399 = vadd.f32 %v2381, %v2393
        %v2400 = vadd.f32 %v2382, %v2394
        %v2401 = vadd.f32 %v2383, %v2395
        %v2402 = vadd.f32 %v2384, %v2396
        %v2403 = vadd.f32 %v2385, %v2397
        %v2404 = vadd.f32 %v2386, %v2398
        %v2405 = vld [vmem:[%s2276 + $0x18] sm:$0xff]
        %v2406 = vld [vmem:[%s2276 + $0x20] sm:$0xff]
        %v2407 = vld [vmem:[%s2276 + $0x28] sm:$0xff]
        %v2408 = vld [vmem:[%s2276 + $0x30] sm:$0x3f]
        %v2409 = vld [vmem:[%s2276 + $0x38] sm:$0x3f]
        %v2410 = vld [vmem:[%s2276 + $0x40] sm:$0x3f]
        %v2411 = vmul.f32 %v2405, %v1967
        %v2412 = vmul.f32 %v2406, %v1971
        %v2413 = vmul.f32 %v2407, %v1975
        %v2414 = vmul.f32 %v2408, %v1967
        %v2415 = vmul.f32 %v2409, %v1971
        %v2416 = vmul.f32 %v2410, %v1975
        %v2417 = vadd.f32 %v2399, %v2411
        %v2418 = vadd.f32 %v2400, %v2412
        %v2419 = vadd.f32 %v2401, %v2413
        %v2420 = vadd.f32 %v2402, %v2414
        %v2421 = vadd.f32 %v2403, %v2415
        %v2422 = vadd.f32 %v2404, %v2416
        %v2423 = vld [vmem:[%s2295] sm:$0xff]
        %v2424 = vld [vmem:[%s2295 + $0x8] sm:$0xff]
        %v2425 = vld [vmem:[%s2295 + $0x10] sm:$0xff]
        %v2426 = vld [vmem:[%s2295 + $0x18] sm:$0x3f]
        %v2427 = vld [vmem:[%s2295 + $0x20] sm:$0x3f]
        %v2428 = vld [vmem:[%s2295 + $0x28] sm:$0x3f]
        %v2429 = vmul.f32 %v2423, %v2002
        %v2430 = vmul.f32 %v2424, %v2006
        %v2431 = vmul.f32 %v2425, %v2010
        %v2432 = vmul.f32 %v2426, %v2002
        %v2433 = vmul.f32 %v2427, %v2006
        %v2434 = vmul.f32 %v2428, %v2010
        %v2435 = vadd.f32 %v2417, %v2429
        %v2436 = vadd.f32 %v2418, %v2430
        %v2437 = vadd.f32 %v2419, %v2431
        %v2438 = vadd.f32 %v2420, %v2432
        %v2439 = vadd.f32 %v2421, %v2433
        %v2440 = vadd.f32 %v2422, %v2434
        %s2441 = scalar_lea.vmem [#allocation3], 192
        %v2442 = vld [vmem:[%s2441] sm:$0xff]
        %v2443 = vld [vmem:[%s2441 + $0x8] sm:$0xff]
        %v2444 = vld [vmem:[%s2441 + $0x10] sm:$0xff]
        %v2445 = vld [vmem:[%s2441 + $0x18] sm:$0x3f]
        %v2446 = vld [vmem:[%s2441 + $0x20] sm:$0x3f]
        %v2447 = vld [vmem:[%s2441 + $0x28] sm:$0x3f]
        %v2448 = vmul.f32 %v2442, %v2037
        %v2449 = vmul.f32 %v2443, %v2041
        %v2450 = vmul.f32 %v2444, %v2045
        %v2451 = vmul.f32 %v2445, %v2037
        %v2452 = vmul.f32 %v2446, %v2041
        %v2453 = vmul.f32 %v2447, %v2045
        %v2454 = vadd.f32 %v2435, %v2448
        %v2455 = vadd.f32 %v2436, %v2449
        %v2456 = vadd.f32 %v2437, %v2450
        %v2457 = vadd.f32 %v2438, %v2451
        %v2458 = vadd.f32 %v2439, %v2452
        %v2459 = vadd.f32 %v2440, %v2453
        %s2460 = scalar_lea.vmem [#allocation2], 288
        %v2461 = vld [vmem:[%s2460 + $0x18] sm:$0xff]
        %v2462 = vld [vmem:[%s2460 + $0x20] sm:$0xff]
        %v2463 = vld [vmem:[%s2460 + $0x28] sm:$0xff]
        %v2464 = vld [vmem:[%s2460 + $0x30] sm:$0x3f]
        %v2465 = vld [vmem:[%s2460 + $0x38] sm:$0x3f]
        %v2466 = vld [vmem:[%s2460 + $0x40] sm:$0x3f]
        %v2467 = vmul.f32 %v2461, %v2072
        %v2468 = vmul.f32 %v2462, %v2076
        %v2469 = vmul.f32 %v2463, %v2080
        %v2470 = vmul.f32 %v2464, %v2072
        %v2471 = vmul.f32 %v2465, %v2076
        %v2472 = vmul.f32 %v2466, %v2080
        %v2473 = vadd.f32 %v2454, %v2467
        %v2474 = vadd.f32 %v2455, %v2468
        %v2475 = vadd.f32 %v2456, %v2469
        %v2476 = vadd.f32 %v2457, %v2470
        %v2477 = vadd.f32 %v2458, %v2471
        %v2478 = vadd.f32 %v2459, %v2472
        %s2479 = scalar_lea.vmem [#allocation3], 960
        %v2480 = vld [vmem:[%s2479] sm:$0xff]
        %v2481 = vld [vmem:[%s2479 + $0x8] sm:$0xff]
        %v2482 = vld [vmem:[%s2479 + $0x10] sm:$0xff]
        %v2483 = vld [vmem:[%s2479 + $0x18] sm:$0x3f]
        %v2484 = vld [vmem:[%s2479 + $0x20] sm:$0x3f]
        %v2485 = vld [vmem:[%s2479 + $0x28] sm:$0x3f]
        %v2486 = vmul.f32 %v2480, %v2107
        %v2487 = vmul.f32 %v2481, %v2111
        %v2488 = vmul.f32 %v2482, %v2115
        %v2489 = vmul.f32 %v2483, %v2107
        %v2490 = vmul.f32 %v2484, %v2111
        %v2491 = vmul.f32 %v2485, %v2115
        %v2492 = vadd.f32 %v2473, %v2486
        %v2493 = vadd.f32 %v2474, %v2487
        %v2494 = vadd.f32 %v2475, %v2488
        %v2495 = vadd.f32 %v2476, %v2489
        %v2496 = vadd.f32 %v2477, %v2490
        %v2497 = vadd.f32 %v2478, %v2491
        %v2498 = vadd.f32 %v2314, %v2492
        %v2499 = vadd.f32 %v2315, %v2493
        %v2500 = vadd.f32 %v2316, %v2494
        %v2501 = vadd.f32 %v2317, %v2495
        %v2502 = vadd.f32 %v2318, %v2496
        %v2503 = vadd.f32 %v2319, %v2497
        %v2504 = vmul.f32 %v2492, %v2492
        %v2505 = vmul.f32 %v2493, %v2493
        %v2506 = vmul.f32 %v2494, %v2494
        %v2507 = vmul.f32 %v2495, %v2495
        %v2508 = vmul.f32 %v2496, %v2496
        %v2509 = vmul.f32 %v2497, %v2497
        %v2510 = vadd.f32 %v2326, %v2504
        %v2511 = vadd.f32 %v2327, %v2505
        %v2512 = vadd.f32 %v2328, %v2506
        %v2513 = vadd.f32 %v2329, %v2507
        %v2514 = vadd.f32 %v2330, %v2508
        %v2515 = vadd.f32 %v2331, %v2509
        %s2516 = scalar_lea.vmem %s464, 96 [#allocation6]
        %2517 = vst [vmem:[%s2516] sm:$0xff] %v2492
        %2518 = vst [vmem:[%s2516 + $0x8] sm:$0xff] %v2493
        %2519 = vst [vmem:[%s2516 + $0x10] sm:$0xff] %v2494
        %2520 = vst [vmem:[%s2516 + $0x18] sm:$0x3f] %v2495
        %2521 = vst [vmem:[%s2516 + $0x20] sm:$0x3f] %v2496
        %2522 = vst [vmem:[%s2516 + $0x28] sm:$0x3f] %v2497
        %v2523 = vld [vmem:[%s2257] sm:$0xff]
        %v2524 = vld [vmem:[%s2257 + $0x8] sm:$0xff]
        %v2525 = vld [vmem:[%s2257 + $0x10] sm:$0xff]
        %v2526 = vld [vmem:[%s2257 + $0x18] sm:$0x3f]
        %v2527 = vld [vmem:[%s2257 + $0x20] sm:$0x3f]
        %v2528 = vld [vmem:[%s2257 + $0x28] sm:$0x3f]
        %v2529 = vmul.f32 %v2523, %v1836
        %v2530 = vmul.f32 %v2524, %v1840
        %v2531 = vmul.f32 %v2525, %v1844
        %v2532 = vmul.f32 %v2526, %v1836
        %v2533 = vmul.f32 %v2527, %v1840
        %v2534 = vmul.f32 %v2528, %v1844
        %v2535 = vld [vmem:[%s2276 + $0x18] sm:$0xff]
        %v2536 = vld [vmem:[%s2276 + $0x20] sm:$0xff]
        %v2537 = vld [vmem:[%s2276 + $0x28] sm:$0xff]
        %v2538 = vld [vmem:[%s2276 + $0x30] sm:$0x3f]
        %v2539 = vld [vmem:[%s2276 + $0x38] sm:$0x3f]
        %v2540 = vld [vmem:[%s2276 + $0x40] sm:$0x3f]
        %v2541 = vmul.f32 %v2535, %v1864
        %v2542 = vmul.f32 %v2536, %v1868
        %v2543 = vmul.f32 %v2537, %v1872
        %v2544 = vmul.f32 %v2538, %v1864
        %v2545 = vmul.f32 %v2539, %v1868
        %v2546 = vmul.f32 %v2540, %v1872
        %v2547 = vadd.f32 %v2529, %v2541
        %v2548 = vadd.f32 %v2530, %v2542
        %v2549 = vadd.f32 %v2531, %v2543
        %v2550 = vadd.f32 %v2532, %v2544
        %v2551 = vadd.f32 %v2533, %v2545
        %v2552 = vadd.f32 %v2534, %v2546
        %v2553 = vld [vmem:[%s2295] sm:$0xff]
        %v2554 = vld [vmem:[%s2295 + $0x8] sm:$0xff]
        %v2555 = vld [vmem:[%s2295 + $0x10] sm:$0xff]
        %v2556 = vld [vmem:[%s2295 + $0x18] sm:$0x3f]
        %v2557 = vld [vmem:[%s2295 + $0x20] sm:$0x3f]
        %v2558 = vld [vmem:[%s2295 + $0x28] sm:$0x3f]
        %v2559 = vmul.f32 %v2553, %v1898
        %v2560 = vmul.f32 %v2554, %v1902
        %v2561 = vmul.f32 %v2555, %v1906
        %v2562 = vmul.f32 %v2556, %v1898
        %v2563 = vmul.f32 %v2557, %v1902
        %v2564 = vmul.f32 %v2558, %v1906
        %v2565 = vadd.f32 %v2547, %v2559
        %v2566 = vadd.f32 %v2548, %v2560
        %v2567 = vadd.f32 %v2549, %v2561
        %v2568 = vadd.f32 %v2550, %v2562
        %v2569 = vadd.f32 %v2551, %v2563
        %v2570 = vadd.f32 %v2552, %v2564
        %v2571 = vld [vmem:[%s2441] sm:$0xff]
        %v2572 = vld [vmem:[%s2441 + $0x8] sm:$0xff]
        %v2573 = vld [vmem:[%s2441 + $0x10] sm:$0xff]
        %v2574 = vld [vmem:[%s2441 + $0x18] sm:$0x3f]
        %v2575 = vld [vmem:[%s2441 + $0x20] sm:$0x3f]
        %v2576 = vld [vmem:[%s2441 + $0x28] sm:$0x3f]
        %v2577 = vmul.f32 %v2571, %v1933
        %v2578 = vmul.f32 %v2572, %v1937
        %v2579 = vmul.f32 %v2573, %v1941
        %v2580 = vmul.f32 %v2574, %v1933
        %v2581 = vmul.f32 %v2575, %v1937
        %v2582 = vmul.f32 %v2576, %v1941
        %v2583 = vadd.f32 %v2565, %v2577
        %v2584 = vadd.f32 %v2566, %v2578
        %v2585 = vadd.f32 %v2567, %v2579
        %v2586 = vadd.f32 %v2568, %v2580
        %v2587 = vadd.f32 %v2569, %v2581
        %v2588 = vadd.f32 %v2570, %v2582
        %v2589 = vld [vmem:[%s2460 + $0x18] sm:$0xff]
        %v2590 = vld [vmem:[%s2460 + $0x20] sm:$0xff]
        %v2591 = vld [vmem:[%s2460 + $0x28] sm:$0xff]
        %v2592 = vld [vmem:[%s2460 + $0x30] sm:$0x3f]
        %v2593 = vld [vmem:[%s2460 + $0x38] sm:$0x3f]
        %v2594 = vld [vmem:[%s2460 + $0x40] sm:$0x3f]
        %v2595 = vmul.f32 %v2589, %v1967
        %v2596 = vmul.f32 %v2590, %v1971
        %v2597 = vmul.f32 %v2591, %v1975
        %v2598 = vmul.f32 %v2592, %v1967
        %v2599 = vmul.f32 %v2593, %v1971
        %v2600 = vmul.f32 %v2594, %v1975
        %v2601 = vadd.f32 %v2583, %v2595
        %v2602 = vadd.f32 %v2584, %v2596
        %v2603 = vadd.f32 %v2585, %v2597
        %v2604 = vadd.f32 %v2586, %v2598
        %v2605 = vadd.f32 %v2587, %v2599
        %v2606 = vadd.f32 %v2588, %v2600
        %v2607 = vld [vmem:[%s2479] sm:$0xff]
        %v2608 = vld [vmem:[%s2479 + $0x8] sm:$0xff]
        %v2609 = vld [vmem:[%s2479 + $0x10] sm:$0xff]
        %v2610 = vld [vmem:[%s2479 + $0x18] sm:$0x3f]
        %v2611 = vld [vmem:[%s2479 + $0x20] sm:$0x3f]
        %v2612 = vld [vmem:[%s2479 + $0x28] sm:$0x3f]
        %v2613 = vmul.f32 %v2607, %v2002
        %v2614 = vmul.f32 %v2608, %v2006
        %v2615 = vmul.f32 %v2609, %v2010
        %v2616 = vmul.f32 %v2610, %v2002
        %v2617 = vmul.f32 %v2611, %v2006
        %v2618 = vmul.f32 %v2612, %v2010
        %v2619 = vadd.f32 %v2601, %v2613
        %v2620 = vadd.f32 %v2602, %v2614
        %v2621 = vadd.f32 %v2603, %v2615
        %v2622 = vadd.f32 %v2604, %v2616
        %v2623 = vadd.f32 %v2605, %v2617
        %v2624 = vadd.f32 %v2606, %v2618
        %s2625 = scalar_lea.vmem [#allocation3], 240
        %v2626 = vld [vmem:[%s2625] sm:$0xff]
        %v2627 = vld [vmem:[%s2625 + $0x8] sm:$0xff]
        %v2628 = vld [vmem:[%s2625 + $0x10] sm:$0xff]
        %v2629 = vld [vmem:[%s2625 + $0x18] sm:$0x3f]
        %v2630 = vld [vmem:[%s2625 + $0x20] sm:$0x3f]
        %v2631 = vld [vmem:[%s2625 + $0x28] sm:$0x3f]
        %v2632 = vmul.f32 %v2626, %v2037
        %v2633 = vmul.f32 %v2627, %v2041
        %v2634 = vmul.f32 %v2628, %v2045
        %v2635 = vmul.f32 %v2629, %v2037
        %v2636 = vmul.f32 %v2630, %v2041
        %v2637 = vmul.f32 %v2631, %v2045
        %v2638 = vadd.f32 %v2619, %v2632
        %v2639 = vadd.f32 %v2620, %v2633
        %v2640 = vadd.f32 %v2621, %v2634
        %v2641 = vadd.f32 %v2622, %v2635
        %v2642 = vadd.f32 %v2623, %v2636
        %v2643 = vadd.f32 %v2624, %v2637
        %s2644 = scalar_lea.vmem [#allocation2], 360
        %v2645 = vld [vmem:[%s2644 + $0x18] sm:$0xff]
        %v2646 = vld [vmem:[%s2644 + $0x20] sm:$0xff]
        %v2647 = vld [vmem:[%s2644 + $0x28] sm:$0xff]
        %v2648 = vld [vmem:[%s2644 + $0x30] sm:$0x3f]
        %v2649 = vld [vmem:[%s2644 + $0x38] sm:$0x3f]
        %v2650 = vld [vmem:[%s2644 + $0x40] sm:$0x3f]
        %v2651 = vmul.f32 %v2645, %v2072
        %v2652 = vmul.f32 %v2646, %v2076
        %v2653 = vmul.f32 %v2647, %v2080
        %v2654 = vmul.f32 %v2648, %v2072
        %v2655 = vmul.f32 %v2649, %v2076
        %v2656 = vmul.f32 %v2650, %v2080
        %v2657 = vadd.f32 %v2638, %v2651
        %v2658 = vadd.f32 %v2639, %v2652
        %v2659 = vadd.f32 %v2640, %v2653
        %v2660 = vadd.f32 %v2641, %v2654
        %v2661 = vadd.f32 %v2642, %v2655
        %v2662 = vadd.f32 %v2643, %v2656
        %s2663 = scalar_lea.vmem [#allocation3], 1008
        %v2664 = vld [vmem:[%s2663] sm:$0xff]
        %v2665 = vld [vmem:[%s2663 + $0x8] sm:$0xff]
        %v2666 = vld [vmem:[%s2663 + $0x10] sm:$0xff]
        %v2667 = vld [vmem:[%s2663 + $0x18] sm:$0x3f]
        %v2668 = vld [vmem:[%s2663 + $0x20] sm:$0x3f]
        %v2669 = vld [vmem:[%s2663 + $0x28] sm:$0x3f]
        %v2670 = vmul.f32 %v2664, %v2107
        %v2671 = vmul.f32 %v2665, %v2111
        %v2672 = vmul.f32 %v2666, %v2115
        %v2673 = vmul.f32 %v2667, %v2107
        %v2674 = vmul.f32 %v2668, %v2111
        %v2675 = vmul.f32 %v2669, %v2115
        %v2676 = vadd.f32 %v2657, %v2670
        %v2677 = vadd.f32 %v2658, %v2671
        %v2678 = vadd.f32 %v2659, %v2672
        %v2679 = vadd.f32 %v2660, %v2673
        %v2680 = vadd.f32 %v2661, %v2674
        %v2681 = vadd.f32 %v2662, %v2675
        %v2682 = vadd.f32 %v2498, %v2676
        %v2683 = vadd.f32 %v2499, %v2677
        %v2684 = vadd.f32 %v2500, %v2678
        %v2685 = vadd.f32 %v2501, %v2679
        %v2686 = vadd.f32 %v2502, %v2680
        %v2687 = vadd.f32 %v2503, %v2681
        %v2688 = vmul.f32 %v2676, %v2676
        %v2689 = vmul.f32 %v2677, %v2677
        %v2690 = vmul.f32 %v2678, %v2678
        %v2691 = vmul.f32 %v2679, %v2679
        %v2692 = vmul.f32 %v2680, %v2680
        %v2693 = vmul.f32 %v2681, %v2681
        %v2694 = vadd.f32 %v2510, %v2688
        %v2695 = vadd.f32 %v2511, %v2689
        %v2696 = vadd.f32 %v2512, %v2690
        %v2697 = vadd.f32 %v2513, %v2691
        %v2698 = vadd.f32 %v2514, %v2692
        %v2699 = vadd.f32 %v2515, %v2693
        %s2700 = scalar_lea.vmem %s464, 144 [#allocation6]
        %2701 = vst [vmem:[%s2700] sm:$0xff] %v2676
        %2702 = vst [vmem:[%s2700 + $0x8] sm:$0xff] %v2677
        %2703 = vst [vmem:[%s2700 + $0x10] sm:$0xff] %v2678
        %2704 = vst [vmem:[%s2700 + $0x18] sm:$0x3f] %v2679
        %2705 = vst [vmem:[%s2700 + $0x20] sm:$0x3f] %v2680
        %2706 = vst [vmem:[%s2700 + $0x28] sm:$0x3f] %v2681
        %v2707 = vld [vmem:[%s2441] sm:$0xff]
        %v2708 = vld [vmem:[%s2441 + $0x8] sm:$0xff]
        %v2709 = vld [vmem:[%s2441 + $0x10] sm:$0xff]
        %v2710 = vld [vmem:[%s2441 + $0x18] sm:$0x3f]
        %v2711 = vld [vmem:[%s2441 + $0x20] sm:$0x3f]
        %v2712 = vld [vmem:[%s2441 + $0x28] sm:$0x3f]
        %v2713 = vmul.f32 %v2707, %v1836
        %v2714 = vmul.f32 %v2708, %v1840
        %v2715 = vmul.f32 %v2709, %v1844
        %v2716 = vmul.f32 %v2710, %v1836
        %v2717 = vmul.f32 %v2711, %v1840
        %v2718 = vmul.f32 %v2712, %v1844
        %v2719 = vld [vmem:[%s2460 + $0x18] sm:$0xff]
        %v2720 = vld [vmem:[%s2460 + $0x20] sm:$0xff]
        %v2721 = vld [vmem:[%s2460 + $0x28] sm:$0xff]
        %v2722 = vld [vmem:[%s2460 + $0x30] sm:$0x3f]
        %v2723 = vld [vmem:[%s2460 + $0x38] sm:$0x3f]
        %v2724 = vld [vmem:[%s2460 + $0x40] sm:$0x3f]
        %v2725 = vmul.f32 %v2719, %v1864
        %v2726 = vmul.f32 %v2720, %v1868
        %v2727 = vmul.f32 %v2721, %v1872
        %v2728 = vmul.f32 %v2722, %v1864
        %v2729 = vmul.f32 %v2723, %v1868
        %v2730 = vmul.f32 %v2724, %v1872
        %v2731 = vadd.f32 %v2713, %v2725
        %v2732 = vadd.f32 %v2714, %v2726
        %v2733 = vadd.f32 %v2715, %v2727
        %v2734 = vadd.f32 %v2716, %v2728
        %v2735 = vadd.f32 %v2717, %v2729
        %v2736 = vadd.f32 %v2718, %v2730
        %v2737 = vld [vmem:[%s2479] sm:$0xff]
        %v2738 = vld [vmem:[%s2479 + $0x8] sm:$0xff]
        %v2739 = vld [vmem:[%s2479 + $0x10] sm:$0xff]
        %v2740 = vld [vmem:[%s2479 + $0x18] sm:$0x3f]
        %v2741 = vld [vmem:[%s2479 + $0x20] sm:$0x3f]
        %v2742 = vld [vmem:[%s2479 + $0x28] sm:$0x3f]
        %v2743 = vmul.f32 %v2737, %v1898
        %v2744 = vmul.f32 %v2738, %v1902
        %v2745 = vmul.f32 %v2739, %v1906
        %v2746 = vmul.f32 %v2740, %v1898
        %v2747 = vmul.f32 %v2741, %v1902
        %v2748 = vmul.f32 %v2742, %v1906
        %v2749 = vadd.f32 %v2731, %v2743
        %v2750 = vadd.f32 %v2732, %v2744
        %v2751 = vadd.f32 %v2733, %v2745
        %v2752 = vadd.f32 %v2734, %v2746
        %v2753 = vadd.f32 %v2735, %v2747
        %v2754 = vadd.f32 %v2736, %v2748
        %v2755 = vld [vmem:[%s2625] sm:$0xff]
        %v2756 = vld [vmem:[%s2625 + $0x8] sm:$0xff]
        %v2757 = vld [vmem:[%s2625 + $0x10] sm:$0xff]
        %v2758 = vld [vmem:[%s2625 + $0x18] sm:$0x3f]
        %v2759 = vld [vmem:[%s2625 + $0x20] sm:$0x3f]
        %v2760 = vld [vmem:[%s2625 + $0x28] sm:$0x3f]
        %v2761 = vmul.f32 %v2755, %v1933
        %v2762 = vmul.f32 %v2756, %v1937
        %v2763 = vmul.f32 %v2757, %v1941
        %v2764 = vmul.f32 %v2758, %v1933
        %v2765 = vmul.f32 %v2759, %v1937
        %v2766 = vmul.f32 %v2760, %v1941
        %v2767 = vadd.f32 %v2749, %v2761
        %v2768 = vadd.f32 %v2750, %v2762
        %v2769 = vadd.f32 %v2751, %v2763
        %v2770 = vadd.f32 %v2752, %v2764
        %v2771 = vadd.f32 %v2753, %v2765
        %v2772 = vadd.f32 %v2754, %v2766
        %v2773 = vld [vmem:[%s2644 + $0x18] sm:$0xff]
        %v2774 = vld [vmem:[%s2644 + $0x20] sm:$0xff]
        %v2775 = vld [vmem:[%s2644 + $0x28] sm:$0xff]
        %v2776 = vld [vmem:[%s2644 + $0x30] sm:$0x3f]
        %v2777 = vld [vmem:[%s2644 + $0x38] sm:$0x3f]
        %v2778 = vld [vmem:[%s2644 + $0x40] sm:$0x3f]
        %v2779 = vmul.f32 %v2773, %v1967
        %v2780 = vmul.f32 %v2774, %v1971
        %v2781 = vmul.f32 %v2775, %v1975
        %v2782 = vmul.f32 %v2776, %v1967
        %v2783 = vmul.f32 %v2777, %v1971
        %v2784 = vmul.f32 %v2778, %v1975
        %v2785 = vadd.f32 %v2767, %v2779
        %v2786 = vadd.f32 %v2768, %v2780
        %v2787 = vadd.f32 %v2769, %v2781
        %v2788 = vadd.f32 %v2770, %v2782
        %v2789 = vadd.f32 %v2771, %v2783
        %v2790 = vadd.f32 %v2772, %v2784
        %v2791 = vld [vmem:[%s2663] sm:$0xff]
        %v2792 = vld [vmem:[%s2663 + $0x8] sm:$0xff]
        %v2793 = vld [vmem:[%s2663 + $0x10] sm:$0xff]
        %v2794 = vld [vmem:[%s2663 + $0x18] sm:$0x3f]
        %v2795 = vld [vmem:[%s2663 + $0x20] sm:$0x3f]
        %v2796 = vld [vmem:[%s2663 + $0x28] sm:$0x3f]
        %v2797 = vmul.f32 %v2791, %v2002
        %v2798 = vmul.f32 %v2792, %v2006
        %v2799 = vmul.f32 %v2793, %v2010
        %v2800 = vmul.f32 %v2794, %v2002
        %v2801 = vmul.f32 %v2795, %v2006
        %v2802 = vmul.f32 %v2796, %v2010
        %v2803 = vadd.f32 %v2785, %v2797
        %v2804 = vadd.f32 %v2786, %v2798
        %v2805 = vadd.f32 %v2787, %v2799
        %v2806 = vadd.f32 %v2788, %v2800
        %v2807 = vadd.f32 %v2789, %v2801
        %v2808 = vadd.f32 %v2790, %v2802
        %s2809 = scalar_lea.vmem [#allocation3], 288
        %v2810 = vld [vmem:[%s2809] sm:$0xff]
        %v2811 = vld [vmem:[%s2809 + $0x8] sm:$0xff]
        %v2812 = vld [vmem:[%s2809 + $0x10] sm:$0xff]
        %v2813 = vld [vmem:[%s2809 + $0x18] sm:$0x3f]
        %v2814 = vld [vmem:[%s2809 + $0x20] sm:$0x3f]
        %v2815 = vld [vmem:[%s2809 + $0x28] sm:$0x3f]
        %v2816 = vmul.f32 %v2810, %v2037
        %v2817 = vmul.f32 %v2811, %v2041
        %v2818 = vmul.f32 %v2812, %v2045
        %v2819 = vmul.f32 %v2813, %v2037
        %v2820 = vmul.f32 %v2814, %v2041
        %v2821 = vmul.f32 %v2815, %v2045
        %v2822 = vadd.f32 %v2803, %v2816
        %v2823 = vadd.f32 %v2804, %v2817
        %v2824 = vadd.f32 %v2805, %v2818
        %v2825 = vadd.f32 %v2806, %v2819
        %v2826 = vadd.f32 %v2807, %v2820
        %v2827 = vadd.f32 %v2808, %v2821
        %s2828 = scalar_lea.vmem [#allocation2], 432
        %v2829 = vld [vmem:[%s2828 + $0x18] sm:$0xff]
        %v2830 = vld [vmem:[%s2828 + $0x20] sm:$0xff]
        %v2831 = vld [vmem:[%s2828 + $0x28] sm:$0xff]
        %v2832 = vld [vmem:[%s2828 + $0x30] sm:$0x3f]
        %v2833 = vld [vmem:[%s2828 + $0x38] sm:$0x3f]
        %v2834 = vld [vmem:[%s2828 + $0x40] sm:$0x3f]
        %v2835 = vmul.f32 %v2829, %v2072
        %v2836 = vmul.f32 %v2830, %v2076
        %v2837 = vmul.f32 %v2831, %v2080
        %v2838 = vmul.f32 %v2832, %v2072
        %v2839 = vmul.f32 %v2833, %v2076
        %v2840 = vmul.f32 %v2834, %v2080
        %v2841 = vadd.f32 %v2822, %v2835
        %v2842 = vadd.f32 %v2823, %v2836
        %v2843 = vadd.f32 %v2824, %v2837
        %v2844 = vadd.f32 %v2825, %v2838
        %v2845 = vadd.f32 %v2826, %v2839
        %v2846 = vadd.f32 %v2827, %v2840
        %s2847 = scalar_lea.vmem [#allocation3], 1056
        %v2848 = vld [vmem:[%s2847] sm:$0xff]
        %v2849 = vld [vmem:[%s2847 + $0x8] sm:$0xff]
        %v2850 = vld [vmem:[%s2847 + $0x10] sm:$0xff]
        %v2851 = vld [vmem:[%s2847 + $0x18] sm:$0x3f]
        %v2852 = vld [vmem:[%s2847 + $0x20] sm:$0x3f]
        %v2853 = vld [vmem:[%s2847 + $0x28] sm:$0x3f]
        %v2854 = vmul.f32 %v2848, %v2107
        %v2855 = vmul.f32 %v2849, %v2111
        %v2856 = vmul.f32 %v2850, %v2115
        %v2857 = vmul.f32 %v2851, %v2107
        %v2858 = vmul.f32 %v2852, %v2111
        %v2859 = vmul.f32 %v2853, %v2115
        %v2860 = vadd.f32 %v2841, %v2854
        %v2861 = vadd.f32 %v2842, %v2855
        %v2862 = vadd.f32 %v2843, %v2856
        %v2863 = vadd.f32 %v2844, %v2857
        %v2864 = vadd.f32 %v2845, %v2858
        %v2865 = vadd.f32 %v2846, %v2859
        %v2866 = vadd.f32 %v2682, %v2860
        %v2867 = vadd.f32 %v2683, %v2861
        %v2868 = vadd.f32 %v2684, %v2862
        %v2869 = vadd.f32 %v2685, %v2863
        %v2870 = vadd.f32 %v2686, %v2864
        %v2871 = vadd.f32 %v2687, %v2865
        %v2872 = vmul.f32 %v2860, %v2860
        %v2873 = vmul.f32 %v2861, %v2861
        %v2874 = vmul.f32 %v2862, %v2862
        %v2875 = vmul.f32 %v2863, %v2863
        %v2876 = vmul.f32 %v2864, %v2864
        %v2877 = vmul.f32 %v2865, %v2865
        %v2878 = vadd.f32 %v2694, %v2872
        %v2879 = vadd.f32 %v2695, %v2873
        %v2880 = vadd.f32 %v2696, %v2874
        %v2881 = vadd.f32 %v2697, %v2875
        %v2882 = vadd.f32 %v2698, %v2876
        %v2883 = vadd.f32 %v2699, %v2877
        %s2884 = scalar_lea.vmem %s464, 192 [#allocation6]
        %2885 = vst [vmem:[%s2884] sm:$0xff] %v2860
        %2886 = vst [vmem:[%s2884 + $0x8] sm:$0xff] %v2861
        %2887 = vst [vmem:[%s2884 + $0x10] sm:$0xff] %v2862
        %2888 = vst [vmem:[%s2884 + $0x18] sm:$0x3f] %v2863
        %2889 = vst [vmem:[%s2884 + $0x20] sm:$0x3f] %v2864
        %2890 = vst [vmem:[%s2884 + $0x28] sm:$0x3f] %v2865
        %v2891 = vld [vmem:[%s2625] sm:$0xff]
        %v2892 = vld [vmem:[%s2625 + $0x8] sm:$0xff]
        %v2893 = vld [vmem:[%s2625 + $0x10] sm:$0xff]
        %v2894 = vld [vmem:[%s2625 + $0x18] sm:$0x3f]
        %v2895 = vld [vmem:[%s2625 + $0x20] sm:$0x3f]
        %v2896 = vld [vmem:[%s2625 + $0x28] sm:$0x3f]
        %v2897 = vmul.f32 %v2891, %v1836
        %v2898 = vmul.f32 %v2892, %v1840
        %v2899 = vmul.f32 %v2893, %v1844
        %v2900 = vmul.f32 %v2894, %v1836
        %v2901 = vmul.f32 %v2895, %v1840
        %v2902 = vmul.f32 %v2896, %v1844
        %v2903 = vld [vmem:[%s2644 + $0x18] sm:$0xff]
        %v2904 = vld [vmem:[%s2644 + $0x20] sm:$0xff]
        %v2905 = vld [vmem:[%s2644 + $0x28] sm:$0xff]
        %v2906 = vld [vmem:[%s2644 + $0x30] sm:$0x3f]
        %v2907 = vld [vmem:[%s2644 + $0x38] sm:$0x3f]
        %v2908 = vld [vmem:[%s2644 + $0x40] sm:$0x3f]
        %v2909 = vmul.f32 %v2903, %v1864
        %v2910 = vmul.f32 %v2904, %v1868
        %v2911 = vmul.f32 %v2905, %v1872
        %v2912 = vmul.f32 %v2906, %v1864
        %v2913 = vmul.f32 %v2907, %v1868
        %v2914 = vmul.f32 %v2908, %v1872
        %v2915 = vadd.f32 %v2897, %v2909
        %v2916 = vadd.f32 %v2898, %v2910
        %v2917 = vadd.f32 %v2899, %v2911
        %v2918 = vadd.f32 %v2900, %v2912
        %v2919 = vadd.f32 %v2901, %v2913
        %v2920 = vadd.f32 %v2902, %v2914
        %v2921 = vld [vmem:[%s2663] sm:$0xff]
        %v2922 = vld [vmem:[%s2663 + $0x8] sm:$0xff]
        %v2923 = vld [vmem:[%s2663 + $0x10] sm:$0xff]
        %v2924 = vld [vmem:[%s2663 + $0x18] sm:$0x3f]
        %v2925 = vld [vmem:[%s2663 + $0x20] sm:$0x3f]
        %v2926 = vld [vmem:[%s2663 + $0x28] sm:$0x3f]
        %v2927 = vmul.f32 %v2921, %v1898
        %v2928 = vmul.f32 %v2922, %v1902
        %v2929 = vmul.f32 %v2923, %v1906
        %v2930 = vmul.f32 %v2924, %v1898
        %v2931 = vmul.f32 %v2925, %v1902
        %v2932 = vmul.f32 %v2926, %v1906
        %v2933 = vadd.f32 %v2915, %v2927
        %v2934 = vadd.f32 %v2916, %v2928
        %v2935 = vadd.f32 %v2917, %v2929
        %v2936 = vadd.f32 %v2918, %v2930
        %v2937 = vadd.f32 %v2919, %v2931
        %v2938 = vadd.f32 %v2920, %v2932
        %v2939 = vld [vmem:[%s2809] sm:$0xff]
        %v2940 = vld [vmem:[%s2809 + $0x8] sm:$0xff]
        %v2941 = vld [vmem:[%s2809 + $0x10] sm:$0xff]
        %v2942 = vld [vmem:[%s2809 + $0x18] sm:$0x3f]
        %v2943 = vld [vmem:[%s2809 + $0x20] sm:$0x3f]
        %v2944 = vld [vmem:[%s2809 + $0x28] sm:$0x3f]
        %v2945 = vmul.f32 %v2939, %v1933
        %v2946 = vmul.f32 %v2940, %v1937
        %v2947 = vmul.f32 %v2941, %v1941
        %v2948 = vmul.f32 %v2942, %v1933
        %v2949 = vmul.f32 %v2943, %v1937
        %v2950 = vmul.f32 %v2944, %v1941
        %v2951 = vadd.f32 %v2933, %v2945
        %v2952 = vadd.f32 %v2934, %v2946
        %v2953 = vadd.f32 %v2935, %v2947
        %v2954 = vadd.f32 %v2936, %v2948
        %v2955 = vadd.f32 %v2937, %v2949
        %v2956 = vadd.f32 %v2938, %v2950
        %v2957 = vld [vmem:[%s2828 + $0x18] sm:$0xff]
        %v2958 = vld [vmem:[%s2828 + $0x20] sm:$0xff]
        %v2959 = vld [vmem:[%s2828 + $0x28] sm:$0xff]
        %v2960 = vld [vmem:[%s2828 + $0x30] sm:$0x3f]
        %v2961 = vld [vmem:[%s2828 + $0x38] sm:$0x3f]
        %v2962 = vld [vmem:[%s2828 + $0x40] sm:$0x3f]
        %v2963 = vmul.f32 %v2957, %v1967
        %v2964 = vmul.f32 %v2958, %v1971
        %v2965 = vmul.f32 %v2959, %v1975
        %v2966 = vmul.f32 %v2960, %v1967
        %v2967 = vmul.f32 %v2961, %v1971
        %v2968 = vmul.f32 %v2962, %v1975
        %v2969 = vadd.f32 %v2951, %v2963
        %v2970 = vadd.f32 %v2952, %v2964
        %v2971 = vadd.f32 %v2953, %v2965
        %v2972 = vadd.f32 %v2954, %v2966
        %v2973 = vadd.f32 %v2955, %v2967
        %v2974 = vadd.f32 %v2956, %v2968
        %v2975 = vld [vmem:[%s2847] sm:$0xff]
        %v2976 = vld [vmem:[%s2847 + $0x8] sm:$0xff]
        %v2977 = vld [vmem:[%s2847 + $0x10] sm:$0xff]
        %v2978 = vld [vmem:[%s2847 + $0x18] sm:$0x3f]
        %v2979 = vld [vmem:[%s2847 + $0x20] sm:$0x3f]
        %v2980 = vld [vmem:[%s2847 + $0x28] sm:$0x3f]
        %v2981 = vmul.f32 %v2975, %v2002
        %v2982 = vmul.f32 %v2976, %v2006
        %v2983 = vmul.f32 %v2977, %v2010
        %v2984 = vmul.f32 %v2978, %v2002
        %v2985 = vmul.f32 %v2979, %v2006
        %v2986 = vmul.f32 %v2980, %v2010
        %v2987 = vadd.f32 %v2969, %v2981
        %v2988 = vadd.f32 %v2970, %v2982
        %v2989 = vadd.f32 %v2971, %v2983
        %v2990 = vadd.f32 %v2972, %v2984
        %v2991 = vadd.f32 %v2973, %v2985
        %v2992 = vadd.f32 %v2974, %v2986
        %s2993 = scalar_lea.vmem [#allocation3], 336
        %v2994 = vld [vmem:[%s2993] sm:$0xff]
        %v2995 = vld [vmem:[%s2993 + $0x8] sm:$0xff]
        %v2996 = vld [vmem:[%s2993 + $0x10] sm:$0xff]
        %v2997 = vld [vmem:[%s2993 + $0x18] sm:$0x3f]
        %v2998 = vld [vmem:[%s2993 + $0x20] sm:$0x3f]
        %v2999 = vld [vmem:[%s2993 + $0x28] sm:$0x3f]
        %v3000 = vmul.f32 %v2994, %v2037
        %v3001 = vmul.f32 %v2995, %v2041
        %v3002 = vmul.f32 %v2996, %v2045
        %v3003 = vmul.f32 %v2997, %v2037
        %v3004 = vmul.f32 %v2998, %v2041
        %v3005 = vmul.f32 %v2999, %v2045
        %v3006 = vadd.f32 %v2987, %v3000
        %v3007 = vadd.f32 %v2988, %v3001
        %v3008 = vadd.f32 %v2989, %v3002
        %v3009 = vadd.f32 %v2990, %v3003
        %v3010 = vadd.f32 %v2991, %v3004
        %v3011 = vadd.f32 %v2992, %v3005
        %s3012 = scalar_lea.vmem [#allocation2], 504
        %v3013 = vld [vmem:[%s3012 + $0x18] sm:$0xff]
        %v3014 = vld [vmem:[%s3012 + $0x20] sm:$0xff]
        %v3015 = vld [vmem:[%s3012 + $0x28] sm:$0xff]
        %v3016 = vld [vmem:[%s3012 + $0x30] sm:$0x3f]
        %v3017 = vld [vmem:[%s3012 + $0x38] sm:$0x3f]
        %v3018 = vld [vmem:[%s3012 + $0x40] sm:$0x3f]
        %v3019 = vmul.f32 %v3013, %v2072
        %v3020 = vmul.f32 %v3014, %v2076
        %v3021 = vmul.f32 %v3015, %v2080
        %v3022 = vmul.f32 %v3016, %v2072
        %v3023 = vmul.f32 %v3017, %v2076
        %v3024 = vmul.f32 %v3018, %v2080
        %v3025 = vadd.f32 %v3006, %v3019
        %v3026 = vadd.f32 %v3007, %v3020
        %v3027 = vadd.f32 %v3008, %v3021
        %v3028 = vadd.f32 %v3009, %v3022
        %v3029 = vadd.f32 %v3010, %v3023
        %v3030 = vadd.f32 %v3011, %v3024
        %s3031 = scalar_lea.vmem [#allocation3], 1104
        %v3032 = vld [vmem:[%s3031] sm:$0xff]
        %v3033 = vld [vmem:[%s3031 + $0x8] sm:$0xff]
        %v3034 = vld [vmem:[%s3031 + $0x10] sm:$0xff]
        %v3035 = vld [vmem:[%s3031 + $0x18] sm:$0x3f]
        %v3036 = vld [vmem:[%s3031 + $0x20] sm:$0x3f]
        %v3037 = vld [vmem:[%s3031 + $0x28] sm:$0x3f]
        %v3038 = vmul.f32 %v3032, %v2107
        %v3039 = vmul.f32 %v3033, %v2111
        %v3040 = vmul.f32 %v3034, %v2115
        %v3041 = vmul.f32 %v3035, %v2107
        %v3042 = vmul.f32 %v3036, %v2111
        %v3043 = vmul.f32 %v3037, %v2115
        %v3044 = vadd.f32 %v3025, %v3038
        %v3045 = vadd.f32 %v3026, %v3039
        %v3046 = vadd.f32 %v3027, %v3040
        %v3047 = vadd.f32 %v3028, %v3041
        %v3048 = vadd.f32 %v3029, %v3042
        %v3049 = vadd.f32 %v3030, %v3043
        %v3050 = vadd.f32 %v2866, %v3044
        %v3051 = vadd.f32 %v2867, %v3045
        %v3052 = vadd.f32 %v2868, %v3046
        %v3053 = vadd.f32 %v2869, %v3047
        %v3054 = vadd.f32 %v2870, %v3048
        %v3055 = vadd.f32 %v2871, %v3049
        %v3056 = vmul.f32 %v3044, %v3044
        %v3057 = vmul.f32 %v3045, %v3045
        %v3058 = vmul.f32 %v3046, %v3046
        %v3059 = vmul.f32 %v3047, %v3047
        %v3060 = vmul.f32 %v3048, %v3048
        %v3061 = vmul.f32 %v3049, %v3049
        %v3062 = vadd.f32 %v2878, %v3056
        %v3063 = vadd.f32 %v2879, %v3057
        %v3064 = vadd.f32 %v2880, %v3058
        %v3065 = vadd.f32 %v2881, %v3059
        %v3066 = vadd.f32 %v2882, %v3060
        %v3067 = vadd.f32 %v2883, %v3061
        %s3068 = scalar_lea.vmem %s464, 240 [#allocation6]
        %3069 = vst [vmem:[%s3068] sm:$0xff] %v3044
        %3070 = vst [vmem:[%s3068 + $0x8] sm:$0xff] %v3045
        %3071 = vst [vmem:[%s3068 + $0x10] sm:$0xff] %v3046
        %3072 = vst [vmem:[%s3068 + $0x18] sm:$0x3f] %v3047
        %3073 = vst [vmem:[%s3068 + $0x20] sm:$0x3f] %v3048
        %3074 = vst [vmem:[%s3068 + $0x28] sm:$0x3f] %v3049
        %v3075 = vld [vmem:[%s2809] sm:$0xff]
        %v3076 = vld [vmem:[%s2809 + $0x8] sm:$0xff]
        %v3077 = vld [vmem:[%s2809 + $0x10] sm:$0xff]
        %v3078 = vld [vmem:[%s2809 + $0x18] sm:$0x3f]
        %v3079 = vld [vmem:[%s2809 + $0x20] sm:$0x3f]
        %v3080 = vld [vmem:[%s2809 + $0x28] sm:$0x3f]
        %v3081 = vmul.f32 %v3075, %v1836
        %v3082 = vmul.f32 %v3076, %v1840
        %v3083 = vmul.f32 %v3077, %v1844
        %v3084 = vmul.f32 %v3078, %v1836
        %v3085 = vmul.f32 %v3079, %v1840
        %v3086 = vmul.f32 %v3080, %v1844
        %v3087 = vld [vmem:[%s2828 + $0x18] sm:$0xff]
        %v3088 = vld [vmem:[%s2828 + $0x20] sm:$0xff]
        %v3089 = vld [vmem:[%s2828 + $0x28] sm:$0xff]
        %v3090 = vld [vmem:[%s2828 + $0x30] sm:$0x3f]
        %v3091 = vld [vmem:[%s2828 + $0x38] sm:$0x3f]
        %v3092 = vld [vmem:[%s2828 + $0x40] sm:$0x3f]
        %v3093 = vmul.f32 %v3087, %v1864
        %v3094 = vmul.f32 %v3088, %v1868
        %v3095 = vmul.f32 %v3089, %v1872
        %v3096 = vmul.f32 %v3090, %v1864
        %v3097 = vmul.f32 %v3091, %v1868
        %v3098 = vmul.f32 %v3092, %v1872
        %v3099 = vadd.f32 %v3081, %v3093
        %v3100 = vadd.f32 %v3082, %v3094
        %v3101 = vadd.f32 %v3083, %v3095
        %v3102 = vadd.f32 %v3084, %v3096
        %v3103 = vadd.f32 %v3085, %v3097
        %v3104 = vadd.f32 %v3086, %v3098
        %v3105 = vld [vmem:[%s2847] sm:$0xff]
        %v3106 = vld [vmem:[%s2847 + $0x8] sm:$0xff]
        %v3107 = vld [vmem:[%s2847 + $0x10] sm:$0xff]
        %v3108 = vld [vmem:[%s2847 + $0x18] sm:$0x3f]
        %v3109 = vld [vmem:[%s2847 + $0x20] sm:$0x3f]
        %v3110 = vld [vmem:[%s2847 + $0x28] sm:$0x3f]
        %v3111 = vmul.f32 %v3105, %v1898
        %v3112 = vmul.f32 %v3106, %v1902
        %v3113 = vmul.f32 %v3107, %v1906
        %v3114 = vmul.f32 %v3108, %v1898
        %v3115 = vmul.f32 %v3109, %v1902
        %v3116 = vmul.f32 %v3110, %v1906
        %v3117 = vadd.f32 %v3099, %v3111
        %v3118 = vadd.f32 %v3100, %v3112
        %v3119 = vadd.f32 %v3101, %v3113
        %v3120 = vadd.f32 %v3102, %v3114
        %v3121 = vadd.f32 %v3103, %v3115
        %v3122 = vadd.f32 %v3104, %v3116
        %v3123 = vld [vmem:[%s2993] sm:$0xff]
        %v3124 = vld [vmem:[%s2993 + $0x8] sm:$0xff]
        %v3125 = vld [vmem:[%s2993 + $0x10] sm:$0xff]
        %v3126 = vld [vmem:[%s2993 + $0x18] sm:$0x3f]
        %v3127 = vld [vmem:[%s2993 + $0x20] sm:$0x3f]
        %v3128 = vld [vmem:[%s2993 + $0x28] sm:$0x3f]
        %v3129 = vmul.f32 %v3123, %v1933
        %v3130 = vmul.f32 %v3124, %v1937
        %v3131 = vmul.f32 %v3125, %v1941
        %v3132 = vmul.f32 %v3126, %v1933
        %v3133 = vmul.f32 %v3127, %v1937
        %v3134 = vmul.f32 %v3128, %v1941
        %v3135 = vadd.f32 %v3117, %v3129
        %v3136 = vadd.f32 %v3118, %v3130
        %v3137 = vadd.f32 %v3119, %v3131
        %v3138 = vadd.f32 %v3120, %v3132
        %v3139 = vadd.f32 %v3121, %v3133
        %v3140 = vadd.f32 %v3122, %v3134
        %v3141 = vld [vmem:[%s3012 + $0x18] sm:$0xff]
        %v3142 = vld [vmem:[%s3012 + $0x20] sm:$0xff]
        %v3143 = vld [vmem:[%s3012 + $0x28] sm:$0xff]
        %v3144 = vld [vmem:[%s3012 + $0x30] sm:$0x3f]
        %v3145 = vld [vmem:[%s3012 + $0x38] sm:$0x3f]
        %v3146 = vld [vmem:[%s3012 + $0x40] sm:$0x3f]
        %v3147 = vmul.f32 %v3141, %v1967
        %v3148 = vmul.f32 %v3142, %v1971
        %v3149 = vmul.f32 %v3143, %v1975
        %v3150 = vmul.f32 %v3144, %v1967
        %v3151 = vmul.f32 %v3145, %v1971
        %v3152 = vmul.f32 %v3146, %v1975
        %v3153 = vadd.f32 %v3135, %v3147
        %v3154 = vadd.f32 %v3136, %v3148
        %v3155 = vadd.f32 %v3137, %v3149
        %v3156 = vadd.f32 %v3138, %v3150
        %v3157 = vadd.f32 %v3139, %v3151
        %v3158 = vadd.f32 %v3140, %v3152
        %v3159 = vld [vmem:[%s3031] sm:$0xff]
        %v3160 = vld [vmem:[%s3031 + $0x8] sm:$0xff]
        %v3161 = vld [vmem:[%s3031 + $0x10] sm:$0xff]
        %v3162 = vld [vmem:[%s3031 + $0x18] sm:$0x3f]
        %v3163 = vld [vmem:[%s3031 + $0x20] sm:$0x3f]
        %v3164 = vld [vmem:[%s3031 + $0x28] sm:$0x3f]
        %v3165 = vmul.f32 %v3159, %v2002
        %v3166 = vmul.f32 %v3160, %v2006
        %v3167 = vmul.f32 %v3161, %v2010
        %v3168 = vmul.f32 %v3162, %v2002
        %v3169 = vmul.f32 %v3163, %v2006
        %v3170 = vmul.f32 %v3164, %v2010
        %v3171 = vadd.f32 %v3153, %v3165
        %v3172 = vadd.f32 %v3154, %v3166
        %v3173 = vadd.f32 %v3155, %v3167
        %v3174 = vadd.f32 %v3156, %v3168
        %v3175 = vadd.f32 %v3157, %v3169
        %v3176 = vadd.f32 %v3158, %v3170
        %s3177 = scalar_lea.vmem [#allocation3], 384
        %v3178 = vld [vmem:[%s3177] sm:$0xff]
        %v3179 = vld [vmem:[%s3177 + $0x8] sm:$0xff]
        %v3180 = vld [vmem:[%s3177 + $0x10] sm:$0xff]
        %v3181 = vld [vmem:[%s3177 + $0x18] sm:$0x3f]
        %v3182 = vld [vmem:[%s3177 + $0x20] sm:$0x3f]
        %v3183 = vld [vmem:[%s3177 + $0x28] sm:$0x3f]
        %v3184 = vmul.f32 %v3178, %v2037
        %v3185 = vmul.f32 %v3179, %v2041
        %v3186 = vmul.f32 %v3180, %v2045
        %v3187 = vmul.f32 %v3181, %v2037
        %v3188 = vmul.f32 %v3182, %v2041
        %v3189 = vmul.f32 %v3183, %v2045
        %v3190 = vadd.f32 %v3171, %v3184
        %v3191 = vadd.f32 %v3172, %v3185
        %v3192 = vadd.f32 %v3173, %v3186
        %v3193 = vadd.f32 %v3174, %v3187
        %v3194 = vadd.f32 %v3175, %v3188
        %v3195 = vadd.f32 %v3176, %v3189
        %s3196 = scalar_lea.vmem [#allocation2], 576
        %v3197 = vld [vmem:[%s3196 + $0x18] sm:$0xff]
        %v3198 = vld [vmem:[%s3196 + $0x20] sm:$0xff]
        %v3199 = vld [vmem:[%s3196 + $0x28] sm:$0xff]
        %v3200 = vld [vmem:[%s3196 + $0x30] sm:$0x3f]
        %v3201 = vld [vmem:[%s3196 + $0x38] sm:$0x3f]
        %v3202 = vld [vmem:[%s3196 + $0x40] sm:$0x3f]
        %v3203 = vmul.f32 %v3197, %v2072
        %v3204 = vmul.f32 %v3198, %v2076
        %v3205 = vmul.f32 %v3199, %v2080
        %v3206 = vmul.f32 %v3200, %v2072
        %v3207 = vmul.f32 %v3201, %v2076
        %v3208 = vmul.f32 %v3202, %v2080
        %v3209 = vadd.f32 %v3190, %v3203
        %v3210 = vadd.f32 %v3191, %v3204
        %v3211 = vadd.f32 %v3192, %v3205
        %v3212 = vadd.f32 %v3193, %v3206
        %v3213 = vadd.f32 %v3194, %v3207
        %v3214 = vadd.f32 %v3195, %v3208
        %s3215 = scalar_lea.vmem [#allocation3], 1152
        %v3216 = vld [vmem:[%s3215] sm:$0xff]
        %v3217 = vld [vmem:[%s3215 + $0x8] sm:$0xff]
        %v3218 = vld [vmem:[%s3215 + $0x10] sm:$0xff]
        %v3219 = vld [vmem:[%s3215 + $0x18] sm:$0x3f]
        %v3220 = vld [vmem:[%s3215 + $0x20] sm:$0x3f]
        %v3221 = vld [vmem:[%s3215 + $0x28] sm:$0x3f]
        %v3222 = vmul.f32 %v3216, %v2107
        %v3223 = vmul.f32 %v3217, %v2111
        %v3224 = vmul.f32 %v3218, %v2115
        %v3225 = vmul.f32 %v3219, %v2107
        %v3226 = vmul.f32 %v3220, %v2111
        %v3227 = vmul.f32 %v3221, %v2115
        %v3228 = vadd.f32 %v3209, %v3222
        %v3229 = vadd.f32 %v3210, %v3223
        %v3230 = vadd.f32 %v3211, %v3224
        %v3231 = vadd.f32 %v3212, %v3225
        %v3232 = vadd.f32 %v3213, %v3226
        %v3233 = vadd.f32 %v3214, %v3227
        %v3234 = vadd.f32 %v3050, %v3228
        %v3235 = vadd.f32 %v3051, %v3229
        %v3236 = vadd.f32 %v3052, %v3230
        %v3237 = vadd.f32 %v3053, %v3231
        %v3238 = vadd.f32 %v3054, %v3232
        %v3239 = vadd.f32 %v3055, %v3233
        %v3240 = vmul.f32 %v3228, %v3228
        %v3241 = vmul.f32 %v3229, %v3229
        %v3242 = vmul.f32 %v3230, %v3230
        %v3243 = vmul.f32 %v3231, %v3231
        %v3244 = vmul.f32 %v3232, %v3232
        %v3245 = vmul.f32 %v3233, %v3233
        %v3246 = vadd.f32 %v3062, %v3240
        %v3247 = vadd.f32 %v3063, %v3241
        %v3248 = vadd.f32 %v3064, %v3242
        %v3249 = vadd.f32 %v3065, %v3243
        %v3250 = vadd.f32 %v3066, %v3244
        %v3251 = vadd.f32 %v3067, %v3245
        %s3252 = scalar_lea.vmem %s464, 288 [#allocation6]
        %3253 = vst [vmem:[%s3252] sm:$0xff] %v3228
        %3254 = vst [vmem:[%s3252 + $0x8] sm:$0xff] %v3229
        %3255 = vst [vmem:[%s3252 + $0x10] sm:$0xff] %v3230
        %3256 = vst [vmem:[%s3252 + $0x18] sm:$0x3f] %v3231
        %3257 = vst [vmem:[%s3252 + $0x20] sm:$0x3f] %v3232
        %3258 = vst [vmem:[%s3252 + $0x28] sm:$0x3f] %v3233
        %v3259 = vld [vmem:[%s2993] sm:$0xff]
        %v3260 = vld [vmem:[%s2993 + $0x8] sm:$0xff]
        %v3261 = vld [vmem:[%s2993 + $0x10] sm:$0xff]
        %v3262 = vld [vmem:[%s2993 + $0x18] sm:$0x3f]
        %v3263 = vld [vmem:[%s2993 + $0x20] sm:$0x3f]
        %v3264 = vld [vmem:[%s2993 + $0x28] sm:$0x3f]
        %v3265 = vmul.f32 %v3259, %v1836
        %v3266 = vmul.f32 %v3260, %v1840
        %v3267 = vmul.f32 %v3261, %v1844
        %v3268 = vmul.f32 %v3262, %v1836
        %v3269 = vmul.f32 %v3263, %v1840
        %v3270 = vmul.f32 %v3264, %v1844
        %v3271 = vld [vmem:[%s3012 + $0x18] sm:$0xff]
        %v3272 = vld [vmem:[%s3012 + $0x20] sm:$0xff]
        %v3273 = vld [vmem:[%s3012 + $0x28] sm:$0xff]
        %v3274 = vld [vmem:[%s3012 + $0x30] sm:$0x3f]
        %v3275 = vld [vmem:[%s3012 + $0x38] sm:$0x3f]
        %v3276 = vld [vmem:[%s3012 + $0x40] sm:$0x3f]
        %v3277 = vmul.f32 %v3271, %v1864
        %v3278 = vmul.f32 %v3272, %v1868
        %v3279 = vmul.f32 %v3273, %v1872
        %v3280 = vmul.f32 %v3274, %v1864
        %v3281 = vmul.f32 %v3275, %v1868
        %v3282 = vmul.f32 %v3276, %v1872
        %v3283 = vadd.f32 %v3265, %v3277
        %v3284 = vadd.f32 %v3266, %v3278
        %v3285 = vadd.f32 %v3267, %v3279
        %v3286 = vadd.f32 %v3268, %v3280
        %v3287 = vadd.f32 %v3269, %v3281
        %v3288 = vadd.f32 %v3270, %v3282
        %v3289 = vld [vmem:[%s3031] sm:$0xff]
        %v3290 = vld [vmem:[%s3031 + $0x8] sm:$0xff]
        %v3291 = vld [vmem:[%s3031 + $0x10] sm:$0xff]
        %v3292 = vld [vmem:[%s3031 + $0x18] sm:$0x3f]
        %v3293 = vld [vmem:[%s3031 + $0x20] sm:$0x3f]
        %v3294 = vld [vmem:[%s3031 + $0x28] sm:$0x3f]
        %v3295 = vmul.f32 %v3289, %v1898
        %v3296 = vmul.f32 %v3290, %v1902
        %v3297 = vmul.f32 %v3291, %v1906
        %v3298 = vmul.f32 %v3292, %v1898
        %v3299 = vmul.f32 %v3293, %v1902
        %v3300 = vmul.f32 %v3294, %v1906
        %v3301 = vadd.f32 %v3283, %v3295
        %v3302 = vadd.f32 %v3284, %v3296
        %v3303 = vadd.f32 %v3285, %v3297
        %v3304 = vadd.f32 %v3286, %v3298
        %v3305 = vadd.f32 %v3287, %v3299
        %v3306 = vadd.f32 %v3288, %v3300
        %v3307 = vld [vmem:[%s3177] sm:$0xff]
        %v3308 = vld [vmem:[%s3177 + $0x8] sm:$0xff]
        %v3309 = vld [vmem:[%s3177 + $0x10] sm:$0xff]
        %v3310 = vld [vmem:[%s3177 + $0x18] sm:$0x3f]
        %v3311 = vld [vmem:[%s3177 + $0x20] sm:$0x3f]
        %v3312 = vld [vmem:[%s3177 + $0x28] sm:$0x3f]
        %v3313 = vmul.f32 %v3307, %v1933
        %v3314 = vmul.f32 %v3308, %v1937
        %v3315 = vmul.f32 %v3309, %v1941
        %v3316 = vmul.f32 %v3310, %v1933
        %v3317 = vmul.f32 %v3311, %v1937
        %v3318 = vmul.f32 %v3312, %v1941
        %v3319 = vadd.f32 %v3301, %v3313
        %v3320 = vadd.f32 %v3302, %v3314
        %v3321 = vadd.f32 %v3303, %v3315
        %v3322 = vadd.f32 %v3304, %v3316
        %v3323 = vadd.f32 %v3305, %v3317
        %v3324 = vadd.f32 %v3306, %v3318
        %v3325 = vld [vmem:[%s3196 + $0x18] sm:$0xff]
        %v3326 = vld [vmem:[%s3196 + $0x20] sm:$0xff]
        %v3327 = vld [vmem:[%s3196 + $0x28] sm:$0xff]
        %v3328 = vld [vmem:[%s3196 + $0x30] sm:$0x3f]
        %v3329 = vld [vmem:[%s3196 + $0x38] sm:$0x3f]
        %v3330 = vld [vmem:[%s3196 + $0x40] sm:$0x3f]
        %v3331 = vmul.f32 %v3325, %v1967
        %v3332 = vmul.f32 %v3326, %v1971
        %v3333 = vmul.f32 %v3327, %v1975
        %v3334 = vmul.f32 %v3328, %v1967
        %v3335 = vmul.f32 %v3329, %v1971
        %v3336 = vmul.f32 %v3330, %v1975
        %v3337 = vadd.f32 %v3319, %v3331
        %v3338 = vadd.f32 %v3320, %v3332
        %v3339 = vadd.f32 %v3321, %v3333
        %v3340 = vadd.f32 %v3322, %v3334
        %v3341 = vadd.f32 %v3323, %v3335
        %v3342 = vadd.f32 %v3324, %v3336
        %v3343 = vld [vmem:[%s3215] sm:$0xff]
        %v3344 = vld [vmem:[%s3215 + $0x8] sm:$0xff]
        %v3345 = vld [vmem:[%s3215 + $0x10] sm:$0xff]
        %v3346 = vld [vmem:[%s3215 + $0x18] sm:$0x3f]
        %v3347 = vld [vmem:[%s3215 + $0x20] sm:$0x3f]
        %v3348 = vld [vmem:[%s3215 + $0x28] sm:$0x3f]
        %v3349 = vmul.f32 %v3343, %v2002
        %v3350 = vmul.f32 %v3344, %v2006
        %v3351 = vmul.f32 %v3345, %v2010
        %v3352 = vmul.f32 %v3346, %v2002
        %v3353 = vmul.f32 %v3347, %v2006
        %v3354 = vmul.f32 %v3348, %v2010
        %v3355 = vadd.f32 %v3337, %v3349
        %v3356 = vadd.f32 %v3338, %v3350
        %v3357 = vadd.f32 %v3339, %v3351
        %v3358 = vadd.f32 %v3340, %v3352
        %v3359 = vadd.f32 %v3341, %v3353
        %v3360 = vadd.f32 %v3342, %v3354
        %s3361 = scalar_lea.vmem [#allocation3], 432
        %v3362 = vld [vmem:[%s3361] sm:$0xff]
        %v3363 = vld [vmem:[%s3361 + $0x8] sm:$0xff]
        %v3364 = vld [vmem:[%s3361 + $0x10] sm:$0xff]
        %v3365 = vld [vmem:[%s3361 + $0x18] sm:$0x3f]
        %v3366 = vld [vmem:[%s3361 + $0x20] sm:$0x3f]
        %v3367 = vld [vmem:[%s3361 + $0x28] sm:$0x3f]
        %v3368 = vmul.f32 %v3362, %v2037
        %v3369 = vmul.f32 %v3363, %v2041
        %v3370 = vmul.f32 %v3364, %v2045
        %v3371 = vmul.f32 %v3365, %v2037
        %v3372 = vmul.f32 %v3366, %v2041
        %v3373 = vmul.f32 %v3367, %v2045
        %v3374 = vadd.f32 %v3355, %v3368
        %v3375 = vadd.f32 %v3356, %v3369
        %v3376 = vadd.f32 %v3357, %v3370
        %v3377 = vadd.f32 %v3358, %v3371
        %v3378 = vadd.f32 %v3359, %v3372
        %v3379 = vadd.f32 %v3360, %v3373
        %s3380 = scalar_lea.vmem [#allocation2], 648
        %v3381 = vld [vmem:[%s3380 + $0x18] sm:$0xff]
        %v3382 = vld [vmem:[%s3380 + $0x20] sm:$0xff]
        %v3383 = vld [vmem:[%s3380 + $0x28] sm:$0xff]
        %v3384 = vld [vmem:[%s3380 + $0x30] sm:$0x3f]
        %v3385 = vld [vmem:[%s3380 + $0x38] sm:$0x3f]
        %v3386 = vld [vmem:[%s3380 + $0x40] sm:$0x3f]
        %v3387 = vmul.f32 %v3381, %v2072
        %v3388 = vmul.f32 %v3382, %v2076
        %v3389 = vmul.f32 %v3383, %v2080
        %v3390 = vmul.f32 %v3384, %v2072
        %v3391 = vmul.f32 %v3385, %v2076
        %v3392 = vmul.f32 %v3386, %v2080
        %v3393 = vadd.f32 %v3374, %v3387
        %v3394 = vadd.f32 %v3375, %v3388
        %v3395 = vadd.f32 %v3376, %v3389
        %v3396 = vadd.f32 %v3377, %v3390
        %v3397 = vadd.f32 %v3378, %v3391
        %v3398 = vadd.f32 %v3379, %v3392
        %s3399 = scalar_lea.vmem [#allocation3], 1200
        %v3400 = vld [vmem:[%s3399] sm:$0xff]
        %v3401 = vld [vmem:[%s3399 + $0x8] sm:$0xff]
        %v3402 = vld [vmem:[%s3399 + $0x10] sm:$0xff]
        %v3403 = vld [vmem:[%s3399 + $0x18] sm:$0x3f]
        %v3404 = vld [vmem:[%s3399 + $0x20] sm:$0x3f]
        %v3405 = vld [vmem:[%s3399 + $0x28] sm:$0x3f]
        %v3406 = vmul.f32 %v3400, %v2107
        %v3407 = vmul.f32 %v3401, %v2111
        %v3408 = vmul.f32 %v3402, %v2115
        %v3409 = vmul.f32 %v3403, %v2107
        %v3410 = vmul.f32 %v3404, %v2111
        %v3411 = vmul.f32 %v3405, %v2115
        %v3412 = vadd.f32 %v3393, %v3406
        %v3413 = vadd.f32 %v3394, %v3407
        %v3414 = vadd.f32 %v3395, %v3408
        %v3415 = vadd.f32 %v3396, %v3409
        %v3416 = vadd.f32 %v3397, %v3410
        %v3417 = vadd.f32 %v3398, %v3411
        %v3418 = vadd.f32 %v3234, %v3412
        %v3419 = vadd.f32 %v3235, %v3413
        %v3420 = vadd.f32 %v3236, %v3414
        %v3421 = vadd.f32 %v3237, %v3415
        %v3422 = vadd.f32 %v3238, %v3416
        %v3423 = vadd.f32 %v3239, %v3417
        %v3424 = vmul.f32 %v3412, %v3412
        %v3425 = vmul.f32 %v3413, %v3413
        %v3426 = vmul.f32 %v3414, %v3414
        %v3427 = vmul.f32 %v3415, %v3415
        %v3428 = vmul.f32 %v3416, %v3416
        %v3429 = vmul.f32 %v3417, %v3417
        %v3430 = vadd.f32 %v3246, %v3424
        %v3431 = vadd.f32 %v3247, %v3425
        %v3432 = vadd.f32 %v3248, %v3426
        %v3433 = vadd.f32 %v3249, %v3427
        %v3434 = vadd.f32 %v3250, %v3428
        %v3435 = vadd.f32 %v3251, %v3429
        %s3436 = scalar_lea.vmem %s464, 336 [#allocation6]
        %3437 = vst [vmem:[%s3436] sm:$0xff] %v3412
        %3438 = vst [vmem:[%s3436 + $0x8] sm:$0xff] %v3413
        %3439 = vst [vmem:[%s3436 + $0x10] sm:$0xff] %v3414
        %3440 = vst [vmem:[%s3436 + $0x18] sm:$0x3f] %v3415
        %3441 = vst [vmem:[%s3436 + $0x20] sm:$0x3f] %v3416
        %3442 = vst [vmem:[%s3436 + $0x28] sm:$0x3f] %v3417
        %v3443 = vld [vmem:[%s3177] sm:$0xff]
        %v3444 = vld [vmem:[%s3177 + $0x8] sm:$0xff]
        %v3445 = vld [vmem:[%s3177 + $0x10] sm:$0xff]
        %v3446 = vld [vmem:[%s3177 + $0x18] sm:$0x3f]
        %v3447 = vld [vmem:[%s3177 + $0x20] sm:$0x3f]
        %v3448 = vld [vmem:[%s3177 + $0x28] sm:$0x3f]
        %v3449 = vmul.f32 %v3443, %v1836
        %v3450 = vmul.f32 %v3444, %v1840
        %v3451 = vmul.f32 %v3445, %v1844
        %v3452 = vmul.f32 %v3446, %v1836
        %v3453 = vmul.f32 %v3447, %v1840
        %v3454 = vmul.f32 %v3448, %v1844
        %v3455 = vld [vmem:[%s3196 + $0x18] sm:$0xff]
        %v3456 = vld [vmem:[%s3196 + $0x20] sm:$0xff]
        %v3457 = vld [vmem:[%s3196 + $0x28] sm:$0xff]
        %v3458 = vld [vmem:[%s3196 + $0x30] sm:$0x3f]
        %v3459 = vld [vmem:[%s3196 + $0x38] sm:$0x3f]
        %v3460 = vld [vmem:[%s3196 + $0x40] sm:$0x3f]
        %v3461 = vmul.f32 %v3455, %v1864
        %v3462 = vmul.f32 %v3456, %v1868
        %v3463 = vmul.f32 %v3457, %v1872
        %v3464 = vmul.f32 %v3458, %v1864
        %v3465 = vmul.f32 %v3459, %v1868
        %v3466 = vmul.f32 %v3460, %v1872
        %v3467 = vadd.f32 %v3449, %v3461
        %v3468 = vadd.f32 %v3450, %v3462
        %v3469 = vadd.f32 %v3451, %v3463
        %v3470 = vadd.f32 %v3452, %v3464
        %v3471 = vadd.f32 %v3453, %v3465
        %v3472 = vadd.f32 %v3454, %v3466
        %v3473 = vld [vmem:[%s3215] sm:$0xff]
        %v3474 = vld [vmem:[%s3215 + $0x8] sm:$0xff]
        %v3475 = vld [vmem:[%s3215 + $0x10] sm:$0xff]
        %v3476 = vld [vmem:[%s3215 + $0x18] sm:$0x3f]
        %v3477 = vld [vmem:[%s3215 + $0x20] sm:$0x3f]
        %v3478 = vld [vmem:[%s3215 + $0x28] sm:$0x3f]
        %v3479 = vmul.f32 %v3473, %v1898
        %v3480 = vmul.f32 %v3474, %v1902
        %v3481 = vmul.f32 %v3475, %v1906
        %v3482 = vmul.f32 %v3476, %v1898
        %v3483 = vmul.f32 %v3477, %v1902
        %v3484 = vmul.f32 %v3478, %v1906
        %v3485 = vadd.f32 %v3467, %v3479
        %v3486 = vadd.f32 %v3468, %v3480
        %v3487 = vadd.f32 %v3469, %v3481
        %v3488 = vadd.f32 %v3470, %v3482
        %v3489 = vadd.f32 %v3471, %v3483
        %v3490 = vadd.f32 %v3472, %v3484
        %v3491 = vld [vmem:[%s3361] sm:$0xff]
        %v3492 = vld [vmem:[%s3361 + $0x8] sm:$0xff]
        %v3493 = vld [vmem:[%s3361 + $0x10] sm:$0xff]
        %v3494 = vld [vmem:[%s3361 + $0x18] sm:$0x3f]
        %v3495 = vld [vmem:[%s3361 + $0x20] sm:$0x3f]
        %v3496 = vld [vmem:[%s3361 + $0x28] sm:$0x3f]
        %v3497 = vmul.f32 %v3491, %v1933
        %v3498 = vmul.f32 %v3492, %v1937
        %v3499 = vmul.f32 %v3493, %v1941
        %v3500 = vmul.f32 %v3494, %v1933
        %v3501 = vmul.f32 %v3495, %v1937
        %v3502 = vmul.f32 %v3496, %v1941
        %v3503 = vadd.f32 %v3485, %v3497
        %v3504 = vadd.f32 %v3486, %v3498
        %v3505 = vadd.f32 %v3487, %v3499
        %v3506 = vadd.f32 %v3488, %v3500
        %v3507 = vadd.f32 %v3489, %v3501
        %v3508 = vadd.f32 %v3490, %v3502
        %v3509 = vld [vmem:[%s3380 + $0x18] sm:$0xff]
        %v3510 = vld [vmem:[%s3380 + $0x20] sm:$0xff]
        %v3511 = vld [vmem:[%s3380 + $0x28] sm:$0xff]
        %v3512 = vld [vmem:[%s3380 + $0x30] sm:$0x3f]
        %v3513 = vld [vmem:[%s3380 + $0x38] sm:$0x3f]
        %v3514 = vld [vmem:[%s3380 + $0x40] sm:$0x3f]
        %v3515 = vmul.f32 %v3509, %v1967
        %v3516 = vmul.f32 %v3510, %v1971
        %v3517 = vmul.f32 %v3511, %v1975
        %v3518 = vmul.f32 %v3512, %v1967
        %v3519 = vmul.f32 %v3513, %v1971
        %v3520 = vmul.f32 %v3514, %v1975
        %v3521 = vadd.f32 %v3503, %v3515
        %v3522 = vadd.f32 %v3504, %v3516
        %v3523 = vadd.f32 %v3505, %v3517
        %v3524 = vadd.f32 %v3506, %v3518
        %v3525 = vadd.f32 %v3507, %v3519
        %v3526 = vadd.f32 %v3508, %v3520
        %v3527 = vld [vmem:[%s3399] sm:$0xff]
        %v3528 = vld [vmem:[%s3399 + $0x8] sm:$0xff]
        %v3529 = vld [vmem:[%s3399 + $0x10] sm:$0xff]
        %v3530 = vld [vmem:[%s3399 + $0x18] sm:$0x3f]
        %v3531 = vld [vmem:[%s3399 + $0x20] sm:$0x3f]
        %v3532 = vld [vmem:[%s3399 + $0x28] sm:$0x3f]
        %v3533 = vmul.f32 %v3527, %v2002
        %v3534 = vmul.f32 %v3528, %v2006
        %v3535 = vmul.f32 %v3529, %v2010
        %v3536 = vmul.f32 %v3530, %v2002
        %v3537 = vmul.f32 %v3531, %v2006
        %v3538 = vmul.f32 %v3532, %v2010
        %v3539 = vadd.f32 %v3521, %v3533
        %v3540 = vadd.f32 %v3522, %v3534
        %v3541 = vadd.f32 %v3523, %v3535
        %v3542 = vadd.f32 %v3524, %v3536
        %v3543 = vadd.f32 %v3525, %v3537
        %v3544 = vadd.f32 %v3526, %v3538
        %s3545 = scalar_lea.vmem [#allocation3], 480
        %v3546 = vld [vmem:[%s3545] sm:$0xff]
        %v3547 = vld [vmem:[%s3545 + $0x8] sm:$0xff]
        %v3548 = vld [vmem:[%s3545 + $0x10] sm:$0xff]
        %v3549 = vld [vmem:[%s3545 + $0x18] sm:$0x3f]
        %v3550 = vld [vmem:[%s3545 + $0x20] sm:$0x3f]
        %v3551 = vld [vmem:[%s3545 + $0x28] sm:$0x3f]
        %v3552 = vmul.f32 %v3546, %v2037
        %v3553 = vmul.f32 %v3547, %v2041
        %v3554 = vmul.f32 %v3548, %v2045
        %v3555 = vmul.f32 %v3549, %v2037
        %v3556 = vmul.f32 %v3550, %v2041
        %v3557 = vmul.f32 %v3551, %v2045
        %v3558 = vadd.f32 %v3539, %v3552
        %v3559 = vadd.f32 %v3540, %v3553
        %v3560 = vadd.f32 %v3541, %v3554
        %v3561 = vadd.f32 %v3542, %v3555
        %v3562 = vadd.f32 %v3543, %v3556
        %v3563 = vadd.f32 %v3544, %v3557
        %s3564 = scalar_lea.vmem [#allocation2], 720
        %v3565 = vld [vmem:[%s3564 + $0x18] sm:$0xff]
        %v3566 = vld [vmem:[%s3564 + $0x20] sm:$0xff]
        %v3567 = vld [vmem:[%s3564 + $0x28] sm:$0xff]
        %v3568 = vld [vmem:[%s3564 + $0x30] sm:$0x3f]
        %v3569 = vld [vmem:[%s3564 + $0x38] sm:$0x3f]
        %v3570 = vld [vmem:[%s3564 + $0x40] sm:$0x3f]
        %v3571 = vmul.f32 %v3565, %v2072
        %v3572 = vmul.f32 %v3566, %v2076
        %v3573 = vmul.f32 %v3567, %v2080
        %v3574 = vmul.f32 %v3568, %v2072
        %v3575 = vmul.f32 %v3569, %v2076
        %v3576 = vmul.f32 %v3570, %v2080
        %v3577 = vadd.f32 %v3558, %v3571
        %v3578 = vadd.f32 %v3559, %v3572
        %v3579 = vadd.f32 %v3560, %v3573
        %v3580 = vadd.f32 %v3561, %v3574
        %v3581 = vadd.f32 %v3562, %v3575
        %v3582 = vadd.f32 %v3563, %v3576
        %s3583 = scalar_lea.vmem [#allocation3], 1248
        %v3584 = vld [vmem:[%s3583] sm:$0xff]
        %v3585 = vld [vmem:[%s3583 + $0x8] sm:$0xff]
        %v3586 = vld [vmem:[%s3583 + $0x10] sm:$0xff]
        %v3587 = vld [vmem:[%s3583 + $0x18] sm:$0x3f]
        %v3588 = vld [vmem:[%s3583 + $0x20] sm:$0x3f]
        %v3589 = vld [vmem:[%s3583 + $0x28] sm:$0x3f]
        %v3590 = vmul.f32 %v3584, %v2107
        %v3591 = vmul.f32 %v3585, %v2111
        %v3592 = vmul.f32 %v3586, %v2115
        %v3593 = vmul.f32 %v3587, %v2107
        %v3594 = vmul.f32 %v3588, %v2111
        %v3595 = vmul.f32 %v3589, %v2115
        %v3596 = vadd.f32 %v3577, %v3590
        %v3597 = vadd.f32 %v3578, %v3591
        %v3598 = vadd.f32 %v3579, %v3592
        %v3599 = vadd.f32 %v3580, %v3593
        %v3600 = vadd.f32 %v3581, %v3594
        %v3601 = vadd.f32 %v3582, %v3595
        %v3602 = vadd.f32 %v3418, %v3596
        %v3603 = vadd.f32 %v3419, %v3597
        %v3604 = vadd.f32 %v3420, %v3598
        %v3605 = vadd.f32 %v3421, %v3599
        %v3606 = vadd.f32 %v3422, %v3600
        %v3607 = vadd.f32 %v3423, %v3601
        %v3608 = vmul.f32 %v3596, %v3596
        %v3609 = vmul.f32 %v3597, %v3597
        %v3610 = vmul.f32 %v3598, %v3598
        %v3611 = vmul.f32 %v3599, %v3599
        %v3612 = vmul.f32 %v3600, %v3600
        %v3613 = vmul.f32 %v3601, %v3601
        %v3614 = vadd.f32 %v3430, %v3608
        %v3615 = vadd.f32 %v3431, %v3609
        %v3616 = vadd.f32 %v3432, %v3610
        %v3617 = vadd.f32 %v3433, %v3611
        %v3618 = vadd.f32 %v3434, %v3612
        %v3619 = vadd.f32 %v3435, %v3613
        %s3620 = scalar_lea.vmem %s464, 384 [#allocation6]
        %3621 = vst [vmem:[%s3620] sm:$0xff] %v3596
        %3622 = vst [vmem:[%s3620 + $0x8] sm:$0xff] %v3597
        %3623 = vst [vmem:[%s3620 + $0x10] sm:$0xff] %v3598
        %3624 = vst [vmem:[%s3620 + $0x18] sm:$0x3f] %v3599
        %3625 = vst [vmem:[%s3620 + $0x20] sm:$0x3f] %v3600
        %3626 = vst [vmem:[%s3620 + $0x28] sm:$0x3f] %v3601
        %v3627 = vld [vmem:[%s3361] sm:$0xff]
        %v3628 = vld [vmem:[%s3361 + $0x8] sm:$0xff]
        %v3629 = vld [vmem:[%s3361 + $0x10] sm:$0xff]
        %v3630 = vld [vmem:[%s3361 + $0x18] sm:$0x3f]
        %v3631 = vld [vmem:[%s3361 + $0x20] sm:$0x3f]
        %v3632 = vld [vmem:[%s3361 + $0x28] sm:$0x3f]
        %v3633 = vmul.f32 %v3627, %v1836
        %v3634 = vmul.f32 %v3628, %v1840
        %v3635 = vmul.f32 %v3629, %v1844
        %v3636 = vmul.f32 %v3630, %v1836
        %v3637 = vmul.f32 %v3631, %v1840
        %v3638 = vmul.f32 %v3632, %v1844
        %v3639 = vld [vmem:[%s3380 + $0x18] sm:$0xff]
        %v3640 = vld [vmem:[%s3380 + $0x20] sm:$0xff]
        %v3641 = vld [vmem:[%s3380 + $0x28] sm:$0xff]
        %v3642 = vld [vmem:[%s3380 + $0x30] sm:$0x3f]
        %v3643 = vld [vmem:[%s3380 + $0x38] sm:$0x3f]
        %v3644 = vld [vmem:[%s3380 + $0x40] sm:$0x3f]
        %v3645 = vmul.f32 %v3639, %v1864
        %v3646 = vmul.f32 %v3640, %v1868
        %v3647 = vmul.f32 %v3641, %v1872
        %v3648 = vmul.f32 %v3642, %v1864
        %v3649 = vmul.f32 %v3643, %v1868
        %v3650 = vmul.f32 %v3644, %v1872
        %v3651 = vadd.f32 %v3633, %v3645
        %v3652 = vadd.f32 %v3634, %v3646
        %v3653 = vadd.f32 %v3635, %v3647
        %v3654 = vadd.f32 %v3636, %v3648
        %v3655 = vadd.f32 %v3637, %v3649
        %v3656 = vadd.f32 %v3638, %v3650
        %v3657 = vld [vmem:[%s3399] sm:$0xff]
        %v3658 = vld [vmem:[%s3399 + $0x8] sm:$0xff]
        %v3659 = vld [vmem:[%s3399 + $0x10] sm:$0xff]
        %v3660 = vld [vmem:[%s3399 + $0x18] sm:$0x3f]
        %v3661 = vld [vmem:[%s3399 + $0x20] sm:$0x3f]
        %v3662 = vld [vmem:[%s3399 + $0x28] sm:$0x3f]
        %v3663 = vmul.f32 %v3657, %v1898
        %v3664 = vmul.f32 %v3658, %v1902
        %v3665 = vmul.f32 %v3659, %v1906
        %v3666 = vmul.f32 %v3660, %v1898
        %v3667 = vmul.f32 %v3661, %v1902
        %v3668 = vmul.f32 %v3662, %v1906
        %v3669 = vadd.f32 %v3651, %v3663
        %v3670 = vadd.f32 %v3652, %v3664
        %v3671 = vadd.f32 %v3653, %v3665
        %v3672 = vadd.f32 %v3654, %v3666
        %v3673 = vadd.f32 %v3655, %v3667
        %v3674 = vadd.f32 %v3656, %v3668
        %v3675 = vld [vmem:[%s3545] sm:$0xff]
        %v3676 = vld [vmem:[%s3545 + $0x8] sm:$0xff]
        %v3677 = vld [vmem:[%s3545 + $0x10] sm:$0xff]
        %v3678 = vld [vmem:[%s3545 + $0x18] sm:$0x3f]
        %v3679 = vld [vmem:[%s3545 + $0x20] sm:$0x3f]
        %v3680 = vld [vmem:[%s3545 + $0x28] sm:$0x3f]
        %v3681 = vmul.f32 %v3675, %v1933
        %v3682 = vmul.f32 %v3676, %v1937
        %v3683 = vmul.f32 %v3677, %v1941
        %v3684 = vmul.f32 %v3678, %v1933
        %v3685 = vmul.f32 %v3679, %v1937
        %v3686 = vmul.f32 %v3680, %v1941
        %v3687 = vadd.f32 %v3669, %v3681
        %v3688 = vadd.f32 %v3670, %v3682
        %v3689 = vadd.f32 %v3671, %v3683
        %v3690 = vadd.f32 %v3672, %v3684
        %v3691 = vadd.f32 %v3673, %v3685
        %v3692 = vadd.f32 %v3674, %v3686
        %v3693 = vld [vmem:[%s3564 + $0x18] sm:$0xff]
        %v3694 = vld [vmem:[%s3564 + $0x20] sm:$0xff]
        %v3695 = vld [vmem:[%s3564 + $0x28] sm:$0xff]
        %v3696 = vld [vmem:[%s3564 + $0x30] sm:$0x3f]
        %v3697 = vld [vmem:[%s3564 + $0x38] sm:$0x3f]
        %v3698 = vld [vmem:[%s3564 + $0x40] sm:$0x3f]
        %v3699 = vmul.f32 %v3693, %v1967
        %v3700 = vmul.f32 %v3694, %v1971
        %v3701 = vmul.f32 %v3695, %v1975
        %v3702 = vmul.f32 %v3696, %v1967
        %v3703 = vmul.f32 %v3697, %v1971
        %v3704 = vmul.f32 %v3698, %v1975
        %v3705 = vadd.f32 %v3687, %v3699
        %v3706 = vadd.f32 %v3688, %v3700
        %v3707 = vadd.f32 %v3689, %v3701
        %v3708 = vadd.f32 %v3690, %v3702
        %v3709 = vadd.f32 %v3691, %v3703
        %v3710 = vadd.f32 %v3692, %v3704
        %v3711 = vld [vmem:[%s3583] sm:$0xff]
        %v3712 = vld [vmem:[%s3583 + $0x8] sm:$0xff]
        %v3713 = vld [vmem:[%s3583 + $0x10] sm:$0xff]
        %v3714 = vld [vmem:[%s3583 + $0x18] sm:$0x3f]
        %v3715 = vld [vmem:[%s3583 + $0x20] sm:$0x3f]
        %v3716 = vld [vmem:[%s3583 + $0x28] sm:$0x3f]
        %v3717 = vmul.f32 %v3711, %v2002
        %v3718 = vmul.f32 %v3712, %v2006
        %v3719 = vmul.f32 %v3713, %v2010
        %v3720 = vmul.f32 %v3714, %v2002
        %v3721 = vmul.f32 %v3715, %v2006
        %v3722 = vmul.f32 %v3716, %v2010
        %v3723 = vadd.f32 %v3705, %v3717
        %v3724 = vadd.f32 %v3706, %v3718
        %v3725 = vadd.f32 %v3707, %v3719
        %v3726 = vadd.f32 %v3708, %v3720
        %v3727 = vadd.f32 %v3709, %v3721
        %v3728 = vadd.f32 %v3710, %v3722
        %s3729 = scalar_lea.vmem [#allocation3], 528
        %v3730 = vld [vmem:[%s3729] sm:$0xff]
        %v3731 = vld [vmem:[%s3729 + $0x8] sm:$0xff]
        %v3732 = vld [vmem:[%s3729 + $0x10] sm:$0xff]
        %v3733 = vld [vmem:[%s3729 + $0x18] sm:$0x3f]
        %v3734 = vld [vmem:[%s3729 + $0x20] sm:$0x3f]
        %v3735 = vld [vmem:[%s3729 + $0x28] sm:$0x3f]
        %v3736 = vmul.f32 %v3730, %v2037
        %v3737 = vmul.f32 %v3731, %v2041
        %v3738 = vmul.f32 %v3732, %v2045
        %v3739 = vmul.f32 %v3733, %v2037
        %v3740 = vmul.f32 %v3734, %v2041
        %v3741 = vmul.f32 %v3735, %v2045
        %v3742 = vadd.f32 %v3723, %v3736
        %v3743 = vadd.f32 %v3724, %v3737
        %v3744 = vadd.f32 %v3725, %v3738
        %v3745 = vadd.f32 %v3726, %v3739
        %v3746 = vadd.f32 %v3727, %v3740
        %v3747 = vadd.f32 %v3728, %v3741
        %s3748 = scalar_lea.vmem [#allocation2], 792
        %v3749 = vld [vmem:[%s3748 + $0x18] sm:$0xff]
        %v3750 = vld [vmem:[%s3748 + $0x20] sm:$0xff]
        %v3751 = vld [vmem:[%s3748 + $0x28] sm:$0xff]
        %v3752 = vld [vmem:[%s3748 + $0x30] sm:$0x3f]
        %v3753 = vld [vmem:[%s3748 + $0x38] sm:$0x3f]
        %v3754 = vld [vmem:[%s3748 + $0x40] sm:$0x3f]
        %v3755 = vmul.f32 %v3749, %v2072
        %v3756 = vmul.f32 %v3750, %v2076
        %v3757 = vmul.f32 %v3751, %v2080
        %v3758 = vmul.f32 %v3752, %v2072
        %v3759 = vmul.f32 %v3753, %v2076
        %v3760 = vmul.f32 %v3754, %v2080
        %v3761 = vadd.f32 %v3742, %v3755
        %v3762 = vadd.f32 %v3743, %v3756
        %v3763 = vadd.f32 %v3744, %v3757
        %v3764 = vadd.f32 %v3745, %v3758
        %v3765 = vadd.f32 %v3746, %v3759
        %v3766 = vadd.f32 %v3747, %v3760
        %s3767 = scalar_lea.vmem [#allocation3], 1296
        %v3768 = vld [vmem:[%s3767] sm:$0xff]
        %v3769 = vld [vmem:[%s3767 + $0x8] sm:$0xff]
        %v3770 = vld [vmem:[%s3767 + $0x10] sm:$0xff]
        %v3771 = vld [vmem:[%s3767 + $0x18] sm:$0x3f]
        %v3772 = vld [vmem:[%s3767 + $0x20] sm:$0x3f]
        %v3773 = vld [vmem:[%s3767 + $0x28] sm:$0x3f]
        %v3774 = vmul.f32 %v3768, %v2107
        %v3775 = vmul.f32 %v3769, %v2111
        %v3776 = vmul.f32 %v3770, %v2115
        %v3777 = vmul.f32 %v3771, %v2107
        %v3778 = vmul.f32 %v3772, %v2111
        %v3779 = vmul.f32 %v3773, %v2115
        %v3780 = vadd.f32 %v3761, %v3774
        %v3781 = vadd.f32 %v3762, %v3775
        %v3782 = vadd.f32 %v3763, %v3776
        %v3783 = vadd.f32 %v3764, %v3777
        %v3784 = vadd.f32 %v3765, %v3778
        %v3785 = vadd.f32 %v3766, %v3779
        %v3786 = vadd.f32 %v3602, %v3780
        %v3787 = vadd.f32 %v3603, %v3781
        %v3788 = vadd.f32 %v3604, %v3782
        %v3789 = vadd.f32 %v3605, %v3783
        %v3790 = vadd.f32 %v3606, %v3784
        %v3791 = vadd.f32 %v3607, %v3785
        %v3792 = vmul.f32 %v3780, %v3780
        %v3793 = vmul.f32 %v3781, %v3781
        %v3794 = vmul.f32 %v3782, %v3782
        %v3795 = vmul.f32 %v3783, %v3783
        %v3796 = vmul.f32 %v3784, %v3784
        %v3797 = vmul.f32 %v3785, %v3785
        %v3798 = vadd.f32 %v3614, %v3792
        %v3799 = vadd.f32 %v3615, %v3793
        %v3800 = vadd.f32 %v3616, %v3794
        %v3801 = vadd.f32 %v3617, %v3795
        %v3802 = vadd.f32 %v3618, %v3796
        %v3803 = vadd.f32 %v3619, %v3797
        %s3804 = scalar_lea.vmem %s464, 432 [#allocation6]
        %3805 = vst [vmem:[%s3804] sm:$0xff] %v3780
        %3806 = vst [vmem:[%s3804 + $0x8] sm:$0xff] %v3781
        %3807 = vst [vmem:[%s3804 + $0x10] sm:$0xff] %v3782
        %3808 = vst [vmem:[%s3804 + $0x18] sm:$0x3f] %v3783
        %3809 = vst [vmem:[%s3804 + $0x20] sm:$0x3f] %v3784
        %3810 = vst [vmem:[%s3804 + $0x28] sm:$0x3f] %v3785
        %v3811 = vld [vmem:[%s3545] sm:$0xff]
        %v3812 = vld [vmem:[%s3545 + $0x8] sm:$0xff]
        %v3813 = vld [vmem:[%s3545 + $0x10] sm:$0xff]
        %v3814 = vld [vmem:[%s3545 + $0x18] sm:$0x3f]
        %v3815 = vld [vmem:[%s3545 + $0x20] sm:$0x3f]
        %v3816 = vld [vmem:[%s3545 + $0x28] sm:$0x3f]
        %v3817 = vmul.f32 %v3811, %v1836
        %v3818 = vmul.f32 %v3812, %v1840
        %v3819 = vmul.f32 %v3813, %v1844
        %v3820 = vmul.f32 %v3814, %v1836
        %v3821 = vmul.f32 %v3815, %v1840
        %v3822 = vmul.f32 %v3816, %v1844
        %v3823 = vld [vmem:[%s3564 + $0x18] sm:$0xff]
        %v3824 = vld [vmem:[%s3564 + $0x20] sm:$0xff]
        %v3825 = vld [vmem:[%s3564 + $0x28] sm:$0xff]
        %v3826 = vld [vmem:[%s3564 + $0x30] sm:$0x3f]
        %v3827 = vld [vmem:[%s3564 + $0x38] sm:$0x3f]
        %v3828 = vld [vmem:[%s3564 + $0x40] sm:$0x3f]
        %v3829 = vmul.f32 %v3823, %v1864
        %v3830 = vmul.f32 %v3824, %v1868
        %v3831 = vmul.f32 %v3825, %v1872
        %v3832 = vmul.f32 %v3826, %v1864
        %v3833 = vmul.f32 %v3827, %v1868
        %v3834 = vmul.f32 %v3828, %v1872
        %v3835 = vadd.f32 %v3817, %v3829
        %v3836 = vadd.f32 %v3818, %v3830
        %v3837 = vadd.f32 %v3819, %v3831
        %v3838 = vadd.f32 %v3820, %v3832
        %v3839 = vadd.f32 %v3821, %v3833
        %v3840 = vadd.f32 %v3822, %v3834
        %v3841 = vld [vmem:[%s3583] sm:$0xff]
        %v3842 = vld [vmem:[%s3583 + $0x8] sm:$0xff]
        %v3843 = vld [vmem:[%s3583 + $0x10] sm:$0xff]
        %v3844 = vld [vmem:[%s3583 + $0x18] sm:$0x3f]
        %v3845 = vld [vmem:[%s3583 + $0x20] sm:$0x3f]
        %v3846 = vld [vmem:[%s3583 + $0x28] sm:$0x3f]
        %v3847 = vmul.f32 %v3841, %v1898
        %v3848 = vmul.f32 %v3842, %v1902
        %v3849 = vmul.f32 %v3843, %v1906
        %v3850 = vmul.f32 %v3844, %v1898
        %v3851 = vmul.f32 %v3845, %v1902
        %v3852 = vmul.f32 %v3846, %v1906
        %v3853 = vadd.f32 %v3835, %v3847
        %v3854 = vadd.f32 %v3836, %v3848
        %v3855 = vadd.f32 %v3837, %v3849
        %v3856 = vadd.f32 %v3838, %v3850
        %v3857 = vadd.f32 %v3839, %v3851
        %v3858 = vadd.f32 %v3840, %v3852
        %v3859 = vld [vmem:[%s3729] sm:$0xff]
        %v3860 = vld [vmem:[%s3729 + $0x8] sm:$0xff]
        %v3861 = vld [vmem:[%s3729 + $0x10] sm:$0xff]
        %v3862 = vld [vmem:[%s3729 + $0x18] sm:$0x3f]
        %v3863 = vld [vmem:[%s3729 + $0x20] sm:$0x3f]
        %v3864 = vld [vmem:[%s3729 + $0x28] sm:$0x3f]
        %v3865 = vmul.f32 %v3859, %v1933
        %v3866 = vmul.f32 %v3860, %v1937
        %v3867 = vmul.f32 %v3861, %v1941
        %v3868 = vmul.f32 %v3862, %v1933
        %v3869 = vmul.f32 %v3863, %v1937
        %v3870 = vmul.f32 %v3864, %v1941
        %v3871 = vadd.f32 %v3853, %v3865
        %v3872 = vadd.f32 %v3854, %v3866
        %v3873 = vadd.f32 %v3855, %v3867
        %v3874 = vadd.f32 %v3856, %v3868
        %v3875 = vadd.f32 %v3857, %v3869
        %v3876 = vadd.f32 %v3858, %v3870
        %v3877 = vld [vmem:[%s3748 + $0x18] sm:$0xff]
        %v3878 = vld [vmem:[%s3748 + $0x20] sm:$0xff]
        %v3879 = vld [vmem:[%s3748 + $0x28] sm:$0xff]
        %v3880 = vld [vmem:[%s3748 + $0x30] sm:$0x3f]
        %v3881 = vld [vmem:[%s3748 + $0x38] sm:$0x3f]
        %v3882 = vld [vmem:[%s3748 + $0x40] sm:$0x3f]
        %v3883 = vmul.f32 %v3877, %v1967
        %v3884 = vmul.f32 %v3878, %v1971
        %v3885 = vmul.f32 %v3879, %v1975
        %v3886 = vmul.f32 %v3880, %v1967
        %v3887 = vmul.f32 %v3881, %v1971
        %v3888 = vmul.f32 %v3882, %v1975
        %v3889 = vadd.f32 %v3871, %v3883
        %v3890 = vadd.f32 %v3872, %v3884
        %v3891 = vadd.f32 %v3873, %v3885
        %v3892 = vadd.f32 %v3874, %v3886
        %v3893 = vadd.f32 %v3875, %v3887
        %v3894 = vadd.f32 %v3876, %v3888
        %v3895 = vld [vmem:[%s3767] sm:$0xff]
        %v3896 = vld [vmem:[%s3767 + $0x8] sm:$0xff]
        %v3897 = vld [vmem:[%s3767 + $0x10] sm:$0xff]
        %v3898 = vld [vmem:[%s3767 + $0x18] sm:$0x3f]
        %v3899 = vld [vmem:[%s3767 + $0x20] sm:$0x3f]
        %v3900 = vld [vmem:[%s3767 + $0x28] sm:$0x3f]
        %v3901 = vmul.f32 %v3895, %v2002
        %v3902 = vmul.f32 %v3896, %v2006
        %v3903 = vmul.f32 %v3897, %v2010
        %v3904 = vmul.f32 %v3898, %v2002
        %v3905 = vmul.f32 %v3899, %v2006
        %v3906 = vmul.f32 %v3900, %v2010
        %v3907 = vadd.f32 %v3889, %v3901
        %v3908 = vadd.f32 %v3890, %v3902
        %v3909 = vadd.f32 %v3891, %v3903
        %v3910 = vadd.f32 %v3892, %v3904
        %v3911 = vadd.f32 %v3893, %v3905
        %v3912 = vadd.f32 %v3894, %v3906
        %s3913 = scalar_lea.vmem [#allocation3], 576
        %v3914 = vld [vmem:[%s3913] sm:$0xff]
        %v3915 = vld [vmem:[%s3913 + $0x8] sm:$0xff]
        %v3916 = vld [vmem:[%s3913 + $0x10] sm:$0xff]
        %v3917 = vld [vmem:[%s3913 + $0x18] sm:$0x3f]
        %v3918 = vld [vmem:[%s3913 + $0x20] sm:$0x3f]
        %v3919 = vld [vmem:[%s3913 + $0x28] sm:$0x3f]
        %v3920 = vmul.f32 %v3914, %v2037
        %v3921 = vmul.f32 %v3915, %v2041
        %v3922 = vmul.f32 %v3916, %v2045
        %v3923 = vmul.f32 %v3917, %v2037
        %v3924 = vmul.f32 %v3918, %v2041
        %v3925 = vmul.f32 %v3919, %v2045
        %v3926 = vadd.f32 %v3907, %v3920
        %v3927 = vadd.f32 %v3908, %v3921
        %v3928 = vadd.f32 %v3909, %v3922
        %v3929 = vadd.f32 %v3910, %v3923
        %v3930 = vadd.f32 %v3911, %v3924
        %v3931 = vadd.f32 %v3912, %v3925
        %s3932 = scalar_lea.vmem [#allocation2], 864
        %v3933 = vld [vmem:[%s3932 + $0x18] sm:$0xff]
        %v3934 = vld [vmem:[%s3932 + $0x20] sm:$0xff]
        %v3935 = vld [vmem:[%s3932 + $0x28] sm:$0xff]
        %v3936 = vld [vmem:[%s3932 + $0x30] sm:$0x3f]
        %v3937 = vld [vmem:[%s3932 + $0x38] sm:$0x3f]
        %v3938 = vld [vmem:[%s3932 + $0x40] sm:$0x3f]
        %v3939 = vmul.f32 %v3933, %v2072
        %v3940 = vmul.f32 %v3934, %v2076
        %v3941 = vmul.f32 %v3935, %v2080
        %v3942 = vmul.f32 %v3936, %v2072
        %v3943 = vmul.f32 %v3937, %v2076
        %v3944 = vmul.f32 %v3938, %v2080
        %v3945 = vadd.f32 %v3926, %v3939
        %v3946 = vadd.f32 %v3927, %v3940
        %v3947 = vadd.f32 %v3928, %v3941
        %v3948 = vadd.f32 %v3929, %v3942
        %v3949 = vadd.f32 %v3930, %v3943
        %v3950 = vadd.f32 %v3931, %v3944
        %s3951 = scalar_lea.vmem [#allocation3], 1344
        %v3952 = vld [vmem:[%s3951] sm:$0xff]
        %v3953 = vld [vmem:[%s3951 + $0x8] sm:$0xff]
        %v3954 = vld [vmem:[%s3951 + $0x10] sm:$0xff]
        %v3955 = vld [vmem:[%s3951 + $0x18] sm:$0x3f]
        %v3956 = vld [vmem:[%s3951 + $0x20] sm:$0x3f]
        %v3957 = vld [vmem:[%s3951 + $0x28] sm:$0x3f]
        %v3958 = vmul.f32 %v3952, %v2107
        %v3959 = vmul.f32 %v3953, %v2111
        %v3960 = vmul.f32 %v3954, %v2115
        %v3961 = vmul.f32 %v3955, %v2107
        %v3962 = vmul.f32 %v3956, %v2111
        %v3963 = vmul.f32 %v3957, %v2115
        %v3964 = vadd.f32 %v3945, %v3958
        %v3965 = vadd.f32 %v3946, %v3959
        %v3966 = vadd.f32 %v3947, %v3960
        %v3967 = vadd.f32 %v3948, %v3961
        %v3968 = vadd.f32 %v3949, %v3962
        %v3969 = vadd.f32 %v3950, %v3963
        %v3970 = vadd.f32 %v3786, %v3964
        %v3971 = vadd.f32 %v3787, %v3965
        %v3972 = vadd.f32 %v3788, %v3966
        %v3973 = vadd.f32 %v3789, %v3967
        %v3974 = vadd.f32 %v3790, %v3968
        %v3975 = vadd.f32 %v3791, %v3969
        %v3976 = vmul.f32 %v3964, %v3964
        %v3977 = vmul.f32 %v3965, %v3965
        %v3978 = vmul.f32 %v3966, %v3966
        %v3979 = vmul.f32 %v3967, %v3967
        %v3980 = vmul.f32 %v3968, %v3968
        %v3981 = vmul.f32 %v3969, %v3969
        %v3982 = vadd.f32 %v3798, %v3976
        %v3983 = vadd.f32 %v3799, %v3977
        %v3984 = vadd.f32 %v3800, %v3978
        %v3985 = vadd.f32 %v3801, %v3979
        %v3986 = vadd.f32 %v3802, %v3980
        %v3987 = vadd.f32 %v3803, %v3981
        %s3988 = scalar_lea.vmem %s464, 480 [#allocation6]
        %3989 = vst [vmem:[%s3988] sm:$0xff] %v3964
        %3990 = vst [vmem:[%s3988 + $0x8] sm:$0xff] %v3965
        %3991 = vst [vmem:[%s3988 + $0x10] sm:$0xff] %v3966
        %3992 = vst [vmem:[%s3988 + $0x18] sm:$0x3f] %v3967
        %3993 = vst [vmem:[%s3988 + $0x20] sm:$0x3f] %v3968
        %3994 = vst [vmem:[%s3988 + $0x28] sm:$0x3f] %v3969
        %v3995 = vld [vmem:[%s3729] sm:$0xff]
        %v3996 = vld [vmem:[%s3729 + $0x8] sm:$0xff]
        %v3997 = vld [vmem:[%s3729 + $0x10] sm:$0xff]
        %v3998 = vld [vmem:[%s3729 + $0x18] sm:$0x3f]
        %v3999 = vld [vmem:[%s3729 + $0x20] sm:$0x3f]
        %v4000 = vld [vmem:[%s3729 + $0x28] sm:$0x3f]
        %v4001 = vmul.f32 %v3995, %v1836
        %v4002 = vmul.f32 %v3996, %v1840
        %v4003 = vmul.f32 %v3997, %v1844
        %v4004 = vmul.f32 %v3998, %v1836
        %v4005 = vmul.f32 %v3999, %v1840
        %v4006 = vmul.f32 %v4000, %v1844
        %v4007 = vld [vmem:[%s3748 + $0x18] sm:$0xff]
        %v4008 = vld [vmem:[%s3748 + $0x20] sm:$0xff]
        %v4009 = vld [vmem:[%s3748 + $0x28] sm:$0xff]
        %v4010 = vld [vmem:[%s3748 + $0x30] sm:$0x3f]
        %v4011 = vld [vmem:[%s3748 + $0x38] sm:$0x3f]
        %v4012 = vld [vmem:[%s3748 + $0x40] sm:$0x3f]
        %v4013 = vmul.f32 %v4007, %v1864
        %v4014 = vmul.f32 %v4008, %v1868
        %v4015 = vmul.f32 %v4009, %v1872
        %v4016 = vmul.f32 %v4010, %v1864
        %v4017 = vmul.f32 %v4011, %v1868
        %v4018 = vmul.f32 %v4012, %v1872
        %v4019 = vadd.f32 %v4001, %v4013
        %v4020 = vadd.f32 %v4002, %v4014
        %v4021 = vadd.f32 %v4003, %v4015
        %v4022 = vadd.f32 %v4004, %v4016
        %v4023 = vadd.f32 %v4005, %v4017
        %v4024 = vadd.f32 %v4006, %v4018
        %v4025 = vld [vmem:[%s3767] sm:$0xff]
        %v4026 = vld [vmem:[%s3767 + $0x8] sm:$0xff]
        %v4027 = vld [vmem:[%s3767 + $0x10] sm:$0xff]
        %v4028 = vld [vmem:[%s3767 + $0x18] sm:$0x3f]
        %v4029 = vld [vmem:[%s3767 + $0x20] sm:$0x3f]
        %v4030 = vld [vmem:[%s3767 + $0x28] sm:$0x3f]
        %v4031 = vmul.f32 %v4025, %v1898
        %v4032 = vmul.f32 %v4026, %v1902
        %v4033 = vmul.f32 %v4027, %v1906
        %v4034 = vmul.f32 %v4028, %v1898
        %v4035 = vmul.f32 %v4029, %v1902
        %v4036 = vmul.f32 %v4030, %v1906
        %v4037 = vadd.f32 %v4019, %v4031
        %v4038 = vadd.f32 %v4020, %v4032
        %v4039 = vadd.f32 %v4021, %v4033
        %v4040 = vadd.f32 %v4022, %v4034
        %v4041 = vadd.f32 %v4023, %v4035
        %v4042 = vadd.f32 %v4024, %v4036
        %v4043 = vld [vmem:[%s3913] sm:$0xff]
        %v4044 = vld [vmem:[%s3913 + $0x8] sm:$0xff]
        %v4045 = vld [vmem:[%s3913 + $0x10] sm:$0xff]
        %v4046 = vld [vmem:[%s3913 + $0x18] sm:$0x3f]
        %v4047 = vld [vmem:[%s3913 + $0x20] sm:$0x3f]
        %v4048 = vld [vmem:[%s3913 + $0x28] sm:$0x3f]
        %v4049 = vmul.f32 %v4043, %v1933
        %v4050 = vmul.f32 %v4044, %v1937
        %v4051 = vmul.f32 %v4045, %v1941
        %v4052 = vmul.f32 %v4046, %v1933
        %v4053 = vmul.f32 %v4047, %v1937
        %v4054 = vmul.f32 %v4048, %v1941
        %v4055 = vadd.f32 %v4037, %v4049
        %v4056 = vadd.f32 %v4038, %v4050
        %v4057 = vadd.f32 %v4039, %v4051
        %v4058 = vadd.f32 %v4040, %v4052
        %v4059 = vadd.f32 %v4041, %v4053
        %v4060 = vadd.f32 %v4042, %v4054
        %v4061 = vld [vmem:[%s3932 + $0x18] sm:$0xff]
        %v4062 = vld [vmem:[%s3932 + $0x20] sm:$0xff]
        %v4063 = vld [vmem:[%s3932 + $0x28] sm:$0xff]
        %v4064 = vld [vmem:[%s3932 + $0x30] sm:$0x3f]
        %v4065 = vld [vmem:[%s3932 + $0x38] sm:$0x3f]
        %v4066 = vld [vmem:[%s3932 + $0x40] sm:$0x3f]
        %v4067 = vmul.f32 %v4061, %v1967
        %v4068 = vmul.f32 %v4062, %v1971
        %v4069 = vmul.f32 %v4063, %v1975
        %v4070 = vmul.f32 %v4064, %v1967
        %v4071 = vmul.f32 %v4065, %v1971
        %v4072 = vmul.f32 %v4066, %v1975
        %v4073 = vadd.f32 %v4055, %v4067
        %v4074 = vadd.f32 %v4056, %v4068
        %v4075 = vadd.f32 %v4057, %v4069
        %v4076 = vadd.f32 %v4058, %v4070
        %v4077 = vadd.f32 %v4059, %v4071
        %v4078 = vadd.f32 %v4060, %v4072
        %v4079 = vld [vmem:[%s3951] sm:$0xff]
        %v4080 = vld [vmem:[%s3951 + $0x8] sm:$0xff]
        %v4081 = vld [vmem:[%s3951 + $0x10] sm:$0xff]
        %v4082 = vld [vmem:[%s3951 + $0x18] sm:$0x3f]
        %v4083 = vld [vmem:[%s3951 + $0x20] sm:$0x3f]
        %v4084 = vld [vmem:[%s3951 + $0x28] sm:$0x3f]
        %v4085 = vmul.f32 %v4079, %v2002
        %v4086 = vmul.f32 %v4080, %v2006
        %v4087 = vmul.f32 %v4081, %v2010
        %v4088 = vmul.f32 %v4082, %v2002
        %v4089 = vmul.f32 %v4083, %v2006
        %v4090 = vmul.f32 %v4084, %v2010
        %v4091 = vadd.f32 %v4073, %v4085
        %v4092 = vadd.f32 %v4074, %v4086
        %v4093 = vadd.f32 %v4075, %v4087
        %v4094 = vadd.f32 %v4076, %v4088
        %v4095 = vadd.f32 %v4077, %v4089
        %v4096 = vadd.f32 %v4078, %v4090
        %s4097 = scalar_lea.vmem [#allocation3], 624
        %v4098 = vld [vmem:[%s4097] sm:$0xff]
        %v4099 = vld [vmem:[%s4097 + $0x8] sm:$0xff]
        %v4100 = vld [vmem:[%s4097 + $0x10] sm:$0xff]
        %v4101 = vld [vmem:[%s4097 + $0x18] sm:$0x3f]
        %v4102 = vld [vmem:[%s4097 + $0x20] sm:$0x3f]
        %v4103 = vld [vmem:[%s4097 + $0x28] sm:$0x3f]
        %v4104 = vmul.f32 %v4098, %v2037
        %v4105 = vmul.f32 %v4099, %v2041
        %v4106 = vmul.f32 %v4100, %v2045
        %v4107 = vmul.f32 %v4101, %v2037
        %v4108 = vmul.f32 %v4102, %v2041
        %v4109 = vmul.f32 %v4103, %v2045
        %v4110 = vadd.f32 %v4091, %v4104
        %v4111 = vadd.f32 %v4092, %v4105
        %v4112 = vadd.f32 %v4093, %v4106
        %v4113 = vadd.f32 %v4094, %v4107
        %v4114 = vadd.f32 %v4095, %v4108
        %v4115 = vadd.f32 %v4096, %v4109
        %s4116 = scalar_lea.vmem [#allocation2], 936
        %v4117 = vld [vmem:[%s4116 + $0x18] sm:$0xff]
        %v4118 = vld [vmem:[%s4116 + $0x20] sm:$0xff]
        %v4119 = vld [vmem:[%s4116 + $0x28] sm:$0xff]
        %v4120 = vld [vmem:[%s4116 + $0x30] sm:$0x3f]
        %v4121 = vld [vmem:[%s4116 + $0x38] sm:$0x3f]
        %v4122 = vld [vmem:[%s4116 + $0x40] sm:$0x3f]
        %v4123 = vmul.f32 %v4117, %v2072
        %v4124 = vmul.f32 %v4118, %v2076
        %v4125 = vmul.f32 %v4119, %v2080
        %v4126 = vmul.f32 %v4120, %v2072
        %v4127 = vmul.f32 %v4121, %v2076
        %v4128 = vmul.f32 %v4122, %v2080
        %v4129 = vadd.f32 %v4110, %v4123
        %v4130 = vadd.f32 %v4111, %v4124
        %v4131 = vadd.f32 %v4112, %v4125
        %v4132 = vadd.f32 %v4113, %v4126
        %v4133 = vadd.f32 %v4114, %v4127
        %v4134 = vadd.f32 %v4115, %v4128
        %s4135 = scalar_lea.vmem [#allocation3], 1392
        %v4136 = vld [vmem:[%s4135] sm:$0xff]
        %v4137 = vld [vmem:[%s4135 + $0x8] sm:$0xff]
        %v4138 = vld [vmem:[%s4135 + $0x10] sm:$0xff]
        %v4139 = vld [vmem:[%s4135 + $0x18] sm:$0x3f]
        %v4140 = vld [vmem:[%s4135 + $0x20] sm:$0x3f]
        %v4141 = vld [vmem:[%s4135 + $0x28] sm:$0x3f]
        %v4142 = vmul.f32 %v4136, %v2107
        %v4143 = vmul.f32 %v4137, %v2111
        %v4144 = vmul.f32 %v4138, %v2115
        %v4145 = vmul.f32 %v4139, %v2107
        %v4146 = vmul.f32 %v4140, %v2111
        %v4147 = vmul.f32 %v4141, %v2115
        %v4148 = vadd.f32 %v4129, %v4142
        %v4149 = vadd.f32 %v4130, %v4143
        %v4150 = vadd.f32 %v4131, %v4144
        %v4151 = vadd.f32 %v4132, %v4145
        %v4152 = vadd.f32 %v4133, %v4146
        %v4153 = vadd.f32 %v4134, %v4147
        %v4154 = vadd.f32 %v3970, %v4148
        %v4155 = vadd.f32 %v3971, %v4149
        %v4156 = vadd.f32 %v3972, %v4150
        %v4157 = vadd.f32 %v3973, %v4151
        %v4158 = vadd.f32 %v3974, %v4152
        %v4159 = vadd.f32 %v3975, %v4153
        %v4160 = vmul.f32 %v4148, %v4148
        %v4161 = vmul.f32 %v4149, %v4149
        %v4162 = vmul.f32 %v4150, %v4150
        %v4163 = vmul.f32 %v4151, %v4151
        %v4164 = vmul.f32 %v4152, %v4152
        %v4165 = vmul.f32 %v4153, %v4153
        %v4166 = vadd.f32 %v3982, %v4160
        %v4167 = vadd.f32 %v3983, %v4161
        %v4168 = vadd.f32 %v3984, %v4162
        %v4169 = vadd.f32 %v3985, %v4163
        %v4170 = vadd.f32 %v3986, %v4164
        %v4171 = vadd.f32 %v3987, %v4165
        %s4172 = scalar_lea.vmem %s464, 528 [#allocation6]
        %4173 = vst [vmem:[%s4172] sm:$0xff] %v4148
        %4174 = vst [vmem:[%s4172 + $0x8] sm:$0xff] %v4149
        %4175 = vst [vmem:[%s4172 + $0x10] sm:$0xff] %v4150
        %4176 = vst [vmem:[%s4172 + $0x18] sm:$0x3f] %v4151
        %4177 = vst [vmem:[%s4172 + $0x20] sm:$0x3f] %v4152
        %4178 = vst [vmem:[%s4172 + $0x28] sm:$0x3f] %v4153
        %v4179 = vld [vmem:[%s3913] sm:$0xff]
        %v4180 = vld [vmem:[%s3913 + $0x8] sm:$0xff]
        %v4181 = vld [vmem:[%s3913 + $0x10] sm:$0xff]
        %v4182 = vld [vmem:[%s3913 + $0x18] sm:$0x3f]
        %v4183 = vld [vmem:[%s3913 + $0x20] sm:$0x3f]
        %v4184 = vld [vmem:[%s3913 + $0x28] sm:$0x3f]
        %v4185 = vmul.f32 %v4179, %v1836
        %v4186 = vmul.f32 %v4180, %v1840
        %v4187 = vmul.f32 %v4181, %v1844
        %v4188 = vmul.f32 %v4182, %v1836
        %v4189 = vmul.f32 %v4183, %v1840
        %v4190 = vmul.f32 %v4184, %v1844
        %v4191 = vld [vmem:[%s3932 + $0x18] sm:$0xff]
        %v4192 = vld [vmem:[%s3932 + $0x20] sm:$0xff]
        %v4193 = vld [vmem:[%s3932 + $0x28] sm:$0xff]
        %v4194 = vld [vmem:[%s3932 + $0x30] sm:$0x3f]
        %v4195 = vld [vmem:[%s3932 + $0x38] sm:$0x3f]
        %v4196 = vld [vmem:[%s3932 + $0x40] sm:$0x3f]
        %v4197 = vmul.f32 %v4191, %v1864
        %v4198 = vmul.f32 %v4192, %v1868
        %v4199 = vmul.f32 %v4193, %v1872
        %v4200 = vmul.f32 %v4194, %v1864
        %v4201 = vmul.f32 %v4195, %v1868
        %v4202 = vmul.f32 %v4196, %v1872
        %v4203 = vadd.f32 %v4185, %v4197
        %v4204 = vadd.f32 %v4186, %v4198
        %v4205 = vadd.f32 %v4187, %v4199
        %v4206 = vadd.f32 %v4188, %v4200
        %v4207 = vadd.f32 %v4189, %v4201
        %v4208 = vadd.f32 %v4190, %v4202
        %v4209 = vld [vmem:[%s3951] sm:$0xff]
        %v4210 = vld [vmem:[%s3951 + $0x8] sm:$0xff]
        %v4211 = vld [vmem:[%s3951 + $0x10] sm:$0xff]
        %v4212 = vld [vmem:[%s3951 + $0x18] sm:$0x3f]
        %v4213 = vld [vmem:[%s3951 + $0x20] sm:$0x3f]
        %v4214 = vld [vmem:[%s3951 + $0x28] sm:$0x3f]
        %v4215 = vmul.f32 %v4209, %v1898
        %v4216 = vmul.f32 %v4210, %v1902
        %v4217 = vmul.f32 %v4211, %v1906
        %v4218 = vmul.f32 %v4212, %v1898
        %v4219 = vmul.f32 %v4213, %v1902
        %v4220 = vmul.f32 %v4214, %v1906
        %v4221 = vadd.f32 %v4203, %v4215
        %v4222 = vadd.f32 %v4204, %v4216
        %v4223 = vadd.f32 %v4205, %v4217
        %v4224 = vadd.f32 %v4206, %v4218
        %v4225 = vadd.f32 %v4207, %v4219
        %v4226 = vadd.f32 %v4208, %v4220
        %v4227 = vld [vmem:[%s4097] sm:$0xff]
        %v4228 = vld [vmem:[%s4097 + $0x8] sm:$0xff]
        %v4229 = vld [vmem:[%s4097 + $0x10] sm:$0xff]
        %v4230 = vld [vmem:[%s4097 + $0x18] sm:$0x3f]
        %v4231 = vld [vmem:[%s4097 + $0x20] sm:$0x3f]
        %v4232 = vld [vmem:[%s4097 + $0x28] sm:$0x3f]
        %v4233 = vmul.f32 %v4227, %v1933
        %v4234 = vmul.f32 %v4228, %v1937
        %v4235 = vmul.f32 %v4229, %v1941
        %v4236 = vmul.f32 %v4230, %v1933
        %v4237 = vmul.f32 %v4231, %v1937
        %v4238 = vmul.f32 %v4232, %v1941
        %v4239 = vadd.f32 %v4221, %v4233
        %v4240 = vadd.f32 %v4222, %v4234
        %v4241 = vadd.f32 %v4223, %v4235
        %v4242 = vadd.f32 %v4224, %v4236
        %v4243 = vadd.f32 %v4225, %v4237
        %v4244 = vadd.f32 %v4226, %v4238
        %v4245 = vld [vmem:[%s4116 + $0x18] sm:$0xff]
        %v4246 = vld [vmem:[%s4116 + $0x20] sm:$0xff]
        %v4247 = vld [vmem:[%s4116 + $0x28] sm:$0xff]
        %v4248 = vld [vmem:[%s4116 + $0x30] sm:$0x3f]
        %v4249 = vld [vmem:[%s4116 + $0x38] sm:$0x3f]
        %v4250 = vld [vmem:[%s4116 + $0x40] sm:$0x3f]
        %v4251 = vmul.f32 %v4245, %v1967
        %v4252 = vmul.f32 %v4246, %v1971
        %v4253 = vmul.f32 %v4247, %v1975
        %v4254 = vmul.f32 %v4248, %v1967
        %v4255 = vmul.f32 %v4249, %v1971
        %v4256 = vmul.f32 %v4250, %v1975
        %v4257 = vadd.f32 %v4239, %v4251
        %v4258 = vadd.f32 %v4240, %v4252
        %v4259 = vadd.f32 %v4241, %v4253
        %v4260 = vadd.f32 %v4242, %v4254
        %v4261 = vadd.f32 %v4243, %v4255
        %v4262 = vadd.f32 %v4244, %v4256
        %v4263 = vld [vmem:[%s4135] sm:$0xff]
        %v4264 = vld [vmem:[%s4135 + $0x8] sm:$0xff]
        %v4265 = vld [vmem:[%s4135 + $0x10] sm:$0xff]
        %v4266 = vld [vmem:[%s4135 + $0x18] sm:$0x3f]
        %v4267 = vld [vmem:[%s4135 + $0x20] sm:$0x3f]
        %v4268 = vld [vmem:[%s4135 + $0x28] sm:$0x3f]
        %v4269 = vmul.f32 %v4263, %v2002
        %v4270 = vmul.f32 %v4264, %v2006
        %v4271 = vmul.f32 %v4265, %v2010
        %v4272 = vmul.f32 %v4266, %v2002
        %v4273 = vmul.f32 %v4267, %v2006
        %v4274 = vmul.f32 %v4268, %v2010
        %v4275 = vadd.f32 %v4257, %v4269
        %v4276 = vadd.f32 %v4258, %v4270
        %v4277 = vadd.f32 %v4259, %v4271
        %v4278 = vadd.f32 %v4260, %v4272
        %v4279 = vadd.f32 %v4261, %v4273
        %v4280 = vadd.f32 %v4262, %v4274
        %s4281 = scalar_lea.vmem [#allocation3], 672
        %v4282 = vld [vmem:[%s4281] sm:$0xff]
        %v4283 = vld [vmem:[%s4281 + $0x8] sm:$0xff]
        %v4284 = vld [vmem:[%s4281 + $0x10] sm:$0xff]
        %v4285 = vld [vmem:[%s4281 + $0x18] sm:$0x3f]
        %v4286 = vld [vmem:[%s4281 + $0x20] sm:$0x3f]
        %v4287 = vld [vmem:[%s4281 + $0x28] sm:$0x3f]
        %v4288 = vmul.f32 %v4282, %v2037
        %v4289 = vmul.f32 %v4283, %v2041
        %v4290 = vmul.f32 %v4284, %v2045
        %v4291 = vmul.f32 %v4285, %v2037
        %v4292 = vmul.f32 %v4286, %v2041
        %v4293 = vmul.f32 %v4287, %v2045
        %v4294 = vadd.f32 %v4275, %v4288
        %v4295 = vadd.f32 %v4276, %v4289
        %v4296 = vadd.f32 %v4277, %v4290
        %v4297 = vadd.f32 %v4278, %v4291
        %v4298 = vadd.f32 %v4279, %v4292
        %v4299 = vadd.f32 %v4280, %v4293
        %s4300 = scalar_lea.vmem [#allocation2], 1008
        %v4301 = vld [vmem:[%s4300 + $0x18] sm:$0xff]
        %v4302 = vld [vmem:[%s4300 + $0x20] sm:$0xff]
        %v4303 = vld [vmem:[%s4300 + $0x28] sm:$0xff]
        %v4304 = vld [vmem:[%s4300 + $0x30] sm:$0x3f]
        %v4305 = vld [vmem:[%s4300 + $0x38] sm:$0x3f]
        %v4306 = vld [vmem:[%s4300 + $0x40] sm:$0x3f]
        %v4307 = vmul.f32 %v4301, %v2072
        %v4308 = vmul.f32 %v4302, %v2076
        %v4309 = vmul.f32 %v4303, %v2080
        %v4310 = vmul.f32 %v4304, %v2072
        %v4311 = vmul.f32 %v4305, %v2076
        %v4312 = vmul.f32 %v4306, %v2080
        %v4313 = vadd.f32 %v4294, %v4307
        %v4314 = vadd.f32 %v4295, %v4308
        %v4315 = vadd.f32 %v4296, %v4309
        %v4316 = vadd.f32 %v4297, %v4310
        %v4317 = vadd.f32 %v4298, %v4311
        %v4318 = vadd.f32 %v4299, %v4312
        %s4319 = scalar_lea.vmem [#allocation3], 1440
        %v4320 = vld [vmem:[%s4319] sm:$0xff]
        %v4321 = vld [vmem:[%s4319 + $0x8] sm:$0xff]
        %v4322 = vld [vmem:[%s4319 + $0x10] sm:$0xff]
        %v4323 = vld [vmem:[%s4319 + $0x18] sm:$0x3f]
        %v4324 = vld [vmem:[%s4319 + $0x20] sm:$0x3f]
        %v4325 = vld [vmem:[%s4319 + $0x28] sm:$0x3f]
        %v4326 = vmul.f32 %v4320, %v2107
        %v4327 = vmul.f32 %v4321, %v2111
        %v4328 = vmul.f32 %v4322, %v2115
        %v4329 = vmul.f32 %v4323, %v2107
        %v4330 = vmul.f32 %v4324, %v2111
        %v4331 = vmul.f32 %v4325, %v2115
        %v4332 = vadd.f32 %v4313, %v4326
        %v4333 = vadd.f32 %v4314, %v4327
        %v4334 = vadd.f32 %v4315, %v4328
        %v4335 = vadd.f32 %v4316, %v4329
        %v4336 = vadd.f32 %v4317, %v4330
        %v4337 = vadd.f32 %v4318, %v4331
        %v4338 = vadd.f32 %v4154, %v4332
        %v4339 = vadd.f32 %v4155, %v4333
        %v4340 = vadd.f32 %v4156, %v4334
        %v4341 = vadd.f32 %v4157, %v4335
        %v4342 = vadd.f32 %v4158, %v4336
        %v4343 = vadd.f32 %v4159, %v4337
        %v4344 = vmul.f32 %v4332, %v4332
        %v4345 = vmul.f32 %v4333, %v4333
        %v4346 = vmul.f32 %v4334, %v4334
        %v4347 = vmul.f32 %v4335, %v4335
        %v4348 = vmul.f32 %v4336, %v4336
        %v4349 = vmul.f32 %v4337, %v4337
        %v4350 = vadd.f32 %v4166, %v4344
        %v4351 = vadd.f32 %v4167, %v4345
        %v4352 = vadd.f32 %v4168, %v4346
        %v4353 = vadd.f32 %v4169, %v4347
        %v4354 = vadd.f32 %v4170, %v4348
        %v4355 = vadd.f32 %v4171, %v4349
        %s4356 = scalar_lea.vmem %s464, 576 [#allocation6]
        %4357 = vst [vmem:[%s4356] sm:$0xff] %v4332
        %4358 = vst [vmem:[%s4356 + $0x8] sm:$0xff] %v4333
        %4359 = vst [vmem:[%s4356 + $0x10] sm:$0xff] %v4334
        %4360 = vst [vmem:[%s4356 + $0x18] sm:$0x3f] %v4335
        %4361 = vst [vmem:[%s4356 + $0x20] sm:$0x3f] %v4336
        %4362 = vst [vmem:[%s4356 + $0x28] sm:$0x3f] %v4337
        %v4363 = vld [vmem:[%s4097] sm:$0xff]
        %v4364 = vld [vmem:[%s4097 + $0x8] sm:$0xff]
        %v4365 = vld [vmem:[%s4097 + $0x10] sm:$0xff]
        %v4366 = vld [vmem:[%s4097 + $0x18] sm:$0x3f]
        %v4367 = vld [vmem:[%s4097 + $0x20] sm:$0x3f]
        %v4368 = vld [vmem:[%s4097 + $0x28] sm:$0x3f]
        %v4369 = vmul.f32 %v4363, %v1836
        %v4370 = vmul.f32 %v4364, %v1840
        %v4371 = vmul.f32 %v4365, %v1844
        %v4372 = vmul.f32 %v4366, %v1836
        %v4373 = vmul.f32 %v4367, %v1840
        %v4374 = vmul.f32 %v4368, %v1844
        %v4375 = vld [vmem:[%s4116 + $0x18] sm:$0xff]
        %v4376 = vld [vmem:[%s4116 + $0x20] sm:$0xff]
        %v4377 = vld [vmem:[%s4116 + $0x28] sm:$0xff]
        %v4378 = vld [vmem:[%s4116 + $0x30] sm:$0x3f]
        %v4379 = vld [vmem:[%s4116 + $0x38] sm:$0x3f]
        %v4380 = vld [vmem:[%s4116 + $0x40] sm:$0x3f]
        %v4381 = vmul.f32 %v4375, %v1864
        %v4382 = vmul.f32 %v4376, %v1868
        %v4383 = vmul.f32 %v4377, %v1872
        %v4384 = vmul.f32 %v4378, %v1864
        %v4385 = vmul.f32 %v4379, %v1868
        %v4386 = vmul.f32 %v4380, %v1872
        %v4387 = vadd.f32 %v4369, %v4381
        %v4388 = vadd.f32 %v4370, %v4382
        %v4389 = vadd.f32 %v4371, %v4383
        %v4390 = vadd.f32 %v4372, %v4384
        %v4391 = vadd.f32 %v4373, %v4385
        %v4392 = vadd.f32 %v4374, %v4386
        %v4393 = vld [vmem:[%s4135] sm:$0xff]
        %v4394 = vld [vmem:[%s4135 + $0x8] sm:$0xff]
        %v4395 = vld [vmem:[%s4135 + $0x10] sm:$0xff]
        %v4396 = vld [vmem:[%s4135 + $0x18] sm:$0x3f]
        %v4397 = vld [vmem:[%s4135 + $0x20] sm:$0x3f]
        %v4398 = vld [vmem:[%s4135 + $0x28] sm:$0x3f]
        %v4399 = vmul.f32 %v4393, %v1898
        %v4400 = vmul.f32 %v4394, %v1902
        %v4401 = vmul.f32 %v4395, %v1906
        %v4402 = vmul.f32 %v4396, %v1898
        %v4403 = vmul.f32 %v4397, %v1902
        %v4404 = vmul.f32 %v4398, %v1906
        %v4405 = vadd.f32 %v4387, %v4399
        %v4406 = vadd.f32 %v4388, %v4400
        %v4407 = vadd.f32 %v4389, %v4401
        %v4408 = vadd.f32 %v4390, %v4402
        %v4409 = vadd.f32 %v4391, %v4403
        %v4410 = vadd.f32 %v4392, %v4404
        %v4411 = vld [vmem:[%s4281] sm:$0xff]
        %v4412 = vld [vmem:[%s4281 + $0x8] sm:$0xff]
        %v4413 = vld [vmem:[%s4281 + $0x10] sm:$0xff]
        %v4414 = vld [vmem:[%s4281 + $0x18] sm:$0x3f]
        %v4415 = vld [vmem:[%s4281 + $0x20] sm:$0x3f]
        %v4416 = vld [vmem:[%s4281 + $0x28] sm:$0x3f]
        %v4417 = vmul.f32 %v4411, %v1933
        %v4418 = vmul.f32 %v4412, %v1937
        %v4419 = vmul.f32 %v4413, %v1941
        %v4420 = vmul.f32 %v4414, %v1933
        %v4421 = vmul.f32 %v4415, %v1937
        %v4422 = vmul.f32 %v4416, %v1941
        %v4423 = vadd.f32 %v4405, %v4417
        %v4424 = vadd.f32 %v4406, %v4418
        %v4425 = vadd.f32 %v4407, %v4419
        %v4426 = vadd.f32 %v4408, %v4420
        %v4427 = vadd.f32 %v4409, %v4421
        %v4428 = vadd.f32 %v4410, %v4422
        %v4429 = vld [vmem:[%s4300 + $0x18] sm:$0xff]
        %v4430 = vld [vmem:[%s4300 + $0x20] sm:$0xff]
        %v4431 = vld [vmem:[%s4300 + $0x28] sm:$0xff]
        %v4432 = vld [vmem:[%s4300 + $0x30] sm:$0x3f]
        %v4433 = vld [vmem:[%s4300 + $0x38] sm:$0x3f]
        %v4434 = vld [vmem:[%s4300 + $0x40] sm:$0x3f]
        %v4435 = vmul.f32 %v4429, %v1967
        %v4436 = vmul.f32 %v4430, %v1971
        %v4437 = vmul.f32 %v4431, %v1975
        %v4438 = vmul.f32 %v4432, %v1967
        %v4439 = vmul.f32 %v4433, %v1971
        %v4440 = vmul.f32 %v4434, %v1975
        %v4441 = vadd.f32 %v4423, %v4435
        %v4442 = vadd.f32 %v4424, %v4436
        %v4443 = vadd.f32 %v4425, %v4437
        %v4444 = vadd.f32 %v4426, %v4438
        %v4445 = vadd.f32 %v4427, %v4439
        %v4446 = vadd.f32 %v4428, %v4440
        %v4447 = vld [vmem:[%s4319] sm:$0xff]
        %v4448 = vld [vmem:[%s4319 + $0x8] sm:$0xff]
        %v4449 = vld [vmem:[%s4319 + $0x10] sm:$0xff]
        %v4450 = vld [vmem:[%s4319 + $0x18] sm:$0x3f]
        %v4451 = vld [vmem:[%s4319 + $0x20] sm:$0x3f]
        %v4452 = vld [vmem:[%s4319 + $0x28] sm:$0x3f]
        %v4453 = vmul.f32 %v4447, %v2002
        %v4454 = vmul.f32 %v4448, %v2006
        %v4455 = vmul.f32 %v4449, %v2010
        %v4456 = vmul.f32 %v4450, %v2002
        %v4457 = vmul.f32 %v4451, %v2006
        %v4458 = vmul.f32 %v4452, %v2010
        %v4459 = vadd.f32 %v4441, %v4453
        %v4460 = vadd.f32 %v4442, %v4454
        %v4461 = vadd.f32 %v4443, %v4455
        %v4462 = vadd.f32 %v4444, %v4456
        %v4463 = vadd.f32 %v4445, %v4457
        %v4464 = vadd.f32 %v4446, %v4458
        %s4465 = scalar_lea.vmem [#allocation3], 720
        %v4466 = vld [vmem:[%s4465] sm:$0xff]
        %v4467 = vld [vmem:[%s4465 + $0x8] sm:$0xff]
        %v4468 = vld [vmem:[%s4465 + $0x10] sm:$0xff]
        %v4469 = vld [vmem:[%s4465 + $0x18] sm:$0x3f]
        %v4470 = vld [vmem:[%s4465 + $0x20] sm:$0x3f]
        %v4471 = vld [vmem:[%s4465 + $0x28] sm:$0x3f]
        %v4472 = vmul.f32 %v4466, %v2037
        %v4473 = vmul.f32 %v4467, %v2041
        %v4474 = vmul.f32 %v4468, %v2045
        %v4475 = vmul.f32 %v4469, %v2037
        %v4476 = vmul.f32 %v4470, %v2041
        %v4477 = vmul.f32 %v4471, %v2045
        %v4478 = vadd.f32 %v4459, %v4472
        %v4479 = vadd.f32 %v4460, %v4473
        %v4480 = vadd.f32 %v4461, %v4474
        %v4481 = vadd.f32 %v4462, %v4475
        %v4482 = vadd.f32 %v4463, %v4476
        %v4483 = vadd.f32 %v4464, %v4477
        %v4484 = vld [vmem:[%s577 + $0x18] sm:$0xff]
        %v4485 = vld [vmem:[%s577 + $0x20] sm:$0xff]
        %v4486 = vld [vmem:[%s577 + $0x28] sm:$0xff]
        %v4487 = vld [vmem:[%s577 + $0x30] sm:$0x3f]
        %v4488 = vld [vmem:[%s577 + $0x38] sm:$0x3f]
        %v4489 = vld [vmem:[%s577 + $0x40] sm:$0x3f]
        %v4490 = vmul.f32 %v4484, %v2072
        %v4491 = vmul.f32 %v4485, %v2076
        %v4492 = vmul.f32 %v4486, %v2080
        %v4493 = vmul.f32 %v4487, %v2072
        %v4494 = vmul.f32 %v4488, %v2076
        %v4495 = vmul.f32 %v4489, %v2080
        %v4496 = vadd.f32 %v4478, %v4490
        %v4497 = vadd.f32 %v4479, %v4491
        %v4498 = vadd.f32 %v4480, %v4492
        %v4499 = vadd.f32 %v4481, %v4493
        %v4500 = vadd.f32 %v4482, %v4494
        %v4501 = vadd.f32 %v4483, %v4495
        %s4502 = scalar_lea.vmem [#allocation3], 1488
        %v4503 = vld [vmem:[%s4502] sm:$0xff]
        %v4504 = vld [vmem:[%s4502 + $0x8] sm:$0xff]
        %v4505 = vld [vmem:[%s4502 + $0x10] sm:$0xff]
        %v4506 = vld [vmem:[%s4502 + $0x18] sm:$0x3f]
        %v4507 = vld [vmem:[%s4502 + $0x20] sm:$0x3f]
        %v4508 = vld [vmem:[%s4502 + $0x28] sm:$0x3f]
        %v4509 = vmul.f32 %v4503, %v2107
        %v4510 = vmul.f32 %v4504, %v2111
        %v4511 = vmul.f32 %v4505, %v2115
        %v4512 = vmul.f32 %v4506, %v2107
        %v4513 = vmul.f32 %v4507, %v2111
        %v4514 = vmul.f32 %v4508, %v2115
        %v4515 = vadd.f32 %v4496, %v4509
        %v4516 = vadd.f32 %v4497, %v4510
        %v4517 = vadd.f32 %v4498, %v4511
        %v4518 = vadd.f32 %v4499, %v4512
        %v4519 = vadd.f32 %v4500, %v4513
        %v4520 = vadd.f32 %v4501, %v4514
        %v4521 = vadd.f32 %v4338, %v4515
        %v4522 = vadd.f32 %v4339, %v4516
        %v4523 = vadd.f32 %v4340, %v4517
        %v4524 = vadd.f32 %v4341, %v4518
        %v4525 = vadd.f32 %v4342, %v4519
        %v4526 = vadd.f32 %v4343, %v4520
        %v4527 = vmul.f32 %v4515, %v4515
        %v4528 = vmul.f32 %v4516, %v4516
        %v4529 = vmul.f32 %v4517, %v4517
        %v4530 = vmul.f32 %v4518, %v4518
        %v4531 = vmul.f32 %v4519, %v4519
        %v4532 = vmul.f32 %v4520, %v4520
        %v4533 = vadd.f32 %v4350, %v4527
        %v4534 = vadd.f32 %v4351, %v4528
        %v4535 = vadd.f32 %v4352, %v4529
        %v4536 = vadd.f32 %v4353, %v4530
        %v4537 = vadd.f32 %v4354, %v4531
        %v4538 = vadd.f32 %v4355, %v4532
        %s4539 = scalar_lea.vmem %s464, 624 [#allocation6]
        %4540 = vst [vmem:[%s4539] sm:$0xff] %v4515
        %4541 = vst [vmem:[%s4539 + $0x8] sm:$0xff] %v4516
        %4542 = vst [vmem:[%s4539 + $0x10] sm:$0xff] %v4517
        %4543 = vst [vmem:[%s4539 + $0x18] sm:$0x3f] %v4518
        %4544 = vst [vmem:[%s4539 + $0x20] sm:$0x3f] %v4519
        %4545 = vst [vmem:[%s4539 + $0x28] sm:$0x3f] %v4520
        %vm4546 = vcmask 1045504
        %v4547 = vsel %vm4546, %v4524, 0.0
        %v4548 = vadd.f32 %v4521, %v4547
        %v4549 = vrot.slane %v4548, 4
        %v4550 = vadd.f32 %v4548, %v4549
        %v4551 = vrot.slane %v4550, 2
        %v4552 = vadd.f32 %v4550, %v4551
        %v4553 = vrot.slane %v4552, 1
        %v4554 = vadd.f32 %v4552, %v4553
        %v4555 = vsel %vm4546, %v4525, 0.0
        %v4556 = vadd.f32 %v4522, %v4555
        %v4557 = vrot.slane %v4556, 4
        %v4558 = vadd.f32 %v4556, %v4557
        %v4559 = vrot.slane %v4558, 2
        %v4560 = vadd.f32 %v4558, %v4559
        %v4561 = vrot.slane %v4560, 1
        %v4562 = vadd.f32 %v4560, %v4561
        %v4563 = vsel %vm4546, %v4526, 0.0
        %v4564 = vadd.f32 %v4523, %v4563
        %v4565 = vrot.slane %v4564, 4
        %v4566 = vadd.f32 %v4564, %v4565
        %v4567 = vrot.slane %v4566, 2
        %v4568 = vadd.f32 %v4566, %v4567
        %v4569 = vrot.slane %v4568, 1
        %v4570 = vadd.f32 %v4568, %v4569
        %v4571 = vmul.f32 %v4554, 0.0051020407
        %v4572 = vmul.f32 %v4562, 0.0051020407
        %v4573 = vmul.f32 %v4570, 0.0051020407
        %v4574 = vsel %vm4546, %v4536, 0.0
        %v4575 = vadd.f32 %v4533, %v4574
        %v4576 = vrot.slane %v4575, 4
        %v4577 = vadd.f32 %v4575, %v4576
        %v4578 = vrot.slane %v4577, 2
        %v4579 = vadd.f32 %v4577, %v4578
        %v4580 = vrot.slane %v4579, 1
        %v4581 = vadd.f32 %v4579, %v4580
        %v4582 = vsel %vm4546, %v4537, 0.0
        %v4583 = vadd.f32 %v4534, %v4582
        %v4584 = vrot.slane %v4583, 4
        %v4585 = vadd.f32 %v4583, %v4584
        %v4586 = vrot.slane %v4585, 2
        %v4587 = vadd.f32 %v4585, %v4586
        %v4588 = vrot.slane %v4587, 1
        %v4589 = vadd.f32 %v4587, %v4588
        %v4590 = vsel %vm4546, %v4538, 0.0
        %v4591 = vadd.f32 %v4535, %v4590
        %v4592 = vrot.slane %v4591, 4
        %v4593 = vadd.f32 %v4591, %v4592
        %v4594 = vrot.slane %v4593, 2
        %v4595 = vadd.f32 %v4593, %v4594
        %v4596 = vrot.slane %v4595, 1
        %v4597 = vadd.f32 %v4595, %v4596
        %v4598 = vmul.f32 %v4581, 0.0051020407
        %v4599 = vmul.f32 %v4589, 0.0051020407
        %v4600 = vmul.f32 %v4597, 0.0051020407
        %v4601 = vmul.f32 %v4571, %v4571
        %v4602 = vmul.f32 %v4572, %v4572
        %v4603 = vmul.f32 %v4573, %v4573
        %v4604 = vsub.f32 %v4598, %v4601
        %v4605 = vsub.f32 %v4599, %v4602
        %v4606 = vsub.f32 %v4600, %v4603
        %v4607 = vmax.f32 %v4604, 0.0
        %v4608 = vmax.f32 %v4605, 0.0
        %v4609 = vmax.f32 %v4606, 0.0
        %v4610 = vadd.f32 %v4607, 0.001
        %v4611 = vadd.f32 %v4608, 0.001
        %v4612 = vadd.f32 %v4609, 0.001
        %v4613 = vrsqrt.pop %v4610
        %v4614 = vrsqrt.pop %v4611
        %v4615 = vrsqrt.pop %v4612
        %v4616 = vld [vmem:[%s470] sm:$0x7]
        %v4618 = vlaneseq
        %v4619 = vshrl.u32 %v4618, 7
        %v4620 = vsub.s32 0, %v4619
        %v4621 = vrot.slane %v4616, %v4620
        %v4622 = vlaneseq
        %v4623 = vshrl.u32 %v4622, 7
        %v4624 = vsub.s32 1, %v4623
        %v4625 = vrot.slane %v4616, %v4624
        %v4626 = vlaneseq
        %v4627 = vshrl.u32 %v4626, 7
        %v4628 = vsub.s32 2, %v4627
        %v4629 = vrot.slane %v4616, %v4628
        %v4633 = vmul.f32 %v4613, %v4621
        %v4634 = vmul.f32 %v4614, %v4625
        %v4635 = vmul.f32 %v4615, %v4629
        %v4636 = vld [vmem:[%s475] sm:$0x7]
        %v4637 = vmul.f32 %v4571, %v4633
        %v4638 = vmul.f32 %v4572, %v4634
        %v4639 = vmul.f32 %v4573, %v4635
        %v4643 = vcombine.low %v4637, %v4638
        %v4645 = vunpack.c.l.s4 1966171168
        %v4646 = vunpack.c.0.s8 %v4645
        %v4647 = vlaneseq
        %v4648 = vshrl.u32 %v4647, 7
        %v4649 = vsub.s32 %v4646, %v4648
        %v4650 = vrot.slane %v4643, %v4649
        %v4652 = vunpack.c.l.s4 1966171168
        %v4653 = vunpack.c.0.s8 %v4652
        %v4654 = vlaneseq
        %v4655 = vshrl.u32 %v4654, 7
        %v4656 = vsub.s32 %v4653, %v4655
        %v4657 = vrot.slane %v4639, %v4656
        %v4658 = vcombine.low %v4650, %v4657
        %v4660 = vunpack.c.l.s4 1966171168
        %v4661 = vunpack.c.0.s8 %v4660
        %v4662 = vlaneseq
        %v4663 = vshrl.u32 %v4662, 7
        %v4664 = vsub.s32 %v4661, %v4663
        %v4665 = vrot.slane %v4658, %v4664
        %v4667 = vsub.f32 %v4636, %v4665
        %v4668 = vld [vmem:[%s464] sm:$0xff]
        %v4669 = vld [vmem:[%s464 + $0x8] sm:$0xff]
        %v4670 = vld [vmem:[%s464 + $0x10] sm:$0xff]
        %v4671 = vld [vmem:[%s464 + $0x18] sm:$0x3f]
        %v4672 = vld [vmem:[%s464 + $0x20] sm:$0x3f]
        %v4673 = vld [vmem:[%s464 + $0x28] sm:$0x3f]
        %v4674 = vlaneseq
        %v4675 = vshrl.u32 %v4674, 7
        %v4676 = vsub.s32 0, %v4675
        %v4677 = vrot.slane %v4633, %v4676
        %v4678 = vlaneseq
        %v4679 = vshrl.u32 %v4678, 7
        %v4680 = vsub.s32 0, %v4679
        %v4681 = vrot.slane %v4634, %v4680
        %v4682 = vlaneseq
        %v4683 = vshrl.u32 %v4682, 7
        %v4684 = vsub.s32 0, %v4683
        %v4685 = vrot.slane %v4635, %v4684
        %v4686 = vmul.f32 %v4668, %v4677
        %v4687 = vmul.f32 %v4669, %v4681
        %v4688 = vmul.f32 %v4670, %v4685
        %v4689 = vmul.f32 %v4671, %v4677
        %v4690 = vmul.f32 %v4672, %v4681
        %v4691 = vmul.f32 %v4673, %v4685
        %v4693 = vlaneseq
        %v4694 = vshrl.u32 %v4693, 7
        %v4695 = vsub.s32 0, %v4694
        %v4696 = vrot.slane %v4667, %v4695
        %v4697 = vlaneseq
        %v4698 = vshrl.u32 %v4697, 7
        %v4699 = vsub.s32 1, %v4698
        %v4700 = vrot.slane %v4667, %v4699
        %v4701 = vlaneseq
        %v4702 = vshrl.u32 %v4701, 7
        %v4703 = vsub.s32 2, %v4702
        %v4704 = vrot.slane %v4667, %v4703
        %v4708 = vadd.f32 %v4686, %v4696
        %v4709 = vadd.f32 %v4687, %v4700
        %v4710 = vadd.f32 %v4688, %v4704
        %v4711 = vadd.f32 %v4689, %v4696
        %v4712 = vadd.f32 %v4690, %v4700
        %v4713 = vadd.f32 %v4691, %v4704
        %4714 = vst [vmem:[%s464] sm:$0xff] %v4708
        %4715 = vst [vmem:[%s464 + $0x8] sm:$0xff] %v4709
        %4716 = vst [vmem:[%s464 + $0x10] sm:$0xff] %v4710
        %4717 = vst [vmem:[%s464 + $0x18] sm:$0x3f] %v4711
        %4718 = vst [vmem:[%s464 + $0x20] sm:$0x3f] %v4712
        %4719 = vst [vmem:[%s464 + $0x28] sm:$0x3f] %v4713
        %v4720 = vld [vmem:[%s2332] sm:$0xff]
        %v4721 = vld [vmem:[%s2332 + $0x8] sm:$0xff]
        %v4722 = vld [vmem:[%s2332 + $0x10] sm:$0xff]
        %v4723 = vld [vmem:[%s2332 + $0x18] sm:$0x3f]
        %v4724 = vld [vmem:[%s2332 + $0x20] sm:$0x3f]
        %v4725 = vld [vmem:[%s2332 + $0x28] sm:$0x3f]
        %v4726 = vmul.f32 %v4720, %v4677
        %v4727 = vmul.f32 %v4721, %v4681
        %v4728 = vmul.f32 %v4722, %v4685
        %v4729 = vmul.f32 %v4723, %v4677
        %v4730 = vmul.f32 %v4724, %v4681
        %v4731 = vmul.f32 %v4725, %v4685
        %v4732 = vadd.f32 %v4726, %v4696
        %v4733 = vadd.f32 %v4727, %v4700
        %v4734 = vadd.f32 %v4728, %v4704
        %v4735 = vadd.f32 %v4729, %v4696
        %v4736 = vadd.f32 %v4730, %v4700
        %v4737 = vadd.f32 %v4731, %v4704
        %4738 = vst [vmem:[%s2332] sm:$0xff] %v4732
        %4739 = vst [vmem:[%s2332 + $0x8] sm:$0xff] %v4733
        %4740 = vst [vmem:[%s2332 + $0x10] sm:$0xff] %v4734
        %4741 = vst [vmem:[%s2332 + $0x18] sm:$0x3f] %v4735
        %4742 = vst [vmem:[%s2332 + $0x20] sm:$0x3f] %v4736
        %4743 = vst [vmem:[%s2332 + $0x28] sm:$0x3f] %v4737
        %v4744 = vld [vmem:[%s2516] sm:$0xff]
        %v4745 = vld [vmem:[%s2516 + $0x8] sm:$0xff]
        %v4746 = vld [vmem:[%s2516 + $0x10] sm:$0xff]
        %v4747 = vld [vmem:[%s2516 + $0x18] sm:$0x3f]
        %v4748 = vld [vmem:[%s2516 + $0x20] sm:$0x3f]
        %v4749 = vld [vmem:[%s2516 + $0x28] sm:$0x3f]
        %v4750 = vmul.f32 %v4744, %v4677
        %v4751 = vmul.f32 %v4745, %v4681
        %v4752 = vmul.f32 %v4746, %v4685
        %v4753 = vmul.f32 %v4747, %v4677
        %v4754 = vmul.f32 %v4748, %v4681
        %v4755 = vmul.f32 %v4749, %v4685
        %v4756 = vadd.f32 %v4750, %v4696
        %v4757 = vadd.f32 %v4751, %v4700
        %v4758 = vadd.f32 %v4752, %v4704
        %v4759 = vadd.f32 %v4753, %v4696
        %v4760 = vadd.f32 %v4754, %v4700
        %v4761 = vadd.f32 %v4755, %v4704
        %4762 = vst [vmem:[%s2516] sm:$0xff] %v4756
        %4763 = vst [vmem:[%s2516 + $0x8] sm:$0xff] %v4757
        %4764 = vst [vmem:[%s2516 + $0x10] sm:$0xff] %v4758
        %4765 = vst [vmem:[%s2516 + $0x18] sm:$0x3f] %v4759
        %4766 = vst [vmem:[%s2516 + $0x20] sm:$0x3f] %v4760
        %4767 = vst [vmem:[%s2516 + $0x28] sm:$0x3f] %v4761
        %v4768 = vld [vmem:[%s2700] sm:$0xff]
        %v4769 = vld [vmem:[%s2700 + $0x8] sm:$0xff]
        %v4770 = vld [vmem:[%s2700 + $0x10] sm:$0xff]
        %v4771 = vld [vmem:[%s2700 + $0x18] sm:$0x3f]
        %v4772 = vld [vmem:[%s2700 + $0x20] sm:$0x3f]
        %v4773 = vld [vmem:[%s2700 + $0x28] sm:$0x3f]
        %v4774 = vmul.f32 %v4768, %v4677
        %v4775 = vmul.f32 %v4769, %v4681
        %v4776 = vmul.f32 %v4770, %v4685
        %v4777 = vmul.f32 %v4771, %v4677
        %v4778 = vmul.f32 %v4772, %v4681
        %v4779 = vmul.f32 %v4773, %v4685
        %v4780 = vadd.f32 %v4774, %v4696
        %v4781 = vadd.f32 %v4775, %v4700
        %v4782 = vadd.f32 %v4776, %v4704
        %v4783 = vadd.f32 %v4777, %v4696
        %v4784 = vadd.f32 %v4778, %v4700
        %v4785 = vadd.f32 %v4779, %v4704
        %4786 = vst [vmem:[%s2700] sm:$0xff] %v4780
        %4787 = vst [vmem:[%s2700 + $0x8] sm:$0xff] %v4781
        %4788 = vst [vmem:[%s2700 + $0x10] sm:$0xff] %v4782
        %4789 = vst [vmem:[%s2700 + $0x18] sm:$0x3f] %v4783
        %4790 = vst [vmem:[%s2700 + $0x20] sm:$0x3f] %v4784
        %4791 = vst [vmem:[%s2700 + $0x28] sm:$0x3f] %v4785
        %v4792 = vld [vmem:[%s2884] sm:$0xff]
        %v4793 = vld [vmem:[%s2884 + $0x8] sm:$0xff]
        %v4794 = vld [vmem:[%s2884 + $0x10] sm:$0xff]
        %v4795 = vld [vmem:[%s2884 + $0x18] sm:$0x3f]
        %v4796 = vld [vmem:[%s2884 + $0x20] sm:$0x3f]
        %v4797 = vld [vmem:[%s2884 + $0x28] sm:$0x3f]
        %v4798 = vmul.f32 %v4792, %v4677
        %v4799 = vmul.f32 %v4793, %v4681
        %v4800 = vmul.f32 %v4794, %v4685
        %v4801 = vmul.f32 %v4795, %v4677
        %v4802 = vmul.f32 %v4796, %v4681
        %v4803 = vmul.f32 %v4797, %v4685
        %v4804 = vadd.f32 %v4798, %v4696
        %v4805 = vadd.f32 %v4799, %v4700
        %v4806 = vadd.f32 %v4800, %v4704
        %v4807 = vadd.f32 %v4801, %v4696
        %v4808 = vadd.f32 %v4802, %v4700
        %v4809 = vadd.f32 %v4803, %v4704
        %4810 = vst [vmem:[%s2884] sm:$0xff] %v4804
        %4811 = vst [vmem:[%s2884 + $0x8] sm:$0xff] %v4805
        %4812 = vst [vmem:[%s2884 + $0x10] sm:$0xff] %v4806
        %4813 = vst [vmem:[%s2884 + $0x18] sm:$0x3f] %v4807
        %4814 = vst [vmem:[%s2884 + $0x20] sm:$0x3f] %v4808
        %4815 = vst [vmem:[%s2884 + $0x28] sm:$0x3f] %v4809
        %v4816 = vld [vmem:[%s3068] sm:$0xff]
        %v4817 = vld [vmem:[%s3068 + $0x8] sm:$0xff]
        %v4818 = vld [vmem:[%s3068 + $0x10] sm:$0xff]
        %v4819 = vld [vmem:[%s3068 + $0x18] sm:$0x3f]
        %v4820 = vld [vmem:[%s3068 + $0x20] sm:$0x3f]
        %v4821 = vld [vmem:[%s3068 + $0x28] sm:$0x3f]
        %v4822 = vmul.f32 %v4816, %v4677
        %v4823 = vmul.f32 %v4817, %v4681
        %v4824 = vmul.f32 %v4818, %v4685
        %v4825 = vmul.f32 %v4819, %v4677
        %v4826 = vmul.f32 %v4820, %v4681
        %v4827 = vmul.f32 %v4821, %v4685
        %v4828 = vadd.f32 %v4822, %v4696
        %v4829 = vadd.f32 %v4823, %v4700
        %v4830 = vadd.f32 %v4824, %v4704
        %v4831 = vadd.f32 %v4825, %v4696
        %v4832 = vadd.f32 %v4826, %v4700
        %v4833 = vadd.f32 %v4827, %v4704
        %4834 = vst [vmem:[%s3068] sm:$0xff] %v4828
        %4835 = vst [vmem:[%s3068 + $0x8] sm:$0xff] %v4829
        %4836 = vst [vmem:[%s3068 + $0x10] sm:$0xff] %v4830
        %4837 = vst [vmem:[%s3068 + $0x18] sm:$0x3f] %v4831
        %4838 = vst [vmem:[%s3068 + $0x20] sm:$0x3f] %v4832
        %4839 = vst [vmem:[%s3068 + $0x28] sm:$0x3f] %v4833
        %v4840 = vld [vmem:[%s3252] sm:$0xff]
        %v4841 = vld [vmem:[%s3252 + $0x8] sm:$0xff]
        %v4842 = vld [vmem:[%s3252 + $0x10] sm:$0xff]
        %v4843 = vld [vmem:[%s3252 + $0x18] sm:$0x3f]
        %v4844 = vld [vmem:[%s3252 + $0x20] sm:$0x3f]
        %v4845 = vld [vmem:[%s3252 + $0x28] sm:$0x3f]
        %v4846 = vmul.f32 %v4840, %v4677
        %v4847 = vmul.f32 %v4841, %v4681
        %v4848 = vmul.f32 %v4842, %v4685
        %v4849 = vmul.f32 %v4843, %v4677
        %v4850 = vmul.f32 %v4844, %v4681
        %v4851 = vmul.f32 %v4845, %v4685
        %v4852 = vadd.f32 %v4846, %v4696
        %v4853 = vadd.f32 %v4847, %v4700
        %v4854 = vadd.f32 %v4848, %v4704
        %v4855 = vadd.f32 %v4849, %v4696
        %v4856 = vadd.f32 %v4850, %v4700
        %v4857 = vadd.f32 %v4851, %v4704
        %4858 = vst [vmem:[%s3252] sm:$0xff] %v4852
        %4859 = vst [vmem:[%s3252 + $0x8] sm:$0xff] %v4853
        %4860 = vst [vmem:[%s3252 + $0x10] sm:$0xff] %v4854
        %4861 = vst [vmem:[%s3252 + $0x18] sm:$0x3f] %v4855
        %4862 = vst [vmem:[%s3252 + $0x20] sm:$0x3f] %v4856
        %4863 = vst [vmem:[%s3252 + $0x28] sm:$0x3f] %v4857
        %v4864 = vld [vmem:[%s3436] sm:$0xff]
        %v4865 = vld [vmem:[%s3436 + $0x8] sm:$0xff]
        %v4866 = vld [vmem:[%s3436 + $0x10] sm:$0xff]
        %v4867 = vld [vmem:[%s3436 + $0x18] sm:$0x3f]
        %v4868 = vld [vmem:[%s3436 + $0x20] sm:$0x3f]
        %v4869 = vld [vmem:[%s3436 + $0x28] sm:$0x3f]
        %v4870 = vmul.f32 %v4864, %v4677
        %v4871 = vmul.f32 %v4865, %v4681
        %v4872 = vmul.f32 %v4866, %v4685
        %v4873 = vmul.f32 %v4867, %v4677
        %v4874 = vmul.f32 %v4868, %v4681
        %v4875 = vmul.f32 %v4869, %v4685
        %v4876 = vadd.f32 %v4870, %v4696
        %v4877 = vadd.f32 %v4871, %v4700
        %v4878 = vadd.f32 %v4872, %v4704
        %v4879 = vadd.f32 %v4873, %v4696
        %v4880 = vadd.f32 %v4874, %v4700
        %v4881 = vadd.f32 %v4875, %v4704
        %4882 = vst [vmem:[%s3436] sm:$0xff] %v4876
        %4883 = vst [vmem:[%s3436 + $0x8] sm:$0xff] %v4877
        %4884 = vst [vmem:[%s3436 + $0x10] sm:$0xff] %v4878
        %4885 = vst [vmem:[%s3436 + $0x18] sm:$0x3f] %v4879
        %4886 = vst [vmem:[%s3436 + $0x20] sm:$0x3f] %v4880
        %4887 = vst [vmem:[%s3436 + $0x28] sm:$0x3f] %v4881
        %v4888 = vld [vmem:[%s3620] sm:$0xff]
        %v4889 = vld [vmem:[%s3620 + $0x8] sm:$0xff]
        %v4890 = vld [vmem:[%s3620 + $0x10] sm:$0xff]
        %v4891 = vld [vmem:[%s3620 + $0x18] sm:$0x3f]
        %v4892 = vld [vmem:[%s3620 + $0x20] sm:$0x3f]
        %v4893 = vld [vmem:[%s3620 + $0x28] sm:$0x3f]
        %v4894 = vmul.f32 %v4888, %v4677
        %v4895 = vmul.f32 %v4889, %v4681
        %v4896 = vmul.f32 %v4890, %v4685
        %v4897 = vmul.f32 %v4891, %v4677
        %v4898 = vmul.f32 %v4892, %v4681
        %v4899 = vmul.f32 %v4893, %v4685
        %v4900 = vadd.f32 %v4894, %v4696
        %v4901 = vadd.f32 %v4895, %v4700
        %v4902 = vadd.f32 %v4896, %v4704
        %v4903 = vadd.f32 %v4897, %v4696
        %v4904 = vadd.f32 %v4898, %v4700
        %v4905 = vadd.f32 %v4899, %v4704
        %4906 = vst [vmem:[%s3620] sm:$0xff] %v4900
        %4907 = vst [vmem:[%s3620 + $0x8] sm:$0xff] %v4901
        %4908 = vst [vmem:[%s3620 + $0x10] sm:$0xff] %v4902
        %4909 = vst [vmem:[%s3620 + $0x18] sm:$0x3f] %v4903
        %4910 = vst [vmem:[%s3620 + $0x20] sm:$0x3f] %v4904
        %4911 = vst [vmem:[%s3620 + $0x28] sm:$0x3f] %v4905
        %v4912 = vld [vmem:[%s3804] sm:$0xff]
        %v4913 = vld [vmem:[%s3804 + $0x8] sm:$0xff]
        %v4914 = vld [vmem:[%s3804 + $0x10] sm:$0xff]
        %v4915 = vld [vmem:[%s3804 + $0x18] sm:$0x3f]
        %v4916 = vld [vmem:[%s3804 + $0x20] sm:$0x3f]
        %v4917 = vld [vmem:[%s3804 + $0x28] sm:$0x3f]
        %v4918 = vmul.f32 %v4912, %v4677
        %v4919 = vmul.f32 %v4913, %v4681
        %v4920 = vmul.f32 %v4914, %v4685
        %v4921 = vmul.f32 %v4915, %v4677
        %v4922 = vmul.f32 %v4916, %v4681
        %v4923 = vmul.f32 %v4917, %v4685
        %v4924 = vadd.f32 %v4918, %v4696
        %v4925 = vadd.f32 %v4919, %v4700
        %v4926 = vadd.f32 %v4920, %v4704
        %v4927 = vadd.f32 %v4921, %v4696
        %v4928 = vadd.f32 %v4922, %v4700
        %v4929 = vadd.f32 %v4923, %v4704
        %4930 = vst [vmem:[%s3804] sm:$0xff] %v4924
        %4931 = vst [vmem:[%s3804 + $0x8] sm:$0xff] %v4925
        %4932 = vst [vmem:[%s3804 + $0x10] sm:$0xff] %v4926
        %4933 = vst [vmem:[%s3804 + $0x18] sm:$0x3f] %v4927
        %4934 = vst [vmem:[%s3804 + $0x20] sm:$0x3f] %v4928
        %4935 = vst [vmem:[%s3804 + $0x28] sm:$0x3f] %v4929
        %v4936 = vld [vmem:[%s3988] sm:$0xff]
        %v4937 = vld [vmem:[%s3988 + $0x8] sm:$0xff]
        %v4938 = vld [vmem:[%s3988 + $0x10] sm:$0xff]
        %v4939 = vld [vmem:[%s3988 + $0x18] sm:$0x3f]
        %v4940 = vld [vmem:[%s3988 + $0x20] sm:$0x3f]
        %v4941 = vld [vmem:[%s3988 + $0x28] sm:$0x3f]
        %v4942 = vmul.f32 %v4936, %v4677
        %v4943 = vmul.f32 %v4937, %v4681
        %v4944 = vmul.f32 %v4938, %v4685
        %v4945 = vmul.f32 %v4939, %v4677
        %v4946 = vmul.f32 %v4940, %v4681
        %v4947 = vmul.f32 %v4941, %v4685
        %v4948 = vadd.f32 %v4942, %v4696
        %v4949 = vadd.f32 %v4943, %v4700
        %v4950 = vadd.f32 %v4944, %v4704
        %v4951 = vadd.f32 %v4945, %v4696
        %v4952 = vadd.f32 %v4946, %v4700
        %v4953 = vadd.f32 %v4947, %v4704
        %4954 = vst [vmem:[%s3988] sm:$0xff] %v4948
        %4955 = vst [vmem:[%s3988 + $0x8] sm:$0xff] %v4949
        %4956 = vst [vmem:[%s3988 + $0x10] sm:$0xff] %v4950
        %4957 = vst [vmem:[%s3988 + $0x18] sm:$0x3f] %v4951
        %4958 = vst [vmem:[%s3988 + $0x20] sm:$0x3f] %v4952
        %4959 = vst [vmem:[%s3988 + $0x28] sm:$0x3f] %v4953
        %v4960 = vld [vmem:[%s4172] sm:$0xff]
        %v4961 = vld [vmem:[%s4172 + $0x8] sm:$0xff]
        %v4962 = vld [vmem:[%s4172 + $0x10] sm:$0xff]
        %v4963 = vld [vmem:[%s4172 + $0x18] sm:$0x3f]
        %v4964 = vld [vmem:[%s4172 + $0x20] sm:$0x3f]
        %v4965 = vld [vmem:[%s4172 + $0x28] sm:$0x3f]
        %v4966 = vmul.f32 %v4960, %v4677
        %v4967 = vmul.f32 %v4961, %v4681
        %v4968 = vmul.f32 %v4962, %v4685
        %v4969 = vmul.f32 %v4963, %v4677
        %v4970 = vmul.f32 %v4964, %v4681
        %v4971 = vmul.f32 %v4965, %v4685
        %v4972 = vadd.f32 %v4966, %v4696
        %v4973 = vadd.f32 %v4967, %v4700
        %v4974 = vadd.f32 %v4968, %v4704
        %v4975 = vadd.f32 %v4969, %v4696
        %v4976 = vadd.f32 %v4970, %v4700
        %v4977 = vadd.f32 %v4971, %v4704
        %4978 = vst [vmem:[%s4172] sm:$0xff] %v4972
        %4979 = vst [vmem:[%s4172 + $0x8] sm:$0xff] %v4973
        %4980 = vst [vmem:[%s4172 + $0x10] sm:$0xff] %v4974
        %4981 = vst [vmem:[%s4172 + $0x18] sm:$0x3f] %v4975
        %4982 = vst [vmem:[%s4172 + $0x20] sm:$0x3f] %v4976
        %4983 = vst [vmem:[%s4172 + $0x28] sm:$0x3f] %v4977
        %v4984 = vld [vmem:[%s4356] sm:$0xff]
        %v4985 = vld [vmem:[%s4356 + $0x8] sm:$0xff]
        %v4986 = vld [vmem:[%s4356 + $0x10] sm:$0xff]
        %v4987 = vld [vmem:[%s4356 + $0x18] sm:$0x3f]
        %v4988 = vld [vmem:[%s4356 + $0x20] sm:$0x3f]
        %v4989 = vld [vmem:[%s4356 + $0x28] sm:$0x3f]
        %v4990 = vmul.f32 %v4984, %v4677
        %v4991 = vmul.f32 %v4985, %v4681
        %v4992 = vmul.f32 %v4986, %v4685
        %v4993 = vmul.f32 %v4987, %v4677
        %v4994 = vmul.f32 %v4988, %v4681
        %v4995 = vmul.f32 %v4989, %v4685
        %v4996 = vadd.f32 %v4990, %v4696
        %v4997 = vadd.f32 %v4991, %v4700
        %v4998 = vadd.f32 %v4992, %v4704
        %v4999 = vadd.f32 %v4993, %v4696
        %v5000 = vadd.f32 %v4994, %v4700
        %v5001 = vadd.f32 %v4995, %v4704
        %5002 = vst [vmem:[%s4356] sm:$0xff] %v4996
        %5003 = vst [vmem:[%s4356 + $0x8] sm:$0xff] %v4997
        %5004 = vst [vmem:[%s4356 + $0x10] sm:$0xff] %v4998
        %5005 = vst [vmem:[%s4356 + $0x18] sm:$0x3f] %v4999
        %5006 = vst [vmem:[%s4356 + $0x20] sm:$0x3f] %v5000
        %5007 = vst [vmem:[%s4356 + $0x28] sm:$0x3f] %v5001
        %v5008 = vld [vmem:[%s4539] sm:$0xff]
        %v5009 = vld [vmem:[%s4539 + $0x8] sm:$0xff]
        %v5010 = vld [vmem:[%s4539 + $0x10] sm:$0xff]
        %v5011 = vld [vmem:[%s4539 + $0x18] sm:$0x3f]
        %v5012 = vld [vmem:[%s4539 + $0x20] sm:$0x3f]
        %v5013 = vld [vmem:[%s4539 + $0x28] sm:$0x3f]
        %v5014 = vmul.f32 %v5008, %v4677
        %v5015 = vmul.f32 %v5009, %v4681
        %v5016 = vmul.f32 %v5010, %v4685
        %v5017 = vmul.f32 %v5011, %v4677
        %v5018 = vmul.f32 %v5012, %v4681
        %v5019 = vmul.f32 %v5013, %v4685
        %v5020 = vadd.f32 %v5014, %v4696
        %v5021 = vadd.f32 %v5015, %v4700
        %v5022 = vadd.f32 %v5016, %v4704
        %v5023 = vadd.f32 %v5017, %v4696
        %v5024 = vadd.f32 %v5018, %v4700
        %v5025 = vadd.f32 %v5019, %v4704
        %5026 = vst [vmem:[%s4539] sm:$0xff] %v5020
        %5027 = vst [vmem:[%s4539 + $0x8] sm:$0xff] %v5021
        %5028 = vst [vmem:[%s4539 + $0x10] sm:$0xff] %v5022
        %5029 = vst [vmem:[%s4539 + $0x18] sm:$0x3f] %v5023
        %5030 = vst [vmem:[%s4539 + $0x20] sm:$0x3f] %v5024
        %5031 = vst [vmem:[%s4539 + $0x28] sm:$0x3f] %v5025
        %s5032 = sand.u32 %s127, 1
        %s5033 = sand.u32 %s127, 1
        %s5034 = smul.addr %s5033, 672
        %s5035 = scalar_lea.vmem [#allocation6], %s5034
        // Predicated region
        $region86: #{depthwise_conv_bn_nchw.1} parent=76 // pred_check
          %p5036 = pneg %p137
        $region87: #{depthwise_conv_bn_nchw.1} parent=76 // pred_check_branch
          %5038 = sbr.rel (%p5036) target = $region89
        $region88: #{depthwise_conv_bn_nchw.1} parent=76 // pred_region
          %s5039 = smul.u32 3, %s15
          %s5040 = smul.addr %s5039, 8
          %s5041 = scalar_lea.vmem %s4, %s5040
          // Predicated region
          $region90: #{depthwise_conv_bn_nchw.1} parent=88 // pred_check
            _
          $region91: #{depthwise_conv_bn_nchw.1} parent=88 // pred_check_branch
            %5043 = sbr.rel (0) target = $region93
          $region92: #{depthwise_conv_bn_nchw.1} parent=88 // pred_region
            // Predicated region
            $region94: #{depthwise_conv_bn_nchw.1} parent=92 // pred_check
              _
            $region95: #{depthwise_conv_bn_nchw.1} parent=92 // pred_check_branch
              %5045 = sbr.rel (0) target = $region97
            $region96: #{depthwise_conv_bn_nchw.1} parent=92 // pred_region
              loop: start=0, step=1, limit=1
              $region98: #{depthwise_conv_bn_nchw.1} parent=96 // loop_pre_header
                _
              $region99: #{depthwise_conv_bn_nchw.1} parent=96 // loop_header
                %s5047 = sphi 0, %s5051
                %p5048 = scmp.ge.s32.totalorder %s5047, 1
                %s5052 = sphi %s5035, %s5035
                %s5053 = sphi %s5041, %s5041
              $region100: #{depthwise_conv_bn_nchw.1} parent=96 // loop_header_branch
                %5050 = sbr.rel (%p5048) target = $region104
              $region101: #{depthwise_conv_bn_nchw.1} parent=96 // loop_body
                %v5054 = vld [vmem:[%s5052] sm:$0xff]
                %5055 = vst [vmem:[%s5053] sm:$0xff] %v5054
                %v5056 = vld [vmem:[%s5052 + $0x8] sm:$0xff]
                %5057 = vst [vmem:[%s5053 + $0x8] sm:$0xff] %v5056
                %v5058 = vld [vmem:[%s5052 + $0x10] sm:$0xff]
                %5059 = vst [vmem:[%s5053 + $0x10] sm:$0xff] %v5058
                %v5060 = vld [vmem:[%s5052 + $0x18] sm:$0xff]
                %5061 = vst [vmem:[%s5053 + $0x60] sm:$0xff] %v5060
                %v5062 = vld [vmem:[%s5052 + $0x20] sm:$0xff]
                %5063 = vst [vmem:[%s5053 + $0x68] sm:$0xff] %v5062
                %v5064 = vld [vmem:[%s5052 + $0x28] sm:$0xff]
                %5065 = vst [vmem:[%s5053 + $0x70] sm:$0xff] %v5064
                %v5066 = vld [vmem:[%s5052 + $0x30] sm:$0xff]
                %5067 = vst [vmem:[%s5053 + $0xc0] sm:$0xff] %v5066
                %v5068 = vld [vmem:[%s5052 + $0x38] sm:$0xff]
                %5069 = vst [vmem:[%s5053 + $0xc8] sm:$0xff] %v5068
                %v5070 = vld [vmem:[%s5052 + $0x40] sm:$0xff]
                %5071 = vst [vmem:[%s5053 + $0xd0] sm:$0xff] %v5070
                %v5072 = vld [vmem:[%s5052 + $0x48] sm:$0xff]
                %5073 = vst [vmem:[%s5053 + $0x120] sm:$0xff] %v5072
                %v5074 = vld [vmem:[%s5052 + $0x50] sm:$0xff]
                %5075 = vst [vmem:[%s5053 + $0x128] sm:$0xff] %v5074
                %v5076 = vld [vmem:[%s5052 + $0x58] sm:$0xff]
                %5077 = vst [vmem:[%s5053 + $0x130] sm:$0xff] %v5076
                %v5078 = vld [vmem:[%s5052 + $0x60] sm:$0xff]
                %5079 = vst [vmem:[%s5053 + $0x180] sm:$0xff] %v5078
                %v5080 = vld [vmem:[%s5052 + $0x68] sm:$0xff]
                %5081 = vst [vmem:[%s5053 + $0x188] sm:$0xff] %v5080
                %v5082 = vld [vmem:[%s5052 + $0x70] sm:$0xff]
                %5083 = vst [vmem:[%s5053 + $0x190] sm:$0xff] %v5082
                %v5084 = vld [vmem:[%s5052 + $0x78] sm:$0xff]
                %5085 = vst [vmem:[%s5053 + $0x1e0] sm:$0xff] %v5084
                %v5086 = vld [vmem:[%s5052 + $0x80] sm:$0xff]
                %5087 = vst [vmem:[%s5053 + $0x1e8] sm:$0xff] %v5086
                %v5088 = vld [vmem:[%s5052 + $0x88] sm:$0xff]
                %5089 = vst [vmem:[%s5053 + $0x1f0] sm:$0xff] %v5088
                %v5090 = vld [vmem:[%s5052 + $0x90] sm:$0xff]
                %5091 = vst [vmem:[%s5053 + $0x240] sm:$0xff] %v5090
                %v5092 = vld [vmem:[%s5052 + $0x98] sm:$0xff]
                %5093 = vst [vmem:[%s5053 + $0x248] sm:$0xff] %v5092
                %v5094 = vld [vmem:[%s5052 + $0xa0] sm:$0xff]
                %5095 = vst [vmem:[%s5053 + $0x250] sm:$0xff] %v5094
                %v5096 = vld [vmem:[%s5052 + $0xa8] sm:$0xff]
                %5097 = vst [vmem:[%s5053 + $0x2a0] sm:$0xff] %v5096
                %v5098 = vld [vmem:[%s5052 + $0xb0] sm:$0xff]
                %5099 = vst [vmem:[%s5053 + $0x2a8] sm:$0xff] %v5098
                %v5100 = vld [vmem:[%s5052 + $0xb8] sm:$0xff]
                %5101 = vst [vmem:[%s5053 + $0x2b0] sm:$0xff] %v5100
                %v5102 = vld [vmem:[%s5052 + $0xc0] sm:$0xff]
                %5103 = vst [vmem:[%s5053 + $0x300] sm:$0xff] %v5102
                %v5104 = vld [vmem:[%s5052 + $0xc8] sm:$0xff]
                %5105 = vst [vmem:[%s5053 + $0x308] sm:$0xff] %v5104
                %v5106 = vld [vmem:[%s5052 + $0xd0] sm:$0xff]
                %5107 = vst [vmem:[%s5053 + $0x310] sm:$0xff] %v5106
                %v5108 = vld [vmem:[%s5052 + $0xd8] sm:$0xff]
                %5109 = vst [vmem:[%s5053 + $0x360] sm:$0xff] %v5108
                %v5110 = vld [vmem:[%s5052 + $0xe0] sm:$0xff]
                %5111 = vst [vmem:[%s5053 + $0x368] sm:$0xff] %v5110
                %v5112 = vld [vmem:[%s5052 + $0xe8] sm:$0xff]
                %5113 = vst [vmem:[%s5053 + $0x370] sm:$0xff] %v5112
                %v5114 = vld [vmem:[%s5052 + $0xf0] sm:$0xff]
                %5115 = vst [vmem:[%s5053 + $0x3c0] sm:$0xff] %v5114
                %v5116 = vld [vmem:[%s5052 + $0xf8] sm:$0xff]
                %5117 = vst [vmem:[%s5053 + $0x3c8] sm:$0xff] %v5116
                %v5118 = vld [vmem:[%s5052 + $0x100] sm:$0xff]
                %5119 = vst [vmem:[%s5053 + $0x3d0] sm:$0xff] %v5118
                %v5120 = vld [vmem:[%s5052 + $0x108] sm:$0xff]
                %5121 = vst [vmem:[%s5053 + $0x420] sm:$0xff] %v5120
                %v5122 = vld [vmem:[%s5052 + $0x110] sm:$0xff]
                %5123 = vst [vmem:[%s5053 + $0x428] sm:$0xff] %v5122
                %v5124 = vld [vmem:[%s5052 + $0x118] sm:$0xff]
                %5125 = vst [vmem:[%s5053 + $0x430] sm:$0xff] %v5124
                %v5126 = vld [vmem:[%s5052 + $0x120] sm:$0xff]
                %5127 = vst [vmem:[%s5053 + $0x480] sm:$0xff] %v5126
                %v5128 = vld [vmem:[%s5052 + $0x128] sm:$0xff]
                %5129 = vst [vmem:[%s5053 + $0x488] sm:$0xff] %v5128
                %v5130 = vld [vmem:[%s5052 + $0x130] sm:$0xff]
                %5131 = vst [vmem:[%s5053 + $0x490] sm:$0xff] %v5130
                %v5132 = vld [vmem:[%s5052 + $0x138] sm:$0xff]
                %5133 = vst [vmem:[%s5053 + $0x4e0] sm:$0xff] %v5132
                %v5134 = vld [vmem:[%s5052 + $0x140] sm:$0xff]
                %5135 = vst [vmem:[%s5053 + $0x4e8] sm:$0xff] %v5134
                %v5136 = vld [vmem:[%s5052 + $0x148] sm:$0xff]
                %5137 = vst [vmem:[%s5053 + $0x4f0] sm:$0xff] %v5136
                %v5138 = vld [vmem:[%s5052 + $0x150] sm:$0xff]
                %5139 = vst [vmem:[%s5053 + $0x540] sm:$0xff] %v5138
                %v5140 = vld [vmem:[%s5052 + $0x158] sm:$0xff]
                %5141 = vst [vmem:[%s5053 + $0x548] sm:$0xff] %v5140
                %v5142 = vld [vmem:[%s5052 + $0x160] sm:$0xff]
                %5143 = vst [vmem:[%s5053 + $0x550] sm:$0xff] %v5142
                %v5144 = vld [vmem:[%s5052 + $0x168] sm:$0xff]
                %5145 = vst [vmem:[%s5053 + $0x5a0] sm:$0xff] %v5144
                %v5146 = vld [vmem:[%s5052 + $0x170] sm:$0xff]
                %5147 = vst [vmem:[%s5053 + $0x5a8] sm:$0xff] %v5146
                %v5148 = vld [vmem:[%s5052 + $0x178] sm:$0xff]
                %5149 = vst [vmem:[%s5053 + $0x5b0] sm:$0xff] %v5148
                %v5150 = vld [vmem:[%s5052 + $0x180] sm:$0xff]
                %5151 = vst [vmem:[%s5053 + $0x600] sm:$0xff] %v5150
                %v5152 = vld [vmem:[%s5052 + $0x188] sm:$0xff]
                %5153 = vst [vmem:[%s5053 + $0x608] sm:$0xff] %v5152
                %v5154 = vld [vmem:[%s5052 + $0x190] sm:$0xff]
                %5155 = vst [vmem:[%s5053 + $0x610] sm:$0xff] %v5154
                %v5156 = vld [vmem:[%s5052 + $0x198] sm:$0xff]
                %5157 = vst [vmem:[%s5053 + $0x660] sm:$0xff] %v5156
                %v5158 = vld [vmem:[%s5052 + $0x1a0] sm:$0xff]
                %5159 = vst [vmem:[%s5053 + $0x668] sm:$0xff] %v5158
                %v5160 = vld [vmem:[%s5052 + $0x1a8] sm:$0xff]
                %5161 = vst [vmem:[%s5053 + $0x670] sm:$0xff] %v5160
                %v5162 = vld [vmem:[%s5052 + $0x1b0] sm:$0xff]
                %5163 = vst [vmem:[%s5053 + $0x6c0] sm:$0xff] %v5162
                %v5164 = vld [vmem:[%s5052 + $0x1b8] sm:$0xff]
                %5165 = vst [vmem:[%s5053 + $0x6c8] sm:$0xff] %v5164
                %v5166 = vld [vmem:[%s5052 + $0x1c0] sm:$0xff]
                %5167 = vst [vmem:[%s5053 + $0x6d0] sm:$0xff] %v5166
                %v5168 = vld [vmem:[%s5052 + $0x1c8] sm:$0xff]
                %5169 = vst [vmem:[%s5053 + $0x720] sm:$0xff] %v5168
                %v5170 = vld [vmem:[%s5052 + $0x1d0] sm:$0xff]
                %5171 = vst [vmem:[%s5053 + $0x728] sm:$0xff] %v5170
                %v5172 = vld [vmem:[%s5052 + $0x1d8] sm:$0xff]
                %5173 = vst [vmem:[%s5053 + $0x730] sm:$0xff] %v5172
                %v5174 = vld [vmem:[%s5052 + $0x1e0] sm:$0xff]
                %5175 = vst [vmem:[%s5053 + $0x780] sm:$0xff] %v5174
                %v5176 = vld [vmem:[%s5052 + $0x1e8] sm:$0xff]
                %5177 = vst [vmem:[%s5053 + $0x788] sm:$0xff] %v5176
                %v5178 = vld [vmem:[%s5052 + $0x1f0] sm:$0xff]
                %5179 = vst [vmem:[%s5053 + $0x790] sm:$0xff] %v5178
                %v5180 = vld [vmem:[%s5052 + $0x1f8] sm:$0xff]
                %5181 = vst [vmem:[%s5053 + $0x7e0] sm:$0xff] %v5180
                %v5182 = vld [vmem:[%s5052 + $0x200] sm:$0xff]
                %5183 = vst [vmem:[%s5053 + $0x7e8] sm:$0xff] %v5182
                %v5184 = vld [vmem:[%s5052 + $0x208] sm:$0xff]
                %5185 = vst [vmem:[%s5053 + $0x7f0] sm:$0xff] %v5184
                %v5186 = vld [vmem:[%s5052 + $0x210] sm:$0xff]
                %5187 = vst [vmem:[%s5053 + $0x840] sm:$0xff] %v5186
                %v5188 = vld [vmem:[%s5052 + $0x218] sm:$0xff]
                %5189 = vst [vmem:[%s5053 + $0x848] sm:$0xff] %v5188
                %v5190 = vld [vmem:[%s5052 + $0x220] sm:$0xff]
                %5191 = vst [vmem:[%s5053 + $0x850] sm:$0xff] %v5190
                %v5192 = vld [vmem:[%s5052 + $0x228] sm:$0xff]
                %5193 = vst [vmem:[%s5053 + $0x8a0] sm:$0xff] %v5192
                %v5194 = vld [vmem:[%s5052 + $0x230] sm:$0xff]
                %5195 = vst [vmem:[%s5053 + $0x8a8] sm:$0xff] %v5194
                %v5196 = vld [vmem:[%s5052 + $0x238] sm:$0xff]
                %5197 = vst [vmem:[%s5053 + $0x8b0] sm:$0xff] %v5196
                %v5198 = vld [vmem:[%s5052 + $0x240] sm:$0xff]
                %5199 = vst [vmem:[%s5053 + $0x900] sm:$0xff] %v5198
                %v5200 = vld [vmem:[%s5052 + $0x248] sm:$0xff]
                %5201 = vst [vmem:[%s5053 + $0x908] sm:$0xff] %v5200
                %v5202 = vld [vmem:[%s5052 + $0x250] sm:$0xff]
                %5203 = vst [vmem:[%s5053 + $0x910] sm:$0xff] %v5202
                %v5204 = vld [vmem:[%s5052 + $0x258] sm:$0xff]
                %5205 = vst [vmem:[%s5053 + $0x960] sm:$0xff] %v5204
                %v5206 = vld [vmem:[%s5052 + $0x260] sm:$0xff]
                %5207 = vst [vmem:[%s5053 + $0x968] sm:$0xff] %v5206
                %v5208 = vld [vmem:[%s5052 + $0x268] sm:$0xff]
                %5209 = vst [vmem:[%s5053 + $0x970] sm:$0xff] %v5208
                %v5210 = vld [vmem:[%s5052 + $0x270] sm:$0xff]
                %5211 = vst [vmem:[%s5053 + $0x9c0] sm:$0xff] %v5210
                %v5212 = vld [vmem:[%s5052 + $0x278] sm:$0xff]
                %5213 = vst [vmem:[%s5053 + $0x9c8] sm:$0xff] %v5212
                %v5214 = vld [vmem:[%s5052 + $0x280] sm:$0xff]
                %5215 = vst [vmem:[%s5053 + $0x9d0] sm:$0xff] %v5214
                %v5216 = vld [vmem:[%s5052 + $0x288] sm:$0xff]
                %5217 = vst [vmem:[%s5053 + $0xa20] sm:$0xff] %v5216
                %v5218 = vld [vmem:[%s5052 + $0x290] sm:$0xff]
                %5219 = vst [vmem:[%s5053 + $0xa28] sm:$0xff] %v5218
                %v5220 = vld [vmem:[%s5052 + $0x298] sm:$0xff]
                %5221 = vst [vmem:[%s5053 + $0xa30] sm:$0xff] %v5220
              $region102: #{depthwise_conv_bn_nchw.1} parent=96 // loop_footer
                %s5051 = sadd.s32 1, %s5047
              $region103: #{depthwise_conv_bn_nchw.1} parent=96 // loop_footer_branch
                %5046 = sbr.rel target = $region99
              $region104: #{depthwise_conv_bn_nchw.1} parent=96 // loop_exit
                _
            $region97: #{depthwise_conv_bn_nchw.1} parent=92 // pred_fallthru
              _
            // Predicated region
            $region105: #{depthwise_conv_bn_nchw.1} parent=92 // pred_check
              _
            $region106: #{depthwise_conv_bn_nchw.1} parent=92 // pred_check_branch
              %5223 = sbr.rel target = $region108
            $region107: #{depthwise_conv_bn_nchw.1} parent=92 // pred_region
              _
            $region108: #{depthwise_conv_bn_nchw.1} parent=92 // pred_fallthru
              _
          $region93: #{depthwise_conv_bn_nchw.1} parent=88 // pred_fallthru
            _
          %5224 = vnop
        $region89: #{depthwise_conv_bn_nchw.1} parent=76 // pred_fallthru
          _
      $region77: #{depthwise_conv_bn_nchw.1} parent=5 // pred_fallthru
        _
      %p5225 = scmp.le.s32.totalorder 2, %s10
      // Predicated region
      $region109: #{depthwise_conv_bn_nchw.1} parent=5 // pred_check
        %p5226 = pneg %p5225
      $region110: #{depthwise_conv_bn_nchw.1} parent=5 // pred_check_branch
        %5228 = sbr.rel (%p5226) target = $region112
      $region111: #{depthwise_conv_bn_nchw.1} parent=5 // pred_region
        %s5229 = ssub.s32 %s10, 2
        // Predicated region
        $region113: #{depthwise_conv_bn_nchw.1} parent=111 // pred_check
          %p5230 = pneg %p143
        $region114: #{depthwise_conv_bn_nchw.1} parent=111 // pred_check_branch
          %5232 = sbr.rel (%p5230) target = $region116
        $region115: #{depthwise_conv_bn_nchw.1} parent=111 // pred_region
          %s5233 = sand.u32 %s128, 1
          %s5234 = sand.u32 %s128, 1
          %s5235 = smul.addr %s5234, 672
          %s5236 = scalar_lea.vmem [#allocation6], %s5235
        $region116: #{depthwise_conv_bn_nchw.1} parent=111 // pred_fallthru
          _
      $region112: #{depthwise_conv_bn_nchw.1} parent=5 // pred_fallthru
        _
    $region6: #{depthwise_conv_bn_nchw.1} parent=1 // loop_footer
      %s14 = sadd.s32 1, %s10
    $region7: #{depthwise_conv_bn_nchw.1} parent=1 // loop_footer_branch
      %9 = sbr.rel target = $region3
    $region8: #{depthwise_conv_bn_nchw.1} parent=1 // loop_exit
      _

</llo_original>
